<compile_context>
chip_gen: v7x
topology: tpu7x:2x2x1
jax: 0.10.0
libtpu: 0.0.40
codegen_flags: <defaults>
</compile_context>

<pallas_src>
import numpy as np
import jax
import jax.numpy as jnp
from jax import lax
from jax.experimental import pallas as pl
from jax.experimental.pallas import tpu as pltpu

# ---------------- configuration (small synthetic sizes) ----------------
B = 2          # batch
C_IN = 4       # image channels
IMG_HW = 16    # image spatial side
HW = IMG_HW * IMG_HW            # flattened input pixels per image (256)
ENC_DIM = 32   # encoder feature channels
ENC_HW = 4     # pooled spatial side
NUM_PIX = ENC_HW * ENC_HW       # 16 pooled pixels
SEQ = 8        # caption length (tokens)
VOCAB = 50     # vocabulary size
EMB_DIM = 32   # embedding dim
ATT_DIM = 32   # attention dim
DEC_DIM = 32   # LSTM hidden dim

VOCAB_PAD = 128                          # lane-dense fc projection width
CAT_DIM = EMB_DIM + ENC_DIM + DEC_DIM    # 96: fused LSTM input width
CAT_PAD = 128                            # padded to a full lane group


# ============================ pooling matrix ============================
def _pool_matrix_np(H, W, ph_out, pw_out):
    """Constant matrix implementing adaptive avg-pool HxW -> ph_out x pw_out."""
    ph, pw = H // ph_out, W // pw_out
    m = np.zeros((ph_out * pw_out, H * W), np.float32)
    for po in range(ph_out):
        for qo in range(pw_out):
            for dh in range(ph):
                for dw in range(pw):
                    m[po * pw_out + qo, (po * ph + dh) * W + (qo * pw + dw)] = 1.0 / (ph * pw)
    return m


def _block_diag_pool(Bsz, H, W, ph_out, pw_out):
    """Block-diagonal pool matrix: one matmul pools all batch items at once."""
    m = _pool_matrix_np(H, W, ph_out, pw_out)
    big = np.zeros((Bsz * m.shape[0], Bsz * m.shape[1]), np.float32)
    for b in range(Bsz):
        big[b * m.shape[0]:(b + 1) * m.shape[0],
            b * m.shape[1]:(b + 1) * m.shape[1]] = m
    return jnp.asarray(big)


# ============================ fused kernel ============================
def _make_captioning_kernel(t_dec):
    """Encoder + attention-LSTM decoder fused into one kernel invocation."""

    def kernel(cap_ref, dl_ref, x_ref,
               enc_w_ref, enc_b_ref, pool_ref, emb_ref,
               w_ih_ref, b_ih_ref, w_ic_ref, b_ic_ref,
               w_ea_ref, b_ea_ref, w_da_ref, b_da_ref,
               w_fa_ref, b_fa_ref, w_fb_ref, b_fb_ref,
               w_lstm_ref, b_lstm_ref, w_fc_ref, b_fc_ref,
               pred_ref, alpha_ref,
               xcat_scr):
        # ===== encoder: 1x1 conv + ReLU + adaptive avg-pool (runs once) =====
        x = x_ref[...].astype(jnp.bfloat16)                          # (B*HW, C_IN)
        feat = jnp.maximum(
            jnp.dot(x, enc_w_ref[...], preferred_element_type=jnp.float32)
            + enc_b_ref[...], 0.0)                                   # (B*HW, ENC) f32
        enc_flat = jnp.dot(pool_ref[...], feat.astype(jnp.bfloat16),
                           preferred_element_type=jnp.float32)       # (B*P, ENC) f32
        enc3 = enc_flat.reshape(B, NUM_PIX, ENC_DIM)                 # (B, P, ENC)
        enc_bf = enc_flat.astype(jnp.bfloat16)

        # ===== decoder init: h0/c0 from mean feature; loop-invariant att proj =====
        mean_enc = jnp.mean(enc3, axis=1).astype(jnp.bfloat16)       # (B, ENC)
        h0 = (jnp.dot(mean_enc, w_ih_ref[...], preferred_element_type=jnp.float32)
              + b_ih_ref[...])                                       # (B, DEC)
        c0 = (jnp.dot(mean_enc, w_ic_ref[...], preferred_element_type=jnp.float32)
              + b_ic_ref[...])
        att1 = (jnp.dot(enc_bf, w_ea_ref[...], preferred_element_type=jnp.float32)
                + b_ea_ref[...]).reshape(B, NUM_PIX, ATT_DIM)        # (B, P, ATT)

        xcat_scr[...] = jnp.zeros_like(xcat_scr)     # lanes [CAT_DIM:128) stay zero
        dl = dl_ref[...]                             # (B, 1) int32 decode lengths
        w_full = w_fa_ref[...][None, :, :]           # (1, 1, ATT) hoisted broadcast
        b_full = b_fa_ref[...]                       # (1, 1)

        # ===== recurrent time loop (in-kernel; h/c as loop carry) =====
        def step(t, hc):
            h, c = hc
            h_bf = h.astype(jnp.bfloat16)

            # --- soft attention (f32 softmax / elementwise; v5e has no bf16 VPU) ---
            att2 = (jnp.dot(h_bf, w_da_ref[...], preferred_element_type=jnp.float32)
                    + b_da_ref[...])                                 # (B, ATT)
            e = jnp.maximum(att1 + att2[:, None, :], 0.0)            # (B, P, ATT)
            scores = jnp.sum(e * w_full, axis=-1) + b_full           # (B, P)
            scores = scores - jnp.max(scores, axis=-1, keepdims=True)
            ex = jnp.exp(scores)
            alpha = ex / jnp.sum(ex, axis=-1, keepdims=True)         # (B, P) f32

            # --- context: VPU broadcast-multiply + sublane reduce (no M=1 MXU) ---
            awe = jnp.sum(alpha[:, :, None] * enc3, axis=1)          # (B, ENC)
            gate = jax.nn.sigmoid(
                jnp.dot(h_bf, w_fb_ref[...], preferred_element_type=jnp.float32)
                + b_fb_ref[...])                                     # (B, ENC)
            awe = gate * awe

            # --- in-kernel embedding gather + concat-free LSTM input assembly ---
            for b in range(B):                                       # B tiny & static
                tok = cap_ref[b, t]                                  # SMEM scalar read
                xcat_scr[b:b + 1, 0:EMB_DIM] = emb_ref[pl.ds(tok, 1), :]
            xcat_scr[:, EMB_DIM:EMB_DIM + ENC_DIM] = awe
            xcat_scr[:, EMB_DIM + ENC_DIM:CAT_DIM] = h

            # --- fused LSTM cell: one K=128 matmul (zero-padded rows) ---
            gates = (jnp.dot(xcat_scr[...].astype(jnp.bfloat16), w_lstm_ref[...],
                             preferred_element_type=jnp.float32) + b_lstm_ref[...])
            i_g = jax.nn.sigmoid(gates[:, 0 * DEC_DIM:1 * DEC_DIM])
            f_g = jax.nn.sigmoid(gates[:, 1 * DEC_DIM:2 * DEC_DIM])
            g_g = jnp.tanh(gates[:, 2 * DEC_DIM:3 * DEC_DIM])
            o_g = jax.nn.sigmoid(gates[:, 3 * DEC_DIM:4 * DEC_DIM])
            c_new = f_g * c + i_g * g_g
            h_new = o_g * jnp.tanh(c_new)

            # --- vocab projection, in-kernel decode-length mask, batch-major store ---
            # TODO(synk): dropout before fc omitted (deterministic / eval-mode forward).
            preds = (jnp.dot(h_new.astype(jnp.bfloat16), w_fc_ref[...],
                             preferred_element_type=jnp.float32) + b_fc_ref[...])  # (B, 128)
            mask = (dl > t).astype(jnp.float32)                      # (B, 1)
            pred_ref[:, pl.ds(t, 1), :] = (preds * mask)[:, None, :VOCAB]
            alpha_ref[:, pl.ds(t, 1), :] = (alpha * mask)[:, None, :]
            return (h_new, c_new)

        lax.fori_loop(0, t_dec, step, (h0, c0), unroll=True)

    return kernel


# ============================ full forward ============================
def image_captioning_forward(params, images, captions, lengths):
    """Mirrors ImageCaptioningModel.forward(images, captions, lengths)."""
    # --- sort by caption length (descending); lengths are static python ints ---
    lengths_np = np.asarray(lengths, dtype=np.int32)
    sort_ind_np = np.argsort(-lengths_np, kind="stable")
    decode_lengths_np = lengths_np[sort_ind_np] - 1
    t_dec = int(decode_lengths_np.max())

    sort_ind = jnp.asarray(sort_ind_np, jnp.int32)
    captions_sorted = jnp.asarray(captions, jnp.int32)[sort_ind_np]   # static gather
    dl = jnp.asarray(decode_lengths_np.reshape(B, 1), jnp.int32)

    # NHWC-flatten + batch-sort of the raw (tiny) images.  The large pre-pool
    # activation never leaves VMEM and encoder_out never touches HBM at all.
    x = jnp.transpose(images, (0, 2, 3, 1)).reshape(B, HW, C_IN)
    x = x[sort_ind_np].reshape(B * HW, C_IN)

    weights = [
        params["enc_w"], params["enc_b"], params["pool_mat"], params["emb"],
        params["w_init_h"], params["b_init_h"],
        params["w_init_c"], params["b_init_c"],
        params["w_enc_att"], params["b_enc_att"],
        params["w_dec_att"], params["b_dec_att"],
        params["w_full_att"], params["b_full_att"],
        params["w_fbeta"], params["b_fbeta"],
        params["w_lstm"], params["b_lstm"],
        params["w_fc"], params["b_fc"],
    ]

    # --- advisory cost estimate ---
    flops = int(
        2 * (B * HW) * C_IN * ENC_DIM
        + 2 * (B * NUM_PIX) * (B * HW) * ENC_DIM
        + 4 * B * ENC_DIM * DEC_DIM
        + 2 * B * NUM_PIX * ENC_DIM * ATT_DIM
        + t_dec * (2 * B * DEC_DIM * ATT_DIM + 3 * B * NUM_PIX * ATT_DIM
                   + 2 * B * NUM_PIX * ENC_DIM + 2 * B * DEC_DIM * ENC_DIM
                   + 2 * B * CAT_PAD * 4 * DEC_DIM + 2 * B * DEC_DIM * VOCAB_PAD))
    transcendentals = int(t_dec * B * (NUM_PIX + ENC_DIM + 5 * DEC_DIM))
    bytes_accessed = int(
        captions_sorted.size * 4 + dl.size * 4 + x.size * 4
        + sum(int(w.size) * w.dtype.itemsize for w in weights)
        + B * t_dec * (VOCAB + NUM_PIX) * 4)

    def vmem_spec():
        return pl.BlockSpec(memory_space=pltpu.MemorySpace.VMEM)

    in_specs = ([pl.BlockSpec(memory_space=pltpu.MemorySpace.SMEM)]   # token ids
                + [vmem_spec() for _ in range(2 + len(weights))])     # dl, x, weights

    predictions, alphas = pl.pallas_call(
        _make_captioning_kernel(t_dec),
        out_shape=(
            jax.ShapeDtypeStruct((B, t_dec, VOCAB), jnp.float32),
            jax.ShapeDtypeStruct((B, t_dec, NUM_PIX), jnp.float32),
        ),
        in_specs=in_specs,
        out_specs=(vmem_spec(), vmem_spec()),
        scratch_shapes=[pltpu.VMEM((B, CAT_PAD), jnp.float32)],       # LSTM input slab
        compiler_params=pltpu.CompilerParams(vmem_limit_bytes=32 * 1024 * 1024),
        cost_estimate=pl.CostEstimate(flops=flops, transcendentals=transcendentals,
                                      bytes_accessed=bytes_accessed),
    )(captions_sorted, dl, x, *weights)

    decode_lengths = jnp.asarray(decode_lengths_np, jnp.int32)
    return predictions, captions_sorted, decode_lengths, alphas, sort_ind


# ============================ parameter init ============================
def init_params(key):
    ks = jax.random.split(key, 16)

    def w(k, shape, scale=0.05):
        return jax.random.normal(k, shape, jnp.float32) * scale

    z = lambda shape: jnp.zeros(shape, jnp.float32)

    # raw LSTMCell / fc weights (mirror the PyTorch modules) ...
    w_lstm_x = w(ks[8], (EMB_DIM, 4 * DEC_DIM))
    w_lstm_a = w(ks[9], (ENC_DIM, 4 * DEC_DIM))
    w_lstm_h = w(ks[10], (DEC_DIM, 4 * DEC_DIM))
    b_lstm_i = z((1, 4 * DEC_DIM))
    b_lstm_h = z((1, 4 * DEC_DIM))
    w_fc = w(ks[11], (DEC_DIM, VOCAB))
    b_fc = z((1, VOCAB))

    # ... fused / padded / bf16 kernel-ready forms built ONCE here so the
    # forward pass issues no per-call weight-prep dispatches.
    w_lstm_fused = jnp.pad(
        jnp.concatenate([w_lstm_x, w_lstm_a, w_lstm_h], axis=0),
        ((0, CAT_PAD - CAT_DIM), (0, 0))).astype(jnp.bfloat16)        # (128, 4H)
    b_lstm_fused = b_lstm_i + b_lstm_h                                # (1, 4H) f32
    w_fc_pad = jnp.pad(w_fc, ((0, 0), (0, VOCAB_PAD - VOCAB))).astype(jnp.bfloat16)
    b_fc_pad = jnp.pad(b_fc, ((0, 0), (0, VOCAB_PAD - VOCAB)))

    return dict(
        # encoder (1x1 conv as matmul) + constant block-diagonal pooling matrix
        enc_w=w(ks[0], (C_IN, ENC_DIM)).astype(jnp.bfloat16),
        enc_b=z((1, ENC_DIM)),
        pool_mat=_block_diag_pool(B, IMG_HW, IMG_HW, ENC_HW, ENC_HW).astype(jnp.bfloat16),
        # embedding table (gathered in-kernel)
        emb=w(ks[1], (VOCAB, EMB_DIM)),
        # decoder linear layers (bf16 MXU operands, f32 biases / VPU operands)
        w_init_h=w(ks[2], (ENC_DIM, DEC_DIM)).astype(jnp.bfloat16),  b_init_h=z((1, DEC_DIM)),
        w_init_c=w(ks[3], (ENC_DIM, DEC_DIM)).astype(jnp.bfloat16),  b_init_c=z((1, DEC_DIM)),
        w_enc_att=w(ks[4], (ENC_DIM, ATT_DIM)).astype(jnp.bfloat16), b_enc_att=z((1, ATT_DIM)),
        w_dec_att=w(ks[5], (DEC_DIM, ATT_DIM)).astype(jnp.bfloat16), b_dec_att=z((1, ATT_DIM)),
        w_full_att=w(ks[6], (1, ATT_DIM)),                           b_full_att=z((1, 1)),
        w_fbeta=w(ks[7], (DEC_DIM, ENC_DIM)).astype(jnp.bfloat16),   b_fbeta=z((1, ENC_DIM)),
        # fused LSTM + padded vocab projection
        w_lstm=w_lstm_fused, b_lstm=b_lstm_fused,
        w_fc=w_fc_pad,       b_fc=b_fc_pad,
    )


# ============================ main ============================
if __name__ == "__main__":
    key = jax.random.PRNGKey(0)
    k_img, k_cap, k_par = jax.random.split(key, 3)

    params = init_params(k_par)

    images = jax.random.normal(k_img, (B, C_IN, IMG_HW, IMG_HW), jnp.float32)  # NCHW
    captions = jax.random.randint(k_cap, (B, SEQ), 0, VOCAB, jnp.int32)
    lengths = [SEQ, SEQ - 2]   # caption lengths (python ints -> static T_dec)

    out = image_captioning_forward(params, images, captions, lengths)
    predictions, captions_sorted, decode_lengths, alphas, sort_ind = out

    jax.block_until_ready(predictions)
    jax.block_until_ready(alphas)
    jax.block_until_ready(captions_sorted)

    t_dec = int(max(lengths) - 1)
    assert predictions.shape == (B, t_dec, VOCAB)
    assert alphas.shape == (B, t_dec, NUM_PIX)
    assert captions_sorted.shape == (B, SEQ)
    assert bool(jnp.all(jnp.isfinite(predictions)))
    # attention weights of the longest (fully-unmasked) item must sum to ~1
    assert bool(jnp.allclose(jnp.sum(alphas[0], axis=-1), 1.0, atol=1e-2))

    print("KERNEL_OK")
</pallas_src>

<mosaic_0001>
module attributes {stable_mosaic.version = 11 : i64} {
  func.func @kernel(%arg0: memref<2x8xi32, #tpu.memory_space<smem>>, %arg1: memref<2x1xi32, #tpu.memory_space<vmem>>, %arg2: memref<512x4xf32, #tpu.memory_space<vmem>>, %arg3: memref<4x32xbf16, #tpu.memory_space<vmem>>, %arg4: memref<1x32xf32, #tpu.memory_space<vmem>>, %arg5: memref<32x512xbf16, #tpu.memory_space<vmem>>, %arg6: memref<50x32xf32, #tpu.memory_space<vmem>>, %arg7: memref<32x32xbf16, #tpu.memory_space<vmem>>, %arg8: memref<1x32xf32, #tpu.memory_space<vmem>>, %arg9: memref<32x32xbf16, #tpu.memory_space<vmem>>, %arg10: memref<1x32xf32, #tpu.memory_space<vmem>>, %arg11: memref<32x32xbf16, #tpu.memory_space<vmem>>, %arg12: memref<1x32xf32, #tpu.memory_space<vmem>>, %arg13: memref<32x32xbf16, #tpu.memory_space<vmem>>, %arg14: memref<1x32xf32, #tpu.memory_space<vmem>>, %arg15: memref<1x32xf32, #tpu.memory_space<vmem>>, %arg16: memref<1x1xf32, #tpu.memory_space<vmem>>, %arg17: memref<32x32xbf16, #tpu.memory_space<vmem>>, %arg18: memref<1x32xf32, #tpu.memory_space<vmem>>, %arg19: memref<128x128xbf16, #tpu.memory_space<vmem>>, %arg20: memref<1x128xf32, #tpu.memory_space<vmem>>, %arg21: memref<32x128xbf16, #tpu.memory_space<vmem>>, %arg22: memref<1x128xf32, #tpu.memory_space<vmem>>, %arg23: memref<2x7x50xf32, #tpu.memory_space<vmem>>, %arg24: memref<2x7x16xf32, #tpu.memory_space<vmem>>, %arg25: memref<2x128xf32, #tpu.memory_space<vmem>>) attributes {dimension_semantics = [], scalar_prefetch = 0 : i64, scratch_operands = 1 : i64, tpu.core_type = #tpu.core_type<tc>} {
    %c0 = arith.constant 0 : index
    %c0_0 = arith.constant 0 : index
    %0 = vector.load %arg2[%c0, %c0_0] : memref<512x4xf32, #tpu.memory_space<vmem>>, vector<512x4xf32>
    %1 = arith.truncf %0 : vector<512x4xf32> to vector<512x4xbf16>
    %c0_1 = arith.constant 0 : index
    %c0_2 = arith.constant 0 : index
    %2 = vector.load %arg3[%c0_1, %c0_2] : memref<4x32xbf16, #tpu.memory_space<vmem>>, vector<4x32xbf16>
    %cst = arith.constant dense<0.000000e+00> : vector<512x32xf32>
    %3 = tpu.matmul %1, %2, %cst {dimension_numbers = #tpu.dot_dimension_numbers<[1], [0], [0], [1], [0, 0, 1, 1], [], []>} : vector<512x4xbf16>, vector<4x32xbf16>, vector<512x32xf32> -> vector<512x32xf32>
    %c0_3 = arith.constant 0 : index
    %c0_4 = arith.constant 0 : index
    %4 = vector.load %arg4[%c0_3, %c0_4] : memref<1x32xf32, #tpu.memory_space<vmem>>, vector<1x32xf32>
    %5 = vector.broadcast %4 : vector<1x32xf32> to vector<512x32xf32>
    %6 = arith.addf %3, %5 : vector<512x32xf32>
    %cst_5 = arith.constant 0.000000e+00 : f32
    %7 = vector.broadcast %cst_5 : f32 to vector<512x32xf32>
    %8 = arith.maximumf %6, %7 : vector<512x32xf32>
    %c0_6 = arith.constant 0 : index
    %c0_7 = arith.constant 0 : index
    %9 = vector.load %arg5[%c0_6, %c0_7] : memref<32x512xbf16, #tpu.memory_space<vmem>>, vector<32x512xbf16>
    %10 = arith.truncf %8 : vector<512x32xf32> to vector<512x32xbf16>
    %cst_8 = arith.constant dense<0.000000e+00> : vector<32x32xf32>
    %11 = tpu.matmul %9, %10, %cst_8 {dimension_numbers = #tpu.dot_dimension_numbers<[1], [0], [0], [1], [0, 0, 1, 1], [], []>} : vector<32x512xbf16>, vector<512x32xbf16>, vector<32x32xf32> -> vector<32x32xf32>
    %12 = vector.shape_cast %11 : vector<32x32xf32> to vector<2x16x32xf32>
    %13 = arith.truncf %11 : vector<32x32xf32> to vector<32x32xbf16>
    %cst_9 = arith.constant dense<0.000000e+00> : vector<2x32xf32>
    %14 = vector.multi_reduction <add>, %12, %cst_9 [1] : vector<2x16x32xf32> to vector<2x32xf32>
    %cst_10 = arith.constant 1.600000e+01 : f32
    %15 = vector.broadcast %cst_10 : f32 to vector<2x32xf32>
    %16 = arith.divf %14, %15 : vector<2x32xf32>
    %17 = arith.truncf %16 : vector<2x32xf32> to vector<2x32xbf16>
    %c0_11 = arith.constant 0 : index
    %c0_12 = arith.constant 0 : index
    %18 = vector.load %arg7[%c0_11, %c0_12] : memref<32x32xbf16, #tpu.memory_space<vmem>>, vector<32x32xbf16>
    %cst_13 = arith.constant dense<0.000000e+00> : vector<2x32xf32>
    %19 = tpu.matmul %17, %18, %cst_13 {dimension_numbers = #tpu.dot_dimension_numbers<[1], [0], [0], [1], [0, 0, 1, 1], [], []>} : vector<2x32xbf16>, vector<32x32xbf16>, vector<2x32xf32> -> vector<2x32xf32>
    %c0_14 = arith.constant 0 : index
    %c0_15 = arith.constant 0 : index
    %20 = vector.load %arg8[%c0_14, %c0_15] : memref<1x32xf32, #tpu.memory_space<vmem>>, vector<1x32xf32>
    %21 = vector.broadcast %20 : vector<1x32xf32> to vector<2x32xf32>
    %22 = arith.addf %19, %21 : vector<2x32xf32>
    %c0_16 = arith.constant 0 : index
    %c0_17 = arith.constant 0 : index
    %23 = vector.load %arg9[%c0_16, %c0_17] : memref<32x32xbf16, #tpu.memory_space<vmem>>, vector<32x32xbf16>
    %cst_18 = arith.constant dense<0.000000e+00> : vector<2x32xf32>
    %24 = tpu.matmul %17, %23, %cst_18 {dimension_numbers = #tpu.dot_dimension_numbers<[1], [0], [0], [1], [0, 0, 1, 1], [], []>} : vector<2x32xbf16>, vector<32x32xbf16>, vector<2x32xf32> -> vector<2x32xf32>
    %c0_19 = arith.constant 0 : index
    %c0_20 = arith.constant 0 : index
    %25 = vector.load %arg10[%c0_19, %c0_20] : memref<1x32xf32, #tpu.memory_space<vmem>>, vector<1x32xf32>
    %26 = vector.broadcast %25 : vector<1x32xf32> to vector<2x32xf32>
    %27 = arith.addf %24, %26 : vector<2x32xf32>
    %c0_21 = arith.constant 0 : index
    %c0_22 = arith.constant 0 : index
    %28 = vector.load %arg11[%c0_21, %c0_22] : memref<32x32xbf16, #tpu.memory_space<vmem>>, vector<32x32xbf16>
    %cst_23 = arith.constant dense<0.000000e+00> : vector<32x32xf32>
    %29 = tpu.matmul %13, %28, %cst_23 {dimension_numbers = #tpu.dot_dimension_numbers<[1], [0], [0], [1], [0, 0, 1, 1], [], []>} : vector<32x32xbf16>, vector<32x32xbf16>, vector<32x32xf32> -> vector<32x32xf32>
    %c0_24 = arith.constant 0 : index
    %c0_25 = arith.constant 0 : index
    %30 = vector.load %arg12[%c0_24, %c0_25] : memref<1x32xf32, #tpu.memory_space<vmem>>, vector<1x32xf32>
    %31 = vector.broadcast %30 : vector<1x32xf32> to vector<32x32xf32>
    %32 = arith.addf %29, %31 : vector<32x32xf32>
    %33 = vector.shape_cast %32 : vector<32x32xf32> to vector<2x16x32xf32>
    %cst_26 = arith.constant 0.000000e+00 : f32
    %34 = vector.broadcast %cst_26 : f32 to vector<2x128xf32>
    %c0_27 = arith.constant 0 : index
    %c0_28 = arith.constant 0 : index
    %35 = vector.load %arg25[%c0_27, %c0_28] : memref<2x128xf32, #tpu.memory_space<vmem>>, vector<2x128xf32>
    tpu.vector_store %arg25[%c0_27, %c0_28], %34 {strides = array<i32>} : memref<2x128xf32, #tpu.memory_space<vmem>>, vector<2x128xf32>,
    %c0_29 = arith.constant 0 : index
    %c0_30 = arith.constant 0 : index
    %36 = vector.load %arg1[%c0_29, %c0_30] : memref<2x1xi32, #tpu.memory_space<vmem>>, vector<2x1xi32>
    %c0_31 = arith.constant 0 : index
    %c0_32 = arith.constant 0 : index
    %37 = vector.load %arg15[%c0_31, %c0_32] : memref<1x32xf32, #tpu.memory_space<vmem>>, vector<1x32xf32>
    %38 = vector.shape_cast %37 : vector<1x32xf32> to vector<1x1x32xf32>
    %c0_33 = arith.constant 0 : index
    %c0_34 = arith.constant 0 : index
    %39 = vector.load %arg16[%c0_33, %c0_34] : memref<1x1xf32, #tpu.memory_space<vmem>>, vector<1x1xf32>
    %c0_i32 = arith.constant 0 : i32
    %40 = arith.truncf %22 : vector<2x32xf32> to vector<2x32xbf16>
    %c0_35 = arith.constant 0 : index
    %c0_36 = arith.constant 0 : index
    %41 = vector.load %arg13[%c0_35, %c0_36] : memref<32x32xbf16, #tpu.memory_space<vmem>>, vector<32x32xbf16>
    %cst_37 = arith.constant dense<0.000000e+00> : vector<2x32xf32>
    %42 = tpu.matmul %40, %41, %cst_37 {dimension_numbers = #tpu.dot_dimension_numbers<[1], [0], [0], [1], [0, 0, 1, 1], [], []>} : vector<2x32xbf16>, vector<32x32xbf16>, vector<2x32xf32> -> vector<2x32xf32>
    %c0_38 = arith.constant 0 : index
    %c0_39 = arith.constant 0 : index
    %43 = vector.load %arg14[%c0_38, %c0_39] : memref<1x32xf32, #tpu.memory_space<vmem>>, vector<1x32xf32>
    %44 = vector.broadcast %43 : vector<1x32xf32> to vector<2x32xf32>
    %45 = arith.addf %42, %44 : vector<2x32xf32>
    %46 = vector.shape_cast %45 : vector<2x32xf32> to vector<2x1x32xf32>
    %47 = vector.broadcast %46 : vector<2x1x32xf32> to vector<2x16x32xf32>
    %48 = arith.addf %33, %47 : vector<2x16x32xf32>
    %cst_40 = arith.constant 0.000000e+00 : f32
    %49 = vector.broadcast %cst_40 : f32 to vector<2x16x32xf32>
    %50 = arith.maximumf %48, %49 : vector<2x16x32xf32>
    %51 = vector.broadcast %38 : vector<1x1x32xf32> to vector<2x16x32xf32>
    %52 = arith.mulf %50, %51 : vector<2x16x32xf32>
    %cst_41 = arith.constant dense<0.000000e+00> : vector<2x16xf32>
    %53 = vector.multi_reduction <add>, %52, %cst_41 [2] : vector<2x16x32xf32> to vector<2x16xf32>
    %54 = vector.broadcast %39 : vector<1x1xf32> to vector<2x16xf32>
    %55 = arith.addf %53, %54 : vector<2x16xf32>
    %cst_42 = arith.constant dense<0xFF800000> : vector<2xf32>
    %56 = vector.multi_reduction <maximumf>, %55, %cst_42 [1] : vector<2x16xf32> to vector<2xf32>
    %57 = vector.shape_cast %56 : vector<2xf32> to vector<2x1xf32>
    %58 = vector.broadcast %57 : vector<2x1xf32> to vector<2x16xf32>
    %59 = arith.subf %55, %58 : vector<2x16xf32>
    %60 = math.exp %59 : vector<2x16xf32>
    %cst_43 = arith.constant dense<0.000000e+00> : vector<2xf32>
    %61 = vector.multi_reduction <add>, %60, %cst_43 [1] : vector<2x16xf32> to vector<2xf32>
    %62 = vector.shape_cast %61 : vector<2xf32> to vector<2x1xf32>
    %63 = vector.broadcast %62 : vector<2x1xf32> to vector<2x16xf32>
    %64 = arith.divf %60, %63 : vector<2x16xf32>
    %65 = vector.shape_cast %64 : vector<2x16xf32> to vector<2x16x1xf32>
    %66 = vector.broadcast %65 : vector<2x16x1xf32> to vector<2x16x32xf32>
    %67 = arith.mulf %66, %12 : vector<2x16x32xf32>
    %cst_44 = arith.constant dense<0.000000e+00> : vector<2x32xf32>
    %68 = vector.multi_reduction <add>, %67, %cst_44 [1] : vector<2x16x32xf32> to vector<2x32xf32>
    %c0_45 = arith.constant 0 : index
    %c0_46 = arith.constant 0 : index
    %69 = vector.load %arg17[%c0_45, %c0_46] : memref<32x32xbf16, #tpu.memory_space<vmem>>, vector<32x32xbf16>
    %cst_47 = arith.constant dense<0.000000e+00> : vector<2x32xf32>
    %70 = tpu.matmul %40, %69, %cst_47 {dimension_numbers = #tpu.dot_dimension_numbers<[1], [0], [0], [1], [0, 0, 1, 1], [], []>} : vector<2x32xbf16>, vector<32x32xbf16>, vector<2x32xf32> -> vector<2x32xf32>
    %c0_48 = arith.constant 0 : index
    %c0_49 = arith.constant 0 : index
    %71 = vector.load %arg18[%c0_48, %c0_49] : memref<1x32xf32, #tpu.memory_space<vmem>>, vector<1x32xf32>
    %72 = vector.broadcast %71 : vector<1x32xf32> to vector<2x32xf32>
    %73 = arith.addf %70, %72 : vector<2x32xf32>
    %74 = arith.negf %73 : vector<2x32xf32>
    %75 = math.exp %74 : vector<2x32xf32>
    %cst_50 = arith.constant 1.000000e+00 : f32
    %76 = vector.broadcast %cst_50 : f32 to vector<2x32xf32>
    %77 = arith.addf %76, %75 : vector<2x32xf32>
    %78 = arith.divf %76, %77 : vector<2x32xf32>
    %79 = arith.mulf %78, %68 : vector<2x32xf32>
    %c0_51 = arith.constant 0 : index
    %80 = arith.index_cast %c0_i32 : i32 to index
    %81 = memref.load %arg0[%c0_51, %80] : memref<2x8xi32, #tpu.memory_space<smem>>
    %82 = arith.index_cast %81 : i32 to index
    %c0_52 = arith.constant 0 : index
    %83 = vector.load %arg6[%82, %c0_52] : memref<50x32xf32, #tpu.memory_space<vmem>>, vector<1x32xf32>
    %c0_53 = arith.constant 0 : index
    %c0_54 = arith.constant 0 : index
    %84 = vector.load %arg25[%c0_53, %c0_54] : memref<2x128xf32, #tpu.memory_space<vmem>>, vector<1x32xf32>
    tpu.vector_store %arg25[%c0_53, %c0_54], %83 {strides = array<i32>} : memref<2x128xf32, #tpu.memory_space<vmem>>, vector<1x32xf32>,
    %c1 = arith.constant 1 : index
    %85 = arith.index_cast %c0_i32 : i32 to index
    %86 = memref.load %arg0[%c1, %85] : memref<2x8xi32, #tpu.memory_space<smem>>
    %87 = arith.index_cast %86 : i32 to index
    %c0_55 = arith.constant 0 : index
    %88 = vector.load %arg6[%87, %c0_55] : memref<50x32xf32, #tpu.memory_space<vmem>>, vector<1x32xf32>
    %c1_56 = arith.constant 1 : index
    %c0_57 = arith.constant 0 : index
    %89 = vector.load %arg25[%c1_56, %c0_57] : memref<2x128xf32, #tpu.memory_space<vmem>>, vector<1x32xf32>
    tpu.vector_store %arg25[%c1_56, %c0_57], %88 {strides = array<i32>} : memref<2x128xf32, #tpu.memory_space<vmem>>, vector<1x32xf32>,
    %c0_58 = arith.constant 0 : index
    %c32 = arith.constant 32 : index
    %90 = vector.load %arg25[%c0_58, %c32] : memref<2x128xf32, #tpu.memory_space<vmem>>, vector<2x32xf32>
    tpu.vector_store %arg25[%c0_58, %c32], %79 {strides = array<i32>} : memref<2x128xf32, #tpu.memory_space<vmem>>, vector<2x32xf32>,
    %c0_59 = arith.constant 0 : index
    %c64 = arith.constant 64 : index
    %91 = vector.load %arg25[%c0_59, %c64] : memref<2x128xf32, #tpu.memory_space<vmem>>, vector<2x32xf32>
    tpu.vector_store %arg25[%c0_59, %c64], %22 {strides = array<i32>} : memref<2x128xf32, #tpu.memory_space<vmem>>, vector<2x32xf32>,
    %c0_60 = arith.constant 0 : index
    %c0_61 = arith.constant 0 : index
    %92 = vector.load %arg25[%c0_60, %c0_61] : memref<2x128xf32, #tpu.memory_space<vmem>>, vector<2x128xf32>
    %93 = arith.truncf %92 : vector<2x128xf32> to vector<2x128xbf16>
    %c0_62 = arith.constant 0 : index
    %c0_63 = arith.constant 0 : index
    %94 = vector.load %arg19[%c0_62, %c0_63] : memref<128x128xbf16, #tpu.memory_space<vmem>>, vector<128x128xbf16>
    %cst_64 = arith.constant dense<0.000000e+00> : vector<2x128xf32>
    %95 = tpu.matmul %93, %94, %cst_64 {dimension_numbers = #tpu.dot_dimension_numbers<[1], [0], [0], [1], [0, 0, 1, 1], [], []>} : vector<2x128xbf16>, vector<128x128xbf16>, vector<2x128xf32> -> vector<2x128xf32>
    %c0_65 = arith.constant 0 : index
    %c0_66 = arith.constant 0 : index
    %96 = vector.load %arg20[%c0_65, %c0_66] : memref<1x128xf32, #tpu.memory_space<vmem>>, vector<1x128xf32>
    %97 = vector.broadcast %96 : vector<1x128xf32> to vector<2x128xf32>
    %98 = arith.addf %95, %97 : vector<2x128xf32>
    %99 = vector.extract_strided_slice %98 {offsets = [0, 0], sizes = [2, 32], strides = [1, 1]} : vector<2x128xf32> to vector<2x32xf32>
    %100 = arith.negf %99 : vector<2x32xf32>
    %101 = math.exp %100 : vector<2x32xf32>
    %cst_67 = arith.constant 1.000000e+00 : f32
    %102 = vector.broadcast %cst_67 : f32 to vector<2x32xf32>
    %103 = arith.addf %102, %101 : vector<2x32xf32>
    %104 = arith.divf %102, %103 : vector<2x32xf32>
    %105 = vector.extract_strided_slice %98 {offsets = [0, 32], sizes = [2, 32], strides = [1, 1]} : vector<2x128xf32> to vector<2x32xf32>
    %106 = arith.negf %105 : vector<2x32xf32>
    %107 = math.exp %106 : vector<2x32xf32>
    %cst_68 = arith.constant 1.000000e+00 : f32
    %108 = vector.broadcast %cst_68 : f32 to vector<2x32xf32>
    %109 = arith.addf %108, %107 : vector<2x32xf32>
    %110 = arith.divf %108, %109 : vector<2x32xf32>
    %111 = vector.extract_strided_slice %98 {offsets = [0, 64], sizes = [2, 32], strides = [1, 1]} : vector<2x128xf32> to vector<2x32xf32>
    %112 = math.tanh %111 : vector<2x32xf32>
    %113 = vector.extract_strided_slice %98 {offsets = [0, 96], sizes = [2, 32], strides = [1, 1]} : vector<2x128xf32> to vector<2x32xf32>
    %114 = arith.negf %113 : vector<2x32xf32>
    %115 = math.exp %114 : vector<2x32xf32>
    %cst_69 = arith.constant 1.000000e+00 : f32
    %116 = vector.broadcast %cst_69 : f32 to vector<2x32xf32>
    %117 = arith.addf %116, %115 : vector<2x32xf32>
    %118 = arith.divf %116, %117 : vector<2x32xf32>
    %119 = arith.mulf %110, %27 : vector<2x32xf32>
    %120 = arith.mulf %104, %112 : vector<2x32xf32>
    %121 = arith.addf %119, %120 : vector<2x32xf32>
    %122 = math.tanh %121 : vector<2x32xf32>
    %123 = arith.mulf %118, %122 : vector<2x32xf32>
    %124 = arith.truncf %123 : vector<2x32xf32> to vector<2x32xbf16>
    %c0_70 = arith.constant 0 : index
    %c0_71 = arith.constant 0 : index
    %125 = vector.load %arg21[%c0_70, %c0_71] : memref<32x128xbf16, #tpu.memory_space<vmem>>, vector<32x128xbf16>
    %cst_72 = arith.constant dense<0.000000e+00> : vector<2x128xf32>
    %126 = tpu.matmul %124, %125, %cst_72 {dimension_numbers = #tpu.dot_dimension_numbers<[1], [0], [0], [1], [0, 0, 1, 1], [], []>} : vector<2x32xbf16>, vector<32x128xbf16>, vector<2x128xf32> -> vector<2x128xf32>
    %c0_73 = arith.constant 0 : index
    %c0_74 = arith.constant 0 : index
    %127 = vector.load %arg22[%c0_73, %c0_74] : memref<1x128xf32, #tpu.memory_space<vmem>>, vector<1x128xf32>
    %128 = vector.broadcast %127 : vector<1x128xf32> to vector<2x128xf32>
    %129 = arith.addf %126, %128 : vector<2x128xf32>
    %130 = vector.broadcast %c0_i32 : i32 to vector<2x1xi32>
    %131 = arith.cmpi sgt, %36, %130 : vector<2x1xi32>
    %132 = arith.extui %131 : vector<2x1xi1> to vector<2x1xi32>
    %133 = arith.sitofp %132 : vector<2x1xi32> to vector<2x1xf32>
    %134 = vector.broadcast %133 : vector<2x1xf32> to vector<2x128xf32>
    %135 = arith.mulf %129, %134 : vector<2x128xf32>
    %136 = vector.extract_strided_slice %135 {offsets = [0, 0], sizes = [2, 50], strides = [1, 1]} : vector<2x128xf32> to vector<2x50xf32>
    %137 = vector.shape_cast %136 : vector<2x50xf32> to vector<2x1x50xf32>
    %c0_75 = arith.constant 0 : index
    %138 = arith.index_cast %c0_i32 : i32 to index
    %c0_76 = arith.constant 0 : index
    %139 = vector.load %arg23[%c0_75, %138, %c0_76] : memref<2x7x50xf32, #tpu.memory_space<vmem>>, vector<2x1x50xf32>
    tpu.vector_store %arg23[%c0_75, %138, %c0_76], %137 {strides = array<i32>} : memref<2x7x50xf32, #tpu.memory_space<vmem>>, vector<2x1x50xf32>,
    %140 = vector.broadcast %133 : vector<2x1xf32> to vector<2x16xf32>
    %141 = arith.mulf %64, %140 : vector<2x16xf32>
    %142 = vector.shape_cast %141 : vector<2x16xf32> to vector<2x1x16xf32>
    %c0_77 = arith.constant 0 : index
    %143 = arith.index_cast %c0_i32 : i32 to index
    %c0_78 = arith.constant 0 : index
    %144 = vector.load %arg24[%c0_77, %143, %c0_78] : memref<2x7x16xf32, #tpu.memory_space<vmem>>, vector<2x1x16xf32>
    tpu.vector_store %arg24[%c0_77, %143, %c0_78], %142 {strides = array<i32>} : memref<2x7x16xf32, #tpu.memory_space<vmem>>, vector<2x1x16xf32>,
    %c1_i32 = arith.constant 1 : i32
    %145 = arith.truncf %123 : vector<2x32xf32> to vector<2x32xbf16>
    %c0_79 = arith.constant 0 : index
    %c0_80 = arith.constant 0 : index
    %146 = vector.load %arg13[%c0_79, %c0_80] : memref<32x32xbf16, #tpu.memory_space<vmem>>, vector<32x32xbf16>
    %cst_81 = arith.constant dense<0.000000e+00> : vector<2x32xf32>
    %147 = tpu.matmul %145, %146, %cst_81 {dimension_numbers = #tpu.dot_dimension_numbers<[1], [0], [0], [1], [0, 0, 1, 1], [], []>} : vector<2x32xbf16>, vector<32x32xbf16>, vector<2x32xf32> -> vector<2x32xf32>
    %c0_82 = arith.constant 0 : index
    %c0_83 = arith.constant 0 : index
    %148 = vector.load %arg14[%c0_82, %c0_83] : memref<1x32xf32, #tpu.memory_space<vmem>>, vector<1x32xf32>
    %149 = vector.broadcast %148 : vector<1x32xf32> to vector<2x32xf32>
    %150 = arith.addf %147, %149 : vector<2x32xf32>
    %151 = vector.shape_cast %150 : vector<2x32xf32> to vector<2x1x32xf32>
    %152 = vector.broadcast %151 : vector<2x1x32xf32> to vector<2x16x32xf32>
    %153 = arith.addf %33, %152 : vector<2x16x32xf32>
    %cst_84 = arith.constant 0.000000e+00 : f32
    %154 = vector.broadcast %cst_84 : f32 to vector<2x16x32xf32>
    %155 = arith.maximumf %153, %154 : vector<2x16x32xf32>
    %156 = vector.broadcast %38 : vector<1x1x32xf32> to vector<2x16x32xf32>
    %157 = arith.mulf %155, %156 : vector<2x16x32xf32>
    %cst_85 = arith.constant dense<0.000000e+00> : vector<2x16xf32>
    %158 = vector.multi_reduction <add>, %157, %cst_85 [2] : vector<2x16x32xf32> to vector<2x16xf32>
    %159 = vector.broadcast %39 : vector<1x1xf32> to vector<2x16xf32>
    %160 = arith.addf %158, %159 : vector<2x16xf32>
    %cst_86 = arith.constant dense<0xFF800000> : vector<2xf32>
    %161 = vector.multi_reduction <maximumf>, %160, %cst_86 [1] : vector<2x16xf32> to vector<2xf32>
    %162 = vector.shape_cast %161 : vector<2xf32> to vector<2x1xf32>
    %163 = vector.broadcast %162 : vector<2x1xf32> to vector<2x16xf32>
    %164 = arith.subf %160, %163 : vector<2x16xf32>
    %165 = math.exp %164 : vector<2x16xf32>
    %cst_87 = arith.constant dense<0.000000e+00> : vector<2xf32>
    %166 = vector.multi_reduction <add>, %165, %cst_87 [1] : vector<2x16xf32> to vector<2xf32>
    %167 = vector.shape_cast %166 : vector<2xf32> to vector<2x1xf32>
    %168 = vector.broadcast %167 : vector<2x1xf32> to vector<2x16xf32>
    %169 = arith.divf %165, %168 : vector<2x16xf32>
    %170 = vector.shape_cast %169 : vector<2x16xf32> to vector<2x16x1xf32>
    %171 = vector.broadcast %170 : vector<2x16x1xf32> to vector<2x16x32xf32>
    %172 = arith.mulf %171, %12 : vector<2x16x32xf32>
    %cst_88 = arith.constant dense<0.000000e+00> : vector<2x32xf32>
    %173 = vector.multi_reduction <add>, %172, %cst_88 [1] : vector<2x16x32xf32> to vector<2x32xf32>
    %c0_89 = arith.constant 0 : index
    %c0_90 = arith.constant 0 : index
    %174 = vector.load %arg17[%c0_89, %c0_90] : memref<32x32xbf16, #tpu.memory_space<vmem>>, vector<32x32xbf16>
    %cst_91 = arith.constant dense<0.000000e+00> : vector<2x32xf32>
    %175 = tpu.matmul %145, %174, %cst_91 {dimension_numbers = #tpu.dot_dimension_numbers<[1], [0], [0], [1], [0, 0, 1, 1], [], []>} : vector<2x32xbf16>, vector<32x32xbf16>, vector<2x32xf32> -> vector<2x32xf32>
    %c0_92 = arith.constant 0 : index
    %c0_93 = arith.constant 0 : index
    %176 = vector.load %arg18[%c0_92, %c0_93] : memref<1x32xf32, #tpu.memory_space<vmem>>, vector<1x32xf32>
    %177 = vector.broadcast %176 : vector<1x32xf32> to vector<2x32xf32>
    %178 = arith.addf %175, %177 : vector<2x32xf32>
    %179 = arith.negf %178 : vector<2x32xf32>
    %180 = math.exp %179 : vector<2x32xf32>
    %cst_94 = arith.constant 1.000000e+00 : f32
    %181 = vector.broadcast %cst_94 : f32 to vector<2x32xf32>
    %182 = arith.addf %181, %180 : vector<2x32xf32>
    %183 = arith.divf %181, %182 : vector<2x32xf32>
    %184 = arith.mulf %183, %173 : vector<2x32xf32>
    %c0_95 = arith.constant 0 : index
    %185 = arith.index_cast %c1_i32 : i32 to index
    %186 = memref.load %arg0[%c0_95, %185] : memref<2x8xi32, #tpu.memory_space<smem>>
    %187 = arith.index_cast %186 : i32 to index
    %c0_96 = arith.constant 0 : index
    %188 = vector.load %arg6[%187, %c0_96] : memref<50x32xf32, #tpu.memory_space<vmem>>, vector<1x32xf32>
    %c0_97 = arith.constant 0 : index
    %c0_98 = arith.constant 0 : index
    %189 = vector.load %arg25[%c0_97, %c0_98] : memref<2x128xf32, #tpu.memory_space<vmem>>, vector<1x32xf32>
    tpu.vector_store %arg25[%c0_97, %c0_98], %188 {strides = array<i32>} : memref<2x128xf32, #tpu.memory_space<vmem>>, vector<1x32xf32>,
    %c1_99 = arith.constant 1 : index
    %190 = arith.index_cast %c1_i32 : i32 to index
    %191 = memref.load %arg0[%c1_99, %190] : memref<2x8xi32, #tpu.memory_space<smem>>
    %192 = arith.index_cast %191 : i32 to index
    %c0_100 = arith.constant 0 : index
    %193 = vector.load %arg6[%192, %c0_100] : memref<50x32xf32, #tpu.memory_space<vmem>>, vector<1x32xf32>
    %c1_101 = arith.constant 1 : index
    %c0_102 = arith.constant 0 : index
    %194 = vector.load %arg25[%c1_101, %c0_102] : memref<2x128xf32, #tpu.memory_space<vmem>>, vector<1x32xf32>
    tpu.vector_store %arg25[%c1_101, %c0_102], %193 {strides = array<i32>} : memref<2x128xf32, #tpu.memory_space<vmem>>, vector<1x32xf32>,
    %c0_103 = arith.constant 0 : index
    %c32_104 = arith.constant 32 : index
    %195 = vector.load %arg25[%c0_103, %c32_104] : memref<2x128xf32, #tpu.memory_space<vmem>>, vector<2x32xf32>
    tpu.vector_store %arg25[%c0_103, %c32_104], %184 {strides = array<i32>} : memref<2x128xf32, #tpu.memory_space<vmem>>, vector<2x32xf32>,
    %c0_105 = arith.constant 0 : index
    %c64_106 = arith.constant 64 : index
    %196 = vector.load %arg25[%c0_105, %c64_106] : memref<2x128xf32, #tpu.memory_space<vmem>>, vector<2x32xf32>
    tpu.vector_store %arg25[%c0_105, %c64_106], %123 {strides = array<i32>} : memref<2x128xf32, #tpu.memory_space<vmem>>, vector<2x32xf32>,
    %c0_107 = arith.constant 0 : index
    %c0_108 = arith.constant 0 : index
    %197 = vector.load %arg25[%c0_107, %c0_108] : memref<2x128xf32, #tpu.memory_space<vmem>>, vector<2x128xf32>
    %198 = arith.truncf %197 : vector<2x128xf32> to vector<2x128xbf16>
    %c0_109 = arith.constant 0 : index
    %c0_110 = arith.constant 0 : index
    %199 = vector.load %arg19[%c0_109, %c0_110] : memref<128x128xbf16, #tpu.memory_space<vmem>>, vector<128x128xbf16>
    %cst_111 = arith.constant dense<0.000000e+00> : vector<2x128xf32>
    %200 = tpu.matmul %198, %199, %cst_111 {dimension_numbers = #tpu.dot_dimension_numbers<[1], [0], [0], [1], [0, 0, 1, 1], [], []>} : vector<2x128xbf16>, vector<128x128xbf16>, vector<2x128xf32> -> vector<2x128xf32>
    %c0_112 = arith.constant 0 : index
    %c0_113 = arith.constant 0 : index
    %201 = vector.load %arg20[%c0_112, %c0_113] : memref<1x128xf32, #tpu.memory_space<vmem>>, vector<1x128xf32>
    %202 = vector.broadcast %201 : vector<1x128xf32> to vector<2x128xf32>
    %203 = arith.addf %200, %202 : vector<2x128xf32>
    %204 = vector.extract_strided_slice %203 {offsets = [0, 0], sizes = [2, 32], strides = [1, 1]} : vector<2x128xf32> to vector<2x32xf32>
    %205 = arith.negf %204 : vector<2x32xf32>
    %206 = math.exp %205 : vector<2x32xf32>
    %cst_114 = arith.constant 1.000000e+00 : f32
    %207 = vector.broadcast %cst_114 : f32 to vector<2x32xf32>
    %208 = arith.addf %207, %206 : vector<2x32xf32>
    %209 = arith.divf %207, %208 : vector<2x32xf32>
    %210 = vector.extract_strided_slice %203 {offsets = [0, 32], sizes = [2, 32], strides = [1, 1]} : vector<2x128xf32> to vector<2x32xf32>
    %211 = arith.negf %210 : vector<2x32xf32>
    %212 = math.exp %211 : vector<2x32xf32>
    %cst_115 = arith.constant 1.000000e+00 : f32
    %213 = vector.broadcast %cst_115 : f32 to vector<2x32xf32>
    %214 = arith.addf %213, %212 : vector<2x32xf32>
    %215 = arith.divf %213, %214 : vector<2x32xf32>
    %216 = vector.extract_strided_slice %203 {offsets = [0, 64], sizes = [2, 32], strides = [1, 1]} : vector<2x128xf32> to vector<2x32xf32>
    %217 = math.tanh %216 : vector<2x32xf32>
    %218 = vector.extract_strided_slice %203 {offsets = [0, 96], sizes = [2, 32], strides = [1, 1]} : vector<2x128xf32> to vector<2x32xf32>
    %219 = arith.negf %218 : vector<2x32xf32>
    %220 = math.exp %219 : vector<2x32xf32>
    %cst_116 = arith.constant 1.000000e+00 : f32
    %221 = vector.broadcast %cst_116 : f32 to vector<2x32xf32>
    %222 = arith.addf %221, %220 : vector<2x32xf32>
    %223 = arith.divf %221, %222 : vector<2x32xf32>
    %224 = arith.mulf %215, %121 : vector<2x32xf32>
    %225 = arith.mulf %209, %217 : vector<2x32xf32>
    %226 = arith.addf %224, %225 : vector<2x32xf32>
    %227 = math.tanh %226 : vector<2x32xf32>
    %228 = arith.mulf %223, %227 : vector<2x32xf32>
    %229 = arith.truncf %228 : vector<2x32xf32> to vector<2x32xbf16>
    %c0_117 = arith.constant 0 : index
    %c0_118 = arith.constant 0 : index
    %230 = vector.load %arg21[%c0_117, %c0_118] : memref<32x128xbf16, #tpu.memory_space<vmem>>, vector<32x128xbf16>
    %cst_119 = arith.constant dense<0.000000e+00> : vector<2x128xf32>
    %231 = tpu.matmul %229, %230, %cst_119 {dimension_numbers = #tpu.dot_dimension_numbers<[1], [0], [0], [1], [0, 0, 1, 1], [], []>} : vector<2x32xbf16>, vector<32x128xbf16>, vector<2x128xf32> -> vector<2x128xf32>
    %c0_120 = arith.constant 0 : index
    %c0_121 = arith.constant 0 : index
    %232 = vector.load %arg22[%c0_120, %c0_121] : memref<1x128xf32, #tpu.memory_space<vmem>>, vector<1x128xf32>
    %233 = vector.broadcast %232 : vector<1x128xf32> to vector<2x128xf32>
    %234 = arith.addf %231, %233 : vector<2x128xf32>
    %235 = vector.broadcast %c1_i32 : i32 to vector<2x1xi32>
    %236 = arith.cmpi sgt, %36, %235 : vector<2x1xi32>
    %237 = arith.extui %236 : vector<2x1xi1> to vector<2x1xi32>
    %238 = arith.sitofp %237 : vector<2x1xi32> to vector<2x1xf32>
    %239 = vector.broadcast %238 : vector<2x1xf32> to vector<2x128xf32>
    %240 = arith.mulf %234, %239 : vector<2x128xf32>
    %241 = vector.extract_strided_slice %240 {offsets = [0, 0], sizes = [2, 50], strides = [1, 1]} : vector<2x128xf32> to vector<2x50xf32>
    %242 = vector.shape_cast %241 : vector<2x50xf32> to vector<2x1x50xf32>
    %c0_122 = arith.constant 0 : index
    %243 = arith.index_cast %c1_i32 : i32 to index
    %c0_123 = arith.constant 0 : index
    %244 = vector.load %arg23[%c0_122, %243, %c0_123] : memref<2x7x50xf32, #tpu.memory_space<vmem>>, vector<2x1x50xf32>
    tpu.vector_store %arg23[%c0_122, %243, %c0_123], %242 {strides = array<i32>} : memref<2x7x50xf32, #tpu.memory_space<vmem>>, vector<2x1x50xf32>,
    %245 = vector.broadcast %238 : vector<2x1xf32> to vector<2x16xf32>
    %246 = arith.mulf %169, %245 : vector<2x16xf32>
    %247 = vector.shape_cast %246 : vector<2x16xf32> to vector<2x1x16xf32>
    %c0_124 = arith.constant 0 : index
    %248 = arith.index_cast %c1_i32 : i32 to index
    %c0_125 = arith.constant 0 : index
    %249 = vector.load %arg24[%c0_124, %248, %c0_125] : memref<2x7x16xf32, #tpu.memory_space<vmem>>, vector<2x1x16xf32>
    tpu.vector_store %arg24[%c0_124, %248, %c0_125], %247 {strides = array<i32>} : memref<2x7x16xf32, #tpu.memory_space<vmem>>, vector<2x1x16xf32>,
    %c2_i32 = arith.constant 2 : i32
    %250 = arith.truncf %228 : vector<2x32xf32> to vector<2x32xbf16>
    %c0_126 = arith.constant 0 : index
    %c0_127 = arith.constant 0 : index
    %251 = vector.load %arg13[%c0_126, %c0_127] : memref<32x32xbf16, #tpu.memory_space<vmem>>, vector<32x32xbf16>
    %cst_128 = arith.constant dense<0.000000e+00> : vector<2x32xf32>
    %252 = tpu.matmul %250, %251, %cst_128 {dimension_numbers = #tpu.dot_dimension_numbers<[1], [0], [0], [1], [0, 0, 1, 1], [], []>} : vector<2x32xbf16>, vector<32x32xbf16>, vector<2x32xf32> -> vector<2x32xf32>
    %c0_129 = arith.constant 0 : index
    %c0_130 = arith.constant 0 : index
    %253 = vector.load %arg14[%c0_129, %c0_130] : memref<1x32xf32, #tpu.memory_space<vmem>>, vector<1x32xf32>
    %254 = vector.broadcast %253 : vector<1x32xf32> to vector<2x32xf32>
    %255 = arith.addf %252, %254 : vector<2x32xf32>
    %256 = vector.shape_cast %255 : vector<2x32xf32> to vector<2x1x32xf32>
    %257 = vector.broadcast %256 : vector<2x1x32xf32> to vector<2x16x32xf32>
    %258 = arith.addf %33, %257 : vector<2x16x32xf32>
    %cst_131 = arith.constant 0.000000e+00 : f32
    %259 = vector.broadcast %cst_131 : f32 to vector<2x16x32xf32>
    %260 = arith.maximumf %258, %259 : vector<2x16x32xf32>
    %261 = vector.broadcast %38 : vector<1x1x32xf32> to vector<2x16x32xf32>
    %262 = arith.mulf %260, %261 : vector<2x16x32xf32>
    %cst_132 = arith.constant dense<0.000000e+00> : vector<2x16xf32>
    %263 = vector.multi_reduction <add>, %262, %cst_132 [2] : vector<2x16x32xf32> to vector<2x16xf32>
    %264 = vector.broadcast %39 : vector<1x1xf32> to vector<2x16xf32>
    %265 = arith.addf %263, %264 : vector<2x16xf32>
    %cst_133 = arith.constant dense<0xFF800000> : vector<2xf32>
    %266 = vector.multi_reduction <maximumf>, %265, %cst_133 [1] : vector<2x16xf32> to vector<2xf32>
    %267 = vector.shape_cast %266 : vector<2xf32> to vector<2x1xf32>
    %268 = vector.broadcast %267 : vector<2x1xf32> to vector<2x16xf32>
    %269 = arith.subf %265, %268 : vector<2x16xf32>
    %270 = math.exp %269 : vector<2x16xf32>
    %cst_134 = arith.constant dense<0.000000e+00> : vector<2xf32>
    %271 = vector.multi_reduction <add>, %270, %cst_134 [1] : vector<2x16xf32> to vector<2xf32>
    %272 = vector.shape_cast %271 : vector<2xf32> to vector<2x1xf32>
    %273 = vector.broadcast %272 : vector<2x1xf32> to vector<2x16xf32>
    %274 = arith.divf %270, %273 : vector<2x16xf32>
    %275 = vector.shape_cast %274 : vector<2x16xf32> to vector<2x16x1xf32>
    %276 = vector.broadcast %275 : vector<2x16x1xf32> to vector<2x16x32xf32>
    %277 = arith.mulf %276, %12 : vector<2x16x32xf32>
    %cst_135 = arith.constant dense<0.000000e+00> : vector<2x32xf32>
    %278 = vector.multi_reduction <add>, %277, %cst_135 [1] : vector<2x16x32xf32> to vector<2x32xf32>
    %c0_136 = arith.constant 0 : index
    %c0_137 = arith.constant 0 : index
    %279 = vector.load %arg17[%c0_136, %c0_137] : memref<32x32xbf16, #tpu.memory_space<vmem>>, vector<32x32xbf16>
    %cst_138 = arith.constant dense<0.000000e+00> : vector<2x32xf32>
    %280 = tpu.matmul %250, %279, %cst_138 {dimension_numbers = #tpu.dot_dimension_numbers<[1], [0], [0], [1], [0, 0, 1, 1], [], []>} : vector<2x32xbf16>, vector<32x32xbf16>, vector<2x32xf32> -> vector<2x32xf32>
    %c0_139 = arith.constant 0 : index
    %c0_140 = arith.constant 0 : index
    %281 = vector.load %arg18[%c0_139, %c0_140] : memref<1x32xf32, #tpu.memory_space<vmem>>, vector<1x32xf32>
    %282 = vector.broadcast %281 : vector<1x32xf32> to vector<2x32xf32>
    %283 = arith.addf %280, %282 : vector<2x32xf32>
    %284 = arith.negf %283 : vector<2x32xf32>
    %285 = math.exp %284 : vector<2x32xf32>
    %cst_141 = arith.constant 1.000000e+00 : f32
    %286 = vector.broadcast %cst_141 : f32 to vector<2x32xf32>
    %287 = arith.addf %286, %285 : vector<2x32xf32>
    %288 = arith.divf %286, %287 : vector<2x32xf32>
    %289 = arith.mulf %288, %278 : vector<2x32xf32>
    %c0_142 = arith.constant 0 : index
    %290 = arith.index_cast %c2_i32 : i32 to index
    %291 = memref.load %arg0[%c0_142, %290] : memref<2x8xi32, #tpu.memory_space<smem>>
    %292 = arith.index_cast %291 : i32 to index
    %c0_143 = arith.constant 0 : index
    %293 = vector.load %arg6[%292, %c0_143] : memref<50x32xf32, #tpu.memory_space<vmem>>, vector<1x32xf32>
    %c0_144 = arith.constant 0 : index
    %c0_145 = arith.constant 0 : index
    %294 = vector.load %arg25[%c0_144, %c0_145] : memref<2x128xf32, #tpu.memory_space<vmem>>, vector<1x32xf32>
    tpu.vector_store %arg25[%c0_144, %c0_145], %293 {strides = array<i32>} : memref<2x128xf32, #tpu.memory_space<vmem>>, vector<1x32xf32>,
    %c1_146 = arith.constant 1 : index
    %295 = arith.index_cast %c2_i32 : i32 to index
    %296 = memref.load %arg0[%c1_146, %295] : memref<2x8xi32, #tpu.memory_space<smem>>
    %297 = arith.index_cast %296 : i32 to index
    %c0_147 = arith.constant 0 : index
    %298 = vector.load %arg6[%297, %c0_147] : memref<50x32xf32, #tpu.memory_space<vmem>>, vector<1x32xf32>
    %c1_148 = arith.constant 1 : index
    %c0_149 = arith.constant 0 : index
    %299 = vector.load %arg25[%c1_148, %c0_149] : memref<2x128xf32, #tpu.memory_space<vmem>>, vector<1x32xf32>
    tpu.vector_store %arg25[%c1_148, %c0_149], %298 {strides = array<i32>} : memref<2x128xf32, #tpu.memory_space<vmem>>, vector<1x32xf32>,
    %c0_150 = arith.constant 0 : index
    %c32_151 = arith.constant 32 : index
    %300 = vector.load %arg25[%c0_150, %c32_151] : memref<2x128xf32, #tpu.memory_space<vmem>>, vector<2x32xf32>
    tpu.vector_store %arg25[%c0_150, %c32_151], %289 {strides = array<i32>} : memref<2x128xf32, #tpu.memory_space<vmem>>, vector<2x32xf32>,
    %c0_152 = arith.constant 0 : index
    %c64_153 = arith.constant 64 : index
    %301 = vector.load %arg25[%c0_152, %c64_153] : memref<2x128xf32, #tpu.memory_space<vmem>>, vector<2x32xf32>
    tpu.vector_store %arg25[%c0_152, %c64_153], %228 {strides = array<i32>} : memref<2x128xf32, #tpu.memory_space<vmem>>, vector<2x32xf32>,
    %c0_154 = arith.constant 0 : index
    %c0_155 = arith.constant 0 : index
    %302 = vector.load %arg25[%c0_154, %c0_155] : memref<2x128xf32, #tpu.memory_space<vmem>>, vector<2x128xf32>
    %303 = arith.truncf %302 : vector<2x128xf32> to vector<2x128xbf16>
    %c0_156 = arith.constant 0 : index
    %c0_157 = arith.constant 0 : index
    %304 = vector.load %arg19[%c0_156, %c0_157] : memref<128x128xbf16, #tpu.memory_space<vmem>>, vector<128x128xbf16>
    %cst_158 = arith.constant dense<0.000000e+00> : vector<2x128xf32>
    %305 = tpu.matmul %303, %304, %cst_158 {dimension_numbers = #tpu.dot_dimension_numbers<[1], [0], [0], [1], [0, 0, 1, 1], [], []>} : vector<2x128xbf16>, vector<128x128xbf16>, vector<2x128xf32> -> vector<2x128xf32>
    %c0_159 = arith.constant 0 : index
    %c0_160 = arith.constant 0 : index
    %306 = vector.load %arg20[%c0_159, %c0_160] : memref<1x128xf32, #tpu.memory_space<vmem>>, vector<1x128xf32>
    %307 = vector.broadcast %306 : vector<1x128xf32> to vector<2x128xf32>
    %308 = arith.addf %305, %307 : vector<2x128xf32>
    %309 = vector.extract_strided_slice %308 {offsets = [0, 0], sizes = [2, 32], strides = [1, 1]} : vector<2x128xf32> to vector<2x32xf32>
    %310 = arith.negf %309 : vector<2x32xf32>
    %311 = math.exp %310 : vector<2x32xf32>
    %cst_161 = arith.constant 1.000000e+00 : f32
    %312 = vector.broadcast %cst_161 : f32 to vector<2x32xf32>
    %313 = arith.addf %312, %311 : vector<2x32xf32>
    %314 = arith.divf %312, %313 : vector<2x32xf32>
    %315 = vector.extract_strided_slice %308 {offsets = [0, 32], sizes = [2, 32], strides = [1, 1]} : vector<2x128xf32> to vector<2x32xf32>
    %316 = arith.negf %315 : vector<2x32xf32>
    %317 = math.exp %316 : vector<2x32xf32>
    %cst_162 = arith.constant 1.000000e+00 : f32
    %318 = vector.broadcast %cst_162 : f32 to vector<2x32xf32>
    %319 = arith.addf %318, %317 : vector<2x32xf32>
    %320 = arith.divf %318, %319 : vector<2x32xf32>
    %321 = vector.extract_strided_slice %308 {offsets = [0, 64], sizes = [2, 32], strides = [1, 1]} : vector<2x128xf32> to vector<2x32xf32>
    %322 = math.tanh %321 : vector<2x32xf32>
    %323 = vector.extract_strided_slice %308 {offsets = [0, 96], sizes = [2, 32], strides = [1, 1]} : vector<2x128xf32> to vector<2x32xf32>
    %324 = arith.negf %323 : vector<2x32xf32>
    %325 = math.exp %324 : vector<2x32xf32>
    %cst_163 = arith.constant 1.000000e+00 : f32
    %326 = vector.broadcast %cst_163 : f32 to vector<2x32xf32>
    %327 = arith.addf %326, %325 : vector<2x32xf32>
    %328 = arith.divf %326, %327 : vector<2x32xf32>
    %329 = arith.mulf %320, %226 : vector<2x32xf32>
    %330 = arith.mulf %314, %322 : vector<2x32xf32>
    %331 = arith.addf %329, %330 : vector<2x32xf32>
    %332 = math.tanh %331 : vector<2x32xf32>
    %333 = arith.mulf %328, %332 : vector<2x32xf32>
    %334 = arith.truncf %333 : vector<2x32xf32> to vector<2x32xbf16>
    %c0_164 = arith.constant 0 : index
    %c0_165 = arith.constant 0 : index
    %335 = vector.load %arg21[%c0_164, %c0_165] : memref<32x128xbf16, #tpu.memory_space<vmem>>, vector<32x128xbf16>
    %cst_166 = arith.constant dense<0.000000e+00> : vector<2x128xf32>
    %336 = tpu.matmul %334, %335, %cst_166 {dimension_numbers = #tpu.dot_dimension_numbers<[1], [0], [0], [1], [0, 0, 1, 1], [], []>} : vector<2x32xbf16>, vector<32x128xbf16>, vector<2x128xf32> -> vector<2x128xf32>
    %c0_167 = arith.constant 0 : index
    %c0_168 = arith.constant 0 : index
    %337 = vector.load %arg22[%c0_167, %c0_168] : memref<1x128xf32, #tpu.memory_space<vmem>>, vector<1x128xf32>
    %338 = vector.broadcast %337 : vector<1x128xf32> to vector<2x128xf32>
    %339 = arith.addf %336, %338 : vector<2x128xf32>
    %340 = vector.broadcast %c2_i32 : i32 to vector<2x1xi32>
    %341 = arith.cmpi sgt, %36, %340 : vector<2x1xi32>
    %342 = arith.extui %341 : vector<2x1xi1> to vector<2x1xi32>
    %343 = arith.sitofp %342 : vector<2x1xi32> to vector<2x1xf32>
    %344 = vector.broadcast %343 : vector<2x1xf32> to vector<2x128xf32>
    %345 = arith.mulf %339, %344 : vector<2x128xf32>
    %346 = vector.extract_strided_slice %345 {offsets = [0, 0], sizes = [2, 50], strides = [1, 1]} : vector<2x128xf32> to vector<2x50xf32>
    %347 = vector.shape_cast %346 : vector<2x50xf32> to vector<2x1x50xf32>
    %c0_169 = arith.constant 0 : index
    %348 = arith.index_cast %c2_i32 : i32 to index
    %c0_170 = arith.constant 0 : index
    %349 = vector.load %arg23[%c0_169, %348, %c0_170] : memref<2x7x50xf32, #tpu.memory_space<vmem>>, vector<2x1x50xf32>
    tpu.vector_store %arg23[%c0_169, %348, %c0_170], %347 {strides = array<i32>} : memref<2x7x50xf32, #tpu.memory_space<vmem>>, vector<2x1x50xf32>,
    %350 = vector.broadcast %343 : vector<2x1xf32> to vector<2x16xf32>
    %351 = arith.mulf %274, %350 : vector<2x16xf32>
    %352 = vector.shape_cast %351 : vector<2x16xf32> to vector<2x1x16xf32>
    %c0_171 = arith.constant 0 : index
    %353 = arith.index_cast %c2_i32 : i32 to index
    %c0_172 = arith.constant 0 : index
    %354 = vector.load %arg24[%c0_171, %353, %c0_172] : memref<2x7x16xf32, #tpu.memory_space<vmem>>, vector<2x1x16xf32>
    tpu.vector_store %arg24[%c0_171, %353, %c0_172], %352 {strides = array<i32>} : memref<2x7x16xf32, #tpu.memory_space<vmem>>, vector<2x1x16xf32>,
    %c3_i32 = arith.constant 3 : i32
    %355 = arith.truncf %333 : vector<2x32xf32> to vector<2x32xbf16>
    %c0_173 = arith.constant 0 : index
    %c0_174 = arith.constant 0 : index
    %356 = vector.load %arg13[%c0_173, %c0_174] : memref<32x32xbf16, #tpu.memory_space<vmem>>, vector<32x32xbf16>
    %cst_175 = arith.constant dense<0.000000e+00> : vector<2x32xf32>
    %357 = tpu.matmul %355, %356, %cst_175 {dimension_numbers = #tpu.dot_dimension_numbers<[1], [0], [0], [1], [0, 0, 1, 1], [], []>} : vector<2x32xbf16>, vector<32x32xbf16>, vector<2x32xf32> -> vector<2x32xf32>
    %c0_176 = arith.constant 0 : index
    %c0_177 = arith.constant 0 : index
    %358 = vector.load %arg14[%c0_176, %c0_177] : memref<1x32xf32, #tpu.memory_space<vmem>>, vector<1x32xf32>
    %359 = vector.broadcast %358 : vector<1x32xf32> to vector<2x32xf32>
    %360 = arith.addf %357, %359 : vector<2x32xf32>
    %361 = vector.shape_cast %360 : vector<2x32xf32> to vector<2x1x32xf32>
    %362 = vector.broadcast %361 : vector<2x1x32xf32> to vector<2x16x32xf32>
    %363 = arith.addf %33, %362 : vector<2x16x32xf32>
    %cst_178 = arith.constant 0.000000e+00 : f32
    %364 = vector.broadcast %cst_178 : f32 to vector<2x16x32xf32>
    %365 = arith.maximumf %363, %364 : vector<2x16x32xf32>
    %366 = vector.broadcast %38 : vector<1x1x32xf32> to vector<2x16x32xf32>
    %367 = arith.mulf %365, %366 : vector<2x16x32xf32>
    %cst_179 = arith.constant dense<0.000000e+00> : vector<2x16xf32>
    %368 = vector.multi_reduction <add>, %367, %cst_179 [2] : vector<2x16x32xf32> to vector<2x16xf32>
    %369 = vector.broadcast %39 : vector<1x1xf32> to vector<2x16xf32>
    %370 = arith.addf %368, %369 : vector<2x16xf32>
    %cst_180 = arith.constant dense<0xFF800000> : vector<2xf32>
    %371 = vector.multi_reduction <maximumf>, %370, %cst_180 [1] : vector<2x16xf32> to vector<2xf32>
    %372 = vector.shape_cast %371 : vector<2xf32> to vector<2x1xf32>
    %373 = vector.broadcast %372 : vector<2x1xf32> to vector<2x16xf32>
    %374 = arith.subf %370, %373 : vector<2x16xf32>
    %375 = math.exp %374 : vector<2x16xf32>
    %cst_181 = arith.constant dense<0.000000e+00> : vector<2xf32>
    %376 = vector.multi_reduction <add>, %375, %cst_181 [1] : vector<2x16xf32> to vector<2xf32>
    %377 = vector.shape_cast %376 : vector<2xf32> to vector<2x1xf32>
    %378 = vector.broadcast %377 : vector<2x1xf32> to vector<2x16xf32>
    %379 = arith.divf %375, %378 : vector<2x16xf32>
    %380 = vector.shape_cast %379 : vector<2x16xf32> to vector<2x16x1xf32>
    %381 = vector.broadcast %380 : vector<2x16x1xf32> to vector<2x16x32xf32>
    %382 = arith.mulf %381, %12 : vector<2x16x32xf32>
    %cst_182 = arith.constant dense<0.000000e+00> : vector<2x32xf32>
    %383 = vector.multi_reduction <add>, %382, %cst_182 [1] : vector<2x16x32xf32> to vector<2x32xf32>
    %c0_183 = arith.constant 0 : index
    %c0_184 = arith.constant 0 : index
    %384 = vector.load %arg17[%c0_183, %c0_184] : memref<32x32xbf16, #tpu.memory_space<vmem>>, vector<32x32xbf16>
    %cst_185 = arith.constant dense<0.000000e+00> : vector<2x32xf32>
    %385 = tpu.matmul %355, %384, %cst_185 {dimension_numbers = #tpu.dot_dimension_numbers<[1], [0], [0], [1], [0, 0, 1, 1], [], []>} : vector<2x32xbf16>, vector<32x32xbf16>, vector<2x32xf32> -> vector<2x32xf32>
    %c0_186 = arith.constant 0 : index
    %c0_187 = arith.constant 0 : index
    %386 = vector.load %arg18[%c0_186, %c0_187] : memref<1x32xf32, #tpu.memory_space<vmem>>, vector<1x32xf32>
    %387 = vector.broadcast %386 : vector<1x32xf32> to vector<2x32xf32>
    %388 = arith.addf %385, %387 : vector<2x32xf32>
    %389 = arith.negf %388 : vector<2x32xf32>
    %390 = math.exp %389 : vector<2x32xf32>
    %cst_188 = arith.constant 1.000000e+00 : f32
    %391 = vector.broadcast %cst_188 : f32 to vector<2x32xf32>
    %392 = arith.addf %391, %390 : vector<2x32xf32>
    %393 = arith.divf %391, %392 : vector<2x32xf32>
    %394 = arith.mulf %393, %383 : vector<2x32xf32>
    %c0_189 = arith.constant 0 : index
    %395 = arith.index_cast %c3_i32 : i32 to index
    %396 = memref.load %arg0[%c0_189, %395] : memref<2x8xi32, #tpu.memory_space<smem>>
    %397 = arith.index_cast %396 : i32 to index
    %c0_190 = arith.constant 0 : index
    %398 = vector.load %arg6[%397, %c0_190] : memref<50x32xf32, #tpu.memory_space<vmem>>, vector<1x32xf32>
    %c0_191 = arith.constant 0 : index
    %c0_192 = arith.constant 0 : index
    %399 = vector.load %arg25[%c0_191, %c0_192] : memref<2x128xf32, #tpu.memory_space<vmem>>, vector<1x32xf32>
    tpu.vector_store %arg25[%c0_191, %c0_192], %398 {strides = array<i32>} : memref<2x128xf32, #tpu.memory_space<vmem>>, vector<1x32xf32>,
    %c1_193 = arith.constant 1 : index
    %400 = arith.index_cast %c3_i32 : i32 to index
    %401 = memref.load %arg0[%c1_193, %400] : memref<2x8xi32, #tpu.memory_space<smem>>
    %402 = arith.index_cast %401 : i32 to index
    %c0_194 = arith.constant 0 : index
    %403 = vector.load %arg6[%402, %c0_194] : memref<50x32xf32, #tpu.memory_space<vmem>>, vector<1x32xf32>
    %c1_195 = arith.constant 1 : index
    %c0_196 = arith.constant 0 : index
    %404 = vector.load %arg25[%c1_195, %c0_196] : memref<2x128xf32, #tpu.memory_space<vmem>>, vector<1x32xf32>
    tpu.vector_store %arg25[%c1_195, %c0_196], %403 {strides = array<i32>} : memref<2x128xf32, #tpu.memory_space<vmem>>, vector<1x32xf32>,
    %c0_197 = arith.constant 0 : index
    %c32_198 = arith.constant 32 : index
    %405 = vector.load %arg25[%c0_197, %c32_198] : memref<2x128xf32, #tpu.memory_space<vmem>>, vector<2x32xf32>
    tpu.vector_store %arg25[%c0_197, %c32_198], %394 {strides = array<i32>} : memref<2x128xf32, #tpu.memory_space<vmem>>, vector<2x32xf32>,
    %c0_199 = arith.constant 0 : index
    %c64_200 = arith.constant 64 : index
    %406 = vector.load %arg25[%c0_199, %c64_200] : memref<2x128xf32, #tpu.memory_space<vmem>>, vector<2x32xf32>
    tpu.vector_store %arg25[%c0_199, %c64_200], %333 {strides = array<i32>} : memref<2x128xf32, #tpu.memory_space<vmem>>, vector<2x32xf32>,
    %c0_201 = arith.constant 0 : index
    %c0_202 = arith.constant 0 : index
    %407 = vector.load %arg25[%c0_201, %c0_202] : memref<2x128xf32, #tpu.memory_space<vmem>>, vector<2x128xf32>
    %408 = arith.truncf %407 : vector<2x128xf32> to vector<2x128xbf16>
    %c0_203 = arith.constant 0 : index
    %c0_204 = arith.constant 0 : index
    %409 = vector.load %arg19[%c0_203, %c0_204] : memref<128x128xbf16, #tpu.memory_space<vmem>>, vector<128x128xbf16>
    %cst_205 = arith.constant dense<0.000000e+00> : vector<2x128xf32>
    %410 = tpu.matmul %408, %409, %cst_205 {dimension_numbers = #tpu.dot_dimension_numbers<[1], [0], [0], [1], [0, 0, 1, 1], [], []>} : vector<2x128xbf16>, vector<128x128xbf16>, vector<2x128xf32> -> vector<2x128xf32>
    %c0_206 = arith.constant 0 : index
    %c0_207 = arith.constant 0 : index
    %411 = vector.load %arg20[%c0_206, %c0_207] : memref<1x128xf32, #tpu.memory_space<vmem>>, vector<1x128xf32>
    %412 = vector.broadcast %411 : vector<1x128xf32> to vector<2x128xf32>
    %413 = arith.addf %410, %412 : vector<2x128xf32>
    %414 = vector.extract_strided_slice %413 {offsets = [0, 0], sizes = [2, 32], strides = [1, 1]} : vector<2x128xf32> to vector<2x32xf32>
    %415 = arith.negf %414 : vector<2x32xf32>
    %416 = math.exp %415 : vector<2x32xf32>
    %cst_208 = arith.constant 1.000000e+00 : f32
    %417 = vector.broadcast %cst_208 : f32 to vector<2x32xf32>
    %418 = arith.addf %417, %416 : vector<2x32xf32>
    %419 = arith.divf %417, %418 : vector<2x32xf32>
    %420 = vector.extract_strided_slice %413 {offsets = [0, 32], sizes = [2, 32], strides = [1, 1]} : vector<2x128xf32> to vector<2x32xf32>
    %421 = arith.negf %420 : vector<2x32xf32>
    %422 = math.exp %421 : vector<2x32xf32>
    %cst_209 = arith.constant 1.000000e+00 : f32
    %423 = vector.broadcast %cst_209 : f32 to vector<2x32xf32>
    %424 = arith.addf %423, %422 : vector<2x32xf32>
    %425 = arith.divf %423, %424 : vector<2x32xf32>
    %426 = vector.extract_strided_slice %413 {offsets = [0, 64], sizes = [2, 32], strides = [1, 1]} : vector<2x128xf32> to vector<2x32xf32>
    %427 = math.tanh %426 : vector<2x32xf32>
    %428 = vector.extract_strided_slice %413 {offsets = [0, 96], sizes = [2, 32], strides = [1, 1]} : vector<2x128xf32> to vector<2x32xf32>
    %429 = arith.negf %428 : vector<2x32xf32>
    %430 = math.exp %429 : vector<2x32xf32>
    %cst_210 = arith.constant 1.000000e+00 : f32
    %431 = vector.broadcast %cst_210 : f32 to vector<2x32xf32>
    %432 = arith.addf %431, %430 : vector<2x32xf32>
    %433 = arith.divf %431, %432 : vector<2x32xf32>
    %434 = arith.mulf %425, %331 : vector<2x32xf32>
    %435 = arith.mulf %419, %427 : vector<2x32xf32>
    %436 = arith.addf %434, %435 : vector<2x32xf32>
    %437 = math.tanh %436 : vector<2x32xf32>
    %438 = arith.mulf %433, %437 : vector<2x32xf32>
    %439 = arith.truncf %438 : vector<2x32xf32> to vector<2x32xbf16>
    %c0_211 = arith.constant 0 : index
    %c0_212 = arith.constant 0 : index
    %440 = vector.load %arg21[%c0_211, %c0_212] : memref<32x128xbf16, #tpu.memory_space<vmem>>, vector<32x128xbf16>
    %cst_213 = arith.constant dense<0.000000e+00> : vector<2x128xf32>
    %441 = tpu.matmul %439, %440, %cst_213 {dimension_numbers = #tpu.dot_dimension_numbers<[1], [0], [0], [1], [0, 0, 1, 1], [], []>} : vector<2x32xbf16>, vector<32x128xbf16>, vector<2x128xf32> -> vector<2x128xf32>
    %c0_214 = arith.constant 0 : index
    %c0_215 = arith.constant 0 : index
    %442 = vector.load %arg22[%c0_214, %c0_215] : memref<1x128xf32, #tpu.memory_space<vmem>>, vector<1x128xf32>
    %443 = vector.broadcast %442 : vector<1x128xf32> to vector<2x128xf32>
    %444 = arith.addf %441, %443 : vector<2x128xf32>
    %445 = vector.broadcast %c3_i32 : i32 to vector<2x1xi32>
    %446 = arith.cmpi sgt, %36, %445 : vector<2x1xi32>
    %447 = arith.extui %446 : vector<2x1xi1> to vector<2x1xi32>
    %448 = arith.sitofp %447 : vector<2x1xi32> to vector<2x1xf32>
    %449 = vector.broadcast %448 : vector<2x1xf32> to vector<2x128xf32>
    %450 = arith.mulf %444, %449 : vector<2x128xf32>
    %451 = vector.extract_strided_slice %450 {offsets = [0, 0], sizes = [2, 50], strides = [1, 1]} : vector<2x128xf32> to vector<2x50xf32>
    %452 = vector.shape_cast %451 : vector<2x50xf32> to vector<2x1x50xf32>
    %c0_216 = arith.constant 0 : index
    %453 = arith.index_cast %c3_i32 : i32 to index
    %c0_217 = arith.constant 0 : index
    %454 = vector.load %arg23[%c0_216, %453, %c0_217] : memref<2x7x50xf32, #tpu.memory_space<vmem>>, vector<2x1x50xf32>
    tpu.vector_store %arg23[%c0_216, %453, %c0_217], %452 {strides = array<i32>} : memref<2x7x50xf32, #tpu.memory_space<vmem>>, vector<2x1x50xf32>,
    %455 = vector.broadcast %448 : vector<2x1xf32> to vector<2x16xf32>
    %456 = arith.mulf %379, %455 : vector<2x16xf32>
    %457 = vector.shape_cast %456 : vector<2x16xf32> to vector<2x1x16xf32>
    %c0_218 = arith.constant 0 : index
    %458 = arith.index_cast %c3_i32 : i32 to index
    %c0_219 = arith.constant 0 : index
    %459 = vector.load %arg24[%c0_218, %458, %c0_219] : memref<2x7x16xf32, #tpu.memory_space<vmem>>, vector<2x1x16xf32>
    tpu.vector_store %arg24[%c0_218, %458, %c0_219], %457 {strides = array<i32>} : memref<2x7x16xf32, #tpu.memory_space<vmem>>, vector<2x1x16xf32>,
    %c4_i32 = arith.constant 4 : i32
    %460 = arith.truncf %438 : vector<2x32xf32> to vector<2x32xbf16>
    %c0_220 = arith.constant 0 : index
    %c0_221 = arith.constant 0 : index
    %461 = vector.load %arg13[%c0_220, %c0_221] : memref<32x32xbf16, #tpu.memory_space<vmem>>, vector<32x32xbf16>
    %cst_222 = arith.constant dense<0.000000e+00> : vector<2x32xf32>
    %462 = tpu.matmul %460, %461, %cst_222 {dimension_numbers = #tpu.dot_dimension_numbers<[1], [0], [0], [1], [0, 0, 1, 1], [], []>} : vector<2x32xbf16>, vector<32x32xbf16>, vector<2x32xf32> -> vector<2x32xf32>
    %c0_223 = arith.constant 0 : index
    %c0_224 = arith.constant 0 : index
    %463 = vector.load %arg14[%c0_223, %c0_224] : memref<1x32xf32, #tpu.memory_space<vmem>>, vector<1x32xf32>
    %464 = vector.broadcast %463 : vector<1x32xf32> to vector<2x32xf32>
    %465 = arith.addf %462, %464 : vector<2x32xf32>
    %466 = vector.shape_cast %465 : vector<2x32xf32> to vector<2x1x32xf32>
    %467 = vector.broadcast %466 : vector<2x1x32xf32> to vector<2x16x32xf32>
    %468 = arith.addf %33, %467 : vector<2x16x32xf32>
    %cst_225 = arith.constant 0.000000e+00 : f32
    %469 = vector.broadcast %cst_225 : f32 to vector<2x16x32xf32>
    %470 = arith.maximumf %468, %469 : vector<2x16x32xf32>
    %471 = vector.broadcast %38 : vector<1x1x32xf32> to vector<2x16x32xf32>
    %472 = arith.mulf %470, %471 : vector<2x16x32xf32>
    %cst_226 = arith.constant dense<0.000000e+00> : vector<2x16xf32>
    %473 = vector.multi_reduction <add>, %472, %cst_226 [2] : vector<2x16x32xf32> to vector<2x16xf32>
    %474 = vector.broadcast %39 : vector<1x1xf32> to vector<2x16xf32>
    %475 = arith.addf %473, %474 : vector<2x16xf32>
    %cst_227 = arith.constant dense<0xFF800000> : vector<2xf32>
    %476 = vector.multi_reduction <maximumf>, %475, %cst_227 [1] : vector<2x16xf32> to vector<2xf32>
    %477 = vector.shape_cast %476 : vector<2xf32> to vector<2x1xf32>
    %478 = vector.broadcast %477 : vector<2x1xf32> to vector<2x16xf32>
    %479 = arith.subf %475, %478 : vector<2x16xf32>
    %480 = math.exp %479 : vector<2x16xf32>
    %cst_228 = arith.constant dense<0.000000e+00> : vector<2xf32>
    %481 = vector.multi_reduction <add>, %480, %cst_228 [1] : vector<2x16xf32> to vector<2xf32>
    %482 = vector.shape_cast %481 : vector<2xf32> to vector<2x1xf32>
    %483 = vector.broadcast %482 : vector<2x1xf32> to vector<2x16xf32>
    %484 = arith.divf %480, %483 : vector<2x16xf32>
    %485 = vector.shape_cast %484 : vector<2x16xf32> to vector<2x16x1xf32>
    %486 = vector.broadcast %485 : vector<2x16x1xf32> to vector<2x16x32xf32>
    %487 = arith.mulf %486, %12 : vector<2x16x32xf32>
    %cst_229 = arith.constant dense<0.000000e+00> : vector<2x32xf32>
    %488 = vector.multi_reduction <add>, %487, %cst_229 [1] : vector<2x16x32xf32> to vector<2x32xf32>
    %c0_230 = arith.constant 0 : index
    %c0_231 = arith.constant 0 : index
    %489 = vector.load %arg17[%c0_230, %c0_231] : memref<32x32xbf16, #tpu.memory_space<vmem>>, vector<32x32xbf16>
    %cst_232 = arith.constant dense<0.000000e+00> : vector<2x32xf32>
    %490 = tpu.matmul %460, %489, %cst_232 {dimension_numbers = #tpu.dot_dimension_numbers<[1], [0], [0], [1], [0, 0, 1, 1], [], []>} : vector<2x32xbf16>, vector<32x32xbf16>, vector<2x32xf32> -> vector<2x32xf32>
    %c0_233 = arith.constant 0 : index
    %c0_234 = arith.constant 0 : index
    %491 = vector.load %arg18[%c0_233, %c0_234] : memref<1x32xf32, #tpu.memory_space<vmem>>, vector<1x32xf32>
    %492 = vector.broadcast %491 : vector<1x32xf32> to vector<2x32xf32>
    %493 = arith.addf %490, %492 : vector<2x32xf32>
    %494 = arith.negf %493 : vector<2x32xf32>
    %495 = math.exp %494 : vector<2x32xf32>
    %cst_235 = arith.constant 1.000000e+00 : f32
    %496 = vector.broadcast %cst_235 : f32 to vector<2x32xf32>
    %497 = arith.addf %496, %495 : vector<2x32xf32>
    %498 = arith.divf %496, %497 : vector<2x32xf32>
    %499 = arith.mulf %498, %488 : vector<2x32xf32>
    %c0_236 = arith.constant 0 : index
    %500 = arith.index_cast %c4_i32 : i32 to index
    %501 = memref.load %arg0[%c0_236, %500] : memref<2x8xi32, #tpu.memory_space<smem>>
    %502 = arith.index_cast %501 : i32 to index
    %c0_237 = arith.constant 0 : index
    %503 = vector.load %arg6[%502, %c0_237] : memref<50x32xf32, #tpu.memory_space<vmem>>, vector<1x32xf32>
    %c0_238 = arith.constant 0 : index
    %c0_239 = arith.constant 0 : index
    %504 = vector.load %arg25[%c0_238, %c0_239] : memref<2x128xf32, #tpu.memory_space<vmem>>, vector<1x32xf32>
    tpu.vector_store %arg25[%c0_238, %c0_239], %503 {strides = array<i32>} : memref<2x128xf32, #tpu.memory_space<vmem>>, vector<1x32xf32>,
    %c1_240 = arith.constant 1 : index
    %505 = arith.index_cast %c4_i32 : i32 to index
    %506 = memref.load %arg0[%c1_240, %505] : memref<2x8xi32, #tpu.memory_space<smem>>
    %507 = arith.index_cast %506 : i32 to index
    %c0_241 = arith.constant 0 : index
    %508 = vector.load %arg6[%507, %c0_241] : memref<50x32xf32, #tpu.memory_space<vmem>>, vector<1x32xf32>
    %c1_242 = arith.constant 1 : index
    %c0_243 = arith.constant 0 : index
    %509 = vector.load %arg25[%c1_242, %c0_243] : memref<2x128xf32, #tpu.memory_space<vmem>>, vector<1x32xf32>
    tpu.vector_store %arg25[%c1_242, %c0_243], %508 {strides = array<i32>} : memref<2x128xf32, #tpu.memory_space<vmem>>, vector<1x32xf32>,
    %c0_244 = arith.constant 0 : index
    %c32_245 = arith.constant 32 : index
    %510 = vector.load %arg25[%c0_244, %c32_245] : memref<2x128xf32, #tpu.memory_space<vmem>>, vector<2x32xf32>
    tpu.vector_store %arg25[%c0_244, %c32_245], %499 {strides = array<i32>} : memref<2x128xf32, #tpu.memory_space<vmem>>, vector<2x32xf32>,
    %c0_246 = arith.constant 0 : index
    %c64_247 = arith.constant 64 : index
    %511 = vector.load %arg25[%c0_246, %c64_247] : memref<2x128xf32, #tpu.memory_space<vmem>>, vector<2x32xf32>
    tpu.vector_store %arg25[%c0_246, %c64_247], %438 {strides = array<i32>} : memref<2x128xf32, #tpu.memory_space<vmem>>, vector<2x32xf32>,
    %c0_248 = arith.constant 0 : index
    %c0_249 = arith.constant 0 : index
    %512 = vector.load %arg25[%c0_248, %c0_249] : memref<2x128xf32, #tpu.memory_space<vmem>>, vector<2x128xf32>
    %513 = arith.truncf %512 : vector<2x128xf32> to vector<2x128xbf16>
    %c0_250 = arith.constant 0 : index
    %c0_251 = arith.constant 0 : index
    %514 = vector.load %arg19[%c0_250, %c0_251] : memref<128x128xbf16, #tpu.memory_space<vmem>>, vector<128x128xbf16>
    %cst_252 = arith.constant dense<0.000000e+00> : vector<2x128xf32>
    %515 = tpu.matmul %513, %514, %cst_252 {dimension_numbers = #tpu.dot_dimension_numbers<[1], [0], [0], [1], [0, 0, 1, 1], [], []>} : vector<2x128xbf16>, vector<128x128xbf16>, vector<2x128xf32> -> vector<2x128xf32>
    %c0_253 = arith.constant 0 : index
    %c0_254 = arith.constant 0 : index
    %516 = vector.load %arg20[%c0_253, %c0_254] : memref<1x128xf32, #tpu.memory_space<vmem>>, vector<1x128xf32>
    %517 = vector.broadcast %516 : vector<1x128xf32> to vector<2x128xf32>
    %518 = arith.addf %515, %517 : vector<2x128xf32>
    %519 = vector.extract_strided_slice %518 {offsets = [0, 0], sizes = [2, 32], strides = [1, 1]} : vector<2x128xf32> to vector<2x32xf32>
    %520 = arith.negf %519 : vector<2x32xf32>
    %521 = math.exp %520 : vector<2x32xf32>
    %cst_255 = arith.constant 1.000000e+00 : f32
    %522 = vector.broadcast %cst_255 : f32 to vector<2x32xf32>
    %523 = arith.addf %522, %521 : vector<2x32xf32>
    %524 = arith.divf %522, %523 : vector<2x32xf32>
    %525 = vector.extract_strided_slice %518 {offsets = [0, 32], sizes = [2, 32], strides = [1, 1]} : vector<2x128xf32> to vector<2x32xf32>
    %526 = arith.negf %525 : vector<2x32xf32>
    %527 = math.exp %526 : vector<2x32xf32>
    %cst_256 = arith.constant 1.000000e+00 : f32
    %528 = vector.broadcast %cst_256 : f32 to vector<2x32xf32>
    %529 = arith.addf %528, %527 : vector<2x32xf32>
    %530 = arith.divf %528, %529 : vector<2x32xf32>
    %531 = vector.extract_strided_slice %518 {offsets = [0, 64], sizes = [2, 32], strides = [1, 1]} : vector<2x128xf32> to vector<2x32xf32>
    %532 = math.tanh %531 : vector<2x32xf32>
    %533 = vector.extract_strided_slice %518 {offsets = [0, 96], sizes = [2, 32], strides = [1, 1]} : vector<2x128xf32> to vector<2x32xf32>
    %534 = arith.negf %533 : vector<2x32xf32>
    %535 = math.exp %534 : vector<2x32xf32>
    %cst_257 = arith.constant 1.000000e+00 : f32
    %536 = vector.broadcast %cst_257 : f32 to vector<2x32xf32>
    %537 = arith.addf %536, %535 : vector<2x32xf32>
    %538 = arith.divf %536, %537 : vector<2x32xf32>
    %539 = arith.mulf %530, %436 : vector<2x32xf32>
    %540 = arith.mulf %524, %532 : vector<2x32xf32>
    %541 = arith.addf %539, %540 : vector<2x32xf32>
    %542 = math.tanh %541 : vector<2x32xf32>
    %543 = arith.mulf %538, %542 : vector<2x32xf32>
    %544 = arith.truncf %543 : vector<2x32xf32> to vector<2x32xbf16>
    %c0_258 = arith.constant 0 : index
    %c0_259 = arith.constant 0 : index
    %545 = vector.load %arg21[%c0_258, %c0_259] : memref<32x128xbf16, #tpu.memory_space<vmem>>, vector<32x128xbf16>
    %cst_260 = arith.constant dense<0.000000e+00> : vector<2x128xf32>
    %546 = tpu.matmul %544, %545, %cst_260 {dimension_numbers = #tpu.dot_dimension_numbers<[1], [0], [0], [1], [0, 0, 1, 1], [], []>} : vector<2x32xbf16>, vector<32x128xbf16>, vector<2x128xf32> -> vector<2x128xf32>
    %c0_261 = arith.constant 0 : index
    %c0_262 = arith.constant 0 : index
    %547 = vector.load %arg22[%c0_261, %c0_262] : memref<1x128xf32, #tpu.memory_space<vmem>>, vector<1x128xf32>
    %548 = vector.broadcast %547 : vector<1x128xf32> to vector<2x128xf32>
    %549 = arith.addf %546, %548 : vector<2x128xf32>
    %550 = vector.broadcast %c4_i32 : i32 to vector<2x1xi32>
    %551 = arith.cmpi sgt, %36, %550 : vector<2x1xi32>
    %552 = arith.extui %551 : vector<2x1xi1> to vector<2x1xi32>
    %553 = arith.sitofp %552 : vector<2x1xi32> to vector<2x1xf32>
    %554 = vector.broadcast %553 : vector<2x1xf32> to vector<2x128xf32>
    %555 = arith.mulf %549, %554 : vector<2x128xf32>
    %556 = vector.extract_strided_slice %555 {offsets = [0, 0], sizes = [2, 50], strides = [1, 1]} : vector<2x128xf32> to vector<2x50xf32>
    %557 = vector.shape_cast %556 : vector<2x50xf32> to vector<2x1x50xf32>
    %c0_263 = arith.constant 0 : index
    %558 = arith.index_cast %c4_i32 : i32 to index
    %c0_264 = arith.constant 0 : index
    %559 = vector.load %arg23[%c0_263, %558, %c0_264] : memref<2x7x50xf32, #tpu.memory_space<vmem>>, vector<2x1x50xf32>
    tpu.vector_store %arg23[%c0_263, %558, %c0_264], %557 {strides = array<i32>} : memref<2x7x50xf32, #tpu.memory_space<vmem>>, vector<2x1x50xf32>,
    %560 = vector.broadcast %553 : vector<2x1xf32> to vector<2x16xf32>
    %561 = arith.mulf %484, %560 : vector<2x16xf32>
    %562 = vector.shape_cast %561 : vector<2x16xf32> to vector<2x1x16xf32>
    %c0_265 = arith.constant 0 : index
    %563 = arith.index_cast %c4_i32 : i32 to index
    %c0_266 = arith.constant 0 : index
    %564 = vector.load %arg24[%c0_265, %563, %c0_266] : memref<2x7x16xf32, #tpu.memory_space<vmem>>, vector<2x1x16xf32>
    tpu.vector_store %arg24[%c0_265, %563, %c0_266], %562 {strides = array<i32>} : memref<2x7x16xf32, #tpu.memory_space<vmem>>, vector<2x1x16xf32>,
    %c5_i32 = arith.constant 5 : i32
    %565 = arith.truncf %543 : vector<2x32xf32> to vector<2x32xbf16>
    %c0_267 = arith.constant 0 : index
    %c0_268 = arith.constant 0 : index
    %566 = vector.load %arg13[%c0_267, %c0_268] : memref<32x32xbf16, #tpu.memory_space<vmem>>, vector<32x32xbf16>
    %cst_269 = arith.constant dense<0.000000e+00> : vector<2x32xf32>
    %567 = tpu.matmul %565, %566, %cst_269 {dimension_numbers = #tpu.dot_dimension_numbers<[1], [0], [0], [1], [0, 0, 1, 1], [], []>} : vector<2x32xbf16>, vector<32x32xbf16>, vector<2x32xf32> -> vector<2x32xf32>
    %c0_270 = arith.constant 0 : index
    %c0_271 = arith.constant 0 : index
    %568 = vector.load %arg14[%c0_270, %c0_271] : memref<1x32xf32, #tpu.memory_space<vmem>>, vector<1x32xf32>
    %569 = vector.broadcast %568 : vector<1x32xf32> to vector<2x32xf32>
    %570 = arith.addf %567, %569 : vector<2x32xf32>
    %571 = vector.shape_cast %570 : vector<2x32xf32> to vector<2x1x32xf32>
    %572 = vector.broadcast %571 : vector<2x1x32xf32> to vector<2x16x32xf32>
    %573 = arith.addf %33, %572 : vector<2x16x32xf32>
    %cst_272 = arith.constant 0.000000e+00 : f32
    %574 = vector.broadcast %cst_272 : f32 to vector<2x16x32xf32>
    %575 = arith.maximumf %573, %574 : vector<2x16x32xf32>
    %576 = vector.broadcast %38 : vector<1x1x32xf32> to vector<2x16x32xf32>
    %577 = arith.mulf %575, %576 : vector<2x16x32xf32>
    %cst_273 = arith.constant dense<0.000000e+00> : vector<2x16xf32>
    %578 = vector.multi_reduction <add>, %577, %cst_273 [2] : vector<2x16x32xf32> to vector<2x16xf32>
    %579 = vector.broadcast %39 : vector<1x1xf32> to vector<2x16xf32>
    %580 = arith.addf %578, %579 : vector<2x16xf32>
    %cst_274 = arith.constant dense<0xFF800000> : vector<2xf32>
    %581 = vector.multi_reduction <maximumf>, %580, %cst_274 [1] : vector<2x16xf32> to vector<2xf32>
    %582 = vector.shape_cast %581 : vector<2xf32> to vector<2x1xf32>
    %583 = vector.broadcast %582 : vector<2x1xf32> to vector<2x16xf32>
    %584 = arith.subf %580, %583 : vector<2x16xf32>
    %585 = math.exp %584 : vector<2x16xf32>
    %cst_275 = arith.constant dense<0.000000e+00> : vector<2xf32>
    %586 = vector.multi_reduction <add>, %585, %cst_275 [1] : vector<2x16xf32> to vector<2xf32>
    %587 = vector.shape_cast %586 : vector<2xf32> to vector<2x1xf32>
    %588 = vector.broadcast %587 : vector<2x1xf32> to vector<2x16xf32>
    %589 = arith.divf %585, %588 : vector<2x16xf32>
    %590 = vector.shape_cast %589 : vector<2x16xf32> to vector<2x16x1xf32>
    %591 = vector.broadcast %590 : vector<2x16x1xf32> to vector<2x16x32xf32>
    %592 = arith.mulf %591, %12 : vector<2x16x32xf32>
    %cst_276 = arith.constant dense<0.000000e+00> : vector<2x32xf32>
    %593 = vector.multi_reduction <add>, %592, %cst_276 [1] : vector<2x16x32xf32> to vector<2x32xf32>
    %c0_277 = arith.constant 0 : index
    %c0_278 = arith.constant 0 : index
    %594 = vector.load %arg17[%c0_277, %c0_278] : memref<32x32xbf16, #tpu.memory_space<vmem>>, vector<32x32xbf16>
    %cst_279 = arith.constant dense<0.000000e+00> : vector<2x32xf32>
    %595 = tpu.matmul %565, %594, %cst_279 {dimension_numbers = #tpu.dot_dimension_numbers<[1], [0], [0], [1], [0, 0, 1, 1], [], []>} : vector<2x32xbf16>, vector<32x32xbf16>, vector<2x32xf32> -> vector<2x32xf32>
    %c0_280 = arith.constant 0 : index
    %c0_281 = arith.constant 0 : index
    %596 = vector.load %arg18[%c0_280, %c0_281] : memref<1x32xf32, #tpu.memory_space<vmem>>, vector<1x32xf32>
    %597 = vector.broadcast %596 : vector<1x32xf32> to vector<2x32xf32>
    %598 = arith.addf %595, %597 : vector<2x32xf32>
    %599 = arith.negf %598 : vector<2x32xf32>
    %600 = math.exp %599 : vector<2x32xf32>
    %cst_282 = arith.constant 1.000000e+00 : f32
    %601 = vector.broadcast %cst_282 : f32 to vector<2x32xf32>
    %602 = arith.addf %601, %600 : vector<2x32xf32>
    %603 = arith.divf %601, %602 : vector<2x32xf32>
    %604 = arith.mulf %603, %593 : vector<2x32xf32>
    %c0_283 = arith.constant 0 : index
    %605 = arith.index_cast %c5_i32 : i32 to index
    %606 = memref.load %arg0[%c0_283, %605] : memref<2x8xi32, #tpu.memory_space<smem>>
    %607 = arith.index_cast %606 : i32 to index
    %c0_284 = arith.constant 0 : index
    %608 = vector.load %arg6[%607, %c0_284] : memref<50x32xf32, #tpu.memory_space<vmem>>, vector<1x32xf32>
    %c0_285 = arith.constant 0 : index
    %c0_286 = arith.constant 0 : index
    %609 = vector.load %arg25[%c0_285, %c0_286] : memref<2x128xf32, #tpu.memory_space<vmem>>, vector<1x32xf32>
    tpu.vector_store %arg25[%c0_285, %c0_286], %608 {strides = array<i32>} : memref<2x128xf32, #tpu.memory_space<vmem>>, vector<1x32xf32>,
    %c1_287 = arith.constant 1 : index
    %610 = arith.index_cast %c5_i32 : i32 to index
    %611 = memref.load %arg0[%c1_287, %610] : memref<2x8xi32, #tpu.memory_space<smem>>
    %612 = arith.index_cast %611 : i32 to index
    %c0_288 = arith.constant 0 : index
    %613 = vector.load %arg6[%612, %c0_288] : memref<50x32xf32, #tpu.memory_space<vmem>>, vector<1x32xf32>
    %c1_289 = arith.constant 1 : index
    %c0_290 = arith.constant 0 : index
    %614 = vector.load %arg25[%c1_289, %c0_290] : memref<2x128xf32, #tpu.memory_space<vmem>>, vector<1x32xf32>
    tpu.vector_store %arg25[%c1_289, %c0_290], %613 {strides = array<i32>} : memref<2x128xf32, #tpu.memory_space<vmem>>, vector<1x32xf32>,
    %c0_291 = arith.constant 0 : index
    %c32_292 = arith.constant 32 : index
    %615 = vector.load %arg25[%c0_291, %c32_292] : memref<2x128xf32, #tpu.memory_space<vmem>>, vector<2x32xf32>
    tpu.vector_store %arg25[%c0_291, %c32_292], %604 {strides = array<i32>} : memref<2x128xf32, #tpu.memory_space<vmem>>, vector<2x32xf32>,
    %c0_293 = arith.constant 0 : index
    %c64_294 = arith.constant 64 : index
    %616 = vector.load %arg25[%c0_293, %c64_294] : memref<2x128xf32, #tpu.memory_space<vmem>>, vector<2x32xf32>
    tpu.vector_store %arg25[%c0_293, %c64_294], %543 {strides = array<i32>} : memref<2x128xf32, #tpu.memory_space<vmem>>, vector<2x32xf32>,
    %c0_295 = arith.constant 0 : index
    %c0_296 = arith.constant 0 : index
    %617 = vector.load %arg25[%c0_295, %c0_296] : memref<2x128xf32, #tpu.memory_space<vmem>>, vector<2x128xf32>
    %618 = arith.truncf %617 : vector<2x128xf32> to vector<2x128xbf16>
    %c0_297 = arith.constant 0 : index
    %c0_298 = arith.constant 0 : index
    %619 = vector.load %arg19[%c0_297, %c0_298] : memref<128x128xbf16, #tpu.memory_space<vmem>>, vector<128x128xbf16>
    %cst_299 = arith.constant dense<0.000000e+00> : vector<2x128xf32>
    %620 = tpu.matmul %618, %619, %cst_299 {dimension_numbers = #tpu.dot_dimension_numbers<[1], [0], [0], [1], [0, 0, 1, 1], [], []>} : vector<2x128xbf16>, vector<128x128xbf16>, vector<2x128xf32> -> vector<2x128xf32>
    %c0_300 = arith.constant 0 : index
    %c0_301 = arith.constant 0 : index
    %621 = vector.load %arg20[%c0_300, %c0_301] : memref<1x128xf32, #tpu.memory_space<vmem>>, vector<1x128xf32>
    %622 = vector.broadcast %621 : vector<1x128xf32> to vector<2x128xf32>
    %623 = arith.addf %620, %622 : vector<2x128xf32>
    %624 = vector.extract_strided_slice %623 {offsets = [0, 0], sizes = [2, 32], strides = [1, 1]} : vector<2x128xf32> to vector<2x32xf32>
    %625 = arith.negf %624 : vector<2x32xf32>
    %626 = math.exp %625 : vector<2x32xf32>
    %cst_302 = arith.constant 1.000000e+00 : f32
    %627 = vector.broadcast %cst_302 : f32 to vector<2x32xf32>
    %628 = arith.addf %627, %626 : vector<2x32xf32>
    %629 = arith.divf %627, %628 : vector<2x32xf32>
    %630 = vector.extract_strided_slice %623 {offsets = [0, 32], sizes = [2, 32], strides = [1, 1]} : vector<2x128xf32> to vector<2x32xf32>
    %631 = arith.negf %630 : vector<2x32xf32>
    %632 = math.exp %631 : vector<2x32xf32>
    %cst_303 = arith.constant 1.000000e+00 : f32
    %633 = vector.broadcast %cst_303 : f32 to vector<2x32xf32>
    %634 = arith.addf %633, %632 : vector<2x32xf32>
    %635 = arith.divf %633, %634 : vector<2x32xf32>
    %636 = vector.extract_strided_slice %623 {offsets = [0, 64], sizes = [2, 32], strides = [1, 1]} : vector<2x128xf32> to vector<2x32xf32>
    %637 = math.tanh %636 : vector<2x32xf32>
    %638 = vector.extract_strided_slice %623 {offsets = [0, 96], sizes = [2, 32], strides = [1, 1]} : vector<2x128xf32> to vector<2x32xf32>
    %639 = arith.negf %638 : vector<2x32xf32>
    %640 = math.exp %639 : vector<2x32xf32>
    %cst_304 = arith.constant 1.000000e+00 : f32
    %641 = vector.broadcast %cst_304 : f32 to vector<2x32xf32>
    %642 = arith.addf %641, %640 : vector<2x32xf32>
    %643 = arith.divf %641, %642 : vector<2x32xf32>
    %644 = arith.mulf %635, %541 : vector<2x32xf32>
    %645 = arith.mulf %629, %637 : vector<2x32xf32>
    %646 = arith.addf %644, %645 : vector<2x32xf32>
    %647 = math.tanh %646 : vector<2x32xf32>
    %648 = arith.mulf %643, %647 : vector<2x32xf32>
    %649 = arith.truncf %648 : vector<2x32xf32> to vector<2x32xbf16>
    %c0_305 = arith.constant 0 : index
    %c0_306 = arith.constant 0 : index
    %650 = vector.load %arg21[%c0_305, %c0_306] : memref<32x128xbf16, #tpu.memory_space<vmem>>, vector<32x128xbf16>
    %cst_307 = arith.constant dense<0.000000e+00> : vector<2x128xf32>
    %651 = tpu.matmul %649, %650, %cst_307 {dimension_numbers = #tpu.dot_dimension_numbers<[1], [0], [0], [1], [0, 0, 1, 1], [], []>} : vector<2x32xbf16>, vector<32x128xbf16>, vector<2x128xf32> -> vector<2x128xf32>
    %c0_308 = arith.constant 0 : index
    %c0_309 = arith.constant 0 : index
    %652 = vector.load %arg22[%c0_308, %c0_309] : memref<1x128xf32, #tpu.memory_space<vmem>>, vector<1x128xf32>
    %653 = vector.broadcast %652 : vector<1x128xf32> to vector<2x128xf32>
    %654 = arith.addf %651, %653 : vector<2x128xf32>
    %655 = vector.broadcast %c5_i32 : i32 to vector<2x1xi32>
    %656 = arith.cmpi sgt, %36, %655 : vector<2x1xi32>
    %657 = arith.extui %656 : vector<2x1xi1> to vector<2x1xi32>
    %658 = arith.sitofp %657 : vector<2x1xi32> to vector<2x1xf32>
    %659 = vector.broadcast %658 : vector<2x1xf32> to vector<2x128xf32>
    %660 = arith.mulf %654, %659 : vector<2x128xf32>
    %661 = vector.extract_strided_slice %660 {offsets = [0, 0], sizes = [2, 50], strides = [1, 1]} : vector<2x128xf32> to vector<2x50xf32>
    %662 = vector.shape_cast %661 : vector<2x50xf32> to vector<2x1x50xf32>
    %c0_310 = arith.constant 0 : index
    %663 = arith.index_cast %c5_i32 : i32 to index
    %c0_311 = arith.constant 0 : index
    %664 = vector.load %arg23[%c0_310, %663, %c0_311] : memref<2x7x50xf32, #tpu.memory_space<vmem>>, vector<2x1x50xf32>
    tpu.vector_store %arg23[%c0_310, %663, %c0_311], %662 {strides = array<i32>} : memref<2x7x50xf32, #tpu.memory_space<vmem>>, vector<2x1x50xf32>,
    %665 = vector.broadcast %658 : vector<2x1xf32> to vector<2x16xf32>
    %666 = arith.mulf %589, %665 : vector<2x16xf32>
    %667 = vector.shape_cast %666 : vector<2x16xf32> to vector<2x1x16xf32>
    %c0_312 = arith.constant 0 : index
    %668 = arith.index_cast %c5_i32 : i32 to index
    %c0_313 = arith.constant 0 : index
    %669 = vector.load %arg24[%c0_312, %668, %c0_313] : memref<2x7x16xf32, #tpu.memory_space<vmem>>, vector<2x1x16xf32>
    tpu.vector_store %arg24[%c0_312, %668, %c0_313], %667 {strides = array<i32>} : memref<2x7x16xf32, #tpu.memory_space<vmem>>, vector<2x1x16xf32>,
    %c6_i32 = arith.constant 6 : i32
    %670 = arith.truncf %648 : vector<2x32xf32> to vector<2x32xbf16>
    %c0_314 = arith.constant 0 : index
    %c0_315 = arith.constant 0 : index
    %671 = vector.load %arg13[%c0_314, %c0_315] : memref<32x32xbf16, #tpu.memory_space<vmem>>, vector<32x32xbf16>
    %cst_316 = arith.constant dense<0.000000e+00> : vector<2x32xf32>
    %672 = tpu.matmul %670, %671, %cst_316 {dimension_numbers = #tpu.dot_dimension_numbers<[1], [0], [0], [1], [0, 0, 1, 1], [], []>} : vector<2x32xbf16>, vector<32x32xbf16>, vector<2x32xf32> -> vector<2x32xf32>
    %c0_317 = arith.constant 0 : index
    %c0_318 = arith.constant 0 : index
    %673 = vector.load %arg14[%c0_317, %c0_318] : memref<1x32xf32, #tpu.memory_space<vmem>>, vector<1x32xf32>
    %674 = vector.broadcast %673 : vector<1x32xf32> to vector<2x32xf32>
    %675 = arith.addf %672, %674 : vector<2x32xf32>
    %676 = vector.shape_cast %675 : vector<2x32xf32> to vector<2x1x32xf32>
    %677 = vector.broadcast %676 : vector<2x1x32xf32> to vector<2x16x32xf32>
    %678 = arith.addf %33, %677 : vector<2x16x32xf32>
    %cst_319 = arith.constant 0.000000e+00 : f32
    %679 = vector.broadcast %cst_319 : f32 to vector<2x16x32xf32>
    %680 = arith.maximumf %678, %679 : vector<2x16x32xf32>
    %681 = vector.broadcast %38 : vector<1x1x32xf32> to vector<2x16x32xf32>
    %682 = arith.mulf %680, %681 : vector<2x16x32xf32>
    %cst_320 = arith.constant dense<0.000000e+00> : vector<2x16xf32>
    %683 = vector.multi_reduction <add>, %682, %cst_320 [2] : vector<2x16x32xf32> to vector<2x16xf32>
    %684 = vector.broadcast %39 : vector<1x1xf32> to vector<2x16xf32>
    %685 = arith.addf %683, %684 : vector<2x16xf32>
    %cst_321 = arith.constant dense<0xFF800000> : vector<2xf32>
    %686 = vector.multi_reduction <maximumf>, %685, %cst_321 [1] : vector<2x16xf32> to vector<2xf32>
    %687 = vector.shape_cast %686 : vector<2xf32> to vector<2x1xf32>
    %688 = vector.broadcast %687 : vector<2x1xf32> to vector<2x16xf32>
    %689 = arith.subf %685, %688 : vector<2x16xf32>
    %690 = math.exp %689 : vector<2x16xf32>
    %cst_322 = arith.constant dense<0.000000e+00> : vector<2xf32>
    %691 = vector.multi_reduction <add>, %690, %cst_322 [1] : vector<2x16xf32> to vector<2xf32>
    %692 = vector.shape_cast %691 : vector<2xf32> to vector<2x1xf32>
    %693 = vector.broadcast %692 : vector<2x1xf32> to vector<2x16xf32>
    %694 = arith.divf %690, %693 : vector<2x16xf32>
    %695 = vector.shape_cast %694 : vector<2x16xf32> to vector<2x16x1xf32>
    %696 = vector.broadcast %695 : vector<2x16x1xf32> to vector<2x16x32xf32>
    %697 = arith.mulf %696, %12 : vector<2x16x32xf32>
    %cst_323 = arith.constant dense<0.000000e+00> : vector<2x32xf32>
    %698 = vector.multi_reduction <add>, %697, %cst_323 [1] : vector<2x16x32xf32> to vector<2x32xf32>
    %c0_324 = arith.constant 0 : index
    %c0_325 = arith.constant 0 : index
    %699 = vector.load %arg17[%c0_324, %c0_325] : memref<32x32xbf16, #tpu.memory_space<vmem>>, vector<32x32xbf16>
    %cst_326 = arith.constant dense<0.000000e+00> : vector<2x32xf32>
    %700 = tpu.matmul %670, %699, %cst_326 {dimension_numbers = #tpu.dot_dimension_numbers<[1], [0], [0], [1], [0, 0, 1, 1], [], []>} : vector<2x32xbf16>, vector<32x32xbf16>, vector<2x32xf32> -> vector<2x32xf32>
    %c0_327 = arith.constant 0 : index
    %c0_328 = arith.constant 0 : index
    %701 = vector.load %arg18[%c0_327, %c0_328] : memref<1x32xf32, #tpu.memory_space<vmem>>, vector<1x32xf32>
    %702 = vector.broadcast %701 : vector<1x32xf32> to vector<2x32xf32>
    %703 = arith.addf %700, %702 : vector<2x32xf32>
    %704 = arith.negf %703 : vector<2x32xf32>
    %705 = math.exp %704 : vector<2x32xf32>
    %cst_329 = arith.constant 1.000000e+00 : f32
    %706 = vector.broadcast %cst_329 : f32 to vector<2x32xf32>
    %707 = arith.addf %706, %705 : vector<2x32xf32>
    %708 = arith.divf %706, %707 : vector<2x32xf32>
    %709 = arith.mulf %708, %698 : vector<2x32xf32>
    %c0_330 = arith.constant 0 : index
    %710 = arith.index_cast %c6_i32 : i32 to index
    %711 = memref.load %arg0[%c0_330, %710] : memref<2x8xi32, #tpu.memory_space<smem>>
    %712 = arith.index_cast %711 : i32 to index
    %c0_331 = arith.constant 0 : index
    %713 = vector.load %arg6[%712, %c0_331] : memref<50x32xf32, #tpu.memory_space<vmem>>, vector<1x32xf32>
    %c0_332 = arith.constant 0 : index
    %c0_333 = arith.constant 0 : index
    %714 = vector.load %arg25[%c0_332, %c0_333] : memref<2x128xf32, #tpu.memory_space<vmem>>, vector<1x32xf32>
    tpu.vector_store %arg25[%c0_332, %c0_333], %713 {strides = array<i32>} : memref<2x128xf32, #tpu.memory_space<vmem>>, vector<1x32xf32>,
    %c1_334 = arith.constant 1 : index
    %715 = arith.index_cast %c6_i32 : i32 to index
    %716 = memref.load %arg0[%c1_334, %715] : memref<2x8xi32, #tpu.memory_space<smem>>
    %717 = arith.index_cast %716 : i32 to index
    %c0_335 = arith.constant 0 : index
    %718 = vector.load %arg6[%717, %c0_335] : memref<50x32xf32, #tpu.memory_space<vmem>>, vector<1x32xf32>
    %c1_336 = arith.constant 1 : index
    %c0_337 = arith.constant 0 : index
    %719 = vector.load %arg25[%c1_336, %c0_337] : memref<2x128xf32, #tpu.memory_space<vmem>>, vector<1x32xf32>
    tpu.vector_store %arg25[%c1_336, %c0_337], %718 {strides = array<i32>} : memref<2x128xf32, #tpu.memory_space<vmem>>, vector<1x32xf32>,
    %c0_338 = arith.constant 0 : index
    %c32_339 = arith.constant 32 : index
    %720 = vector.load %arg25[%c0_338, %c32_339] : memref<2x128xf32, #tpu.memory_space<vmem>>, vector<2x32xf32>
    tpu.vector_store %arg25[%c0_338, %c32_339], %709 {strides = array<i32>} : memref<2x128xf32, #tpu.memory_space<vmem>>, vector<2x32xf32>,
    %c0_340 = arith.constant 0 : index
    %c64_341 = arith.constant 64 : index
    %721 = vector.load %arg25[%c0_340, %c64_341] : memref<2x128xf32, #tpu.memory_space<vmem>>, vector<2x32xf32>
    tpu.vector_store %arg25[%c0_340, %c64_341], %648 {strides = array<i32>} : memref<2x128xf32, #tpu.memory_space<vmem>>, vector<2x32xf32>,
    %c0_342 = arith.constant 0 : index
    %c0_343 = arith.constant 0 : index
    %722 = vector.load %arg25[%c0_342, %c0_343] : memref<2x128xf32, #tpu.memory_space<vmem>>, vector<2x128xf32>
    %723 = arith.truncf %722 : vector<2x128xf32> to vector<2x128xbf16>
    %c0_344 = arith.constant 0 : index
    %c0_345 = arith.constant 0 : index
    %724 = vector.load %arg19[%c0_344, %c0_345] : memref<128x128xbf16, #tpu.memory_space<vmem>>, vector<128x128xbf16>
    %cst_346 = arith.constant dense<0.000000e+00> : vector<2x128xf32>
    %725 = tpu.matmul %723, %724, %cst_346 {dimension_numbers = #tpu.dot_dimension_numbers<[1], [0], [0], [1], [0, 0, 1, 1], [], []>} : vector<2x128xbf16>, vector<128x128xbf16>, vector<2x128xf32> -> vector<2x128xf32>
    %c0_347 = arith.constant 0 : index
    %c0_348 = arith.constant 0 : index
    %726 = vector.load %arg20[%c0_347, %c0_348] : memref<1x128xf32, #tpu.memory_space<vmem>>, vector<1x128xf32>
    %727 = vector.broadcast %726 : vector<1x128xf32> to vector<2x128xf32>
    %728 = arith.addf %725, %727 : vector<2x128xf32>
    %729 = vector.extract_strided_slice %728 {offsets = [0, 0], sizes = [2, 32], strides = [1, 1]} : vector<2x128xf32> to vector<2x32xf32>
    %730 = arith.negf %729 : vector<2x32xf32>
    %731 = math.exp %730 : vector<2x32xf32>
    %cst_349 = arith.constant 1.000000e+00 : f32
    %732 = vector.broadcast %cst_349 : f32 to vector<2x32xf32>
    %733 = arith.addf %732, %731 : vector<2x32xf32>
    %734 = arith.divf %732, %733 : vector<2x32xf32>
    %735 = vector.extract_strided_slice %728 {offsets = [0, 32], sizes = [2, 32], strides = [1, 1]} : vector<2x128xf32> to vector<2x32xf32>
    %736 = arith.negf %735 : vector<2x32xf32>
    %737 = math.exp %736 : vector<2x32xf32>
    %cst_350 = arith.constant 1.000000e+00 : f32
    %738 = vector.broadcast %cst_350 : f32 to vector<2x32xf32>
    %739 = arith.addf %738, %737 : vector<2x32xf32>
    %740 = arith.divf %738, %739 : vector<2x32xf32>
    %741 = vector.extract_strided_slice %728 {offsets = [0, 64], sizes = [2, 32], strides = [1, 1]} : vector<2x128xf32> to vector<2x32xf32>
    %742 = math.tanh %741 : vector<2x32xf32>
    %743 = vector.extract_strided_slice %728 {offsets = [0, 96], sizes = [2, 32], strides = [1, 1]} : vector<2x128xf32> to vector<2x32xf32>
    %744 = arith.negf %743 : vector<2x32xf32>
    %745 = math.exp %744 : vector<2x32xf32>
    %cst_351 = arith.constant 1.000000e+00 : f32
    %746 = vector.broadcast %cst_351 : f32 to vector<2x32xf32>
    %747 = arith.addf %746, %745 : vector<2x32xf32>
    %748 = arith.divf %746, %747 : vector<2x32xf32>
    %749 = arith.mulf %740, %646 : vector<2x32xf32>
    %750 = arith.mulf %734, %742 : vector<2x32xf32>
    %751 = arith.addf %749, %750 : vector<2x32xf32>
    %752 = math.tanh %751 : vector<2x32xf32>
    %753 = arith.mulf %748, %752 : vector<2x32xf32>
    %754 = arith.truncf %753 : vector<2x32xf32> to vector<2x32xbf16>
    %c0_352 = arith.constant 0 : index
    %c0_353 = arith.constant 0 : index
    %755 = vector.load %arg21[%c0_352, %c0_353] : memref<32x128xbf16, #tpu.memory_space<vmem>>, vector<32x128xbf16>
    %cst_354 = arith.constant dense<0.000000e+00> : vector<2x128xf32>
    %756 = tpu.matmul %754, %755, %cst_354 {dimension_numbers = #tpu.dot_dimension_numbers<[1], [0], [0], [1], [0, 0, 1, 1], [], []>} : vector<2x32xbf16>, vector<32x128xbf16>, vector<2x128xf32> -> vector<2x128xf32>
    %c0_355 = arith.constant 0 : index
    %c0_356 = arith.constant 0 : index
    %757 = vector.load %arg22[%c0_355, %c0_356] : memref<1x128xf32, #tpu.memory_space<vmem>>, vector<1x128xf32>
    %758 = vector.broadcast %757 : vector<1x128xf32> to vector<2x128xf32>
    %759 = arith.addf %756, %758 : vector<2x128xf32>
    %760 = vector.broadcast %c6_i32 : i32 to vector<2x1xi32>
    %761 = arith.cmpi sgt, %36, %760 : vector<2x1xi32>
    %762 = arith.extui %761 : vector<2x1xi1> to vector<2x1xi32>
    %763 = arith.sitofp %762 : vector<2x1xi32> to vector<2x1xf32>
    %764 = vector.broadcast %763 : vector<2x1xf32> to vector<2x128xf32>
    %765 = arith.mulf %759, %764 : vector<2x128xf32>
    %766 = vector.extract_strided_slice %765 {offsets = [0, 0], sizes = [2, 50], strides = [1, 1]} : vector<2x128xf32> to vector<2x50xf32>
    %767 = vector.shape_cast %766 : vector<2x50xf32> to vector<2x1x50xf32>
    %c0_357 = arith.constant 0 : index
    %768 = arith.index_cast %c6_i32 : i32 to index
    %c0_358 = arith.constant 0 : index
    %769 = vector.load %arg23[%c0_357, %768, %c0_358] : memref<2x7x50xf32, #tpu.memory_space<vmem>>, vector<2x1x50xf32>
    tpu.vector_store %arg23[%c0_357, %768, %c0_358], %767 {strides = array<i32>} : memref<2x7x50xf32, #tpu.memory_space<vmem>>, vector<2x1x50xf32>,
    %770 = vector.broadcast %763 : vector<2x1xf32> to vector<2x16xf32>
    %771 = arith.mulf %694, %770 : vector<2x16xf32>
    %772 = vector.shape_cast %771 : vector<2x16xf32> to vector<2x1x16xf32>
    %c0_359 = arith.constant 0 : index
    %773 = arith.index_cast %c6_i32 : i32 to index
    %c0_360 = arith.constant 0 : index
    %774 = vector.load %arg24[%c0_359, %773, %c0_360] : memref<2x7x16xf32, #tpu.memory_space<vmem>>, vector<2x1x16xf32>
    tpu.vector_store %arg24[%c0_359, %773, %c0_360], %772 {strides = array<i32>} : memref<2x7x16xf32, #tpu.memory_space<vmem>>, vector<2x1x16xf32>,
    %c7_i32 = arith.constant 7 : i32
    return
  }
}

</mosaic_0001>

<llo_original>
// kernel: tpu_custom_call.1
$region0: #{tpu_custom_call.1}
  #allocation0 [shape = 'u32[]', space=smem, size = 0x4, offset = 0x4, fixed_abs, tag = 'smem constant byte address 0x4 - core index']
  #allocation1 [shape = 'u32[144,128]{1,0:T(1,128)}', space=vmem, size = 0x12000, scoped, tag = 'internal scratch']
  #allocation2 [shape = 'f32[2,128]{1,0:T(2,128)}', space=vmem, size = 0x400, scoped, tag = 'scratch operand']
  #allocation3 [shape = 'f32[1,1]{1,0:T(1,128)S(1)}', space=vmem, size = 0x200, scoped, tag = 'scoped memory for tpu_custom_call.1']
  %s0 = inlined_call_operand.vmem [shape: s32[2,8], index: 0, kind: input, shape index: {}]
  %s1 = inlined_call_operand.vmem [shape: s32[2,1], index: 1, kind: input, shape index: {}]
  %s2 = inlined_call_operand.vmem [shape: f32[512,4], index: 2, kind: input, shape index: {}]
  %s3 = inlined_call_operand.vmem [shape: bf16[4,32], index: 3, kind: input, shape index: {}]
  %s4 = inlined_call_operand.vmem [shape: f32[1,32], index: 4, kind: input, shape index: {}]
  %s5 = inlined_call_operand.vmem [shape: bf16[32,512], index: 5, kind: input, shape index: {}]
  %s6 = inlined_call_operand.vmem [shape: f32[50,32], index: 6, kind: input, shape index: {}]
  %s7 = inlined_call_operand.vmem [shape: bf16[32,32], index: 7, kind: input, shape index: {}]
  %s8 = inlined_call_operand.vmem [shape: f32[1,32], index: 8, kind: input, shape index: {}]
  %s9 = inlined_call_operand.vmem [shape: bf16[32,32], index: 9, kind: input, shape index: {}]
  %s10 = inlined_call_operand.vmem [shape: f32[1,32], index: 10, kind: input, shape index: {}]
  %s11 = inlined_call_operand.vmem [shape: bf16[32,32], index: 11, kind: input, shape index: {}]
  %s12 = inlined_call_operand.vmem [shape: f32[1,32], index: 12, kind: input, shape index: {}]
  %s13 = inlined_call_operand.vmem [shape: bf16[32,32], index: 13, kind: input, shape index: {}]
  %s14 = inlined_call_operand.vmem [shape: f32[1,32], index: 14, kind: input, shape index: {}]
  %s15 = inlined_call_operand.vmem [shape: f32[1,32], index: 15, kind: input, shape index: {}]
  %s16 = inlined_call_operand.<no memory space> [shape: f32[1,1], index: 16, kind: input, shape index: {}]
  %s17 = inlined_call_operand.vmem [shape: bf16[32,32], index: 17, kind: input, shape index: {}]
  %s18 = inlined_call_operand.vmem [shape: f32[1,32], index: 18, kind: input, shape index: {}]
  %s19 = inlined_call_operand.vmem [shape: bf16[128,128], index: 19, kind: input, shape index: {}]
  %s20 = inlined_call_operand.vmem [shape: f32[1,128], index: 20, kind: input, shape index: {}]
  %s21 = inlined_call_operand.vmem [shape: bf16[32,128], index: 21, kind: input, shape index: {}]
  %s22 = inlined_call_operand.vmem [shape: f32[1,128], index: 22, kind: input, shape index: {}]
  %s23 = inlined_call_operand.vmem [shape: f32[2,7,50], index: 23, kind: output, shape index: {0}]
  %s24 = inlined_call_operand.vmem [shape: f32[2,7,16], index: 24, kind: output, shape index: {1}]
  %25 = xla_tuple %s23, %s24
  %s26 = sld [smem:[#allocation0]]
  $region114: #{tpu_custom_call.1} parent=0
    _
  %s28 = ssub.s32 1, %s26
  %s29 = scalar_select 0, %s28, %s26
  %v30 = vstv %s16
  %31 = vst [vmem:[#allocation3] sm:$0x1] %v30
  $region1: #{tpu_custom_call.1} parent=0
    #allocation4 [shape = 'u8[1024]{0}', space=smem, size = 0x400, scoped, tag = 'input window, operand 0, single buffered']
    #allocation5 [shape = 's32[1]{0}', space=sflag, size = 0x4, scoped, tag = 'scoped memory for tpu_custom_call.1']
    %32 = vsyncpa [#allocation5], 0
    // Predicated region
    $region2: #{tpu_custom_call.1} parent=1 // pred_check
      _
    $region3: #{tpu_custom_call.1} parent=1 // pred_check_branch
      %34 = sbr.rel (0) target = $region5
    $region4: #{tpu_custom_call.1} parent=1 // pred_region
      %s36 = ssub.s32 32, 32
      %37 = vsyncadd [#allocation5], %s36
      %s39 = sshll.u32 %s0, 4
      %s40 = int_to_ptr.vmem [resolvable:$true] %s39
      %42 = dma.vmem_to_smem %s40, 32, [#allocation4], [#allocation5]
    $region5: #{tpu_custom_call.1} parent=1 // pred_fallthru
      _
    // Predicated region
    $region6: #{tpu_custom_call.1} parent=1 // pred_check
      _
    $region7: #{tpu_custom_call.1} parent=1 // pred_check_branch
      %44 = sbr.rel (0) target = $region9
    $region8: #{tpu_custom_call.1} parent=1 // pred_region
      _
    $region9: #{tpu_custom_call.1} parent=1 // pred_fallthru
      _
    // Predicated region
    $region10: #{tpu_custom_call.1} parent=1 // pred_check
      _
    $region11: #{tpu_custom_call.1} parent=1 // pred_check_branch
      %46 = sbr.rel (0) target = $region13
    $region12: #{tpu_custom_call.1} parent=1 // pred_region
      _
    $region13: #{tpu_custom_call.1} parent=1 // pred_fallthru
      _
    // Predicated region
    $region14: #{tpu_custom_call.1} parent=1 // pred_check
      _
    $region15: #{tpu_custom_call.1} parent=1 // pred_check_branch
      %48 = sbr.rel (0) target = $region17
    $region16: #{tpu_custom_call.1} parent=1 // pred_region
      _
    $region17: #{tpu_custom_call.1} parent=1 // pred_fallthru
      _
    // Predicated region
    $region18: #{tpu_custom_call.1} parent=1 // pred_check
      _
    $region19: #{tpu_custom_call.1} parent=1 // pred_check_branch
      %50 = sbr.rel (0) target = $region21
    $region20: #{tpu_custom_call.1} parent=1 // pred_region
      _
    $region21: #{tpu_custom_call.1} parent=1 // pred_fallthru
      _
    // Predicated region
    $region22: #{tpu_custom_call.1} parent=1 // pred_check
      _
    $region23: #{tpu_custom_call.1} parent=1 // pred_check_branch
      %52 = sbr.rel (0) target = $region25
    $region24: #{tpu_custom_call.1} parent=1 // pred_region
      _
    $region25: #{tpu_custom_call.1} parent=1 // pred_fallthru
      _
    // Predicated region
    $region26: #{tpu_custom_call.1} parent=1 // pred_check
      _
    $region27: #{tpu_custom_call.1} parent=1 // pred_check_branch
      %54 = sbr.rel (0) target = $region29
    $region28: #{tpu_custom_call.1} parent=1 // pred_region
      _
    $region29: #{tpu_custom_call.1} parent=1 // pred_fallthru
      _
    // Predicated region
    $region30: #{tpu_custom_call.1} parent=1 // pred_check
      _
    $region31: #{tpu_custom_call.1} parent=1 // pred_check_branch
      %56 = sbr.rel (0) target = $region33
    $region32: #{tpu_custom_call.1} parent=1 // pred_region
      _
    $region33: #{tpu_custom_call.1} parent=1 // pred_fallthru
      _
    // Predicated region
    $region34: #{tpu_custom_call.1} parent=1 // pred_check
      _
    $region35: #{tpu_custom_call.1} parent=1 // pred_check_branch
      %58 = sbr.rel (0) target = $region37
    $region36: #{tpu_custom_call.1} parent=1 // pred_region
      _
    $region37: #{tpu_custom_call.1} parent=1 // pred_fallthru
      _
    // Predicated region
    $region38: #{tpu_custom_call.1} parent=1 // pred_check
      _
    $region39: #{tpu_custom_call.1} parent=1 // pred_check_branch
      %60 = sbr.rel (0) target = $region41
    $region40: #{tpu_custom_call.1} parent=1 // pred_region
      _
    $region41: #{tpu_custom_call.1} parent=1 // pred_fallthru
      _
    // Predicated region
    $region42: #{tpu_custom_call.1} parent=1 // pred_check
      _
    $region43: #{tpu_custom_call.1} parent=1 // pred_check_branch
      %62 = sbr.rel (0) target = $region45
    $region44: #{tpu_custom_call.1} parent=1 // pred_region
      _
    $region45: #{tpu_custom_call.1} parent=1 // pred_fallthru
      _
    // Predicated region
    $region46: #{tpu_custom_call.1} parent=1 // pred_check
      _
    $region47: #{tpu_custom_call.1} parent=1 // pred_check_branch
      %64 = sbr.rel (0) target = $region49
    $region48: #{tpu_custom_call.1} parent=1 // pred_region
      _
    $region49: #{tpu_custom_call.1} parent=1 // pred_fallthru
      _
    // Predicated region
    $region50: #{tpu_custom_call.1} parent=1 // pred_check
      _
    $region51: #{tpu_custom_call.1} parent=1 // pred_check_branch
      %66 = sbr.rel (0) target = $region53
    $region52: #{tpu_custom_call.1} parent=1 // pred_region
      _
    $region53: #{tpu_custom_call.1} parent=1 // pred_fallthru
      _
    // Predicated region
    $region54: #{tpu_custom_call.1} parent=1 // pred_check
      _
    $region55: #{tpu_custom_call.1} parent=1 // pred_check_branch
      %68 = sbr.rel (0) target = $region57
    $region56: #{tpu_custom_call.1} parent=1 // pred_region
      _
    $region57: #{tpu_custom_call.1} parent=1 // pred_fallthru
      _
    // Predicated region
    $region58: #{tpu_custom_call.1} parent=1 // pred_check
      _
    $region59: #{tpu_custom_call.1} parent=1 // pred_check_branch
      %70 = sbr.rel (0) target = $region61
    $region60: #{tpu_custom_call.1} parent=1 // pred_region
      _
    $region61: #{tpu_custom_call.1} parent=1 // pred_fallthru
      _
    // Predicated region
    $region62: #{tpu_custom_call.1} parent=1 // pred_check
      _
    $region63: #{tpu_custom_call.1} parent=1 // pred_check_branch
      %72 = sbr.rel (0) target = $region65
    $region64: #{tpu_custom_call.1} parent=1 // pred_region
      _
    $region65: #{tpu_custom_call.1} parent=1 // pred_fallthru
      _
    // Predicated region
    $region66: #{tpu_custom_call.1} parent=1 // pred_check
      _
    $region67: #{tpu_custom_call.1} parent=1 // pred_check_branch
      %74 = sbr.rel (0) target = $region69
    $region68: #{tpu_custom_call.1} parent=1 // pred_region
      _
    $region69: #{tpu_custom_call.1} parent=1 // pred_fallthru
      _
    // Predicated region
    $region70: #{tpu_custom_call.1} parent=1 // pred_check
      _
    $region71: #{tpu_custom_call.1} parent=1 // pred_check_branch
      %76 = sbr.rel (0) target = $region73
    $region72: #{tpu_custom_call.1} parent=1 // pred_region
      _
    $region73: #{tpu_custom_call.1} parent=1 // pred_fallthru
      _
    // Predicated region
    $region74: #{tpu_custom_call.1} parent=1 // pred_check
      _
    $region75: #{tpu_custom_call.1} parent=1 // pred_check_branch
      %78 = sbr.rel (0) target = $region77
    $region76: #{tpu_custom_call.1} parent=1 // pred_region
      _
    $region77: #{tpu_custom_call.1} parent=1 // pred_fallthru
      _
    // Predicated region
    $region78: #{tpu_custom_call.1} parent=1 // pred_check
      _
    $region79: #{tpu_custom_call.1} parent=1 // pred_check_branch
      %80 = sbr.rel (0) target = $region81
    $region80: #{tpu_custom_call.1} parent=1 // pred_region
      _
    $region81: #{tpu_custom_call.1} parent=1 // pred_fallthru
      _
    // Predicated region
    $region82: #{tpu_custom_call.1} parent=1 // pred_check
      _
    $region83: #{tpu_custom_call.1} parent=1 // pred_check_branch
      %82 = sbr.rel (0) target = $region85
    $region84: #{tpu_custom_call.1} parent=1 // pred_region
      _
    $region85: #{tpu_custom_call.1} parent=1 // pred_fallthru
      _
    // Predicated region
    $region86: #{tpu_custom_call.1} parent=1 // pred_check
      _
    $region87: #{tpu_custom_call.1} parent=1 // pred_check_branch
      %84 = sbr.rel (0) target = $region89
    $region88: #{tpu_custom_call.1} parent=1 // pred_region
      _
    $region89: #{tpu_custom_call.1} parent=1 // pred_fallthru
      _
    // Predicated region
    $region90: #{tpu_custom_call.1} parent=1 // pred_check
      _
    $region91: #{tpu_custom_call.1} parent=1 // pred_check_branch
      %86 = sbr.rel (0) target = $region93
    $region92: #{tpu_custom_call.1} parent=1 // pred_region
      _
    $region93: #{tpu_custom_call.1} parent=1 // pred_fallthru
      _
    // Predicated region
    $region94: #{tpu_custom_call.1} parent=1 // pred_check
      _
    $region95: #{tpu_custom_call.1} parent=1 // pred_check_branch
      %88 = sbr.rel (0) target = $region97
    $region96: #{tpu_custom_call.1} parent=1 // pred_region
      %89 = dma.done [#allocation5], 32
    $region97: #{tpu_custom_call.1} parent=1 // pred_fallthru
      _
    %90 = sfence
    %v92 = vld [vmem:[%s2] sm:$0xff]
    %v93 = vld [vmem:[%s2 + $0x8] sm:$0xff]
    %v94 = vld [vmem:[%s2 + $0x10] sm:$0xff]
    %v95 = vld [vmem:[%s2 + $0x18] sm:$0xff]
    %v96 = vld [vmem:[%s2 + $0x20] sm:$0xff]
    %v97 = vld [vmem:[%s2 + $0x28] sm:$0xff]
    %v98 = vld [vmem:[%s2 + $0x30] sm:$0xff]
    %v99 = vld [vmem:[%s2 + $0x38] sm:$0xff]
    %v100 = vld [vmem:[%s2 + $0x40] sm:$0xff]
    %v101 = vld [vmem:[%s2 + $0x48] sm:$0xff]
    %v102 = vld [vmem:[%s2 + $0x50] sm:$0xff]
    %v103 = vld [vmem:[%s2 + $0x58] sm:$0xff]
    %v104 = vld [vmem:[%s2 + $0x60] sm:$0xff]
    %v105 = vld [vmem:[%s2 + $0x68] sm:$0xff]
    %v106 = vld [vmem:[%s2 + $0x70] sm:$0xff]
    %v107 = vld [vmem:[%s2 + $0x78] sm:$0xff]
    %v108 = vld [vmem:[%s2 + $0x80] sm:$0xff]
    %v109 = vld [vmem:[%s2 + $0x88] sm:$0xff]
    %v110 = vld [vmem:[%s2 + $0x90] sm:$0xff]
    %v111 = vld [vmem:[%s2 + $0x98] sm:$0xff]
    %v112 = vld [vmem:[%s2 + $0xa0] sm:$0xff]
    %v113 = vld [vmem:[%s2 + $0xa8] sm:$0xff]
    %v114 = vld [vmem:[%s2 + $0xb0] sm:$0xff]
    %v115 = vld [vmem:[%s2 + $0xb8] sm:$0xff]
    %v116 = vld [vmem:[%s2 + $0xc0] sm:$0xff]
    %v117 = vld [vmem:[%s2 + $0xc8] sm:$0xff]
    %v118 = vld [vmem:[%s2 + $0xd0] sm:$0xff]
    %v119 = vld [vmem:[%s2 + $0xd8] sm:$0xff]
    %v120 = vld [vmem:[%s2 + $0xe0] sm:$0xff]
    %v121 = vld [vmem:[%s2 + $0xe8] sm:$0xff]
    %v122 = vld [vmem:[%s2 + $0xf0] sm:$0xff]
    %v123 = vld [vmem:[%s2 + $0xf8] sm:$0xff]
    %v124 = vld [vmem:[%s2 + $0x100] sm:$0xff]
    %v125 = vld [vmem:[%s2 + $0x108] sm:$0xff]
    %v126 = vld [vmem:[%s2 + $0x110] sm:$0xff]
    %v127 = vld [vmem:[%s2 + $0x118] sm:$0xff]
    %v128 = vld [vmem:[%s2 + $0x120] sm:$0xff]
    %v129 = vld [vmem:[%s2 + $0x128] sm:$0xff]
    %v130 = vld [vmem:[%s2 + $0x130] sm:$0xff]
    %v131 = vld [vmem:[%s2 + $0x138] sm:$0xff]
    %v132 = vld [vmem:[%s2 + $0x140] sm:$0xff]
    %v133 = vld [vmem:[%s2 + $0x148] sm:$0xff]
    %v134 = vld [vmem:[%s2 + $0x150] sm:$0xff]
    %v135 = vld [vmem:[%s2 + $0x158] sm:$0xff]
    %v136 = vld [vmem:[%s2 + $0x160] sm:$0xff]
    %v137 = vld [vmem:[%s2 + $0x168] sm:$0xff]
    %v138 = vld [vmem:[%s2 + $0x170] sm:$0xff]
    %v139 = vld [vmem:[%s2 + $0x178] sm:$0xff]
    %v140 = vld [vmem:[%s2 + $0x180] sm:$0xff]
    %v141 = vld [vmem:[%s2 + $0x188] sm:$0xff]
    %v142 = vld [vmem:[%s2 + $0x190] sm:$0xff]
    %v143 = vld [vmem:[%s2 + $0x198] sm:$0xff]
    %v144 = vld [vmem:[%s2 + $0x1a0] sm:$0xff]
    %v145 = vld [vmem:[%s2 + $0x1a8] sm:$0xff]
    %v146 = vld [vmem:[%s2 + $0x1b0] sm:$0xff]
    %v147 = vld [vmem:[%s2 + $0x1b8] sm:$0xff]
    %v148 = vld [vmem:[%s2 + $0x1c0] sm:$0xff]
    %v149 = vld [vmem:[%s2 + $0x1c8] sm:$0xff]
    %v150 = vld [vmem:[%s2 + $0x1d0] sm:$0xff]
    %v151 = vld [vmem:[%s2 + $0x1d8] sm:$0xff]
    %v152 = vld [vmem:[%s2 + $0x1e0] sm:$0xff]
    %v153 = vld [vmem:[%s2 + $0x1e8] sm:$0xff]
    %v154 = vld [vmem:[%s2 + $0x1f0] sm:$0xff]
    %v155 = vld [vmem:[%s2 + $0x1f8] sm:$0xff]
    %v156 = vpack.c.bf16 %v93, %v92
    %v157 = vpack.c.bf16 %v95, %v94
    %v158 = vpack.c.bf16 %v97, %v96
    %v159 = vpack.c.bf16 %v99, %v98
    %v160 = vpack.c.bf16 %v101, %v100
    %v161 = vpack.c.bf16 %v103, %v102
    %v162 = vpack.c.bf16 %v105, %v104
    %v163 = vpack.c.bf16 %v107, %v106
    %v164 = vpack.c.bf16 %v109, %v108
    %v165 = vpack.c.bf16 %v111, %v110
    %v166 = vpack.c.bf16 %v113, %v112
    %v167 = vpack.c.bf16 %v115, %v114
    %v168 = vpack.c.bf16 %v117, %v116
    %v169 = vpack.c.bf16 %v119, %v118
    %v170 = vpack.c.bf16 %v121, %v120
    %v171 = vpack.c.bf16 %v123, %v122
    %v172 = vpack.c.bf16 %v125, %v124
    %v173 = vpack.c.bf16 %v127, %v126
    %v174 = vpack.c.bf16 %v129, %v128
    %v175 = vpack.c.bf16 %v131, %v130
    %v176 = vpack.c.bf16 %v133, %v132
    %v177 = vpack.c.bf16 %v135, %v134
    %v178 = vpack.c.bf16 %v137, %v136
    %v179 = vpack.c.bf16 %v139, %v138
    %v180 = vpack.c.bf16 %v141, %v140
    %v181 = vpack.c.bf16 %v143, %v142
    %v182 = vpack.c.bf16 %v145, %v144
    %v183 = vpack.c.bf16 %v147, %v146
    %v184 = vpack.c.bf16 %v149, %v148
    %v185 = vpack.c.bf16 %v151, %v150
    %v186 = vpack.c.bf16 %v153, %v152
    %v187 = vpack.c.bf16 %v155, %v154
    %v188 = vld [vmem:[%s3] sm:$0x3]
    %v189 = vld [vmem:[%s4] sm:$0x1]
    %v191 = vlaneseq
    %v192 = vshrl.u32 %v191, 7
    %v193 = vsub.s32 0, %v192
    %v194 = vrot.slane %v189, %v193
    %vm196 = vcmask 31744
    %v198 = vsel %vm196, %v156, 0
    %v201 = vsel %vm196, %v157, 0
    %v204 = vsel %vm196, %v158, 0
    %v207 = vsel %vm196, %v159, 0
    %v210 = vsel %vm196, %v160, 0
    %v213 = vsel %vm196, %v161, 0
    %v216 = vsel %vm196, %v162, 0
    %v219 = vsel %vm196, %v163, 0
    %v222 = vsel %vm196, %v164, 0
    %v225 = vsel %vm196, %v165, 0
    %v228 = vsel %vm196, %v166, 0
    %v231 = vsel %vm196, %v167, 0
    %v234 = vsel %vm196, %v168, 0
    %v237 = vsel %vm196, %v169, 0
    %v240 = vsel %vm196, %v170, 0
    %v243 = vsel %vm196, %v171, 0
    %v246 = vsel %vm196, %v172, 0
    %v249 = vsel %vm196, %v173, 0
    %v252 = vsel %vm196, %v174, 0
    %v255 = vsel %vm196, %v175, 0
    %v258 = vsel %vm196, %v176, 0
    %v261 = vsel %vm196, %v177, 0
    %v264 = vsel %vm196, %v178, 0
    %v267 = vsel %vm196, %v179, 0
    %v270 = vsel %vm196, %v180, 0
    %v273 = vsel %vm196, %v181, 0
    %v276 = vsel %vm196, %v182, 0
    %v279 = vsel %vm196, %v183, 0
    %v282 = vsel %vm196, %v184, 0
    %v285 = vsel %vm196, %v185, 0
    %v288 = vsel %vm196, %v186, 0
    %v291 = vsel %vm196, %v187, 0
    %vm293 = vcmask 1041408
    %v295 = vsel %vm293, %v188, 0
    %297 = vmatprep.subr.bf16.mxu0 0
    %298 = vmatpush1.bf16.msra.mxu0 %v295
    %299 = vmatprep.subr.bf16.mxu0 0
    %300 = vmatpush1.bf16.msra.mxu0 0
    %301 = vmatprep.subr.bf16.mxu0 0
    %302 = vmatpush1.bf16.msra.mxu0 0
    %303 = vmatprep.subr.bf16.mxu0 0
    %304 = vmatpush1.bf16.msra.mxu0 0
    %305 = vmatprep.subr.bf16.mxu0 0
    %306 = vmatpush1.bf16.msra.mxu0 0
    %307 = vmatprep.subr.bf16.mxu0 0
    %308 = vmatpush1.bf16.msra.mxu0 0
    %309 = vmatprep.subr.bf16.mxu0 0
    %310 = vmatpush1.bf16.msra.mxu0 0
    %311 = vmatprep.subr.bf16.mxu0 0
    %312 = vmatpush1.bf16.msra.mxu0 0
    %313 = vmatprep.subr.bf16.mxu0 0
    %314 = vmatpush1.bf16.msra.mxu0 0
    %315 = vmatprep.subr.bf16.mxu0 0
    %316 = vmatpush1.bf16.msra.mxu0 0
    %317 = vmatprep.subr.bf16.mxu0 0
    %318 = vmatpush1.bf16.msra.mxu0 0
    %319 = vmatprep.subr.bf16.mxu0 0
    %320 = vmatpush1.bf16.msra.mxu0 0
    %321 = vmatprep.subr.bf16.mxu0 0
    %322 = vmatpush1.bf16.msra.mxu0 0
    %323 = vmatprep.subr.bf16.mxu0 0
    %324 = vmatpush1.bf16.msra.mxu0 0
    %325 = vmatprep.subr.bf16.mxu0 0
    %326 = vmatpush1.bf16.msra.mxu0 0
    %327 = vmatprep.subr.bf16.mxu0 0
    %328 = vmatpush1.bf16.msra.mxu0 0
    %329 = vmatprep.mubr.bf16.mxu0 0
    %330 = vmatmul.mubr.bf16.gmra.mrb[0].mxu0 %v198
    %v331 = vpop.f32.mrb[0].mxu0
    %v332 = vadd.f32 %v194, %v331
    %v333 = vpop.f32.mrb[0].mxu0
    %v334 = vpop.f32.mrb[0].mxu0
    %v335 = vadd.f32 %v194, %v334
    %v336 = vpop.f32.mrb[0].mxu0
    %337 = vmatprep.mubr.bf16.mxu0 0
    %338 = vmatmul.mubr.bf16.gmra.mrb[0].mxu0 %v201
    %v339 = vpop.f32.mrb[0].mxu0
    %v340 = vadd.f32 %v194, %v339
    %v341 = vpop.f32.mrb[0].mxu0
    %v342 = vpop.f32.mrb[0].mxu0
    %v343 = vadd.f32 %v194, %v342
    %v344 = vpop.f32.mrb[0].mxu0
    %345 = vmatprep.mubr.bf16.mxu0 0
    %346 = vmatmul.mubr.bf16.gmra.mrb[0].mxu0 %v204
    %v347 = vpop.f32.mrb[0].mxu0
    %v348 = vadd.f32 %v194, %v347
    %v349 = vpop.f32.mrb[0].mxu0
    %v350 = vpop.f32.mrb[0].mxu0
    %v351 = vadd.f32 %v194, %v350
    %v352 = vpop.f32.mrb[0].mxu0
    %353 = vmatprep.mubr.bf16.mxu0 0
    %354 = vmatmul.mubr.bf16.gmra.mrb[0].mxu0 %v207
    %v355 = vpop.f32.mrb[0].mxu0
    %v356 = vadd.f32 %v194, %v355
    %v357 = vpop.f32.mrb[0].mxu0
    %v358 = vpop.f32.mrb[0].mxu0
    %v359 = vadd.f32 %v194, %v358
    %v360 = vpop.f32.mrb[0].mxu0
    %361 = vmatprep.mubr.bf16.mxu0 0
    %362 = vmatmul.mubr.bf16.gmra.mrb[0].mxu0 %v210
    %v363 = vpop.f32.mrb[0].mxu0
    %v364 = vadd.f32 %v194, %v363
    %v365 = vpop.f32.mrb[0].mxu0
    %v366 = vpop.f32.mrb[0].mxu0
    %v367 = vadd.f32 %v194, %v366
    %v368 = vpop.f32.mrb[0].mxu0
    %369 = vmatprep.mubr.bf16.mxu0 0
    %370 = vmatmul.mubr.bf16.gmra.mrb[0].mxu0 %v213
    %v371 = vpop.f32.mrb[0].mxu0
    %v372 = vadd.f32 %v194, %v371
    %v373 = vpop.f32.mrb[0].mxu0
    %v374 = vpop.f32.mrb[0].mxu0
    %v375 = vadd.f32 %v194, %v374
    %v376 = vpop.f32.mrb[0].mxu0
    %377 = vmatprep.mubr.bf16.mxu0 0
    %378 = vmatmul.mubr.bf16.gmra.mrb[0].mxu0 %v216
    %v379 = vpop.f32.mrb[0].mxu0
    %v380 = vadd.f32 %v194, %v379
    %v381 = vpop.f32.mrb[0].mxu0
    %v382 = vpop.f32.mrb[0].mxu0
    %v383 = vadd.f32 %v194, %v382
    %v384 = vpop.f32.mrb[0].mxu0
    %385 = vmatprep.mubr.bf16.mxu0 0
    %386 = vmatmul.mubr.bf16.gmra.mrb[0].mxu0 %v219
    %v387 = vpop.f32.mrb[0].mxu0
    %v388 = vadd.f32 %v194, %v387
    %v389 = vpop.f32.mrb[0].mxu0
    %v390 = vpop.f32.mrb[0].mxu0
    %v391 = vadd.f32 %v194, %v390
    %v392 = vpop.f32.mrb[0].mxu0
    %393 = vmatprep.mubr.bf16.mxu0 0
    %394 = vmatmul.mubr.bf16.gmra.mrb[0].mxu0 %v222
    %v395 = vpop.f32.mrb[0].mxu0
    %v396 = vadd.f32 %v194, %v395
    %v397 = vpop.f32.mrb[0].mxu0
    %v398 = vpop.f32.mrb[0].mxu0
    %v399 = vadd.f32 %v194, %v398
    %v400 = vpop.f32.mrb[0].mxu0
    %401 = vmatprep.mubr.bf16.mxu0 0
    %402 = vmatmul.mubr.bf16.gmra.mrb[0].mxu0 %v225
    %v403 = vpop.f32.mrb[0].mxu0
    %v404 = vadd.f32 %v194, %v403
    %v405 = vpop.f32.mrb[0].mxu0
    %v406 = vpop.f32.mrb[0].mxu0
    %v407 = vadd.f32 %v194, %v406
    %v408 = vpop.f32.mrb[0].mxu0
    %409 = vmatprep.mubr.bf16.mxu0 0
    %410 = vmatmul.mubr.bf16.gmra.mrb[0].mxu0 %v228
    %v411 = vpop.f32.mrb[0].mxu0
    %v412 = vadd.f32 %v194, %v411
    %v413 = vpop.f32.mrb[0].mxu0
    %v414 = vpop.f32.mrb[0].mxu0
    %v415 = vadd.f32 %v194, %v414
    %v416 = vpop.f32.mrb[0].mxu0
    %417 = vmatprep.mubr.bf16.mxu0 0
    %418 = vmatmul.mubr.bf16.gmra.mrb[0].mxu0 %v231
    %v419 = vpop.f32.mrb[0].mxu0
    %v420 = vadd.f32 %v194, %v419
    %v421 = vpop.f32.mrb[0].mxu0
    %v422 = vpop.f32.mrb[0].mxu0
    %v423 = vadd.f32 %v194, %v422
    %v424 = vpop.f32.mrb[0].mxu0
    %425 = vmatprep.mubr.bf16.mxu0 0
    %426 = vmatmul.mubr.bf16.gmra.mrb[0].mxu0 %v234
    %v427 = vpop.f32.mrb[0].mxu0
    %v428 = vadd.f32 %v194, %v427
    %v429 = vpop.f32.mrb[0].mxu0
    %v430 = vpop.f32.mrb[0].mxu0
    %v431 = vadd.f32 %v194, %v430
    %v432 = vpop.f32.mrb[0].mxu0
    %433 = vmatprep.mubr.bf16.mxu0 0
    %434 = vmatmul.mubr.bf16.gmra.mrb[0].mxu0 %v237
    %v435 = vpop.f32.mrb[0].mxu0
    %v436 = vadd.f32 %v194, %v435
    %v437 = vpop.f32.mrb[0].mxu0
    %v438 = vpop.f32.mrb[0].mxu0
    %v439 = vadd.f32 %v194, %v438
    %v440 = vpop.f32.mrb[0].mxu0
    %441 = vmatprep.mubr.bf16.mxu0 0
    %442 = vmatmul.mubr.bf16.gmra.mrb[0].mxu0 %v240
    %v443 = vpop.f32.mrb[0].mxu0
    %v444 = vadd.f32 %v194, %v443
    %v445 = vpop.f32.mrb[0].mxu0
    %v446 = vpop.f32.mrb[0].mxu0
    %v447 = vadd.f32 %v194, %v446
    %v448 = vpop.f32.mrb[0].mxu0
    %449 = vmatprep.mubr.bf16.mxu0 0
    %450 = vmatmul.mubr.bf16.gmra.mrb[0].mxu0 %v243
    %v451 = vpop.f32.mrb[0].mxu0
    %v452 = vadd.f32 %v194, %v451
    %v453 = vpop.f32.mrb[0].mxu0
    %v454 = vpop.f32.mrb[0].mxu0
    %v455 = vadd.f32 %v194, %v454
    %v456 = vpop.f32.mrb[0].mxu0
    %457 = vmatprep.mubr.bf16.mxu0 0
    %458 = vmatmul.mubr.bf16.gmra.mrb[0].mxu0 %v246
    %v459 = vpop.f32.mrb[0].mxu0
    %v460 = vadd.f32 %v194, %v459
    %v461 = vpop.f32.mrb[0].mxu0
    %v462 = vpop.f32.mrb[0].mxu0
    %v463 = vadd.f32 %v194, %v462
    %v464 = vpop.f32.mrb[0].mxu0
    %465 = vmatprep.mubr.bf16.mxu0 0
    %466 = vmatmul.mubr.bf16.gmra.mrb[0].mxu0 %v249
    %v467 = vpop.f32.mrb[0].mxu0
    %v468 = vadd.f32 %v194, %v467
    %v469 = vpop.f32.mrb[0].mxu0
    %v470 = vpop.f32.mrb[0].mxu0
    %v471 = vadd.f32 %v194, %v470
    %v472 = vpop.f32.mrb[0].mxu0
    %473 = vmatprep.mubr.bf16.mxu0 0
    %474 = vmatmul.mubr.bf16.gmra.mrb[0].mxu0 %v252
    %v475 = vpop.f32.mrb[0].mxu0
    %v476 = vadd.f32 %v194, %v475
    %v477 = vpop.f32.mrb[0].mxu0
    %v478 = vpop.f32.mrb[0].mxu0
    %v479 = vadd.f32 %v194, %v478
    %v480 = vpop.f32.mrb[0].mxu0
    %481 = vmatprep.mubr.bf16.mxu0 0
    %482 = vmatmul.mubr.bf16.gmra.mrb[0].mxu0 %v255
    %v483 = vpop.f32.mrb[0].mxu0
    %v484 = vadd.f32 %v194, %v483
    %v485 = vpop.f32.mrb[0].mxu0
    %v486 = vpop.f32.mrb[0].mxu0
    %v487 = vadd.f32 %v194, %v486
    %v488 = vpop.f32.mrb[0].mxu0
    %489 = vmatprep.mubr.bf16.mxu0 0
    %490 = vmatmul.mubr.bf16.gmra.mrb[0].mxu0 %v258
    %v491 = vpop.f32.mrb[0].mxu0
    %v492 = vadd.f32 %v194, %v491
    %v493 = vpop.f32.mrb[0].mxu0
    %v494 = vpop.f32.mrb[0].mxu0
    %v495 = vadd.f32 %v194, %v494
    %v496 = vpop.f32.mrb[0].mxu0
    %497 = vmatprep.mubr.bf16.mxu0 0
    %498 = vmatmul.mubr.bf16.gmra.mrb[0].mxu0 %v261
    %v499 = vpop.f32.mrb[0].mxu0
    %v500 = vadd.f32 %v194, %v499
    %v501 = vpop.f32.mrb[0].mxu0
    %v502 = vpop.f32.mrb[0].mxu0
    %v503 = vadd.f32 %v194, %v502
    %v504 = vpop.f32.mrb[0].mxu0
    %505 = vmatprep.mubr.bf16.mxu0 0
    %506 = vmatmul.mubr.bf16.gmra.mrb[0].mxu0 %v264
    %v507 = vpop.f32.mrb[0].mxu0
    %v508 = vadd.f32 %v194, %v507
    %v509 = vpop.f32.mrb[0].mxu0
    %v510 = vpop.f32.mrb[0].mxu0
    %v511 = vadd.f32 %v194, %v510
    %v512 = vpop.f32.mrb[0].mxu0
    %513 = vmatprep.mubr.bf16.mxu0 0
    %514 = vmatmul.mubr.bf16.gmra.mrb[0].mxu0 %v267
    %v515 = vpop.f32.mrb[0].mxu0
    %v516 = vadd.f32 %v194, %v515
    %v517 = vpop.f32.mrb[0].mxu0
    %v518 = vpop.f32.mrb[0].mxu0
    %v519 = vadd.f32 %v194, %v518
    %v520 = vpop.f32.mrb[0].mxu0
    %521 = vmatprep.mubr.bf16.mxu0 0
    %522 = vmatmul.mubr.bf16.gmra.mrb[0].mxu0 %v270
    %v523 = vpop.f32.mrb[0].mxu0
    %v524 = vadd.f32 %v194, %v523
    %v525 = vpop.f32.mrb[0].mxu0
    %v526 = vpop.f32.mrb[0].mxu0
    %v527 = vadd.f32 %v194, %v526
    %v528 = vpop.f32.mrb[0].mxu0
    %529 = vmatprep.mubr.bf16.mxu0 0
    %530 = vmatmul.mubr.bf16.gmra.mrb[0].mxu0 %v273
    %v531 = vpop.f32.mrb[0].mxu0
    %v532 = vadd.f32 %v194, %v531
    %v533 = vpop.f32.mrb[0].mxu0
    %v534 = vpop.f32.mrb[0].mxu0
    %v535 = vadd.f32 %v194, %v534
    %v536 = vpop.f32.mrb[0].mxu0
    %537 = vmatprep.mubr.bf16.mxu0 0
    %538 = vmatmul.mubr.bf16.gmra.mrb[0].mxu0 %v276
    %v539 = vpop.f32.mrb[0].mxu0
    %v540 = vadd.f32 %v194, %v539
    %v541 = vpop.f32.mrb[0].mxu0
    %v542 = vpop.f32.mrb[0].mxu0
    %v543 = vadd.f32 %v194, %v542
    %v544 = vpop.f32.mrb[0].mxu0
    %545 = vmatprep.mubr.bf16.mxu0 0
    %546 = vmatmul.mubr.bf16.gmra.mrb[0].mxu0 %v279
    %v547 = vpop.f32.mrb[0].mxu0
    %v548 = vadd.f32 %v194, %v547
    %v549 = vpop.f32.mrb[0].mxu0
    %v550 = vpop.f32.mrb[0].mxu0
    %v551 = vadd.f32 %v194, %v550
    %v552 = vpop.f32.mrb[0].mxu0
    %553 = vmatprep.mubr.bf16.mxu0 0
    %554 = vmatmul.mubr.bf16.gmra.mrb[0].mxu0 %v282
    %v555 = vpop.f32.mrb[0].mxu0
    %v556 = vadd.f32 %v194, %v555
    %v557 = vpop.f32.mrb[0].mxu0
    %v558 = vpop.f32.mrb[0].mxu0
    %v559 = vadd.f32 %v194, %v558
    %v560 = vpop.f32.mrb[0].mxu0
    %561 = vmatprep.mubr.bf16.mxu0 0
    %562 = vmatmul.mubr.bf16.gmra.mrb[0].mxu0 %v285
    %v563 = vpop.f32.mrb[0].mxu0
    %v564 = vadd.f32 %v194, %v563
    %v565 = vpop.f32.mrb[0].mxu0
    %v566 = vpop.f32.mrb[0].mxu0
    %v567 = vadd.f32 %v194, %v566
    %v568 = vpop.f32.mrb[0].mxu0
    %569 = vmatprep.mubr.bf16.mxu0 0
    %570 = vmatmul.mubr.bf16.gmra.mrb[0].mxu0 %v288
    %v571 = vpop.f32.mrb[0].mxu0
    %v572 = vadd.f32 %v194, %v571
    %v573 = vpop.f32.mrb[0].mxu0
    %v574 = vpop.f32.mrb[0].mxu0
    %v575 = vadd.f32 %v194, %v574
    %v576 = vpop.f32.mrb[0].mxu0
    %577 = vmatprep.mubr.bf16.mxu0 0
    %578 = vmatmul.mubr.bf16.gmra.mrb[0].mxu0 %v291
    %v579 = vpop.f32.mrb[0].mxu0
    %v580 = vadd.f32 %v194, %v579
    %v581 = vpop.f32.mrb[0].mxu0
    %v582 = vpop.f32.mrb[0].mxu0
    %v583 = vadd.f32 %v194, %v582
    %v584 = vpop.f32.mrb[0].mxu0
    %585 = vdwg.mxu0
    %v586 = vmax.f32 %v332, 0.0
    %v587 = vmax.f32 %v335, 0.0
    %v588 = vmax.f32 %v340, 0.0
    %v589 = vmax.f32 %v343, 0.0
    %v590 = vmax.f32 %v348, 0.0
    %v591 = vmax.f32 %v351, 0.0
    %v592 = vmax.f32 %v356, 0.0
    %v593 = vmax.f32 %v359, 0.0
    %v594 = vmax.f32 %v364, 0.0
    %v595 = vmax.f32 %v367, 0.0
    %v596 = vmax.f32 %v372, 0.0
    %v597 = vmax.f32 %v375, 0.0
    %v598 = vmax.f32 %v380, 0.0
    %v599 = vmax.f32 %v383, 0.0
    %v600 = vmax.f32 %v388, 0.0
    %v601 = vmax.f32 %v391, 0.0
    %v602 = vmax.f32 %v396, 0.0
    %v603 = vmax.f32 %v399, 0.0
    %v604 = vmax.f32 %v404, 0.0
    %v605 = vmax.f32 %v407, 0.0
    %v606 = vmax.f32 %v412, 0.0
    %v607 = vmax.f32 %v415, 0.0
    %v608 = vmax.f32 %v420, 0.0
    %v609 = vmax.f32 %v423, 0.0
    %v610 = vmax.f32 %v428, 0.0
    %v611 = vmax.f32 %v431, 0.0
    %v612 = vmax.f32 %v436, 0.0
    %v613 = vmax.f32 %v439, 0.0
    %v614 = vmax.f32 %v444, 0.0
    %v615 = vmax.f32 %v447, 0.0
    %v616 = vmax.f32 %v452, 0.0
    %v617 = vmax.f32 %v455, 0.0
    %v618 = vmax.f32 %v460, 0.0
    %v619 = vmax.f32 %v463, 0.0
    %v620 = vmax.f32 %v468, 0.0
    %v621 = vmax.f32 %v471, 0.0
    %v622 = vmax.f32 %v476, 0.0
    %v623 = vmax.f32 %v479, 0.0
    %v624 = vmax.f32 %v484, 0.0
    %v625 = vmax.f32 %v487, 0.0
    %v626 = vmax.f32 %v492, 0.0
    %v627 = vmax.f32 %v495, 0.0
    %v628 = vmax.f32 %v500, 0.0
    %v629 = vmax.f32 %v503, 0.0
    %v630 = vmax.f32 %v508, 0.0
    %v631 = vmax.f32 %v511, 0.0
    %v632 = vmax.f32 %v516, 0.0
    %v633 = vmax.f32 %v519, 0.0
    %v634 = vmax.f32 %v524, 0.0
    %v635 = vmax.f32 %v527, 0.0
    %v636 = vmax.f32 %v532, 0.0
    %v637 = vmax.f32 %v535, 0.0
    %v638 = vmax.f32 %v540, 0.0
    %v639 = vmax.f32 %v543, 0.0
    %v640 = vmax.f32 %v548, 0.0
    %v641 = vmax.f32 %v551, 0.0
    %v642 = vmax.f32 %v556, 0.0
    %v643 = vmax.f32 %v559, 0.0
    %v644 = vmax.f32 %v564, 0.0
    %v645 = vmax.f32 %v567, 0.0
    %v646 = vmax.f32 %v572, 0.0
    %v647 = vmax.f32 %v575, 0.0
    %v648 = vmax.f32 %v580, 0.0
    %v649 = vmax.f32 %v583, 0.0
    %v650 = vld [vmem:[%s5] sm:$0xff]
    %v651 = vld [vmem:[%s5 + $0x8] sm:$0xff]
    %v652 = vld [vmem:[%s5 + $0x10] sm:$0xff]
    %v653 = vld [vmem:[%s5 + $0x18] sm:$0xff]
    %v654 = vld [vmem:[%s5 + $0x20] sm:$0xff]
    %v655 = vld [vmem:[%s5 + $0x28] sm:$0xff]
    %v656 = vld [vmem:[%s5 + $0x30] sm:$0xff]
    %v657 = vld [vmem:[%s5 + $0x38] sm:$0xff]
    %v658 = vpack.c.bf16 %v587, %v586
    %v659 = vpack.c.bf16 %v589, %v588
    %v660 = vpack.c.bf16 %v591, %v590
    %v661 = vpack.c.bf16 %v593, %v592
    %v662 = vpack.c.bf16 %v595, %v594
    %v663 = vpack.c.bf16 %v597, %v596
    %v664 = vpack.c.bf16 %v599, %v598
    %v665 = vpack.c.bf16 %v601, %v600
    %v666 = vpack.c.bf16 %v603, %v602
    %v667 = vpack.c.bf16 %v605, %v604
    %v668 = vpack.c.bf16 %v607, %v606
    %v669 = vpack.c.bf16 %v609, %v608
    %v670 = vpack.c.bf16 %v611, %v610
    %v671 = vpack.c.bf16 %v613, %v612
    %v672 = vpack.c.bf16 %v615, %v614
    %v673 = vpack.c.bf16 %v617, %v616
    %v674 = vpack.c.bf16 %v619, %v618
    %v675 = vpack.c.bf16 %v621, %v620
    %v676 = vpack.c.bf16 %v623, %v622
    %v677 = vpack.c.bf16 %v625, %v624
    %v678 = vpack.c.bf16 %v627, %v626
    %v679 = vpack.c.bf16 %v629, %v628
    %v680 = vpack.c.bf16 %v631, %v630
    %v681 = vpack.c.bf16 %v633, %v632
    %v682 = vpack.c.bf16 %v635, %v634
    %v683 = vpack.c.bf16 %v637, %v636
    %v684 = vpack.c.bf16 %v639, %v638
    %v685 = vpack.c.bf16 %v641, %v640
    %v686 = vpack.c.bf16 %v643, %v642
    %v687 = vpack.c.bf16 %v645, %v644
    %v688 = vpack.c.bf16 %v647, %v646
    %v689 = vpack.c.bf16 %v649, %v648
    %v698 = vunpack.c.l.b16 %v650
    %v699 = vunpack.c.h.b16 %v650
    %v700 = vunpack.c.l.b16 %v651
    %v701 = vunpack.c.h.b16 %v651
    %v702 = vunpack.c.l.b16 %v652
    %v703 = vunpack.c.h.b16 %v652
    %v704 = vunpack.c.l.b16 %v653
    %v705 = vunpack.c.h.b16 %v653
    %v706 = vunpack.c.l.b16 %v654
    %v707 = vunpack.c.h.b16 %v654
    %v708 = vunpack.c.l.b16 %v655
    %v709 = vunpack.c.h.b16 %v655
    %v710 = vunpack.c.l.b16 %v656
    %v711 = vunpack.c.h.b16 %v656
    %v712 = vunpack.c.l.b16 %v657
    %v713 = vunpack.c.h.b16 %v657
    %v714 = vpack.c.b16 %v702, %v698
    %v715 = vpack.c.b16 %v703, %v699
    %v716 = vpack.c.b16 %v704, %v700
    %v717 = vpack.c.b16 %v705, %v701
    %v718 = vpack.c.b16 %v710, %v706
    %v719 = vpack.c.b16 %v711, %v707
    %v720 = vpack.c.b16 %v712, %v708
    %v721 = vpack.c.b16 %v713, %v709
    %730 = vmatprep.subr.bf16.mxu0 0
    %731 = vmatpush1.bf16.msra.mxu0 %v658
    %732 = vmatprep.subr.bf16.mxu0 0
    %733 = vmatpush1.bf16.msra.mxu0 %v659
    %734 = vmatprep.subr.bf16.mxu0 0
    %735 = vmatpush1.bf16.msra.mxu0 %v660
    %736 = vmatprep.subr.bf16.mxu0 0
    %737 = vmatpush1.bf16.msra.mxu0 %v661
    %738 = vmatprep.subr.bf16.mxu0 0
    %739 = vmatpush1.bf16.msra.mxu0 %v662
    %740 = vmatprep.subr.bf16.mxu0 0
    %741 = vmatpush1.bf16.msra.mxu0 %v663
    %742 = vmatprep.subr.bf16.mxu0 0
    %743 = vmatpush1.bf16.msra.mxu0 %v664
    %744 = vmatprep.subr.bf16.mxu0 0
    %745 = vmatpush1.bf16.msra.mxu0 %v665
    %746 = vmatprep.subr.bf16.mxu0 0
    %747 = vmatpush1.bf16.msra.mxu0 %v666
    %748 = vmatprep.subr.bf16.mxu0 0
    %749 = vmatpush1.bf16.msra.mxu0 %v667
    %750 = vmatprep.subr.bf16.mxu0 0
    %751 = vmatpush1.bf16.msra.mxu0 %v668
    %752 = vmatprep.subr.bf16.mxu0 0
    %753 = vmatpush1.bf16.msra.mxu0 %v669
    %754 = vmatprep.subr.bf16.mxu0 0
    %755 = vmatpush1.bf16.msra.mxu0 %v670
    %756 = vmatprep.subr.bf16.mxu0 0
    %757 = vmatpush1.bf16.msra.mxu0 %v671
    %758 = vmatprep.subr.bf16.mxu0 0
    %759 = vmatpush1.bf16.msra.mxu0 %v672
    %760 = vmatprep.subr.bf16.mxu0 0
    %761 = vmatpush1.bf16.msra.mxu0 %v673
    %762 = vmatprep.mubr.bf16.mxu0 %v715
    %763 = vmatmul.mubr.bf16.gmra.mrb[0].mxu0 %v714
    %v764 = vpop.f32.mrb[0].mxu0
    %v765 = vadd.f32 0.0, %v764
    %v766 = vpop.f32.mrb[0].mxu0
    %v767 = vpop.f32.mrb[0].mxu0
    %v768 = vadd.f32 0.0, %v767
    %v769 = vpop.f32.mrb[0].mxu0
    %770 = vmatprep.mubr.bf16.mxu0 %v719
    %771 = vmatmul.mubr.bf16.gmra.mrb[0].mxu0 %v718
    %v772 = vpop.f32.mrb[0].mxu0
    %v773 = vadd.f32 0.0, %v772
    %v774 = vpop.f32.mrb[0].mxu0
    %v775 = vpop.f32.mrb[0].mxu0
    %v776 = vadd.f32 0.0, %v775
    %v777 = vpop.f32.mrb[0].mxu0
    %778 = vdwg.mxu0
    %779 = vmatprep.subr.bf16.mxu0 0
    %780 = vmatpush1.bf16.msra.mxu0 %v674
    %781 = vmatprep.subr.bf16.mxu0 0
    %782 = vmatpush1.bf16.msra.mxu0 %v675
    %783 = vmatprep.subr.bf16.mxu0 0
    %784 = vmatpush1.bf16.msra.mxu0 %v676
    %785 = vmatprep.subr.bf16.mxu0 0
    %786 = vmatpush1.bf16.msra.mxu0 %v677
    %787 = vmatprep.subr.bf16.mxu0 0
    %788 = vmatpush1.bf16.msra.mxu0 %v678
    %789 = vmatprep.subr.bf16.mxu0 0
    %790 = vmatpush1.bf16.msra.mxu0 %v679
    %791 = vmatprep.subr.bf16.mxu0 0
    %792 = vmatpush1.bf16.msra.mxu0 %v680
    %793 = vmatprep.subr.bf16.mxu0 0
    %794 = vmatpush1.bf16.msra.mxu0 %v681
    %795 = vmatprep.subr.bf16.mxu0 0
    %796 = vmatpush1.bf16.msra.mxu0 %v682
    %797 = vmatprep.subr.bf16.mxu0 0
    %798 = vmatpush1.bf16.msra.mxu0 %v683
    %799 = vmatprep.subr.bf16.mxu0 0
    %800 = vmatpush1.bf16.msra.mxu0 %v684
    %801 = vmatprep.subr.bf16.mxu0 0
    %802 = vmatpush1.bf16.msra.mxu0 %v685
    %803 = vmatprep.subr.bf16.mxu0 0
    %804 = vmatpush1.bf16.msra.mxu0 %v686
    %805 = vmatprep.subr.bf16.mxu0 0
    %806 = vmatpush1.bf16.msra.mxu0 %v687
    %807 = vmatprep.subr.bf16.mxu0 0
    %808 = vmatpush1.bf16.msra.mxu0 %v688
    %809 = vmatprep.subr.bf16.mxu0 0
    %810 = vmatpush1.bf16.msra.mxu0 %v689
    %811 = vmatprep.mubr.bf16.mxu0 %v717
    %812 = vmatmul.mubr.bf16.gmra.mrb[0].mxu0 %v716
    %v813 = vpop.f32.mrb[0].mxu0
    %v814 = vadd.f32 %v765, %v813
    %v815 = vpop.f32.mrb[0].mxu0
    %v816 = vpop.f32.mrb[0].mxu0
    %v817 = vadd.f32 %v768, %v816
    %v818 = vpop.f32.mrb[0].mxu0
    %819 = vmatprep.mubr.bf16.mxu0 %v721
    %820 = vmatmul.mubr.bf16.gmra.mrb[0].mxu0 %v720
    %v821 = vpop.f32.mrb[0].mxu0
    %v822 = vadd.f32 %v773, %v821
    %v823 = vpop.f32.mrb[0].mxu0
    %v824 = vpop.f32.mrb[0].mxu0
    %v825 = vadd.f32 %v776, %v824
    %v826 = vpop.f32.mrb[0].mxu0
    %827 = vdwg.mxu0
    %v828 = vpack.c.bf16 %v817, %v814
    %v829 = vpack.c.bf16 %v825, %v822
    %vm830 = vcmask 261120
    %v831 = vsel %vm830, %v814, 0.0
    %v832 = vsel %vm830, %v817, 0.0
    %v833 = vadd.f32 %v831, %v832
    %v834 = vrot.slane %v833, 4
    %v835 = vadd.f32 %v833, %v834
    %v836 = vrot.slane %v835, 2
    %v837 = vadd.f32 %v835, %v836
    %v838 = vrot.slane %v837, 1
    %v839 = vadd.f32 %v837, %v838
    %v840 = vsel %vm830, %v822, 0.0
    %v841 = vsel %vm830, %v825, 0.0
    %v842 = vadd.f32 %v840, %v841
    %v843 = vrot.slane %v842, 4
    %v844 = vadd.f32 %v842, %v843
    %v845 = vrot.slane %v844, 2
    %v846 = vadd.f32 %v844, %v845
    %v847 = vrot.slane %v846, 1
    %v848 = vadd.f32 %v846, %v847
    %v849 = vrcp.pop 16.0
    %v850 = vmul.f32 %v839, %v849
    %v851 = vmul.f32 %v848, %v849
    %v852 = vpack.c.bf16 %v850, %v850
    %v853 = vpack.c.bf16 %v851, %v851
    %v854 = vld [vmem:[%s7] sm:$0xf]
    %v855 = vld [vmem:[%s7 + $0x4] sm:$0xf]
    %v856 = vld [vmem:[%s7 + $0x8] sm:$0xf]
    %v857 = vld [vmem:[%s7 + $0xc] sm:$0xf]
    %v858 = vld [vmem:[%s8] sm:$0x1]
    %v860 = vlaneseq
    %v861 = vshrl.u32 %v860, 7
    %v862 = vsub.s32 0, %v861
    %v863 = vrot.slane %v858, %v862
    %v867 = vunpack.c.l.b16 %v852
    %v868 = vunpack.c.l.b16 %v853
    %vm869 = vcmask 1041409
    %v870 = vsel %vm869, %v868, %v867
    %v871 = vpack.c.b16 %v870, %v870
    %v876 = vunpack.c.l.b16 %v854
    %v877 = vunpack.c.l.b16 %v855
    %v878 = vunpack.c.l.b16 %v856
    %v879 = vunpack.c.l.b16 %v857
    %v880 = vpack.c.b16 %v877, %v876
    %v881 = vpack.c.b16 %v879, %v878
    %v885 = vsel %vm830, %v871, 0
    %887 = vmatprep.subr.bf16.mxu0 0
    %888 = vmatpush1.bf16.msra.mxu0 %v880
    %889 = vmatprep.subr.bf16.mxu0 0
    %890 = vmatpush1.bf16.msra.mxu0 %v881
    %891 = vmatprep.subr.bf16.mxu0 0
    %892 = vmatpush1.bf16.msra.mxu0 0
    %893 = vmatprep.subr.bf16.mxu0 0
    %894 = vmatpush1.bf16.msra.mxu0 0
    %895 = vmatprep.subr.bf16.mxu0 0
    %896 = vmatpush1.bf16.msra.mxu0 0
    %897 = vmatprep.subr.bf16.mxu0 0
    %898 = vmatpush1.bf16.msra.mxu0 0
    %899 = vmatprep.subr.bf16.mxu0 0
    %900 = vmatpush1.bf16.msra.mxu0 0
    %901 = vmatprep.subr.bf16.mxu0 0
    %902 = vmatpush1.bf16.msra.mxu0 0
    %903 = vmatprep.subr.bf16.mxu0 0
    %904 = vmatpush1.bf16.msra.mxu0 0
    %905 = vmatprep.subr.bf16.mxu0 0
    %906 = vmatpush1.bf16.msra.mxu0 0
    %907 = vmatprep.subr.bf16.mxu0 0
    %908 = vmatpush1.bf16.msra.mxu0 0
    %909 = vmatprep.subr.bf16.mxu0 0
    %910 = vmatpush1.bf16.msra.mxu0 0
    %911 = vmatprep.subr.bf16.mxu0 0
    %912 = vmatpush1.bf16.msra.mxu0 0
    %913 = vmatprep.subr.bf16.mxu0 0
    %914 = vmatpush1.bf16.msra.mxu0 0
    %915 = vmatprep.subr.bf16.mxu0 0
    %916 = vmatpush1.bf16.msra.mxu0 0
    %917 = vmatprep.subr.bf16.mxu0 0
    %918 = vmatpush1.bf16.msra.mxu0 0
    %919 = vmatprep.mubr.bf16.mxu0 0
    %920 = vmatmul.mubr.bf16.gmra.mrb[0].mxu0 %v885
    %v921 = vpop.f32.mrb[0].mxu0
    %v922 = vadd.f32 %v863, %v921
    %v923 = vpop.f32.mrb[0].mxu0
    %v924 = vpop.f32.mrb[0].mxu0
    %v925 = vpop.f32.mrb[0].mxu0
    %926 = vdwg.mxu0
    %v927 = vld [vmem:[%s9] sm:$0xf]
    %v928 = vld [vmem:[%s9 + $0x4] sm:$0xf]
    %v929 = vld [vmem:[%s9 + $0x8] sm:$0xf]
    %v930 = vld [vmem:[%s9 + $0xc] sm:$0xf]
    %v931 = vld [vmem:[%s10] sm:$0x1]
    %v933 = vlaneseq
    %v934 = vshrl.u32 %v933, 7
    %v935 = vsub.s32 0, %v934
    %v936 = vrot.slane %v931, %v935
    %v942 = vunpack.c.l.b16 %v927
    %v943 = vunpack.c.l.b16 %v928
    %v944 = vunpack.c.l.b16 %v929
    %v945 = vunpack.c.l.b16 %v930
    %v946 = vpack.c.b16 %v943, %v942
    %v947 = vpack.c.b16 %v945, %v944
    %950 = vmatprep.subr.bf16.mxu0 0
    %951 = vmatpush1.bf16.msra.mxu0 %v946
    %952 = vmatprep.subr.bf16.mxu0 0
    %953 = vmatpush1.bf16.msra.mxu0 %v947
    %954 = vmatprep.subr.bf16.mxu0 0
    %955 = vmatpush1.bf16.msra.mxu0 0
    %956 = vmatprep.subr.bf16.mxu0 0
    %957 = vmatpush1.bf16.msra.mxu0 0
    %958 = vmatprep.subr.bf16.mxu0 0
    %959 = vmatpush1.bf16.msra.mxu0 0
    %960 = vmatprep.subr.bf16.mxu0 0
    %961 = vmatpush1.bf16.msra.mxu0 0
    %962 = vmatprep.subr.bf16.mxu0 0
    %963 = vmatpush1.bf16.msra.mxu0 0
    %964 = vmatprep.subr.bf16.mxu0 0
    %965 = vmatpush1.bf16.msra.mxu0 0
    %966 = vmatprep.subr.bf16.mxu0 0
    %967 = vmatpush1.bf16.msra.mxu0 0
    %968 = vmatprep.subr.bf16.mxu0 0
    %969 = vmatpush1.bf16.msra.mxu0 0
    %970 = vmatprep.subr.bf16.mxu0 0
    %971 = vmatpush1.bf16.msra.mxu0 0
    %972 = vmatprep.subr.bf16.mxu0 0
    %973 = vmatpush1.bf16.msra.mxu0 0
    %974 = vmatprep.subr.bf16.mxu0 0
    %975 = vmatpush1.bf16.msra.mxu0 0
    %976 = vmatprep.subr.bf16.mxu0 0
    %977 = vmatpush1.bf16.msra.mxu0 0
    %978 = vmatprep.subr.bf16.mxu0 0
    %979 = vmatpush1.bf16.msra.mxu0 0
    %980 = vmatprep.subr.bf16.mxu0 0
    %981 = vmatpush1.bf16.msra.mxu0 0
    %982 = vmatprep.mubr.bf16.mxu0 0
    %983 = vmatmul.mubr.bf16.gmra.mrb[0].mxu0 %v885
    %v984 = vpop.f32.mrb[0].mxu0
    %v985 = vadd.f32 %v936, %v984
    %v986 = vpop.f32.mrb[0].mxu0
    %v987 = vpop.f32.mrb[0].mxu0
    %v988 = vpop.f32.mrb[0].mxu0
    %989 = vdwg.mxu0
    %v990 = vld [vmem:[%s11] sm:$0xf]
    %v991 = vld [vmem:[%s11 + $0x4] sm:$0xf]
    %v992 = vld [vmem:[%s11 + $0x8] sm:$0xf]
    %v993 = vld [vmem:[%s11 + $0xc] sm:$0xf]
    %v994 = vld [vmem:[%s12] sm:$0x1]
    %v996 = vlaneseq
    %v997 = vshrl.u32 %v996, 7
    %v998 = vsub.s32 0, %v997
    %v999 = vrot.slane %v994, %v998
    %v1005 = vunpack.c.l.b16 %v990
    %v1006 = vunpack.c.l.b16 %v991
    %v1007 = vunpack.c.l.b16 %v992
    %v1008 = vunpack.c.l.b16 %v993
    %v1009 = vpack.c.b16 %v1006, %v1005
    %v1010 = vpack.c.b16 %v1008, %v1007
    %v1014 = vsel %vm830, %v828, 0
    %v1017 = vsel %vm830, %v829, 0
    %1019 = vmatprep.subr.bf16.mxu0 0
    %1020 = vmatpush1.bf16.msra.mxu0 %v1009
    %1021 = vmatprep.subr.bf16.mxu0 0
    %1022 = vmatpush1.bf16.msra.mxu0 %v1010
    %1023 = vmatprep.subr.bf16.mxu0 0
    %1024 = vmatpush1.bf16.msra.mxu0 0
    %1025 = vmatprep.subr.bf16.mxu0 0
    %1026 = vmatpush1.bf16.msra.mxu0 0
    %1027 = vmatprep.subr.bf16.mxu0 0
    %1028 = vmatpush1.bf16.msra.mxu0 0
    %1029 = vmatprep.subr.bf16.mxu0 0
    %1030 = vmatpush1.bf16.msra.mxu0 0
    %1031 = vmatprep.subr.bf16.mxu0 0
    %1032 = vmatpush1.bf16.msra.mxu0 0
    %1033 = vmatprep.subr.bf16.mxu0 0
    %1034 = vmatpush1.bf16.msra.mxu0 0
    %1035 = vmatprep.subr.bf16.mxu0 0
    %1036 = vmatpush1.bf16.msra.mxu0 0
    %1037 = vmatprep.subr.bf16.mxu0 0
    %1038 = vmatpush1.bf16.msra.mxu0 0
    %1039 = vmatprep.subr.bf16.mxu0 0
    %1040 = vmatpush1.bf16.msra.mxu0 0
    %1041 = vmatprep.subr.bf16.mxu0 0
    %1042 = vmatpush1.bf16.msra.mxu0 0
    %1043 = vmatprep.subr.bf16.mxu0 0
    %1044 = vmatpush1.bf16.msra.mxu0 0
    %1045 = vmatprep.subr.bf16.mxu0 0
    %1046 = vmatpush1.bf16.msra.mxu0 0
    %1047 = vmatprep.subr.bf16.mxu0 0
    %1048 = vmatpush1.bf16.msra.mxu0 0
    %1049 = vmatprep.subr.bf16.mxu0 0
    %1050 = vmatpush1.bf16.msra.mxu0 0
    %1051 = vmatprep.mubr.bf16.mxu0 0
    %1052 = vmatmul.mubr.bf16.gmra.mrb[0].mxu0 %v1014
    %v1053 = vpop.f32.mrb[0].mxu0
    %v1054 = vadd.f32 %v999, %v1053
    %v1055 = vpop.f32.mrb[0].mxu0
    %v1056 = vpop.f32.mrb[0].mxu0
    %v1057 = vadd.f32 %v999, %v1056
    %v1058 = vpop.f32.mrb[0].mxu0
    %1059 = vmatprep.mubr.bf16.mxu0 0
    %1060 = vmatmul.mubr.bf16.gmra.mrb[0].mxu0 %v1017
    %v1061 = vpop.f32.mrb[0].mxu0
    %v1062 = vadd.f32 %v999, %v1061
    %v1063 = vpop.f32.mrb[0].mxu0
    %v1064 = vpop.f32.mrb[0].mxu0
    %v1065 = vadd.f32 %v999, %v1064
    %v1066 = vpop.f32.mrb[0].mxu0
    %1067 = vdwg.mxu0
    %1068 = vst [vmem:[#allocation2] sm:$0x3] 0.0
    %v1069 = vld [vmem:[%s1] sm:$0x3]
    %v1070 = vld [vmem:[%s15] sm:$0x1]
    %v1071 = vld [vmem:[#allocation3] sm:$0x1]
    %v1072 = vpack.c.bf16 %v922, %v922
    %v1073 = vld [vmem:[%s13] sm:$0xf]
    %v1074 = vld [vmem:[%s13 + $0x4] sm:$0xf]
    %v1075 = vld [vmem:[%s13 + $0x8] sm:$0xf]
    %v1076 = vld [vmem:[%s13 + $0xc] sm:$0xf]
    %v1077 = vld [vmem:[%s14] sm:$0x1]
    %v1079 = vlaneseq
    %v1080 = vshrl.u32 %v1079, 7
    %v1081 = vsub.s32 0, %v1080
    %v1082 = vrot.slane %v1077, %v1081
    %v1088 = vunpack.c.l.b16 %v1073
    %v1089 = vunpack.c.l.b16 %v1074
    %v1090 = vunpack.c.l.b16 %v1075
    %v1091 = vunpack.c.l.b16 %v1076
    %v1092 = vpack.c.b16 %v1089, %v1088
    %v1093 = vpack.c.b16 %v1091, %v1090
    %v1097 = vsel %vm830, %v1072, 0
    %1099 = vmatprep.subr.bf16.mxu0 0
    %1100 = vmatpush1.bf16.msra.mxu0 %v1092
    %1101 = vmatprep.subr.bf16.mxu0 0
    %1102 = vmatpush1.bf16.msra.mxu0 %v1093
    %1103 = vmatprep.subr.bf16.mxu0 0
    %1104 = vmatpush1.bf16.msra.mxu0 0
    %1105 = vmatprep.subr.bf16.mxu0 0
    %1106 = vmatpush1.bf16.msra.mxu0 0
    %1107 = vmatprep.subr.bf16.mxu0 0
    %1108 = vmatpush1.bf16.msra.mxu0 0
    %1109 = vmatprep.subr.bf16.mxu0 0
    %1110 = vmatpush1.bf16.msra.mxu0 0
    %1111 = vmatprep.subr.bf16.mxu0 0
    %1112 = vmatpush1.bf16.msra.mxu0 0
    %1113 = vmatprep.subr.bf16.mxu0 0
    %1114 = vmatpush1.bf16.msra.mxu0 0
    %1115 = vmatprep.subr.bf16.mxu0 0
    %1116 = vmatpush1.bf16.msra.mxu0 0
    %1117 = vmatprep.subr.bf16.mxu0 0
    %1118 = vmatpush1.bf16.msra.mxu0 0
    %1119 = vmatprep.subr.bf16.mxu0 0
    %1120 = vmatpush1.bf16.msra.mxu0 0
    %1121 = vmatprep.subr.bf16.mxu0 0
    %1122 = vmatpush1.bf16.msra.mxu0 0
    %1123 = vmatprep.subr.bf16.mxu0 0
    %1124 = vmatpush1.bf16.msra.mxu0 0
    %1125 = vmatprep.subr.bf16.mxu0 0
    %1126 = vmatpush1.bf16.msra.mxu0 0
    %1127 = vmatprep.subr.bf16.mxu0 0
    %1128 = vmatpush1.bf16.msra.mxu0 0
    %1129 = vmatprep.subr.bf16.mxu0 0
    %1130 = vmatpush1.bf16.msra.mxu0 0
    %1131 = vmatprep.mubr.bf16.mxu0 0
    %1132 = vmatmul.mubr.bf16.gmra.mrb[0].mxu0 %v1097
    %v1133 = vpop.f32.mrb[0].mxu0
    %v1134 = vadd.f32 %v1082, %v1133
    %v1135 = vpop.f32.mrb[0].mxu0
    %v1136 = vpop.f32.mrb[0].mxu0
    %v1137 = vpop.f32.mrb[0].mxu0
    %1138 = vdwg.mxu0
    %v1141 = vunpack.c.l.s4 1966171168
    %v1142 = vunpack.c.0.s8 %v1141
    %v1143 = vlaneseq
    %v1144 = vshrl.u32 %v1143, 7
    %v1145 = vsub.s32 %v1142, %v1144
    %v1146 = vrot.slane %v1134, %v1145
    %v1147 = vcombine.high %v1146, %v1146
    %v1149 = vunpack.c.l.s4 1966171168
    %v1150 = vunpack.c.0.s8 %v1149
    %v1151 = vlaneseq
    %v1152 = vshrl.u32 %v1151, 7
    %v1153 = vsub.s32 %v1150, %v1152
    %v1154 = vrot.slane %v1146, %v1153
    %v1156 = vunpack.c.l.s4 1966171168
    %v1157 = vunpack.c.0.s8 %v1156
    %v1158 = vlaneseq
    %v1159 = vshrl.u32 %v1158, 7
    %v1160 = vsub.s32 %v1157, %v1159
    %v1161 = vrot.slane %v1147, %v1160
    %v1162 = vlaneseq
    %v1163 = vshrl.u32 %v1162, 7
    %v1164 = vsub.s32 0, %v1163
    %v1165 = vrot.slane %v1154, %v1164
    %v1166 = vlaneseq
    %v1167 = vshrl.u32 %v1166, 7
    %v1168 = vsub.s32 0, %v1167
    %v1169 = vrot.slane %v1161, %v1168
    %v1172 = vadd.f32 %v1054, %v1165
    %v1173 = vadd.f32 %v1057, %v1165
    %v1174 = vadd.f32 %v1062, %v1169
    %v1175 = vadd.f32 %v1065, %v1169
    %v1176 = vmax.f32 %v1172, 0.0
    %v1177 = vmax.f32 %v1173, 0.0
    %v1178 = vmax.f32 %v1174, 0.0
    %v1179 = vmax.f32 %v1175, 0.0
    %v1181 = vlaneseq
    %v1182 = vshrl.u32 %v1181, 7
    %v1183 = vsub.s32 0, %v1182
    %v1184 = vrot.slane %v1070, %v1183
    %v1186 = vmul.f32 %v1176, %v1184
    %v1187 = vmul.f32 %v1177, %v1184
    %v1188 = vmul.f32 %v1178, %v1184
    %v1189 = vmul.f32 %v1179, %v1184
    %v1190 = vsel %vm830, %v1186, 0.0
    %1191 = vadd.xlane.f32.xlu0 %v1190
    %v1192 = vpop.xlane.xlu0 %1191
    %v1193 = vsel %vm830, %v1187, 0.0
    %1194 = vadd.xlane.f32.xlu0 %v1193
    %v1195 = vpop.xlane.xlu0 %1194
    %v1196 = vsel %vm830, %v1188, 0.0
    %1197 = vadd.xlane.f32.xlu0 %v1196
    %v1198 = vpop.xlane.xlu0 %1197
    %v1199 = vsel %vm830, %v1189, 0.0
    %1200 = vadd.xlane.f32.xlu0 %v1199
    %v1201 = vpop.xlane.xlu0 %1200
    %v1203 = vlaneseq
    %v1204 = vshrl.u32 %v1203, 7
    %v1205 = vsub.s32 0, %v1204
    %v1206 = vrot.slane %v1071, %v1205
    %1207 = vset.pattern.permute.xlu0 0
    %1208 = vperm.xlu0 %1207, %v1206
    %v1209 = vpop.permute.xlu0 %1208
    %v1211 = vadd.f32 %v1192, %v1209
    %v1212 = vadd.f32 %v1195, %v1209
    %v1213 = vadd.f32 %v1198, %v1209
    %v1214 = vadd.f32 %v1201, %v1209
    %v1219 = vlaneseq
    %v1220 = vand.u32 %v1219, 127
    %v1221 = vlaneseq
    %v1222 = vshrl.u32 %v1221, 7
    %v1223 = vsub.s32 %v1220, %v1222
    %v1224 = vrot.slane %v1211, %v1223
    %v1225 = vadd.s32 %v1220, 4294967288
    %v1226 = vlaneseq
    %v1227 = vshrl.u32 %v1226, 7
    %v1228 = vsub.s32 %v1225, %v1227
    %v1229 = vrot.slane %v1212, %v1228
    %vm1230 = vcmask 130112
    %v1231 = vsel %vm1230, %v1229, %v1224
    %v1232 = vlaneseq
    %v1233 = vshrl.u32 %v1232, 7
    %v1234 = vsub.s32 %v1220, %v1233
    %v1235 = vrot.slane %v1213, %v1234
    %v1236 = vlaneseq
    %v1237 = vshrl.u32 %v1236, 7
    %v1238 = vsub.s32 %v1225, %v1237
    %v1239 = vrot.slane %v1214, %v1238
    %v1240 = vsel %vm1230, %v1239, %v1235
    %v1241 = vsel %vm869, %v1240, %v1231
    %vm1243 = vcmask 123904
    %v1244 = vsel %vm1243, %v1241, -inf
    %1245 = vmax.xlane.f32.xlu0 %v1244
    %v1246 = vpop.xlane.xlu0 %1245
    %v1248 = vlaneseq
    %v1249 = vshrl.u32 %v1248, 7
    %v1250 = vsub.s32 0, %v1249
    %v1251 = vrot.slane %v1246, %v1250
    %v1252 = vlaneseq
    %v1253 = vshrl.u32 %v1252, 7
    %v1254 = vsub.s32 1, %v1253
    %v1255 = vrot.slane %v1246, %v1254
    %v1258 = vsub.f32 %v1211, %v1251
    %v1259 = vsub.f32 %v1212, %v1251
    %v1260 = vsub.f32 %v1213, %v1255
    %v1261 = vsub.f32 %v1214, %v1255
    %v1262 = vmul.f32 %v1258, 1.442695
    %v1263 = vpow.pop %v1262
    %v1264 = vmul.f32 %v1259, 1.442695
    %v1265 = vpow.pop %v1264
    %v1266 = vmul.f32 %v1260, 1.442695
    %v1267 = vpow.pop %v1266
    %v1268 = vmul.f32 %v1261, 1.442695
    %v1269 = vpow.pop %v1268
    %1274 = vset.pattern.permute.xlu0 0
    %1275 = vperm.xlu0 %1274, %v1263
    %v1276 = vpop.permute.xlu0 %1275
    %1277 = vset.pattern.permute.xlu0 0
    %1278 = vperm.xlu0 %1277, %v1265
    %v1279 = vpop.permute.xlu0 %1278
    %1280 = vset.pattern.permute.xlu0 0
    %1281 = vperm.xlu0 %1280, %v1267
    %v1282 = vpop.permute.xlu0 %1281
    %1283 = vset.pattern.permute.xlu0 0
    %1284 = vperm.xlu0 %1283, %v1269
    %v1285 = vpop.permute.xlu0 %1284
    %v1286 = vlaneseq
    %v1287 = vshrl.u32 %v1286, 7
    %v1288 = vsub.s32 %v1220, %v1287
    %v1289 = vrot.slane %v1276, %v1288
    %v1290 = vlaneseq
    %v1291 = vshrl.u32 %v1290, 7
    %v1292 = vsub.s32 %v1225, %v1291
    %v1293 = vrot.slane %v1279, %v1292
    %v1294 = vsel %vm1230, %v1293, %v1289
    %v1295 = vlaneseq
    %v1296 = vshrl.u32 %v1295, 7
    %v1297 = vsub.s32 %v1220, %v1296
    %v1298 = vrot.slane %v1282, %v1297
    %v1299 = vlaneseq
    %v1300 = vshrl.u32 %v1299, 7
    %v1301 = vsub.s32 %v1225, %v1300
    %v1302 = vrot.slane %v1285, %v1301
    %v1303 = vsel %vm1230, %v1302, %v1298
    %v1304 = vsel %vm869, %v1303, %v1294
    %v1306 = vsel %vm1243, %v1304, 0.0
    %1307 = vadd.xlane.f32.xlu0 %v1306
    %v1308 = vpop.xlane.xlu0 %1307
    %v1310 = vlaneseq
    %v1311 = vshrl.u32 %v1310, 7
    %v1312 = vsub.s32 0, %v1311
    %v1313 = vrot.slane %v1308, %v1312
    %v1314 = vlaneseq
    %v1315 = vshrl.u32 %v1314, 7
    %v1316 = vsub.s32 1, %v1315
    %v1317 = vrot.slane %v1308, %v1316
    %v1320 = vrcp.pop %v1313
    %v1321 = vmul.f32 %v1263, %v1320
    %v1322 = vmul.f32 %v1265, %v1320
    %v1323 = vrcp.pop %v1317
    %v1324 = vmul.f32 %v1267, %v1323
    %v1325 = vmul.f32 %v1269, %v1323
    %1327 = vset.pattern.permute.xlu0 0
    %1328 = vperm.xlu0 %1327, %v1321
    %v1329 = vpop.permute.xlu0 %1328
    %1332 = vset.pattern.permute.xlu0 0
    %1333 = vperm.xlu0 %1332, %v1322
    %v1334 = vpop.permute.xlu0 %1333
    %1337 = vset.pattern.permute.xlu0 0
    %1338 = vperm.xlu0 %1337, %v1324
    %v1339 = vpop.permute.xlu0 %1338
    %1342 = vset.pattern.permute.xlu0 0
    %1343 = vperm.xlu0 %1342, %v1325
    %v1344 = vpop.permute.xlu0 %1343
    %v1346 = vmul.f32 %v1329, %v814
    %v1347 = vmul.f32 %v1334, %v817
    %v1348 = vmul.f32 %v1339, %v822
    %v1349 = vmul.f32 %v1344, %v825
    %v1350 = vsel %vm830, %v1346, 0.0
    %v1351 = vsel %vm830, %v1347, 0.0
    %v1352 = vadd.f32 %v1350, %v1351
    %v1353 = vrot.slane %v1352, 4
    %v1354 = vadd.f32 %v1352, %v1353
    %v1355 = vrot.slane %v1354, 2
    %v1356 = vadd.f32 %v1354, %v1355
    %v1357 = vrot.slane %v1356, 1
    %v1358 = vadd.f32 %v1356, %v1357
    %v1359 = vsel %vm830, %v1348, 0.0
    %v1360 = vsel %vm830, %v1349, 0.0
    %v1361 = vadd.f32 %v1359, %v1360
    %v1362 = vrot.slane %v1361, 4
    %v1363 = vadd.f32 %v1361, %v1362
    %v1364 = vrot.slane %v1363, 2
    %v1365 = vadd.f32 %v1363, %v1364
    %v1366 = vrot.slane %v1365, 1
    %v1367 = vadd.f32 %v1365, %v1366
    %v1368 = vld [vmem:[%s17] sm:$0xf]
    %v1369 = vld [vmem:[%s17 + $0x4] sm:$0xf]
    %v1370 = vld [vmem:[%s17 + $0x8] sm:$0xf]
    %v1371 = vld [vmem:[%s17 + $0xc] sm:$0xf]
    %v1372 = vld [vmem:[%s18] sm:$0x1]
    %v1374 = vlaneseq
    %v1375 = vshrl.u32 %v1374, 7
    %v1376 = vsub.s32 0, %v1375
    %v1377 = vrot.slane %v1372, %v1376
    %v1383 = vunpack.c.l.b16 %v1368
    %v1384 = vunpack.c.l.b16 %v1369
    %v1385 = vunpack.c.l.b16 %v1370
    %v1386 = vunpack.c.l.b16 %v1371
    %v1387 = vpack.c.b16 %v1384, %v1383
    %v1388 = vpack.c.b16 %v1386, %v1385
    %1391 = vmatprep.subr.bf16.mxu0 0
    %1392 = vmatpush1.bf16.msra.mxu0 %v1387
    %1393 = vmatprep.subr.bf16.mxu0 0
    %1394 = vmatpush1.bf16.msra.mxu0 %v1388
    %1395 = vmatprep.subr.bf16.mxu0 0
    %1396 = vmatpush1.bf16.msra.mxu0 0
    %1397 = vmatprep.subr.bf16.mxu0 0
    %1398 = vmatpush1.bf16.msra.mxu0 0
    %1399 = vmatprep.subr.bf16.mxu0 0
    %1400 = vmatpush1.bf16.msra.mxu0 0
    %1401 = vmatprep.subr.bf16.mxu0 0
    %1402 = vmatpush1.bf16.msra.mxu0 0
    %1403 = vmatprep.subr.bf16.mxu0 0
    %1404 = vmatpush1.bf16.msra.mxu0 0
    %1405 = vmatprep.subr.bf16.mxu0 0
    %1406 = vmatpush1.bf16.msra.mxu0 0
    %1407 = vmatprep.subr.bf16.mxu0 0
    %1408 = vmatpush1.bf16.msra.mxu0 0
    %1409 = vmatprep.subr.bf16.mxu0 0
    %1410 = vmatpush1.bf16.msra.mxu0 0
    %1411 = vmatprep.subr.bf16.mxu0 0
    %1412 = vmatpush1.bf16.msra.mxu0 0
    %1413 = vmatprep.subr.bf16.mxu0 0
    %1414 = vmatpush1.bf16.msra.mxu0 0
    %1415 = vmatprep.subr.bf16.mxu0 0
    %1416 = vmatpush1.bf16.msra.mxu0 0
    %1417 = vmatprep.subr.bf16.mxu0 0
    %1418 = vmatpush1.bf16.msra.mxu0 0
    %1419 = vmatprep.subr.bf16.mxu0 0
    %1420 = vmatpush1.bf16.msra.mxu0 0
    %1421 = vmatprep.subr.bf16.mxu0 0
    %1422 = vmatpush1.bf16.msra.mxu0 0
    %1423 = vmatprep.mubr.bf16.mxu0 0
    %1424 = vmatmul.mubr.bf16.gmra.mrb[0].mxu0 %v1097
    %v1425 = vpop.f32.mrb[0].mxu0
    %v1426 = vadd.f32 %v1377, %v1425
    %v1427 = vpop.f32.mrb[0].mxu0
    %v1428 = vpop.f32.mrb[0].mxu0
    %v1429 = vpop.f32.mrb[0].mxu0
    %1430 = vdwg.mxu0
    %v1431 = vxor.u32 %v1426, 2147483648
    %v1432 = vmul.f32 %v1431, 1.442695
    %v1433 = vpow.pop %v1432
    %v1434 = vadd.f32 %v1433, 1.0
    %v1435 = vrcp.pop %v1434
    %v1436 = vmul.f32 1.0, %v1435
    %v1439 = vsel %vm869, %v1367, %v1358
    %v1441 = vmul.f32 %v1436, %v1439
    %s1442 = sld [smem:[#allocation4]]
    %s1443 = scalar_lea.vmem %s6, %s1442
    %v1444 = vld [vmem:[%s1443] sm:$0x1]
    %vm1445 = vcmask 253952
    %1446 = vst.msk [vmem:[#allocation2] sm:$0x1] %vm1445, %v1444
    %s1447 = sld [smem:[#allocation4 + $0x80]]
    %s1448 = scalar_lea.vmem %s6, %s1447
    %v1449 = vld [vmem:[%s1448] sm:$0x1]
    %1450 = vst.msk [vmem:[#allocation2 + $0x1] sm:$0x1] %vm1445, %v1449
    %1452 = vrot.lane.b32.xlu0 %v1441, 32
    %v1453 = vpop.permute.xlu0 %1452
    %vm1455 = vcmask 517376
    %1456 = vst.msk [vmem:[#allocation2] sm:$0x3] %vm1455, %v1453
    %1458 = vrot.lane.b32.xlu0 %v922, 64
    %v1459 = vpop.permute.xlu0 %1458
    %vm1461 = vcmask 779776
    %1462 = vst.msk [vmem:[#allocation2] sm:$0x3] %vm1461, %v1459
    %v1463 = vld [vmem:[#allocation2] sm:$0x3]
    %v1464 = vpack.c.bf16 %v1463, %v1463
    %v1465 = vld [vmem:[%s19] sm:$0xf]
    %v1466 = vld [vmem:[%s19 + $0x4] sm:$0xf]
    %v1467 = vld [vmem:[%s19 + $0x8] sm:$0xf]
    %v1468 = vld [vmem:[%s19 + $0xc] sm:$0xf]
    %v1469 = vld [vmem:[%s19 + $0x10] sm:$0xf]
    %v1470 = vld [vmem:[%s19 + $0x14] sm:$0xf]
    %v1471 = vld [vmem:[%s19 + $0x18] sm:$0xf]
    %v1472 = vld [vmem:[%s19 + $0x1c] sm:$0xf]
    %v1473 = vld [vmem:[%s19 + $0x20] sm:$0xf]
    %v1474 = vld [vmem:[%s19 + $0x24] sm:$0xf]
    %v1475 = vld [vmem:[%s19 + $0x28] sm:$0xf]
    %v1476 = vld [vmem:[%s19 + $0x2c] sm:$0xf]
    %v1477 = vld [vmem:[%s19 + $0x30] sm:$0xf]
    %v1478 = vld [vmem:[%s19 + $0x34] sm:$0xf]
    %v1479 = vld [vmem:[%s19 + $0x38] sm:$0xf]
    %v1480 = vld [vmem:[%s19 + $0x3c] sm:$0xf]
    %v1481 = vld [vmem:[%s20] sm:$0x1]
    %v1483 = vlaneseq
    %v1484 = vshrl.u32 %v1483, 7
    %v1485 = vsub.s32 0, %v1484
    %v1486 = vrot.slane %v1481, %v1485
    %v1504 = vunpack.c.l.b16 %v1465
    %v1505 = vunpack.c.l.b16 %v1466
    %v1506 = vunpack.c.l.b16 %v1467
    %v1507 = vunpack.c.l.b16 %v1468
    %v1508 = vunpack.c.l.b16 %v1469
    %v1509 = vunpack.c.l.b16 %v1470
    %v1510 = vunpack.c.l.b16 %v1471
    %v1511 = vunpack.c.l.b16 %v1472
    %v1512 = vunpack.c.l.b16 %v1473
    %v1513 = vunpack.c.l.b16 %v1474
    %v1514 = vunpack.c.l.b16 %v1475
    %v1515 = vunpack.c.l.b16 %v1476
    %v1516 = vunpack.c.l.b16 %v1477
    %v1517 = vunpack.c.l.b16 %v1478
    %v1518 = vunpack.c.l.b16 %v1479
    %v1519 = vunpack.c.l.b16 %v1480
    %v1520 = vpack.c.b16 %v1505, %v1504
    %v1521 = vpack.c.b16 %v1507, %v1506
    %v1522 = vpack.c.b16 %v1509, %v1508
    %v1523 = vpack.c.b16 %v1511, %v1510
    %v1524 = vpack.c.b16 %v1513, %v1512
    %v1525 = vpack.c.b16 %v1515, %v1514
    %v1526 = vpack.c.b16 %v1517, %v1516
    %v1527 = vpack.c.b16 %v1519, %v1518
    %1536 = vmatprep.subr.bf16.mxu0 0
    %1537 = vmatpush1.bf16.msra.mxu0 %v1520
    %1538 = vmatprep.subr.bf16.mxu0 0
    %1539 = vmatpush1.bf16.msra.mxu0 %v1521
    %1540 = vmatprep.subr.bf16.mxu0 0
    %1541 = vmatpush1.bf16.msra.mxu0 %v1522
    %1542 = vmatprep.subr.bf16.mxu0 0
    %1543 = vmatpush1.bf16.msra.mxu0 %v1523
    %1544 = vmatprep.subr.bf16.mxu0 0
    %1545 = vmatpush1.bf16.msra.mxu0 %v1524
    %1546 = vmatprep.subr.bf16.mxu0 0
    %1547 = vmatpush1.bf16.msra.mxu0 %v1525
    %1548 = vmatprep.subr.bf16.mxu0 0
    %1549 = vmatpush1.bf16.msra.mxu0 %v1526
    %1550 = vmatprep.subr.bf16.mxu0 0
    %1551 = vmatpush1.bf16.msra.mxu0 %v1527
    %1552 = vmatprep.subr.bf16.mxu0 0
    %1553 = vmatpush1.bf16.msra.mxu0 0
    %1554 = vmatprep.subr.bf16.mxu0 0
    %1555 = vmatpush1.bf16.msra.mxu0 0
    %1556 = vmatprep.subr.bf16.mxu0 0
    %1557 = vmatpush1.bf16.msra.mxu0 0
    %1558 = vmatprep.subr.bf16.mxu0 0
    %1559 = vmatpush1.bf16.msra.mxu0 0
    %1560 = vmatprep.subr.bf16.mxu0 0
    %1561 = vmatpush1.bf16.msra.mxu0 0
    %1562 = vmatprep.subr.bf16.mxu0 0
    %1563 = vmatpush1.bf16.msra.mxu0 0
    %1564 = vmatprep.subr.bf16.mxu0 0
    %1565 = vmatpush1.bf16.msra.mxu0 0
    %1566 = vmatprep.subr.bf16.mxu0 0
    %1567 = vmatpush1.bf16.msra.mxu0 0
    %1568 = vmatprep.mubr.bf16.mxu0 0
    %1569 = vmatmul.mubr.bf16.gmra.mrb[0].mxu0 %v1464
    %v1570 = vpop.f32.mrb[0].mxu0
    %v1571 = vadd.f32 %v1486, %v1570
    %v1572 = vpop.f32.mrb[0].mxu0
    %v1573 = vpop.f32.mrb[0].mxu0
    %v1574 = vpop.f32.mrb[0].mxu0
    %1575 = vdwg.mxu0
    %v1576 = vxor.u32 %v1571, 2147483648
    %v1577 = vmul.f32 %v1576, 1.442695
    %v1578 = vpow.pop %v1577
    %v1579 = vadd.f32 %v1578, 1.0
    %v1580 = vrcp.pop %v1579
    %v1581 = vmul.f32 1.0, %v1580
    %v1582 = vtanh.pop %v1571
    %1584 = vrot.lane.b32.xlu0 %v985, 32
    %v1585 = vpop.permute.xlu0 %1584
    %v1587 = vmul.f32 %v1581, %v1585
    %1589 = vrot.lane.b32.xlu0 %v1582, 64
    %v1590 = vpop.permute.xlu0 %1589
    %v1592 = vmul.f32 %v1581, %v1590
    %1594 = vrot.lane.b32.xlu0 %v1592, 32
    %v1595 = vpop.permute.xlu0 %1594
    %v1597 = vadd.f32 %v1587, %v1595
    %v1598 = vtanh.pop %v1597
    %1600 = vrot.lane.b32.xlu0 %v1598, 64
    %v1601 = vpop.permute.xlu0 %1600
    %v1603 = vmul.f32 %v1581, %v1601
    %v1604 = vpack.c.bf16 %v1603, %v1603
    %v1605 = vld [vmem:[%s21] sm:$0xf]
    %v1606 = vld [vmem:[%s21 + $0x4] sm:$0xf]
    %v1607 = vld [vmem:[%s21 + $0x8] sm:$0xf]
    %v1608 = vld [vmem:[%s21 + $0xc] sm:$0xf]
    %v1609 = vld [vmem:[%s22] sm:$0x1]
    %v1611 = vlaneseq
    %v1612 = vshrl.u32 %v1611, 7
    %v1613 = vsub.s32 0, %v1612
    %v1614 = vrot.slane %v1609, %v1613
    %1617 = vrot.lane.b32.xlu0 %v1604, 32
    %v1618 = vpop.permute.xlu0 %1617
    %v1623 = vunpack.c.l.b16 %v1605
    %v1624 = vunpack.c.l.b16 %v1606
    %v1625 = vunpack.c.l.b16 %v1607
    %v1626 = vunpack.c.l.b16 %v1608
    %v1627 = vpack.c.b16 %v1624, %v1623
    %v1628 = vpack.c.b16 %v1626, %v1625
    %v1632 = vsel %vm830, %v1618, 0
    %1634 = vmatprep.subr.bf16.mxu0 0
    %1635 = vmatpush1.bf16.msra.mxu0 %v1627
    %1636 = vmatprep.subr.bf16.mxu0 0
    %1637 = vmatpush1.bf16.msra.mxu0 %v1628
    %1638 = vmatprep.subr.bf16.mxu0 0
    %1639 = vmatpush1.bf16.msra.mxu0 0
    %1640 = vmatprep.subr.bf16.mxu0 0
    %1641 = vmatpush1.bf16.msra.mxu0 0
    %1642 = vmatprep.subr.bf16.mxu0 0
    %1643 = vmatpush1.bf16.msra.mxu0 0
    %1644 = vmatprep.subr.bf16.mxu0 0
    %1645 = vmatpush1.bf16.msra.mxu0 0
    %1646 = vmatprep.subr.bf16.mxu0 0
    %1647 = vmatpush1.bf16.msra.mxu0 0
    %1648 = vmatprep.subr.bf16.mxu0 0
    %1649 = vmatpush1.bf16.msra.mxu0 0
    %1650 = vmatprep.subr.bf16.mxu0 0
    %1651 = vmatpush1.bf16.msra.mxu0 0
    %1652 = vmatprep.subr.bf16.mxu0 0
    %1653 = vmatpush1.bf16.msra.mxu0 0
    %1654 = vmatprep.subr.bf16.mxu0 0
    %1655 = vmatpush1.bf16.msra.mxu0 0
    %1656 = vmatprep.subr.bf16.mxu0 0
    %1657 = vmatpush1.bf16.msra.mxu0 0
    %1658 = vmatprep.subr.bf16.mxu0 0
    %1659 = vmatpush1.bf16.msra.mxu0 0
    %1660 = vmatprep.subr.bf16.mxu0 0
    %1661 = vmatpush1.bf16.msra.mxu0 0
    %1662 = vmatprep.subr.bf16.mxu0 0
    %1663 = vmatpush1.bf16.msra.mxu0 0
    %1664 = vmatprep.subr.bf16.mxu0 0
    %1665 = vmatpush1.bf16.msra.mxu0 0
    %1666 = vmatprep.mubr.bf16.mxu0 0
    %1667 = vmatmul.mubr.bf16.gmra.mrb[0].mxu0 %v1632
    %v1668 = vpop.f32.mrb[0].mxu0
    %v1669 = vadd.f32 %v1614, %v1668
    %v1670 = vpop.f32.mrb[0].mxu0
    %v1671 = vpop.f32.mrb[0].mxu0
    %v1672 = vpop.f32.mrb[0].mxu0
    %1673 = vdwg.mxu0
    %vm1674 = vcmp.gt.s32.totalorder %v1069, 0
    %v1675 = vsel %vm1674, 1, 0
    %v1676 = vcvt.s32.f32 %v1675
    %1678 = vset.pattern.permute.xlu0 0
    %1679 = vperm.xlu0 %1678, %v1676
    %v1680 = vpop.permute.xlu0 %1679
    %v1682 = vmul.f32 %v1669, %v1680
    %v1685 = vunpack.c.l.s4 1966171168
    %v1686 = vunpack.c.0.s8 %v1685
    %v1687 = vlaneseq
    %v1688 = vshrl.u32 %v1687, 7
    %v1689 = vsub.s32 %v1686, %v1688
    %v1690 = vrot.slane %v1682, %v1689
    %v1691 = vcombine.high %v1690, %v1690
    %v1693 = vunpack.c.l.s4 1966171168
    %v1694 = vunpack.c.0.s8 %v1693
    %v1695 = vlaneseq
    %v1696 = vshrl.u32 %v1695, 7
    %v1697 = vsub.s32 %v1694, %v1696
    %v1698 = vrot.slane %v1690, %v1697
    %v1700 = vunpack.c.l.s4 1966171168
    %v1701 = vunpack.c.0.s8 %v1700
    %v1702 = vlaneseq
    %v1703 = vshrl.u32 %v1702, 7
    %v1704 = vsub.s32 %v1701, %v1703
    %v1705 = vrot.slane %v1691, %v1704
    %vm1708 = vcmask 401408
    %1709 = vst.msk [vmem:[%s23] sm:$0x1] %vm1708, %v1698
    %1710 = vst.msk [vmem:[%s23 + $0x8] sm:$0x1] %vm1708, %v1705
    %v1711 = vlaneseq
    %v1712 = vshrl.u32 %v1711, 7
    %v1713 = vsub.s32 0, %v1712
    %v1714 = vrot.slane %v1680, %v1713
    %v1715 = vlaneseq
    %v1716 = vshrl.u32 %v1715, 7
    %v1717 = vsub.s32 1, %v1716
    %v1718 = vrot.slane %v1680, %v1717
    %v1721 = vmul.f32 %v1321, %v1714
    %v1722 = vmul.f32 %v1322, %v1714
    %v1723 = vmul.f32 %v1324, %v1718
    %v1724 = vmul.f32 %v1325, %v1718
    %1729 = vset.pattern.permute.xlu0 0
    %1730 = vperm.xlu0 %1729, %v1721
    %v1731 = vpop.permute.xlu0 %1730
    %1732 = vset.pattern.permute.xlu0 0
    %1733 = vperm.xlu0 %1732, %v1722
    %v1734 = vpop.permute.xlu0 %1733
    %1735 = vset.pattern.permute.xlu0 0
    %1736 = vperm.xlu0 %1735, %v1723
    %v1737 = vpop.permute.xlu0 %1736
    %1738 = vset.pattern.permute.xlu0 0
    %1739 = vperm.xlu0 %1738, %v1724
    %v1740 = vpop.permute.xlu0 %1739
    %v1741 = vlaneseq
    %v1742 = vshrl.u32 %v1741, 7
    %v1743 = vsub.s32 %v1220, %v1742
    %v1744 = vrot.slane %v1731, %v1743
    %v1745 = vlaneseq
    %v1746 = vshrl.u32 %v1745, 7
    %v1747 = vsub.s32 %v1225, %v1746
    %v1748 = vrot.slane %v1734, %v1747
    %v1749 = vsel %vm1230, %v1748, %v1744
    %v1750 = vlaneseq
    %v1751 = vshrl.u32 %v1750, 7
    %v1752 = vsub.s32 %v1220, %v1751
    %v1753 = vrot.slane %v1737, %v1752
    %v1754 = vlaneseq
    %v1755 = vshrl.u32 %v1754, 7
    %v1756 = vsub.s32 %v1225, %v1755
    %v1757 = vrot.slane %v1740, %v1756
    %v1758 = vsel %vm1230, %v1757, %v1753
    %vm1761 = vcmask 122880
    %1762 = vst.msk [vmem:[%s24] sm:$0x1] %vm1761, %v1749
    %1763 = vst.msk [vmem:[%s24 + $0x8] sm:$0x1] %vm1761, %v1758
    %v1764 = vld [vmem:[%s13] sm:$0xf]
    %v1765 = vld [vmem:[%s13 + $0x4] sm:$0xf]
    %v1766 = vld [vmem:[%s13 + $0x8] sm:$0xf]
    %v1767 = vld [vmem:[%s13 + $0xc] sm:$0xf]
    %v1768 = vld [vmem:[%s14] sm:$0x1]
    %v1770 = vlaneseq
    %v1771 = vshrl.u32 %v1770, 7
    %v1772 = vsub.s32 0, %v1771
    %v1773 = vrot.slane %v1768, %v1772
    %v1779 = vunpack.c.l.b16 %v1764
    %v1780 = vunpack.c.l.b16 %v1765
    %v1781 = vunpack.c.l.b16 %v1766
    %v1782 = vunpack.c.l.b16 %v1767
    %v1783 = vpack.c.b16 %v1780, %v1779
    %v1784 = vpack.c.b16 %v1782, %v1781
    %1787 = vmatprep.subr.bf16.mxu0 0
    %1788 = vmatpush1.bf16.msra.mxu0 %v1783
    %1789 = vmatprep.subr.bf16.mxu0 0
    %1790 = vmatpush1.bf16.msra.mxu0 %v1784
    %1791 = vmatprep.subr.bf16.mxu0 0
    %1792 = vmatpush1.bf16.msra.mxu0 0
    %1793 = vmatprep.subr.bf16.mxu0 0
    %1794 = vmatpush1.bf16.msra.mxu0 0
    %1795 = vmatprep.subr.bf16.mxu0 0
    %1796 = vmatpush1.bf16.msra.mxu0 0
    %1797 = vmatprep.subr.bf16.mxu0 0
    %1798 = vmatpush1.bf16.msra.mxu0 0
    %1799 = vmatprep.subr.bf16.mxu0 0
    %1800 = vmatpush1.bf16.msra.mxu0 0
    %1801 = vmatprep.subr.bf16.mxu0 0
    %1802 = vmatpush1.bf16.msra.mxu0 0
    %1803 = vmatprep.subr.bf16.mxu0 0
    %1804 = vmatpush1.bf16.msra.mxu0 0
    %1805 = vmatprep.subr.bf16.mxu0 0
    %1806 = vmatpush1.bf16.msra.mxu0 0
    %1807 = vmatprep.subr.bf16.mxu0 0
    %1808 = vmatpush1.bf16.msra.mxu0 0
    %1809 = vmatprep.subr.bf16.mxu0 0
    %1810 = vmatpush1.bf16.msra.mxu0 0
    %1811 = vmatprep.subr.bf16.mxu0 0
    %1812 = vmatpush1.bf16.msra.mxu0 0
    %1813 = vmatprep.subr.bf16.mxu0 0
    %1814 = vmatpush1.bf16.msra.mxu0 0
    %1815 = vmatprep.subr.bf16.mxu0 0
    %1816 = vmatpush1.bf16.msra.mxu0 0
    %1817 = vmatprep.subr.bf16.mxu0 0
    %1818 = vmatpush1.bf16.msra.mxu0 0
    %1819 = vmatprep.mubr.bf16.mxu0 0
    %1820 = vmatmul.mubr.bf16.gmra.mrb[0].mxu0 %v1632
    %v1821 = vpop.f32.mrb[0].mxu0
    %v1822 = vadd.f32 %v1773, %v1821
    %v1823 = vpop.f32.mrb[0].mxu0
    %v1824 = vpop.f32.mrb[0].mxu0
    %v1825 = vpop.f32.mrb[0].mxu0
    %1826 = vdwg.mxu0
    %v1829 = vunpack.c.l.s4 1966171168
    %v1830 = vunpack.c.0.s8 %v1829
    %v1831 = vlaneseq
    %v1832 = vshrl.u32 %v1831, 7
    %v1833 = vsub.s32 %v1830, %v1832
    %v1834 = vrot.slane %v1822, %v1833
    %v1835 = vcombine.high %v1834, %v1834
    %v1837 = vunpack.c.l.s4 1966171168
    %v1838 = vunpack.c.0.s8 %v1837
    %v1839 = vlaneseq
    %v1840 = vshrl.u32 %v1839, 7
    %v1841 = vsub.s32 %v1838, %v1840
    %v1842 = vrot.slane %v1834, %v1841
    %v1844 = vunpack.c.l.s4 1966171168
    %v1845 = vunpack.c.0.s8 %v1844
    %v1846 = vlaneseq
    %v1847 = vshrl.u32 %v1846, 7
    %v1848 = vsub.s32 %v1845, %v1847
    %v1849 = vrot.slane %v1835, %v1848
    %v1850 = vlaneseq
    %v1851 = vshrl.u32 %v1850, 7
    %v1852 = vsub.s32 0, %v1851
    %v1853 = vrot.slane %v1842, %v1852
    %v1854 = vlaneseq
    %v1855 = vshrl.u32 %v1854, 7
    %v1856 = vsub.s32 0, %v1855
    %v1857 = vrot.slane %v1849, %v1856
    %v1860 = vadd.f32 %v1054, %v1853
    %v1861 = vadd.f32 %v1057, %v1853
    %v1862 = vadd.f32 %v1062, %v1857
    %v1863 = vadd.f32 %v1065, %v1857
    %v1864 = vmax.f32 %v1860, 0.0
    %v1865 = vmax.f32 %v1861, 0.0
    %v1866 = vmax.f32 %v1862, 0.0
    %v1867 = vmax.f32 %v1863, 0.0
    %v1868 = vmul.f32 %v1864, %v1184
    %v1869 = vmul.f32 %v1865, %v1184
    %v1870 = vmul.f32 %v1866, %v1184
    %v1871 = vmul.f32 %v1867, %v1184
    %v1872 = vsel %vm830, %v1868, 0.0
    %1873 = vadd.xlane.f32.xlu0 %v1872
    %v1874 = vpop.xlane.xlu0 %1873
    %v1875 = vsel %vm830, %v1869, 0.0
    %1876 = vadd.xlane.f32.xlu0 %v1875
    %v1877 = vpop.xlane.xlu0 %1876
    %v1878 = vsel %vm830, %v1870, 0.0
    %1879 = vadd.xlane.f32.xlu0 %v1878
    %v1880 = vpop.xlane.xlu0 %1879
    %v1881 = vsel %vm830, %v1871, 0.0
    %1882 = vadd.xlane.f32.xlu0 %v1881
    %v1883 = vpop.xlane.xlu0 %1882
    %v1884 = vadd.f32 %v1874, %v1209
    %v1885 = vadd.f32 %v1877, %v1209
    %v1886 = vadd.f32 %v1880, %v1209
    %v1887 = vadd.f32 %v1883, %v1209
    %v1892 = vlaneseq
    %v1893 = vshrl.u32 %v1892, 7
    %v1894 = vsub.s32 %v1220, %v1893
    %v1895 = vrot.slane %v1884, %v1894
    %v1896 = vlaneseq
    %v1897 = vshrl.u32 %v1896, 7
    %v1898 = vsub.s32 %v1225, %v1897
    %v1899 = vrot.slane %v1885, %v1898
    %v1900 = vsel %vm1230, %v1899, %v1895
    %v1901 = vlaneseq
    %v1902 = vshrl.u32 %v1901, 7
    %v1903 = vsub.s32 %v1220, %v1902
    %v1904 = vrot.slane %v1886, %v1903
    %v1905 = vlaneseq
    %v1906 = vshrl.u32 %v1905, 7
    %v1907 = vsub.s32 %v1225, %v1906
    %v1908 = vrot.slane %v1887, %v1907
    %v1909 = vsel %vm1230, %v1908, %v1904
    %v1910 = vsel %vm869, %v1909, %v1900
    %v1912 = vsel %vm1243, %v1910, -inf
    %1913 = vmax.xlane.f32.xlu0 %v1912
    %v1914 = vpop.xlane.xlu0 %1913
    %v1916 = vlaneseq
    %v1917 = vshrl.u32 %v1916, 7
    %v1918 = vsub.s32 0, %v1917
    %v1919 = vrot.slane %v1914, %v1918
    %v1920 = vlaneseq
    %v1921 = vshrl.u32 %v1920, 7
    %v1922 = vsub.s32 1, %v1921
    %v1923 = vrot.slane %v1914, %v1922
    %v1926 = vsub.f32 %v1884, %v1919
    %v1927 = vsub.f32 %v1885, %v1919
    %v1928 = vsub.f32 %v1886, %v1923
    %v1929 = vsub.f32 %v1887, %v1923
    %v1930 = vmul.f32 %v1926, 1.442695
    %v1931 = vpow.pop %v1930
    %v1932 = vmul.f32 %v1927, 1.442695
    %v1933 = vpow.pop %v1932
    %v1934 = vmul.f32 %v1928, 1.442695
    %v1935 = vpow.pop %v1934
    %v1936 = vmul.f32 %v1929, 1.442695
    %v1937 = vpow.pop %v1936
    %1942 = vset.pattern.permute.xlu0 0
    %1943 = vperm.xlu0 %1942, %v1931
    %v1944 = vpop.permute.xlu0 %1943
    %1945 = vset.pattern.permute.xlu0 0
    %1946 = vperm.xlu0 %1945, %v1933
    %v1947 = vpop.permute.xlu0 %1946
    %1948 = vset.pattern.permute.xlu0 0
    %1949 = vperm.xlu0 %1948, %v1935
    %v1950 = vpop.permute.xlu0 %1949
    %1951 = vset.pattern.permute.xlu0 0
    %1952 = vperm.xlu0 %1951, %v1937
    %v1953 = vpop.permute.xlu0 %1952
    %v1954 = vlaneseq
    %v1955 = vshrl.u32 %v1954, 7
    %v1956 = vsub.s32 %v1220, %v1955
    %v1957 = vrot.slane %v1944, %v1956
    %v1958 = vlaneseq
    %v1959 = vshrl.u32 %v1958, 7
    %v1960 = vsub.s32 %v1225, %v1959
    %v1961 = vrot.slane %v1947, %v1960
    %v1962 = vsel %vm1230, %v1961, %v1957
    %v1963 = vlaneseq
    %v1964 = vshrl.u32 %v1963, 7
    %v1965 = vsub.s32 %v1220, %v1964
    %v1966 = vrot.slane %v1950, %v1965
    %v1967 = vlaneseq
    %v1968 = vshrl.u32 %v1967, 7
    %v1969 = vsub.s32 %v1225, %v1968
    %v1970 = vrot.slane %v1953, %v1969
    %v1971 = vsel %vm1230, %v1970, %v1966
    %v1972 = vsel %vm869, %v1971, %v1962
    %v1974 = vsel %vm1243, %v1972, 0.0
    %1975 = vadd.xlane.f32.xlu0 %v1974
    %v1976 = vpop.xlane.xlu0 %1975
    %v1978 = vlaneseq
    %v1979 = vshrl.u32 %v1978, 7
    %v1980 = vsub.s32 0, %v1979
    %v1981 = vrot.slane %v1976, %v1980
    %v1982 = vlaneseq
    %v1983 = vshrl.u32 %v1982, 7
    %v1984 = vsub.s32 1, %v1983
    %v1985 = vrot.slane %v1976, %v1984
    %v1988 = vrcp.pop %v1981
    %v1989 = vmul.f32 %v1931, %v1988
    %v1990 = vmul.f32 %v1933, %v1988
    %v1991 = vrcp.pop %v1985
    %v1992 = vmul.f32 %v1935, %v1991
    %v1993 = vmul.f32 %v1937, %v1991
    %1995 = vset.pattern.permute.xlu0 0
    %1996 = vperm.xlu0 %1995, %v1989
    %v1997 = vpop.permute.xlu0 %1996
    %2000 = vset.pattern.permute.xlu0 0
    %2001 = vperm.xlu0 %2000, %v1990
    %v2002 = vpop.permute.xlu0 %2001
    %2005 = vset.pattern.permute.xlu0 0
    %2006 = vperm.xlu0 %2005, %v1992
    %v2007 = vpop.permute.xlu0 %2006
    %2010 = vset.pattern.permute.xlu0 0
    %2011 = vperm.xlu0 %2010, %v1993
    %v2012 = vpop.permute.xlu0 %2011
    %v2014 = vmul.f32 %v1997, %v814
    %v2015 = vmul.f32 %v2002, %v817
    %v2016 = vmul.f32 %v2007, %v822
    %v2017 = vmul.f32 %v2012, %v825
    %v2018 = vsel %vm830, %v2014, 0.0
    %v2019 = vsel %vm830, %v2015, 0.0
    %v2020 = vadd.f32 %v2018, %v2019
    %v2021 = vrot.slane %v2020, 4
    %v2022 = vadd.f32 %v2020, %v2021
    %v2023 = vrot.slane %v2022, 2
    %v2024 = vadd.f32 %v2022, %v2023
    %v2025 = vrot.slane %v2024, 1
    %v2026 = vadd.f32 %v2024, %v2025
    %v2027 = vsel %vm830, %v2016, 0.0
    %v2028 = vsel %vm830, %v2017, 0.0
    %v2029 = vadd.f32 %v2027, %v2028
    %v2030 = vrot.slane %v2029, 4
    %v2031 = vadd.f32 %v2029, %v2030
    %v2032 = vrot.slane %v2031, 2
    %v2033 = vadd.f32 %v2031, %v2032
    %v2034 = vrot.slane %v2033, 1
    %v2035 = vadd.f32 %v2033, %v2034
    %v2036 = vld [vmem:[%s17] sm:$0xf]
    %v2037 = vld [vmem:[%s17 + $0x4] sm:$0xf]
    %v2038 = vld [vmem:[%s17 + $0x8] sm:$0xf]
    %v2039 = vld [vmem:[%s17 + $0xc] sm:$0xf]
    %v2040 = vld [vmem:[%s18] sm:$0x1]
    %v2042 = vlaneseq
    %v2043 = vshrl.u32 %v2042, 7
    %v2044 = vsub.s32 0, %v2043
    %v2045 = vrot.slane %v2040, %v2044
    %v2051 = vunpack.c.l.b16 %v2036
    %v2052 = vunpack.c.l.b16 %v2037
    %v2053 = vunpack.c.l.b16 %v2038
    %v2054 = vunpack.c.l.b16 %v2039
    %v2055 = vpack.c.b16 %v2052, %v2051
    %v2056 = vpack.c.b16 %v2054, %v2053
    %2059 = vmatprep.subr.bf16.mxu0 0
    %2060 = vmatpush1.bf16.msra.mxu0 %v2055
    %2061 = vmatprep.subr.bf16.mxu0 0
    %2062 = vmatpush1.bf16.msra.mxu0 %v2056
    %2063 = vmatprep.subr.bf16.mxu0 0
    %2064 = vmatpush1.bf16.msra.mxu0 0
    %2065 = vmatprep.subr.bf16.mxu0 0
    %2066 = vmatpush1.bf16.msra.mxu0 0
    %2067 = vmatprep.subr.bf16.mxu0 0
    %2068 = vmatpush1.bf16.msra.mxu0 0
    %2069 = vmatprep.subr.bf16.mxu0 0
    %2070 = vmatpush1.bf16.msra.mxu0 0
    %2071 = vmatprep.subr.bf16.mxu0 0
    %2072 = vmatpush1.bf16.msra.mxu0 0
    %2073 = vmatprep.subr.bf16.mxu0 0
    %2074 = vmatpush1.bf16.msra.mxu0 0
    %2075 = vmatprep.subr.bf16.mxu0 0
    %2076 = vmatpush1.bf16.msra.mxu0 0
    %2077 = vmatprep.subr.bf16.mxu0 0
    %2078 = vmatpush1.bf16.msra.mxu0 0
    %2079 = vmatprep.subr.bf16.mxu0 0
    %2080 = vmatpush1.bf16.msra.mxu0 0
    %2081 = vmatprep.subr.bf16.mxu0 0
    %2082 = vmatpush1.bf16.msra.mxu0 0
    %2083 = vmatprep.subr.bf16.mxu0 0
    %2084 = vmatpush1.bf16.msra.mxu0 0
    %2085 = vmatprep.subr.bf16.mxu0 0
    %2086 = vmatpush1.bf16.msra.mxu0 0
    %2087 = vmatprep.subr.bf16.mxu0 0
    %2088 = vmatpush1.bf16.msra.mxu0 0
    %2089 = vmatprep.subr.bf16.mxu0 0
    %2090 = vmatpush1.bf16.msra.mxu0 0
    %2091 = vmatprep.mubr.bf16.mxu0 0
    %2092 = vmatmul.mubr.bf16.gmra.mrb[0].mxu0 %v1632
    %v2093 = vpop.f32.mrb[0].mxu0
    %v2094 = vadd.f32 %v2045, %v2093
    %v2095 = vpop.f32.mrb[0].mxu0
    %v2096 = vpop.f32.mrb[0].mxu0
    %v2097 = vpop.f32.mrb[0].mxu0
    %2098 = vdwg.mxu0
    %v2099 = vxor.u32 %v2094, 2147483648
    %v2100 = vmul.f32 %v2099, 1.442695
    %v2101 = vpow.pop %v2100
    %v2102 = vadd.f32 %v2101, 1.0
    %v2103 = vrcp.pop %v2102
    %v2104 = vmul.f32 1.0, %v2103
    %v2107 = vsel %vm869, %v2035, %v2026
    %v2109 = vmul.f32 %v2104, %v2107
    %s2110 = sld [smem:[#allocation4 + $0x1]]
    %s2111 = scalar_lea.vmem %s6, %s2110
    %v2112 = vld [vmem:[%s2111] sm:$0x1]
    %2113 = vst.msk [vmem:[#allocation2] sm:$0x1] %vm1445, %v2112
    %s2114 = sld [smem:[#allocation4 + $0x81]]
    %s2115 = scalar_lea.vmem %s6, %s2114
    %v2116 = vld [vmem:[%s2115] sm:$0x1]
    %2117 = vst.msk [vmem:[#allocation2 + $0x1] sm:$0x1] %vm1445, %v2116
    %2119 = vrot.lane.b32.xlu0 %v2109, 32
    %v2120 = vpop.permute.xlu0 %2119
    %2122 = vst.msk [vmem:[#allocation2] sm:$0x3] %vm1455, %v2120
    %2124 = vrot.lane.b32.xlu0 %v1603, 96
    %v2125 = vpop.permute.xlu0 %2124
    %2127 = vst.msk [vmem:[#allocation2] sm:$0x3] %vm1461, %v2125
    %v2128 = vld [vmem:[#allocation2] sm:$0x3]
    %v2129 = vpack.c.bf16 %v2128, %v2128
    %v2130 = vld [vmem:[%s19] sm:$0xf]
    %v2131 = vld [vmem:[%s19 + $0x4] sm:$0xf]
    %v2132 = vld [vmem:[%s19 + $0x8] sm:$0xf]
    %v2133 = vld [vmem:[%s19 + $0xc] sm:$0xf]
    %v2134 = vld [vmem:[%s19 + $0x10] sm:$0xf]
    %v2135 = vld [vmem:[%s19 + $0x14] sm:$0xf]
    %v2136 = vld [vmem:[%s19 + $0x18] sm:$0xf]
    %v2137 = vld [vmem:[%s19 + $0x1c] sm:$0xf]
    %v2138 = vld [vmem:[%s19 + $0x20] sm:$0xf]
    %v2139 = vld [vmem:[%s19 + $0x24] sm:$0xf]
    %v2140 = vld [vmem:[%s19 + $0x28] sm:$0xf]
    %v2141 = vld [vmem:[%s19 + $0x2c] sm:$0xf]
    %v2142 = vld [vmem:[%s19 + $0x30] sm:$0xf]
    %v2143 = vld [vmem:[%s19 + $0x34] sm:$0xf]
    %v2144 = vld [vmem:[%s19 + $0x38] sm:$0xf]
    %v2145 = vld [vmem:[%s19 + $0x3c] sm:$0xf]
    %v2146 = vld [vmem:[%s20] sm:$0x1]
    %v2148 = vlaneseq
    %v2149 = vshrl.u32 %v2148, 7
    %v2150 = vsub.s32 0, %v2149
    %v2151 = vrot.slane %v2146, %v2150
    %v2169 = vunpack.c.l.b16 %v2130
    %v2170 = vunpack.c.l.b16 %v2131
    %v2171 = vunpack.c.l.b16 %v2132
    %v2172 = vunpack.c.l.b16 %v2133
    %v2173 = vunpack.c.l.b16 %v2134
    %v2174 = vunpack.c.l.b16 %v2135
    %v2175 = vunpack.c.l.b16 %v2136
    %v2176 = vunpack.c.l.b16 %v2137
    %v2177 = vunpack.c.l.b16 %v2138
    %v2178 = vunpack.c.l.b16 %v2139
    %v2179 = vunpack.c.l.b16 %v2140
    %v2180 = vunpack.c.l.b16 %v2141
    %v2181 = vunpack.c.l.b16 %v2142
    %v2182 = vunpack.c.l.b16 %v2143
    %v2183 = vunpack.c.l.b16 %v2144
    %v2184 = vunpack.c.l.b16 %v2145
    %v2185 = vpack.c.b16 %v2170, %v2169
    %v2186 = vpack.c.b16 %v2172, %v2171
    %v2187 = vpack.c.b16 %v2174, %v2173
    %v2188 = vpack.c.b16 %v2176, %v2175
    %v2189 = vpack.c.b16 %v2178, %v2177
    %v2190 = vpack.c.b16 %v2180, %v2179
    %v2191 = vpack.c.b16 %v2182, %v2181
    %v2192 = vpack.c.b16 %v2184, %v2183
    %2201 = vmatprep.subr.bf16.mxu0 0
    %2202 = vmatpush1.bf16.msra.mxu0 %v2185
    %2203 = vmatprep.subr.bf16.mxu0 0
    %2204 = vmatpush1.bf16.msra.mxu0 %v2186
    %2205 = vmatprep.subr.bf16.mxu0 0
    %2206 = vmatpush1.bf16.msra.mxu0 %v2187
    %2207 = vmatprep.subr.bf16.mxu0 0
    %2208 = vmatpush1.bf16.msra.mxu0 %v2188
    %2209 = vmatprep.subr.bf16.mxu0 0
    %2210 = vmatpush1.bf16.msra.mxu0 %v2189
    %2211 = vmatprep.subr.bf16.mxu0 0
    %2212 = vmatpush1.bf16.msra.mxu0 %v2190
    %2213 = vmatprep.subr.bf16.mxu0 0
    %2214 = vmatpush1.bf16.msra.mxu0 %v2191
    %2215 = vmatprep.subr.bf16.mxu0 0
    %2216 = vmatpush1.bf16.msra.mxu0 %v2192
    %2217 = vmatprep.subr.bf16.mxu0 0
    %2218 = vmatpush1.bf16.msra.mxu0 0
    %2219 = vmatprep.subr.bf16.mxu0 0
    %2220 = vmatpush1.bf16.msra.mxu0 0
    %2221 = vmatprep.subr.bf16.mxu0 0
    %2222 = vmatpush1.bf16.msra.mxu0 0
    %2223 = vmatprep.subr.bf16.mxu0 0
    %2224 = vmatpush1.bf16.msra.mxu0 0
    %2225 = vmatprep.subr.bf16.mxu0 0
    %2226 = vmatpush1.bf16.msra.mxu0 0
    %2227 = vmatprep.subr.bf16.mxu0 0
    %2228 = vmatpush1.bf16.msra.mxu0 0
    %2229 = vmatprep.subr.bf16.mxu0 0
    %2230 = vmatpush1.bf16.msra.mxu0 0
    %2231 = vmatprep.subr.bf16.mxu0 0
    %2232 = vmatpush1.bf16.msra.mxu0 0
    %2233 = vmatprep.mubr.bf16.mxu0 0
    %2234 = vmatmul.mubr.bf16.gmra.mrb[0].mxu0 %v2129
    %v2235 = vpop.f32.mrb[0].mxu0
    %v2236 = vadd.f32 %v2151, %v2235
    %v2237 = vpop.f32.mrb[0].mxu0
    %v2238 = vpop.f32.mrb[0].mxu0
    %v2239 = vpop.f32.mrb[0].mxu0
    %2240 = vdwg.mxu0
    %v2241 = vxor.u32 %v2236, 2147483648
    %v2242 = vmul.f32 %v2241, 1.442695
    %v2243 = vpow.pop %v2242
    %v2244 = vadd.f32 %v2243, 1.0
    %v2245 = vrcp.pop %v2244
    %v2246 = vmul.f32 1.0, %v2245
    %v2247 = vtanh.pop %v2236
    %v2248 = vmul.f32 %v2246, %v1597
    %2250 = vrot.lane.b32.xlu0 %v2247, 64
    %v2251 = vpop.permute.xlu0 %2250
    %v2253 = vmul.f32 %v2246, %v2251
    %2255 = vrot.lane.b32.xlu0 %v2253, 32
    %v2256 = vpop.permute.xlu0 %2255
    %v2258 = vadd.f32 %v2248, %v2256
    %v2259 = vtanh.pop %v2258
    %2261 = vrot.lane.b32.xlu0 %v2259, 64
    %v2262 = vpop.permute.xlu0 %2261
    %v2264 = vmul.f32 %v2246, %v2262
    %v2265 = vpack.c.bf16 %v2264, %v2264
    %v2266 = vld [vmem:[%s21] sm:$0xf]
    %v2267 = vld [vmem:[%s21 + $0x4] sm:$0xf]
    %v2268 = vld [vmem:[%s21 + $0x8] sm:$0xf]
    %v2269 = vld [vmem:[%s21 + $0xc] sm:$0xf]
    %v2270 = vld [vmem:[%s22] sm:$0x1]
    %v2272 = vlaneseq
    %v2273 = vshrl.u32 %v2272, 7
    %v2274 = vsub.s32 0, %v2273
    %v2275 = vrot.slane %v2270, %v2274
    %2278 = vrot.lane.b32.xlu0 %v2265, 32
    %v2279 = vpop.permute.xlu0 %2278
    %v2284 = vunpack.c.l.b16 %v2266
    %v2285 = vunpack.c.l.b16 %v2267
    %v2286 = vunpack.c.l.b16 %v2268
    %v2287 = vunpack.c.l.b16 %v2269
    %v2288 = vpack.c.b16 %v2285, %v2284
    %v2289 = vpack.c.b16 %v2287, %v2286
    %v2293 = vsel %vm830, %v2279, 0
    %2295 = vmatprep.subr.bf16.mxu0 0
    %2296 = vmatpush1.bf16.msra.mxu0 %v2288
    %2297 = vmatprep.subr.bf16.mxu0 0
    %2298 = vmatpush1.bf16.msra.mxu0 %v2289
    %2299 = vmatprep.subr.bf16.mxu0 0
    %2300 = vmatpush1.bf16.msra.mxu0 0
    %2301 = vmatprep.subr.bf16.mxu0 0
    %2302 = vmatpush1.bf16.msra.mxu0 0
    %2303 = vmatprep.subr.bf16.mxu0 0
    %2304 = vmatpush1.bf16.msra.mxu0 0
    %2305 = vmatprep.subr.bf16.mxu0 0
    %2306 = vmatpush1.bf16.msra.mxu0 0
    %2307 = vmatprep.subr.bf16.mxu0 0
    %2308 = vmatpush1.bf16.msra.mxu0 0
    %2309 = vmatprep.subr.bf16.mxu0 0
    %2310 = vmatpush1.bf16.msra.mxu0 0
    %2311 = vmatprep.subr.bf16.mxu0 0
    %2312 = vmatpush1.bf16.msra.mxu0 0
    %2313 = vmatprep.subr.bf16.mxu0 0
    %2314 = vmatpush1.bf16.msra.mxu0 0
    %2315 = vmatprep.subr.bf16.mxu0 0
    %2316 = vmatpush1.bf16.msra.mxu0 0
    %2317 = vmatprep.subr.bf16.mxu0 0
    %2318 = vmatpush1.bf16.msra.mxu0 0
    %2319 = vmatprep.subr.bf16.mxu0 0
    %2320 = vmatpush1.bf16.msra.mxu0 0
    %2321 = vmatprep.subr.bf16.mxu0 0
    %2322 = vmatpush1.bf16.msra.mxu0 0
    %2323 = vmatprep.subr.bf16.mxu0 0
    %2324 = vmatpush1.bf16.msra.mxu0 0
    %2325 = vmatprep.subr.bf16.mxu0 0
    %2326 = vmatpush1.bf16.msra.mxu0 0
    %2327 = vmatprep.mubr.bf16.mxu0 0
    %2328 = vmatmul.mubr.bf16.gmra.mrb[0].mxu0 %v2293
    %v2329 = vpop.f32.mrb[0].mxu0
    %v2330 = vadd.f32 %v2275, %v2329
    %v2331 = vpop.f32.mrb[0].mxu0
    %v2332 = vpop.f32.mrb[0].mxu0
    %v2333 = vpop.f32.mrb[0].mxu0
    %2334 = vdwg.mxu0
    %vm2335 = vcmp.gt.s32.totalorder %v1069, 1
    %v2336 = vsel %vm2335, 1, 0
    %v2337 = vcvt.s32.f32 %v2336
    %2339 = vset.pattern.permute.xlu0 0
    %2340 = vperm.xlu0 %2339, %v2337
    %v2341 = vpop.permute.xlu0 %2340
    %v2343 = vmul.f32 %v2330, %v2341
    %v2346 = vunpack.c.l.s4 1966171168
    %v2347 = vunpack.c.0.s8 %v2346
    %v2348 = vlaneseq
    %v2349 = vshrl.u32 %v2348, 7
    %v2350 = vsub.s32 %v2347, %v2349
    %v2351 = vrot.slane %v2343, %v2350
    %v2352 = vcombine.high %v2351, %v2351
    %v2354 = vunpack.c.l.s4 1966171168
    %v2355 = vunpack.c.0.s8 %v2354
    %v2356 = vlaneseq
    %v2357 = vshrl.u32 %v2356, 7
    %v2358 = vsub.s32 %v2355, %v2357
    %v2359 = vrot.slane %v2351, %v2358
    %v2361 = vunpack.c.l.s4 1966171168
    %v2362 = vunpack.c.0.s8 %v2361
    %v2363 = vlaneseq
    %v2364 = vshrl.u32 %v2363, 7
    %v2365 = vsub.s32 %v2362, %v2364
    %v2366 = vrot.slane %v2352, %v2365
    %2369 = vst.msk [vmem:[%s23 + $0x1] sm:$0x1] %vm1708, %v2359
    %2370 = vst.msk [vmem:[%s23 + $0x9] sm:$0x1] %vm1708, %v2366
    %v2371 = vlaneseq
    %v2372 = vshrl.u32 %v2371, 7
    %v2373 = vsub.s32 0, %v2372
    %v2374 = vrot.slane %v2341, %v2373
    %v2375 = vlaneseq
    %v2376 = vshrl.u32 %v2375, 7
    %v2377 = vsub.s32 1, %v2376
    %v2378 = vrot.slane %v2341, %v2377
    %v2381 = vmul.f32 %v1989, %v2374
    %v2382 = vmul.f32 %v1990, %v2374
    %v2383 = vmul.f32 %v1992, %v2378
    %v2384 = vmul.f32 %v1993, %v2378
    %2389 = vset.pattern.permute.xlu0 0
    %2390 = vperm.xlu0 %2389, %v2381
    %v2391 = vpop.permute.xlu0 %2390
    %2392 = vset.pattern.permute.xlu0 0
    %2393 = vperm.xlu0 %2392, %v2382
    %v2394 = vpop.permute.xlu0 %2393
    %2395 = vset.pattern.permute.xlu0 0
    %2396 = vperm.xlu0 %2395, %v2383
    %v2397 = vpop.permute.xlu0 %2396
    %2398 = vset.pattern.permute.xlu0 0
    %2399 = vperm.xlu0 %2398, %v2384
    %v2400 = vpop.permute.xlu0 %2399
    %v2401 = vlaneseq
    %v2402 = vshrl.u32 %v2401, 7
    %v2403 = vsub.s32 %v1220, %v2402
    %v2404 = vrot.slane %v2391, %v2403
    %v2405 = vlaneseq
    %v2406 = vshrl.u32 %v2405, 7
    %v2407 = vsub.s32 %v1225, %v2406
    %v2408 = vrot.slane %v2394, %v2407
    %v2409 = vsel %vm1230, %v2408, %v2404
    %v2410 = vlaneseq
    %v2411 = vshrl.u32 %v2410, 7
    %v2412 = vsub.s32 %v1220, %v2411
    %v2413 = vrot.slane %v2397, %v2412
    %v2414 = vlaneseq
    %v2415 = vshrl.u32 %v2414, 7
    %v2416 = vsub.s32 %v1225, %v2415
    %v2417 = vrot.slane %v2400, %v2416
    %v2418 = vsel %vm1230, %v2417, %v2413
    %2421 = vst.msk [vmem:[%s24 + $0x1] sm:$0x1] %vm1761, %v2409
    %2422 = vst.msk [vmem:[%s24 + $0x9] sm:$0x1] %vm1761, %v2418
    %v2423 = vld [vmem:[%s13] sm:$0xf]
    %v2424 = vld [vmem:[%s13 + $0x4] sm:$0xf]
    %v2425 = vld [vmem:[%s13 + $0x8] sm:$0xf]
    %v2426 = vld [vmem:[%s13 + $0xc] sm:$0xf]
    %v2427 = vld [vmem:[%s14] sm:$0x1]
    %v2429 = vlaneseq
    %v2430 = vshrl.u32 %v2429, 7
    %v2431 = vsub.s32 0, %v2430
    %v2432 = vrot.slane %v2427, %v2431
    %v2438 = vunpack.c.l.b16 %v2423
    %v2439 = vunpack.c.l.b16 %v2424
    %v2440 = vunpack.c.l.b16 %v2425
    %v2441 = vunpack.c.l.b16 %v2426
    %v2442 = vpack.c.b16 %v2439, %v2438
    %v2443 = vpack.c.b16 %v2441, %v2440
    %2446 = vmatprep.subr.bf16.mxu0 0
    %2447 = vmatpush1.bf16.msra.mxu0 %v2442
    %2448 = vmatprep.subr.bf16.mxu0 0
    %2449 = vmatpush1.bf16.msra.mxu0 %v2443
    %2450 = vmatprep.subr.bf16.mxu0 0
    %2451 = vmatpush1.bf16.msra.mxu0 0
    %2452 = vmatprep.subr.bf16.mxu0 0
    %2453 = vmatpush1.bf16.msra.mxu0 0
    %2454 = vmatprep.subr.bf16.mxu0 0
    %2455 = vmatpush1.bf16.msra.mxu0 0
    %2456 = vmatprep.subr.bf16.mxu0 0
    %2457 = vmatpush1.bf16.msra.mxu0 0
    %2458 = vmatprep.subr.bf16.mxu0 0
    %2459 = vmatpush1.bf16.msra.mxu0 0
    %2460 = vmatprep.subr.bf16.mxu0 0
    %2461 = vmatpush1.bf16.msra.mxu0 0
    %2462 = vmatprep.subr.bf16.mxu0 0
    %2463 = vmatpush1.bf16.msra.mxu0 0
    %2464 = vmatprep.subr.bf16.mxu0 0
    %2465 = vmatpush1.bf16.msra.mxu0 0
    %2466 = vmatprep.subr.bf16.mxu0 0
    %2467 = vmatpush1.bf16.msra.mxu0 0
    %2468 = vmatprep.subr.bf16.mxu0 0
    %2469 = vmatpush1.bf16.msra.mxu0 0
    %2470 = vmatprep.subr.bf16.mxu0 0
    %2471 = vmatpush1.bf16.msra.mxu0 0
    %2472 = vmatprep.subr.bf16.mxu0 0
    %2473 = vmatpush1.bf16.msra.mxu0 0
    %2474 = vmatprep.subr.bf16.mxu0 0
    %2475 = vmatpush1.bf16.msra.mxu0 0
    %2476 = vmatprep.subr.bf16.mxu0 0
    %2477 = vmatpush1.bf16.msra.mxu0 0
    %2478 = vmatprep.mubr.bf16.mxu0 0
    %2479 = vmatmul.mubr.bf16.gmra.mrb[0].mxu0 %v2293
    %v2480 = vpop.f32.mrb[0].mxu0
    %v2481 = vadd.f32 %v2432, %v2480
    %v2482 = vpop.f32.mrb[0].mxu0
    %v2483 = vpop.f32.mrb[0].mxu0
    %v2484 = vpop.f32.mrb[0].mxu0
    %2485 = vdwg.mxu0
    %v2488 = vunpack.c.l.s4 1966171168
    %v2489 = vunpack.c.0.s8 %v2488
    %v2490 = vlaneseq
    %v2491 = vshrl.u32 %v2490, 7
    %v2492 = vsub.s32 %v2489, %v2491
    %v2493 = vrot.slane %v2481, %v2492
    %v2494 = vcombine.high %v2493, %v2493
    %v2496 = vunpack.c.l.s4 1966171168
    %v2497 = vunpack.c.0.s8 %v2496
    %v2498 = vlaneseq
    %v2499 = vshrl.u32 %v2498, 7
    %v2500 = vsub.s32 %v2497, %v2499
    %v2501 = vrot.slane %v2493, %v2500
    %v2503 = vunpack.c.l.s4 1966171168
    %v2504 = vunpack.c.0.s8 %v2503
    %v2505 = vlaneseq
    %v2506 = vshrl.u32 %v2505, 7
    %v2507 = vsub.s32 %v2504, %v2506
    %v2508 = vrot.slane %v2494, %v2507
    %v2509 = vlaneseq
    %v2510 = vshrl.u32 %v2509, 7
    %v2511 = vsub.s32 0, %v2510
    %v2512 = vrot.slane %v2501, %v2511
    %v2513 = vlaneseq
    %v2514 = vshrl.u32 %v2513, 7
    %v2515 = vsub.s32 0, %v2514
    %v2516 = vrot.slane %v2508, %v2515
    %v2519 = vadd.f32 %v1054, %v2512
    %v2520 = vadd.f32 %v1057, %v2512
    %v2521 = vadd.f32 %v1062, %v2516
    %v2522 = vadd.f32 %v1065, %v2516
    %v2523 = vmax.f32 %v2519, 0.0
    %v2524 = vmax.f32 %v2520, 0.0
    %v2525 = vmax.f32 %v2521, 0.0
    %v2526 = vmax.f32 %v2522, 0.0
    %v2527 = vmul.f32 %v2523, %v1184
    %v2528 = vmul.f32 %v2524, %v1184
    %v2529 = vmul.f32 %v2525, %v1184
    %v2530 = vmul.f32 %v2526, %v1184
    %v2531 = vsel %vm830, %v2527, 0.0
    %2532 = vadd.xlane.f32.xlu0 %v2531
    %v2533 = vpop.xlane.xlu0 %2532
    %v2534 = vsel %vm830, %v2528, 0.0
    %2535 = vadd.xlane.f32.xlu0 %v2534
    %v2536 = vpop.xlane.xlu0 %2535
    %v2537 = vsel %vm830, %v2529, 0.0
    %2538 = vadd.xlane.f32.xlu0 %v2537
    %v2539 = vpop.xlane.xlu0 %2538
    %v2540 = vsel %vm830, %v2530, 0.0
    %2541 = vadd.xlane.f32.xlu0 %v2540
    %v2542 = vpop.xlane.xlu0 %2541
    %v2543 = vadd.f32 %v2533, %v1209
    %v2544 = vadd.f32 %v2536, %v1209
    %v2545 = vadd.f32 %v2539, %v1209
    %v2546 = vadd.f32 %v2542, %v1209
    %v2551 = vlaneseq
    %v2552 = vshrl.u32 %v2551, 7
    %v2553 = vsub.s32 %v1220, %v2552
    %v2554 = vrot.slane %v2543, %v2553
    %v2555 = vlaneseq
    %v2556 = vshrl.u32 %v2555, 7
    %v2557 = vsub.s32 %v1225, %v2556
    %v2558 = vrot.slane %v2544, %v2557
    %v2559 = vsel %vm1230, %v2558, %v2554
    %v2560 = vlaneseq
    %v2561 = vshrl.u32 %v2560, 7
    %v2562 = vsub.s32 %v1220, %v2561
    %v2563 = vrot.slane %v2545, %v2562
    %v2564 = vlaneseq
    %v2565 = vshrl.u32 %v2564, 7
    %v2566 = vsub.s32 %v1225, %v2565
    %v2567 = vrot.slane %v2546, %v2566
    %v2568 = vsel %vm1230, %v2567, %v2563
    %v2569 = vsel %vm869, %v2568, %v2559
    %v2571 = vsel %vm1243, %v2569, -inf
    %2572 = vmax.xlane.f32.xlu0 %v2571
    %v2573 = vpop.xlane.xlu0 %2572
    %v2575 = vlaneseq
    %v2576 = vshrl.u32 %v2575, 7
    %v2577 = vsub.s32 0, %v2576
    %v2578 = vrot.slane %v2573, %v2577
    %v2579 = vlaneseq
    %v2580 = vshrl.u32 %v2579, 7
    %v2581 = vsub.s32 1, %v2580
    %v2582 = vrot.slane %v2573, %v2581
    %v2585 = vsub.f32 %v2543, %v2578
    %v2586 = vsub.f32 %v2544, %v2578
    %v2587 = vsub.f32 %v2545, %v2582
    %v2588 = vsub.f32 %v2546, %v2582
    %v2589 = vmul.f32 %v2585, 1.442695
    %v2590 = vpow.pop %v2589
    %v2591 = vmul.f32 %v2586, 1.442695
    %v2592 = vpow.pop %v2591
    %v2593 = vmul.f32 %v2587, 1.442695
    %v2594 = vpow.pop %v2593
    %v2595 = vmul.f32 %v2588, 1.442695
    %v2596 = vpow.pop %v2595
    %2601 = vset.pattern.permute.xlu0 0
    %2602 = vperm.xlu0 %2601, %v2590
    %v2603 = vpop.permute.xlu0 %2602
    %2604 = vset.pattern.permute.xlu0 0
    %2605 = vperm.xlu0 %2604, %v2592
    %v2606 = vpop.permute.xlu0 %2605
    %2607 = vset.pattern.permute.xlu0 0
    %2608 = vperm.xlu0 %2607, %v2594
    %v2609 = vpop.permute.xlu0 %2608
    %2610 = vset.pattern.permute.xlu0 0
    %2611 = vperm.xlu0 %2610, %v2596
    %v2612 = vpop.permute.xlu0 %2611
    %v2613 = vlaneseq
    %v2614 = vshrl.u32 %v2613, 7
    %v2615 = vsub.s32 %v1220, %v2614
    %v2616 = vrot.slane %v2603, %v2615
    %v2617 = vlaneseq
    %v2618 = vshrl.u32 %v2617, 7
    %v2619 = vsub.s32 %v1225, %v2618
    %v2620 = vrot.slane %v2606, %v2619
    %v2621 = vsel %vm1230, %v2620, %v2616
    %v2622 = vlaneseq
    %v2623 = vshrl.u32 %v2622, 7
    %v2624 = vsub.s32 %v1220, %v2623
    %v2625 = vrot.slane %v2609, %v2624
    %v2626 = vlaneseq
    %v2627 = vshrl.u32 %v2626, 7
    %v2628 = vsub.s32 %v1225, %v2627
    %v2629 = vrot.slane %v2612, %v2628
    %v2630 = vsel %vm1230, %v2629, %v2625
    %v2631 = vsel %vm869, %v2630, %v2621
    %v2633 = vsel %vm1243, %v2631, 0.0
    %2634 = vadd.xlane.f32.xlu0 %v2633
    %v2635 = vpop.xlane.xlu0 %2634
    %v2637 = vlaneseq
    %v2638 = vshrl.u32 %v2637, 7
    %v2639 = vsub.s32 0, %v2638
    %v2640 = vrot.slane %v2635, %v2639
    %v2641 = vlaneseq
    %v2642 = vshrl.u32 %v2641, 7
    %v2643 = vsub.s32 1, %v2642
    %v2644 = vrot.slane %v2635, %v2643
    %v2647 = vrcp.pop %v2640
    %v2648 = vmul.f32 %v2590, %v2647
    %v2649 = vmul.f32 %v2592, %v2647
    %v2650 = vrcp.pop %v2644
    %v2651 = vmul.f32 %v2594, %v2650
    %v2652 = vmul.f32 %v2596, %v2650
    %2654 = vset.pattern.permute.xlu0 0
    %2655 = vperm.xlu0 %2654, %v2648
    %v2656 = vpop.permute.xlu0 %2655
    %2659 = vset.pattern.permute.xlu0 0
    %2660 = vperm.xlu0 %2659, %v2649
    %v2661 = vpop.permute.xlu0 %2660
    %2664 = vset.pattern.permute.xlu0 0
    %2665 = vperm.xlu0 %2664, %v2651
    %v2666 = vpop.permute.xlu0 %2665
    %2669 = vset.pattern.permute.xlu0 0
    %2670 = vperm.xlu0 %2669, %v2652
    %v2671 = vpop.permute.xlu0 %2670
    %v2673 = vmul.f32 %v2656, %v814
    %v2674 = vmul.f32 %v2661, %v817
    %v2675 = vmul.f32 %v2666, %v822
    %v2676 = vmul.f32 %v2671, %v825
    %v2677 = vsel %vm830, %v2673, 0.0
    %v2678 = vsel %vm830, %v2674, 0.0
    %v2679 = vadd.f32 %v2677, %v2678
    %v2680 = vrot.slane %v2679, 4
    %v2681 = vadd.f32 %v2679, %v2680
    %v2682 = vrot.slane %v2681, 2
    %v2683 = vadd.f32 %v2681, %v2682
    %v2684 = vrot.slane %v2683, 1
    %v2685 = vadd.f32 %v2683, %v2684
    %v2686 = vsel %vm830, %v2675, 0.0
    %v2687 = vsel %vm830, %v2676, 0.0
    %v2688 = vadd.f32 %v2686, %v2687
    %v2689 = vrot.slane %v2688, 4
    %v2690 = vadd.f32 %v2688, %v2689
    %v2691 = vrot.slane %v2690, 2
    %v2692 = vadd.f32 %v2690, %v2691
    %v2693 = vrot.slane %v2692, 1
    %v2694 = vadd.f32 %v2692, %v2693
    %v2695 = vld [vmem:[%s17] sm:$0xf]
    %v2696 = vld [vmem:[%s17 + $0x4] sm:$0xf]
    %v2697 = vld [vmem:[%s17 + $0x8] sm:$0xf]
    %v2698 = vld [vmem:[%s17 + $0xc] sm:$0xf]
    %v2699 = vld [vmem:[%s18] sm:$0x1]
    %v2701 = vlaneseq
    %v2702 = vshrl.u32 %v2701, 7
    %v2703 = vsub.s32 0, %v2702
    %v2704 = vrot.slane %v2699, %v2703
    %v2710 = vunpack.c.l.b16 %v2695
    %v2711 = vunpack.c.l.b16 %v2696
    %v2712 = vunpack.c.l.b16 %v2697
    %v2713 = vunpack.c.l.b16 %v2698
    %v2714 = vpack.c.b16 %v2711, %v2710
    %v2715 = vpack.c.b16 %v2713, %v2712
    %2718 = vmatprep.subr.bf16.mxu0 0
    %2719 = vmatpush1.bf16.msra.mxu0 %v2714
    %2720 = vmatprep.subr.bf16.mxu0 0
    %2721 = vmatpush1.bf16.msra.mxu0 %v2715
    %2722 = vmatprep.subr.bf16.mxu0 0
    %2723 = vmatpush1.bf16.msra.mxu0 0
    %2724 = vmatprep.subr.bf16.mxu0 0
    %2725 = vmatpush1.bf16.msra.mxu0 0
    %2726 = vmatprep.subr.bf16.mxu0 0
    %2727 = vmatpush1.bf16.msra.mxu0 0
    %2728 = vmatprep.subr.bf16.mxu0 0
    %2729 = vmatpush1.bf16.msra.mxu0 0
    %2730 = vmatprep.subr.bf16.mxu0 0
    %2731 = vmatpush1.bf16.msra.mxu0 0
    %2732 = vmatprep.subr.bf16.mxu0 0
    %2733 = vmatpush1.bf16.msra.mxu0 0
    %2734 = vmatprep.subr.bf16.mxu0 0
    %2735 = vmatpush1.bf16.msra.mxu0 0
    %2736 = vmatprep.subr.bf16.mxu0 0
    %2737 = vmatpush1.bf16.msra.mxu0 0
    %2738 = vmatprep.subr.bf16.mxu0 0
    %2739 = vmatpush1.bf16.msra.mxu0 0
    %2740 = vmatprep.subr.bf16.mxu0 0
    %2741 = vmatpush1.bf16.msra.mxu0 0
    %2742 = vmatprep.subr.bf16.mxu0 0
    %2743 = vmatpush1.bf16.msra.mxu0 0
    %2744 = vmatprep.subr.bf16.mxu0 0
    %2745 = vmatpush1.bf16.msra.mxu0 0
    %2746 = vmatprep.subr.bf16.mxu0 0
    %2747 = vmatpush1.bf16.msra.mxu0 0
    %2748 = vmatprep.subr.bf16.mxu0 0
    %2749 = vmatpush1.bf16.msra.mxu0 0
    %2750 = vmatprep.mubr.bf16.mxu0 0
    %2751 = vmatmul.mubr.bf16.gmra.mrb[0].mxu0 %v2293
    %v2752 = vpop.f32.mrb[0].mxu0
    %v2753 = vadd.f32 %v2704, %v2752
    %v2754 = vpop.f32.mrb[0].mxu0
    %v2755 = vpop.f32.mrb[0].mxu0
    %v2756 = vpop.f32.mrb[0].mxu0
    %2757 = vdwg.mxu0
    %v2758 = vxor.u32 %v2753, 2147483648
    %v2759 = vmul.f32 %v2758, 1.442695
    %v2760 = vpow.pop %v2759
    %v2761 = vadd.f32 %v2760, 1.0
    %v2762 = vrcp.pop %v2761
    %v2763 = vmul.f32 1.0, %v2762
    %v2766 = vsel %vm869, %v2694, %v2685
    %v2768 = vmul.f32 %v2763, %v2766
    %s2769 = sld [smem:[#allocation4 + $0x2]]
    %s2770 = scalar_lea.vmem %s6, %s2769
    %v2771 = vld [vmem:[%s2770] sm:$0x1]
    %2772 = vst.msk [vmem:[#allocation2] sm:$0x1] %vm1445, %v2771
    %s2773 = sld [smem:[#allocation4 + $0x82]]
    %s2774 = scalar_lea.vmem %s6, %s2773
    %v2775 = vld [vmem:[%s2774] sm:$0x1]
    %2776 = vst.msk [vmem:[#allocation2 + $0x1] sm:$0x1] %vm1445, %v2775
    %2778 = vrot.lane.b32.xlu0 %v2768, 32
    %v2779 = vpop.permute.xlu0 %2778
    %2781 = vst.msk [vmem:[#allocation2] sm:$0x3] %vm1455, %v2779
    %2783 = vrot.lane.b32.xlu0 %v2264, 96
    %v2784 = vpop.permute.xlu0 %2783
    %2786 = vst.msk [vmem:[#allocation2] sm:$0x3] %vm1461, %v2784
    %v2787 = vld [vmem:[#allocation2] sm:$0x3]
    %v2788 = vpack.c.bf16 %v2787, %v2787
    %v2789 = vld [vmem:[%s19] sm:$0xf]
    %v2790 = vld [vmem:[%s19 + $0x4] sm:$0xf]
    %v2791 = vld [vmem:[%s19 + $0x8] sm:$0xf]
    %v2792 = vld [vmem:[%s19 + $0xc] sm:$0xf]
    %v2793 = vld [vmem:[%s19 + $0x10] sm:$0xf]
    %v2794 = vld [vmem:[%s19 + $0x14] sm:$0xf]
    %v2795 = vld [vmem:[%s19 + $0x18] sm:$0xf]
    %v2796 = vld [vmem:[%s19 + $0x1c] sm:$0xf]
    %v2797 = vld [vmem:[%s19 + $0x20] sm:$0xf]
    %v2798 = vld [vmem:[%s19 + $0x24] sm:$0xf]
    %v2799 = vld [vmem:[%s19 + $0x28] sm:$0xf]
    %v2800 = vld [vmem:[%s19 + $0x2c] sm:$0xf]
    %v2801 = vld [vmem:[%s19 + $0x30] sm:$0xf]
    %v2802 = vld [vmem:[%s19 + $0x34] sm:$0xf]
    %v2803 = vld [vmem:[%s19 + $0x38] sm:$0xf]
    %v2804 = vld [vmem:[%s19 + $0x3c] sm:$0xf]
    %v2805 = vld [vmem:[%s20] sm:$0x1]
    %v2807 = vlaneseq
    %v2808 = vshrl.u32 %v2807, 7
    %v2809 = vsub.s32 0, %v2808
    %v2810 = vrot.slane %v2805, %v2809
    %v2828 = vunpack.c.l.b16 %v2789
    %v2829 = vunpack.c.l.b16 %v2790
    %v2830 = vunpack.c.l.b16 %v2791
    %v2831 = vunpack.c.l.b16 %v2792
    %v2832 = vunpack.c.l.b16 %v2793
    %v2833 = vunpack.c.l.b16 %v2794
    %v2834 = vunpack.c.l.b16 %v2795
    %v2835 = vunpack.c.l.b16 %v2796
    %v2836 = vunpack.c.l.b16 %v2797
    %v2837 = vunpack.c.l.b16 %v2798
    %v2838 = vunpack.c.l.b16 %v2799
    %v2839 = vunpack.c.l.b16 %v2800
    %v2840 = vunpack.c.l.b16 %v2801
    %v2841 = vunpack.c.l.b16 %v2802
    %v2842 = vunpack.c.l.b16 %v2803
    %v2843 = vunpack.c.l.b16 %v2804
    %v2844 = vpack.c.b16 %v2829, %v2828
    %v2845 = vpack.c.b16 %v2831, %v2830
    %v2846 = vpack.c.b16 %v2833, %v2832
    %v2847 = vpack.c.b16 %v2835, %v2834
    %v2848 = vpack.c.b16 %v2837, %v2836
    %v2849 = vpack.c.b16 %v2839, %v2838
    %v2850 = vpack.c.b16 %v2841, %v2840
    %v2851 = vpack.c.b16 %v2843, %v2842
    %2860 = vmatprep.subr.bf16.mxu0 0
    %2861 = vmatpush1.bf16.msra.mxu0 %v2844
    %2862 = vmatprep.subr.bf16.mxu0 0
    %2863 = vmatpush1.bf16.msra.mxu0 %v2845
    %2864 = vmatprep.subr.bf16.mxu0 0
    %2865 = vmatpush1.bf16.msra.mxu0 %v2846
    %2866 = vmatprep.subr.bf16.mxu0 0
    %2867 = vmatpush1.bf16.msra.mxu0 %v2847
    %2868 = vmatprep.subr.bf16.mxu0 0
    %2869 = vmatpush1.bf16.msra.mxu0 %v2848
    %2870 = vmatprep.subr.bf16.mxu0 0
    %2871 = vmatpush1.bf16.msra.mxu0 %v2849
    %2872 = vmatprep.subr.bf16.mxu0 0
    %2873 = vmatpush1.bf16.msra.mxu0 %v2850
    %2874 = vmatprep.subr.bf16.mxu0 0
    %2875 = vmatpush1.bf16.msra.mxu0 %v2851
    %2876 = vmatprep.subr.bf16.mxu0 0
    %2877 = vmatpush1.bf16.msra.mxu0 0
    %2878 = vmatprep.subr.bf16.mxu0 0
    %2879 = vmatpush1.bf16.msra.mxu0 0
    %2880 = vmatprep.subr.bf16.mxu0 0
    %2881 = vmatpush1.bf16.msra.mxu0 0
    %2882 = vmatprep.subr.bf16.mxu0 0
    %2883 = vmatpush1.bf16.msra.mxu0 0
    %2884 = vmatprep.subr.bf16.mxu0 0
    %2885 = vmatpush1.bf16.msra.mxu0 0
    %2886 = vmatprep.subr.bf16.mxu0 0
    %2887 = vmatpush1.bf16.msra.mxu0 0
    %2888 = vmatprep.subr.bf16.mxu0 0
    %2889 = vmatpush1.bf16.msra.mxu0 0
    %2890 = vmatprep.subr.bf16.mxu0 0
    %2891 = vmatpush1.bf16.msra.mxu0 0
    %2892 = vmatprep.mubr.bf16.mxu0 0
    %2893 = vmatmul.mubr.bf16.gmra.mrb[0].mxu0 %v2788
    %v2894 = vpop.f32.mrb[0].mxu0
    %v2895 = vadd.f32 %v2810, %v2894
    %v2896 = vpop.f32.mrb[0].mxu0
    %v2897 = vpop.f32.mrb[0].mxu0
    %v2898 = vpop.f32.mrb[0].mxu0
    %2899 = vdwg.mxu0
    %v2900 = vxor.u32 %v2895, 2147483648
    %v2901 = vmul.f32 %v2900, 1.442695
    %v2902 = vpow.pop %v2901
    %v2903 = vadd.f32 %v2902, 1.0
    %v2904 = vrcp.pop %v2903
    %v2905 = vmul.f32 1.0, %v2904
    %v2906 = vtanh.pop %v2895
    %v2907 = vmul.f32 %v2905, %v2258
    %2909 = vrot.lane.b32.xlu0 %v2906, 64
    %v2910 = vpop.permute.xlu0 %2909
    %v2912 = vmul.f32 %v2905, %v2910
    %2914 = vrot.lane.b32.xlu0 %v2912, 32
    %v2915 = vpop.permute.xlu0 %2914
    %v2917 = vadd.f32 %v2907, %v2915
    %v2918 = vtanh.pop %v2917
    %2920 = vrot.lane.b32.xlu0 %v2918, 64
    %v2921 = vpop.permute.xlu0 %2920
    %v2923 = vmul.f32 %v2905, %v2921
    %v2924 = vpack.c.bf16 %v2923, %v2923
    %v2925 = vld [vmem:[%s21] sm:$0xf]
    %v2926 = vld [vmem:[%s21 + $0x4] sm:$0xf]
    %v2927 = vld [vmem:[%s21 + $0x8] sm:$0xf]
    %v2928 = vld [vmem:[%s21 + $0xc] sm:$0xf]
    %v2929 = vld [vmem:[%s22] sm:$0x1]
    %v2931 = vlaneseq
    %v2932 = vshrl.u32 %v2931, 7
    %v2933 = vsub.s32 0, %v2932
    %v2934 = vrot.slane %v2929, %v2933
    %2937 = vrot.lane.b32.xlu0 %v2924, 32
    %v2938 = vpop.permute.xlu0 %2937
    %v2943 = vunpack.c.l.b16 %v2925
    %v2944 = vunpack.c.l.b16 %v2926
    %v2945 = vunpack.c.l.b16 %v2927
    %v2946 = vunpack.c.l.b16 %v2928
    %v2947 = vpack.c.b16 %v2944, %v2943
    %v2948 = vpack.c.b16 %v2946, %v2945
    %v2952 = vsel %vm830, %v2938, 0
    %2954 = vmatprep.subr.bf16.mxu0 0
    %2955 = vmatpush1.bf16.msra.mxu0 %v2947
    %2956 = vmatprep.subr.bf16.mxu0 0
    %2957 = vmatpush1.bf16.msra.mxu0 %v2948
    %2958 = vmatprep.subr.bf16.mxu0 0
    %2959 = vmatpush1.bf16.msra.mxu0 0
    %2960 = vmatprep.subr.bf16.mxu0 0
    %2961 = vmatpush1.bf16.msra.mxu0 0
    %2962 = vmatprep.subr.bf16.mxu0 0
    %2963 = vmatpush1.bf16.msra.mxu0 0
    %2964 = vmatprep.subr.bf16.mxu0 0
    %2965 = vmatpush1.bf16.msra.mxu0 0
    %2966 = vmatprep.subr.bf16.mxu0 0
    %2967 = vmatpush1.bf16.msra.mxu0 0
    %2968 = vmatprep.subr.bf16.mxu0 0
    %2969 = vmatpush1.bf16.msra.mxu0 0
    %2970 = vmatprep.subr.bf16.mxu0 0
    %2971 = vmatpush1.bf16.msra.mxu0 0
    %2972 = vmatprep.subr.bf16.mxu0 0
    %2973 = vmatpush1.bf16.msra.mxu0 0
    %2974 = vmatprep.subr.bf16.mxu0 0
    %2975 = vmatpush1.bf16.msra.mxu0 0
    %2976 = vmatprep.subr.bf16.mxu0 0
    %2977 = vmatpush1.bf16.msra.mxu0 0
    %2978 = vmatprep.subr.bf16.mxu0 0
    %2979 = vmatpush1.bf16.msra.mxu0 0
    %2980 = vmatprep.subr.bf16.mxu0 0
    %2981 = vmatpush1.bf16.msra.mxu0 0
    %2982 = vmatprep.subr.bf16.mxu0 0
    %2983 = vmatpush1.bf16.msra.mxu0 0
    %2984 = vmatprep.subr.bf16.mxu0 0
    %2985 = vmatpush1.bf16.msra.mxu0 0
    %2986 = vmatprep.mubr.bf16.mxu0 0
    %2987 = vmatmul.mubr.bf16.gmra.mrb[0].mxu0 %v2952
    %v2988 = vpop.f32.mrb[0].mxu0
    %v2989 = vadd.f32 %v2934, %v2988
    %v2990 = vpop.f32.mrb[0].mxu0
    %v2991 = vpop.f32.mrb[0].mxu0
    %v2992 = vpop.f32.mrb[0].mxu0
    %2993 = vdwg.mxu0
    %vm2994 = vcmp.gt.s32.totalorder %v1069, 2
    %v2995 = vsel %vm2994, 1, 0
    %v2996 = vcvt.s32.f32 %v2995
    %2998 = vset.pattern.permute.xlu0 0
    %2999 = vperm.xlu0 %2998, %v2996
    %v3000 = vpop.permute.xlu0 %2999
    %v3002 = vmul.f32 %v2989, %v3000
    %v3005 = vunpack.c.l.s4 1966171168
    %v3006 = vunpack.c.0.s8 %v3005
    %v3007 = vlaneseq
    %v3008 = vshrl.u32 %v3007, 7
    %v3009 = vsub.s32 %v3006, %v3008
    %v3010 = vrot.slane %v3002, %v3009
    %v3011 = vcombine.high %v3010, %v3010
    %v3013 = vunpack.c.l.s4 1966171168
    %v3014 = vunpack.c.0.s8 %v3013
    %v3015 = vlaneseq
    %v3016 = vshrl.u32 %v3015, 7
    %v3017 = vsub.s32 %v3014, %v3016
    %v3018 = vrot.slane %v3010, %v3017
    %v3020 = vunpack.c.l.s4 1966171168
    %v3021 = vunpack.c.0.s8 %v3020
    %v3022 = vlaneseq
    %v3023 = vshrl.u32 %v3022, 7
    %v3024 = vsub.s32 %v3021, %v3023
    %v3025 = vrot.slane %v3011, %v3024
    %3028 = vst.msk [vmem:[%s23 + $0x2] sm:$0x1] %vm1708, %v3018
    %3029 = vst.msk [vmem:[%s23 + $0xa] sm:$0x1] %vm1708, %v3025
    %v3030 = vlaneseq
    %v3031 = vshrl.u32 %v3030, 7
    %v3032 = vsub.s32 0, %v3031
    %v3033 = vrot.slane %v3000, %v3032
    %v3034 = vlaneseq
    %v3035 = vshrl.u32 %v3034, 7
    %v3036 = vsub.s32 1, %v3035
    %v3037 = vrot.slane %v3000, %v3036
    %v3040 = vmul.f32 %v2648, %v3033
    %v3041 = vmul.f32 %v2649, %v3033
    %v3042 = vmul.f32 %v2651, %v3037
    %v3043 = vmul.f32 %v2652, %v3037
    %3048 = vset.pattern.permute.xlu0 0
    %3049 = vperm.xlu0 %3048, %v3040
    %v3050 = vpop.permute.xlu0 %3049
    %3051 = vset.pattern.permute.xlu0 0
    %3052 = vperm.xlu0 %3051, %v3041
    %v3053 = vpop.permute.xlu0 %3052
    %3054 = vset.pattern.permute.xlu0 0
    %3055 = vperm.xlu0 %3054, %v3042
    %v3056 = vpop.permute.xlu0 %3055
    %3057 = vset.pattern.permute.xlu0 0
    %3058 = vperm.xlu0 %3057, %v3043
    %v3059 = vpop.permute.xlu0 %3058
    %v3060 = vlaneseq
    %v3061 = vshrl.u32 %v3060, 7
    %v3062 = vsub.s32 %v1220, %v3061
    %v3063 = vrot.slane %v3050, %v3062
    %v3064 = vlaneseq
    %v3065 = vshrl.u32 %v3064, 7
    %v3066 = vsub.s32 %v1225, %v3065
    %v3067 = vrot.slane %v3053, %v3066
    %v3068 = vsel %vm1230, %v3067, %v3063
    %v3069 = vlaneseq
    %v3070 = vshrl.u32 %v3069, 7
    %v3071 = vsub.s32 %v1220, %v3070
    %v3072 = vrot.slane %v3056, %v3071
    %v3073 = vlaneseq
    %v3074 = vshrl.u32 %v3073, 7
    %v3075 = vsub.s32 %v1225, %v3074
    %v3076 = vrot.slane %v3059, %v3075
    %v3077 = vsel %vm1230, %v3076, %v3072
    %3080 = vst.msk [vmem:[%s24 + $0x2] sm:$0x1] %vm1761, %v3068
    %3081 = vst.msk [vmem:[%s24 + $0xa] sm:$0x1] %vm1761, %v3077
    %v3082 = vld [vmem:[%s13] sm:$0xf]
    %v3083 = vld [vmem:[%s13 + $0x4] sm:$0xf]
    %v3084 = vld [vmem:[%s13 + $0x8] sm:$0xf]
    %v3085 = vld [vmem:[%s13 + $0xc] sm:$0xf]
    %v3086 = vld [vmem:[%s14] sm:$0x1]
    %v3088 = vlaneseq
    %v3089 = vshrl.u32 %v3088, 7
    %v3090 = vsub.s32 0, %v3089
    %v3091 = vrot.slane %v3086, %v3090
    %v3097 = vunpack.c.l.b16 %v3082
    %v3098 = vunpack.c.l.b16 %v3083
    %v3099 = vunpack.c.l.b16 %v3084
    %v3100 = vunpack.c.l.b16 %v3085
    %v3101 = vpack.c.b16 %v3098, %v3097
    %v3102 = vpack.c.b16 %v3100, %v3099
    %3105 = vmatprep.subr.bf16.mxu0 0
    %3106 = vmatpush1.bf16.msra.mxu0 %v3101
    %3107 = vmatprep.subr.bf16.mxu0 0
    %3108 = vmatpush1.bf16.msra.mxu0 %v3102
    %3109 = vmatprep.subr.bf16.mxu0 0
    %3110 = vmatpush1.bf16.msra.mxu0 0
    %3111 = vmatprep.subr.bf16.mxu0 0
    %3112 = vmatpush1.bf16.msra.mxu0 0
    %3113 = vmatprep.subr.bf16.mxu0 0
    %3114 = vmatpush1.bf16.msra.mxu0 0
    %3115 = vmatprep.subr.bf16.mxu0 0
    %3116 = vmatpush1.bf16.msra.mxu0 0
    %3117 = vmatprep.subr.bf16.mxu0 0
    %3118 = vmatpush1.bf16.msra.mxu0 0
    %3119 = vmatprep.subr.bf16.mxu0 0
    %3120 = vmatpush1.bf16.msra.mxu0 0
    %3121 = vmatprep.subr.bf16.mxu0 0
    %3122 = vmatpush1.bf16.msra.mxu0 0
    %3123 = vmatprep.subr.bf16.mxu0 0
    %3124 = vmatpush1.bf16.msra.mxu0 0
    %3125 = vmatprep.subr.bf16.mxu0 0
    %3126 = vmatpush1.bf16.msra.mxu0 0
    %3127 = vmatprep.subr.bf16.mxu0 0
    %3128 = vmatpush1.bf16.msra.mxu0 0
    %3129 = vmatprep.subr.bf16.mxu0 0
    %3130 = vmatpush1.bf16.msra.mxu0 0
    %3131 = vmatprep.subr.bf16.mxu0 0
    %3132 = vmatpush1.bf16.msra.mxu0 0
    %3133 = vmatprep.subr.bf16.mxu0 0
    %3134 = vmatpush1.bf16.msra.mxu0 0
    %3135 = vmatprep.subr.bf16.mxu0 0
    %3136 = vmatpush1.bf16.msra.mxu0 0
    %3137 = vmatprep.mubr.bf16.mxu0 0
    %3138 = vmatmul.mubr.bf16.gmra.mrb[0].mxu0 %v2952
    %v3139 = vpop.f32.mrb[0].mxu0
    %v3140 = vadd.f32 %v3091, %v3139
    %v3141 = vpop.f32.mrb[0].mxu0
    %v3142 = vpop.f32.mrb[0].mxu0
    %v3143 = vpop.f32.mrb[0].mxu0
    %3144 = vdwg.mxu0
    %v3147 = vunpack.c.l.s4 1966171168
    %v3148 = vunpack.c.0.s8 %v3147
    %v3149 = vlaneseq
    %v3150 = vshrl.u32 %v3149, 7
    %v3151 = vsub.s32 %v3148, %v3150
    %v3152 = vrot.slane %v3140, %v3151
    %v3153 = vcombine.high %v3152, %v3152
    %v3155 = vunpack.c.l.s4 1966171168
    %v3156 = vunpack.c.0.s8 %v3155
    %v3157 = vlaneseq
    %v3158 = vshrl.u32 %v3157, 7
    %v3159 = vsub.s32 %v3156, %v3158
    %v3160 = vrot.slane %v3152, %v3159
    %v3162 = vunpack.c.l.s4 1966171168
    %v3163 = vunpack.c.0.s8 %v3162
    %v3164 = vlaneseq
    %v3165 = vshrl.u32 %v3164, 7
    %v3166 = vsub.s32 %v3163, %v3165
    %v3167 = vrot.slane %v3153, %v3166
    %v3168 = vlaneseq
    %v3169 = vshrl.u32 %v3168, 7
    %v3170 = vsub.s32 0, %v3169
    %v3171 = vrot.slane %v3160, %v3170
    %v3172 = vlaneseq
    %v3173 = vshrl.u32 %v3172, 7
    %v3174 = vsub.s32 0, %v3173
    %v3175 = vrot.slane %v3167, %v3174
    %v3178 = vadd.f32 %v1054, %v3171
    %v3179 = vadd.f32 %v1057, %v3171
    %v3180 = vadd.f32 %v1062, %v3175
    %v3181 = vadd.f32 %v1065, %v3175
    %v3182 = vmax.f32 %v3178, 0.0
    %v3183 = vmax.f32 %v3179, 0.0
    %v3184 = vmax.f32 %v3180, 0.0
    %v3185 = vmax.f32 %v3181, 0.0
    %v3186 = vmul.f32 %v3182, %v1184
    %v3187 = vmul.f32 %v3183, %v1184
    %v3188 = vmul.f32 %v3184, %v1184
    %v3189 = vmul.f32 %v3185, %v1184
    %v3190 = vsel %vm830, %v3186, 0.0
    %3191 = vadd.xlane.f32.xlu0 %v3190
    %v3192 = vpop.xlane.xlu0 %3191
    %v3193 = vsel %vm830, %v3187, 0.0
    %3194 = vadd.xlane.f32.xlu0 %v3193
    %v3195 = vpop.xlane.xlu0 %3194
    %v3196 = vsel %vm830, %v3188, 0.0
    %3197 = vadd.xlane.f32.xlu0 %v3196
    %v3198 = vpop.xlane.xlu0 %3197
    %v3199 = vsel %vm830, %v3189, 0.0
    %3200 = vadd.xlane.f32.xlu0 %v3199
    %v3201 = vpop.xlane.xlu0 %3200
    %v3202 = vadd.f32 %v3192, %v1209
    %v3203 = vadd.f32 %v3195, %v1209
    %v3204 = vadd.f32 %v3198, %v1209
    %v3205 = vadd.f32 %v3201, %v1209
    %v3210 = vlaneseq
    %v3211 = vshrl.u32 %v3210, 7
    %v3212 = vsub.s32 %v1220, %v3211
    %v3213 = vrot.slane %v3202, %v3212
    %v3214 = vlaneseq
    %v3215 = vshrl.u32 %v3214, 7
    %v3216 = vsub.s32 %v1225, %v3215
    %v3217 = vrot.slane %v3203, %v3216
    %v3218 = vsel %vm1230, %v3217, %v3213
    %v3219 = vlaneseq
    %v3220 = vshrl.u32 %v3219, 7
    %v3221 = vsub.s32 %v1220, %v3220
    %v3222 = vrot.slane %v3204, %v3221
    %v3223 = vlaneseq
    %v3224 = vshrl.u32 %v3223, 7
    %v3225 = vsub.s32 %v1225, %v3224
    %v3226 = vrot.slane %v3205, %v3225
    %v3227 = vsel %vm1230, %v3226, %v3222
    %v3228 = vsel %vm869, %v3227, %v3218
    %v3230 = vsel %vm1243, %v3228, -inf
    %3231 = vmax.xlane.f32.xlu0 %v3230
    %v3232 = vpop.xlane.xlu0 %3231
    %v3234 = vlaneseq
    %v3235 = vshrl.u32 %v3234, 7
    %v3236 = vsub.s32 0, %v3235
    %v3237 = vrot.slane %v3232, %v3236
    %v3238 = vlaneseq
    %v3239 = vshrl.u32 %v3238, 7
    %v3240 = vsub.s32 1, %v3239
    %v3241 = vrot.slane %v3232, %v3240
    %v3244 = vsub.f32 %v3202, %v3237
    %v3245 = vsub.f32 %v3203, %v3237
    %v3246 = vsub.f32 %v3204, %v3241
    %v3247 = vsub.f32 %v3205, %v3241
    %v3248 = vmul.f32 %v3244, 1.442695
    %v3249 = vpow.pop %v3248
    %v3250 = vmul.f32 %v3245, 1.442695
    %v3251 = vpow.pop %v3250
    %v3252 = vmul.f32 %v3246, 1.442695
    %v3253 = vpow.pop %v3252
    %v3254 = vmul.f32 %v3247, 1.442695
    %v3255 = vpow.pop %v3254
    %3260 = vset.pattern.permute.xlu0 0
    %3261 = vperm.xlu0 %3260, %v3249
    %v3262 = vpop.permute.xlu0 %3261
    %3263 = vset.pattern.permute.xlu0 0
    %3264 = vperm.xlu0 %3263, %v3251
    %v3265 = vpop.permute.xlu0 %3264
    %3266 = vset.pattern.permute.xlu0 0
    %3267 = vperm.xlu0 %3266, %v3253
    %v3268 = vpop.permute.xlu0 %3267
    %3269 = vset.pattern.permute.xlu0 0
    %3270 = vperm.xlu0 %3269, %v3255
    %v3271 = vpop.permute.xlu0 %3270
    %v3272 = vlaneseq
    %v3273 = vshrl.u32 %v3272, 7
    %v3274 = vsub.s32 %v1220, %v3273
    %v3275 = vrot.slane %v3262, %v3274
    %v3276 = vlaneseq
    %v3277 = vshrl.u32 %v3276, 7
    %v3278 = vsub.s32 %v1225, %v3277
    %v3279 = vrot.slane %v3265, %v3278
    %v3280 = vsel %vm1230, %v3279, %v3275
    %v3281 = vlaneseq
    %v3282 = vshrl.u32 %v3281, 7
    %v3283 = vsub.s32 %v1220, %v3282
    %v3284 = vrot.slane %v3268, %v3283
    %v3285 = vlaneseq
    %v3286 = vshrl.u32 %v3285, 7
    %v3287 = vsub.s32 %v1225, %v3286
    %v3288 = vrot.slane %v3271, %v3287
    %v3289 = vsel %vm1230, %v3288, %v3284
    %v3290 = vsel %vm869, %v3289, %v3280
    %v3292 = vsel %vm1243, %v3290, 0.0
    %3293 = vadd.xlane.f32.xlu0 %v3292
    %v3294 = vpop.xlane.xlu0 %3293
    %v3296 = vlaneseq
    %v3297 = vshrl.u32 %v3296, 7
    %v3298 = vsub.s32 0, %v3297
    %v3299 = vrot.slane %v3294, %v3298
    %v3300 = vlaneseq
    %v3301 = vshrl.u32 %v3300, 7
    %v3302 = vsub.s32 1, %v3301
    %v3303 = vrot.slane %v3294, %v3302
    %v3306 = vrcp.pop %v3299
    %v3307 = vmul.f32 %v3249, %v3306
    %v3308 = vmul.f32 %v3251, %v3306
    %v3309 = vrcp.pop %v3303
    %v3310 = vmul.f32 %v3253, %v3309
    %v3311 = vmul.f32 %v3255, %v3309
    %3313 = vset.pattern.permute.xlu0 0
    %3314 = vperm.xlu0 %3313, %v3307
    %v3315 = vpop.permute.xlu0 %3314
    %3318 = vset.pattern.permute.xlu0 0
    %3319 = vperm.xlu0 %3318, %v3308
    %v3320 = vpop.permute.xlu0 %3319
    %3323 = vset.pattern.permute.xlu0 0
    %3324 = vperm.xlu0 %3323, %v3310
    %v3325 = vpop.permute.xlu0 %3324
    %3328 = vset.pattern.permute.xlu0 0
    %3329 = vperm.xlu0 %3328, %v3311
    %v3330 = vpop.permute.xlu0 %3329
    %v3332 = vmul.f32 %v3315, %v814
    %v3333 = vmul.f32 %v3320, %v817
    %v3334 = vmul.f32 %v3325, %v822
    %v3335 = vmul.f32 %v3330, %v825
    %v3336 = vsel %vm830, %v3332, 0.0
    %v3337 = vsel %vm830, %v3333, 0.0
    %v3338 = vadd.f32 %v3336, %v3337
    %v3339 = vrot.slane %v3338, 4
    %v3340 = vadd.f32 %v3338, %v3339
    %v3341 = vrot.slane %v3340, 2
    %v3342 = vadd.f32 %v3340, %v3341
    %v3343 = vrot.slane %v3342, 1
    %v3344 = vadd.f32 %v3342, %v3343
    %v3345 = vsel %vm830, %v3334, 0.0
    %v3346 = vsel %vm830, %v3335, 0.0
    %v3347 = vadd.f32 %v3345, %v3346
    %v3348 = vrot.slane %v3347, 4
    %v3349 = vadd.f32 %v3347, %v3348
    %v3350 = vrot.slane %v3349, 2
    %v3351 = vadd.f32 %v3349, %v3350
    %v3352 = vrot.slane %v3351, 1
    %v3353 = vadd.f32 %v3351, %v3352
    %v3354 = vld [vmem:[%s17] sm:$0xf]
    %v3355 = vld [vmem:[%s17 + $0x4] sm:$0xf]
    %v3356 = vld [vmem:[%s17 + $0x8] sm:$0xf]
    %v3357 = vld [vmem:[%s17 + $0xc] sm:$0xf]
    %v3358 = vld [vmem:[%s18] sm:$0x1]
    %v3360 = vlaneseq
    %v3361 = vshrl.u32 %v3360, 7
    %v3362 = vsub.s32 0, %v3361
    %v3363 = vrot.slane %v3358, %v3362
    %v3369 = vunpack.c.l.b16 %v3354
    %v3370 = vunpack.c.l.b16 %v3355
    %v3371 = vunpack.c.l.b16 %v3356
    %v3372 = vunpack.c.l.b16 %v3357
    %v3373 = vpack.c.b16 %v3370, %v3369
    %v3374 = vpack.c.b16 %v3372, %v3371
    %3377 = vmatprep.subr.bf16.mxu0 0
    %3378 = vmatpush1.bf16.msra.mxu0 %v3373
    %3379 = vmatprep.subr.bf16.mxu0 0
    %3380 = vmatpush1.bf16.msra.mxu0 %v3374
    %3381 = vmatprep.subr.bf16.mxu0 0
    %3382 = vmatpush1.bf16.msra.mxu0 0
    %3383 = vmatprep.subr.bf16.mxu0 0
    %3384 = vmatpush1.bf16.msra.mxu0 0
    %3385 = vmatprep.subr.bf16.mxu0 0
    %3386 = vmatpush1.bf16.msra.mxu0 0
    %3387 = vmatprep.subr.bf16.mxu0 0
    %3388 = vmatpush1.bf16.msra.mxu0 0
    %3389 = vmatprep.subr.bf16.mxu0 0
    %3390 = vmatpush1.bf16.msra.mxu0 0
    %3391 = vmatprep.subr.bf16.mxu0 0
    %3392 = vmatpush1.bf16.msra.mxu0 0
    %3393 = vmatprep.subr.bf16.mxu0 0
    %3394 = vmatpush1.bf16.msra.mxu0 0
    %3395 = vmatprep.subr.bf16.mxu0 0
    %3396 = vmatpush1.bf16.msra.mxu0 0
    %3397 = vmatprep.subr.bf16.mxu0 0
    %3398 = vmatpush1.bf16.msra.mxu0 0
    %3399 = vmatprep.subr.bf16.mxu0 0
    %3400 = vmatpush1.bf16.msra.mxu0 0
    %3401 = vmatprep.subr.bf16.mxu0 0
    %3402 = vmatpush1.bf16.msra.mxu0 0
    %3403 = vmatprep.subr.bf16.mxu0 0
    %3404 = vmatpush1.bf16.msra.mxu0 0
    %3405 = vmatprep.subr.bf16.mxu0 0
    %3406 = vmatpush1.bf16.msra.mxu0 0
    %3407 = vmatprep.subr.bf16.mxu0 0
    %3408 = vmatpush1.bf16.msra.mxu0 0
    %3409 = vmatprep.mubr.bf16.mxu0 0
    %3410 = vmatmul.mubr.bf16.gmra.mrb[0].mxu0 %v2952
    %v3411 = vpop.f32.mrb[0].mxu0
    %v3412 = vadd.f32 %v3363, %v3411
    %v3413 = vpop.f32.mrb[0].mxu0
    %v3414 = vpop.f32.mrb[0].mxu0
    %v3415 = vpop.f32.mrb[0].mxu0
    %3416 = vdwg.mxu0
    %v3417 = vxor.u32 %v3412, 2147483648
    %v3418 = vmul.f32 %v3417, 1.442695
    %v3419 = vpow.pop %v3418
    %v3420 = vadd.f32 %v3419, 1.0
    %v3421 = vrcp.pop %v3420
    %v3422 = vmul.f32 1.0, %v3421
    %v3425 = vsel %vm869, %v3353, %v3344
    %v3427 = vmul.f32 %v3422, %v3425
    %s3428 = sld [smem:[#allocation4 + $0x3]]
    %s3429 = scalar_lea.vmem %s6, %s3428
    %v3430 = vld [vmem:[%s3429] sm:$0x1]
    %3431 = vst.msk [vmem:[#allocation2] sm:$0x1] %vm1445, %v3430
    %s3432 = sld [smem:[#allocation4 + $0x83]]
    %s3433 = scalar_lea.vmem %s6, %s3432
    %v3434 = vld [vmem:[%s3433] sm:$0x1]
    %3435 = vst.msk [vmem:[#allocation2 + $0x1] sm:$0x1] %vm1445, %v3434
    %3437 = vrot.lane.b32.xlu0 %v3427, 32
    %v3438 = vpop.permute.xlu0 %3437
    %3440 = vst.msk [vmem:[#allocation2] sm:$0x3] %vm1455, %v3438
    %3442 = vrot.lane.b32.xlu0 %v2923, 96
    %v3443 = vpop.permute.xlu0 %3442
    %3445 = vst.msk [vmem:[#allocation2] sm:$0x3] %vm1461, %v3443
    %v3446 = vld [vmem:[#allocation2] sm:$0x3]
    %v3447 = vpack.c.bf16 %v3446, %v3446
    %v3448 = vld [vmem:[%s19] sm:$0xf]
    %v3449 = vld [vmem:[%s19 + $0x4] sm:$0xf]
    %v3450 = vld [vmem:[%s19 + $0x8] sm:$0xf]
    %v3451 = vld [vmem:[%s19 + $0xc] sm:$0xf]
    %v3452 = vld [vmem:[%s19 + $0x10] sm:$0xf]
    %v3453 = vld [vmem:[%s19 + $0x14] sm:$0xf]
    %v3454 = vld [vmem:[%s19 + $0x18] sm:$0xf]
    %v3455 = vld [vmem:[%s19 + $0x1c] sm:$0xf]
    %v3456 = vld [vmem:[%s19 + $0x20] sm:$0xf]
    %v3457 = vld [vmem:[%s19 + $0x24] sm:$0xf]
    %v3458 = vld [vmem:[%s19 + $0x28] sm:$0xf]
    %v3459 = vld [vmem:[%s19 + $0x2c] sm:$0xf]
    %v3460 = vld [vmem:[%s19 + $0x30] sm:$0xf]
    %v3461 = vld [vmem:[%s19 + $0x34] sm:$0xf]
    %v3462 = vld [vmem:[%s19 + $0x38] sm:$0xf]
    %v3463 = vld [vmem:[%s19 + $0x3c] sm:$0xf]
    %v3464 = vld [vmem:[%s20] sm:$0x1]
    %v3466 = vlaneseq
    %v3467 = vshrl.u32 %v3466, 7
    %v3468 = vsub.s32 0, %v3467
    %v3469 = vrot.slane %v3464, %v3468
    %v3487 = vunpack.c.l.b16 %v3448
    %v3488 = vunpack.c.l.b16 %v3449
    %v3489 = vunpack.c.l.b16 %v3450
    %v3490 = vunpack.c.l.b16 %v3451
    %v3491 = vunpack.c.l.b16 %v3452
    %v3492 = vunpack.c.l.b16 %v3453
    %v3493 = vunpack.c.l.b16 %v3454
    %v3494 = vunpack.c.l.b16 %v3455
    %v3495 = vunpack.c.l.b16 %v3456
    %v3496 = vunpack.c.l.b16 %v3457
    %v3497 = vunpack.c.l.b16 %v3458
    %v3498 = vunpack.c.l.b16 %v3459
    %v3499 = vunpack.c.l.b16 %v3460
    %v3500 = vunpack.c.l.b16 %v3461
    %v3501 = vunpack.c.l.b16 %v3462
    %v3502 = vunpack.c.l.b16 %v3463
    %v3503 = vpack.c.b16 %v3488, %v3487
    %v3504 = vpack.c.b16 %v3490, %v3489
    %v3505 = vpack.c.b16 %v3492, %v3491
    %v3506 = vpack.c.b16 %v3494, %v3493
    %v3507 = vpack.c.b16 %v3496, %v3495
    %v3508 = vpack.c.b16 %v3498, %v3497
    %v3509 = vpack.c.b16 %v3500, %v3499
    %v3510 = vpack.c.b16 %v3502, %v3501
    %3519 = vmatprep.subr.bf16.mxu0 0
    %3520 = vmatpush1.bf16.msra.mxu0 %v3503
    %3521 = vmatprep.subr.bf16.mxu0 0
    %3522 = vmatpush1.bf16.msra.mxu0 %v3504
    %3523 = vmatprep.subr.bf16.mxu0 0
    %3524 = vmatpush1.bf16.msra.mxu0 %v3505
    %3525 = vmatprep.subr.bf16.mxu0 0
    %3526 = vmatpush1.bf16.msra.mxu0 %v3506
    %3527 = vmatprep.subr.bf16.mxu0 0
    %3528 = vmatpush1.bf16.msra.mxu0 %v3507
    %3529 = vmatprep.subr.bf16.mxu0 0
    %3530 = vmatpush1.bf16.msra.mxu0 %v3508
    %3531 = vmatprep.subr.bf16.mxu0 0
    %3532 = vmatpush1.bf16.msra.mxu0 %v3509
    %3533 = vmatprep.subr.bf16.mxu0 0
    %3534 = vmatpush1.bf16.msra.mxu0 %v3510
    %3535 = vmatprep.subr.bf16.mxu0 0
    %3536 = vmatpush1.bf16.msra.mxu0 0
    %3537 = vmatprep.subr.bf16.mxu0 0
    %3538 = vmatpush1.bf16.msra.mxu0 0
    %3539 = vmatprep.subr.bf16.mxu0 0
    %3540 = vmatpush1.bf16.msra.mxu0 0
    %3541 = vmatprep.subr.bf16.mxu0 0
    %3542 = vmatpush1.bf16.msra.mxu0 0
    %3543 = vmatprep.subr.bf16.mxu0 0
    %3544 = vmatpush1.bf16.msra.mxu0 0
    %3545 = vmatprep.subr.bf16.mxu0 0
    %3546 = vmatpush1.bf16.msra.mxu0 0
    %3547 = vmatprep.subr.bf16.mxu0 0
    %3548 = vmatpush1.bf16.msra.mxu0 0
    %3549 = vmatprep.subr.bf16.mxu0 0
    %3550 = vmatpush1.bf16.msra.mxu0 0
    %3551 = vmatprep.mubr.bf16.mxu0 0
    %3552 = vmatmul.mubr.bf16.gmra.mrb[0].mxu0 %v3447
    %v3553 = vpop.f32.mrb[0].mxu0
    %v3554 = vadd.f32 %v3469, %v3553
    %v3555 = vpop.f32.mrb[0].mxu0
    %v3556 = vpop.f32.mrb[0].mxu0
    %v3557 = vpop.f32.mrb[0].mxu0
    %3558 = vdwg.mxu0
    %v3559 = vxor.u32 %v3554, 2147483648
    %v3560 = vmul.f32 %v3559, 1.442695
    %v3561 = vpow.pop %v3560
    %v3562 = vadd.f32 %v3561, 1.0
    %v3563 = vrcp.pop %v3562
    %v3564 = vmul.f32 1.0, %v3563
    %v3565 = vtanh.pop %v3554
    %v3566 = vmul.f32 %v3564, %v2917
    %3568 = vrot.lane.b32.xlu0 %v3565, 64
    %v3569 = vpop.permute.xlu0 %3568
    %v3571 = vmul.f32 %v3564, %v3569
    %3573 = vrot.lane.b32.xlu0 %v3571, 32
    %v3574 = vpop.permute.xlu0 %3573
    %v3576 = vadd.f32 %v3566, %v3574
    %v3577 = vtanh.pop %v3576
    %3579 = vrot.lane.b32.xlu0 %v3577, 64
    %v3580 = vpop.permute.xlu0 %3579
    %v3582 = vmul.f32 %v3564, %v3580
    %v3583 = vpack.c.bf16 %v3582, %v3582
    %v3584 = vld [vmem:[%s21] sm:$0xf]
    %v3585 = vld [vmem:[%s21 + $0x4] sm:$0xf]
    %v3586 = vld [vmem:[%s21 + $0x8] sm:$0xf]
    %v3587 = vld [vmem:[%s21 + $0xc] sm:$0xf]
    %v3588 = vld [vmem:[%s22] sm:$0x1]
    %v3590 = vlaneseq
    %v3591 = vshrl.u32 %v3590, 7
    %v3592 = vsub.s32 0, %v3591
    %v3593 = vrot.slane %v3588, %v3592
    %3596 = vrot.lane.b32.xlu0 %v3583, 32
    %v3597 = vpop.permute.xlu0 %3596
    %v3602 = vunpack.c.l.b16 %v3584
    %v3603 = vunpack.c.l.b16 %v3585
    %v3604 = vunpack.c.l.b16 %v3586
    %v3605 = vunpack.c.l.b16 %v3587
    %v3606 = vpack.c.b16 %v3603, %v3602
    %v3607 = vpack.c.b16 %v3605, %v3604
    %v3611 = vsel %vm830, %v3597, 0
    %3613 = vmatprep.subr.bf16.mxu0 0
    %3614 = vmatpush1.bf16.msra.mxu0 %v3606
    %3615 = vmatprep.subr.bf16.mxu0 0
    %3616 = vmatpush1.bf16.msra.mxu0 %v3607
    %3617 = vmatprep.subr.bf16.mxu0 0
    %3618 = vmatpush1.bf16.msra.mxu0 0
    %3619 = vmatprep.subr.bf16.mxu0 0
    %3620 = vmatpush1.bf16.msra.mxu0 0
    %3621 = vmatprep.subr.bf16.mxu0 0
    %3622 = vmatpush1.bf16.msra.mxu0 0
    %3623 = vmatprep.subr.bf16.mxu0 0
    %3624 = vmatpush1.bf16.msra.mxu0 0
    %3625 = vmatprep.subr.bf16.mxu0 0
    %3626 = vmatpush1.bf16.msra.mxu0 0
    %3627 = vmatprep.subr.bf16.mxu0 0
    %3628 = vmatpush1.bf16.msra.mxu0 0
    %3629 = vmatprep.subr.bf16.mxu0 0
    %3630 = vmatpush1.bf16.msra.mxu0 0
    %3631 = vmatprep.subr.bf16.mxu0 0
    %3632 = vmatpush1.bf16.msra.mxu0 0
    %3633 = vmatprep.subr.bf16.mxu0 0
    %3634 = vmatpush1.bf16.msra.mxu0 0
    %3635 = vmatprep.subr.bf16.mxu0 0
    %3636 = vmatpush1.bf16.msra.mxu0 0
    %3637 = vmatprep.subr.bf16.mxu0 0
    %3638 = vmatpush1.bf16.msra.mxu0 0
    %3639 = vmatprep.subr.bf16.mxu0 0
    %3640 = vmatpush1.bf16.msra.mxu0 0
    %3641 = vmatprep.subr.bf16.mxu0 0
    %3642 = vmatpush1.bf16.msra.mxu0 0
    %3643 = vmatprep.subr.bf16.mxu0 0
    %3644 = vmatpush1.bf16.msra.mxu0 0
    %3645 = vmatprep.mubr.bf16.mxu0 0
    %3646 = vmatmul.mubr.bf16.gmra.mrb[0].mxu0 %v3611
    %v3647 = vpop.f32.mrb[0].mxu0
    %v3648 = vadd.f32 %v3593, %v3647
    %v3649 = vpop.f32.mrb[0].mxu0
    %v3650 = vpop.f32.mrb[0].mxu0
    %v3651 = vpop.f32.mrb[0].mxu0
    %3652 = vdwg.mxu0
    %vm3653 = vcmp.gt.s32.totalorder %v1069, 3
    %v3654 = vsel %vm3653, 1, 0
    %v3655 = vcvt.s32.f32 %v3654
    %3657 = vset.pattern.permute.xlu0 0
    %3658 = vperm.xlu0 %3657, %v3655
    %v3659 = vpop.permute.xlu0 %3658
    %v3661 = vmul.f32 %v3648, %v3659
    %v3664 = vunpack.c.l.s4 1966171168
    %v3665 = vunpack.c.0.s8 %v3664
    %v3666 = vlaneseq
    %v3667 = vshrl.u32 %v3666, 7
    %v3668 = vsub.s32 %v3665, %v3667
    %v3669 = vrot.slane %v3661, %v3668
    %v3670 = vcombine.high %v3669, %v3669
    %v3672 = vunpack.c.l.s4 1966171168
    %v3673 = vunpack.c.0.s8 %v3672
    %v3674 = vlaneseq
    %v3675 = vshrl.u32 %v3674, 7
    %v3676 = vsub.s32 %v3673, %v3675
    %v3677 = vrot.slane %v3669, %v3676
    %v3679 = vunpack.c.l.s4 1966171168
    %v3680 = vunpack.c.0.s8 %v3679
    %v3681 = vlaneseq
    %v3682 = vshrl.u32 %v3681, 7
    %v3683 = vsub.s32 %v3680, %v3682
    %v3684 = vrot.slane %v3670, %v3683
    %3687 = vst.msk [vmem:[%s23 + $0x3] sm:$0x1] %vm1708, %v3677
    %3688 = vst.msk [vmem:[%s23 + $0xb] sm:$0x1] %vm1708, %v3684
    %v3689 = vlaneseq
    %v3690 = vshrl.u32 %v3689, 7
    %v3691 = vsub.s32 0, %v3690
    %v3692 = vrot.slane %v3659, %v3691
    %v3693 = vlaneseq
    %v3694 = vshrl.u32 %v3693, 7
    %v3695 = vsub.s32 1, %v3694
    %v3696 = vrot.slane %v3659, %v3695
    %v3699 = vmul.f32 %v3307, %v3692
    %v3700 = vmul.f32 %v3308, %v3692
    %v3701 = vmul.f32 %v3310, %v3696
    %v3702 = vmul.f32 %v3311, %v3696
    %3707 = vset.pattern.permute.xlu0 0
    %3708 = vperm.xlu0 %3707, %v3699
    %v3709 = vpop.permute.xlu0 %3708
    %3710 = vset.pattern.permute.xlu0 0
    %3711 = vperm.xlu0 %3710, %v3700
    %v3712 = vpop.permute.xlu0 %3711
    %3713 = vset.pattern.permute.xlu0 0
    %3714 = vperm.xlu0 %3713, %v3701
    %v3715 = vpop.permute.xlu0 %3714
    %3716 = vset.pattern.permute.xlu0 0
    %3717 = vperm.xlu0 %3716, %v3702
    %v3718 = vpop.permute.xlu0 %3717
    %v3719 = vlaneseq
    %v3720 = vshrl.u32 %v3719, 7
    %v3721 = vsub.s32 %v1220, %v3720
    %v3722 = vrot.slane %v3709, %v3721
    %v3723 = vlaneseq
    %v3724 = vshrl.u32 %v3723, 7
    %v3725 = vsub.s32 %v1225, %v3724
    %v3726 = vrot.slane %v3712, %v3725
    %v3727 = vsel %vm1230, %v3726, %v3722
    %v3728 = vlaneseq
    %v3729 = vshrl.u32 %v3728, 7
    %v3730 = vsub.s32 %v1220, %v3729
    %v3731 = vrot.slane %v3715, %v3730
    %v3732 = vlaneseq
    %v3733 = vshrl.u32 %v3732, 7
    %v3734 = vsub.s32 %v1225, %v3733
    %v3735 = vrot.slane %v3718, %v3734
    %v3736 = vsel %vm1230, %v3735, %v3731
    %3739 = vst.msk [vmem:[%s24 + $0x3] sm:$0x1] %vm1761, %v3727
    %3740 = vst.msk [vmem:[%s24 + $0xb] sm:$0x1] %vm1761, %v3736
    %v3741 = vld [vmem:[%s13] sm:$0xf]
    %v3742 = vld [vmem:[%s13 + $0x4] sm:$0xf]
    %v3743 = vld [vmem:[%s13 + $0x8] sm:$0xf]
    %v3744 = vld [vmem:[%s13 + $0xc] sm:$0xf]
    %v3745 = vld [vmem:[%s14] sm:$0x1]
    %v3747 = vlaneseq
    %v3748 = vshrl.u32 %v3747, 7
    %v3749 = vsub.s32 0, %v3748
    %v3750 = vrot.slane %v3745, %v3749
    %v3756 = vunpack.c.l.b16 %v3741
    %v3757 = vunpack.c.l.b16 %v3742
    %v3758 = vunpack.c.l.b16 %v3743
    %v3759 = vunpack.c.l.b16 %v3744
    %v3760 = vpack.c.b16 %v3757, %v3756
    %v3761 = vpack.c.b16 %v3759, %v3758
    %3764 = vmatprep.subr.bf16.mxu0 0
    %3765 = vmatpush1.bf16.msra.mxu0 %v3760
    %3766 = vmatprep.subr.bf16.mxu0 0
    %3767 = vmatpush1.bf16.msra.mxu0 %v3761
    %3768 = vmatprep.subr.bf16.mxu0 0
    %3769 = vmatpush1.bf16.msra.mxu0 0
    %3770 = vmatprep.subr.bf16.mxu0 0
    %3771 = vmatpush1.bf16.msra.mxu0 0
    %3772 = vmatprep.subr.bf16.mxu0 0
    %3773 = vmatpush1.bf16.msra.mxu0 0
    %3774 = vmatprep.subr.bf16.mxu0 0
    %3775 = vmatpush1.bf16.msra.mxu0 0
    %3776 = vmatprep.subr.bf16.mxu0 0
    %3777 = vmatpush1.bf16.msra.mxu0 0
    %3778 = vmatprep.subr.bf16.mxu0 0
    %3779 = vmatpush1.bf16.msra.mxu0 0
    %3780 = vmatprep.subr.bf16.mxu0 0
    %3781 = vmatpush1.bf16.msra.mxu0 0
    %3782 = vmatprep.subr.bf16.mxu0 0
    %3783 = vmatpush1.bf16.msra.mxu0 0
    %3784 = vmatprep.subr.bf16.mxu0 0
    %3785 = vmatpush1.bf16.msra.mxu0 0
    %3786 = vmatprep.subr.bf16.mxu0 0
    %3787 = vmatpush1.bf16.msra.mxu0 0
    %3788 = vmatprep.subr.bf16.mxu0 0
    %3789 = vmatpush1.bf16.msra.mxu0 0
    %3790 = vmatprep.subr.bf16.mxu0 0
    %3791 = vmatpush1.bf16.msra.mxu0 0
    %3792 = vmatprep.subr.bf16.mxu0 0
    %3793 = vmatpush1.bf16.msra.mxu0 0
    %3794 = vmatprep.subr.bf16.mxu0 0
    %3795 = vmatpush1.bf16.msra.mxu0 0
    %3796 = vmatprep.mubr.bf16.mxu0 0
    %3797 = vmatmul.mubr.bf16.gmra.mrb[0].mxu0 %v3611
    %v3798 = vpop.f32.mrb[0].mxu0
    %v3799 = vadd.f32 %v3750, %v3798
    %v3800 = vpop.f32.mrb[0].mxu0
    %v3801 = vpop.f32.mrb[0].mxu0
    %v3802 = vpop.f32.mrb[0].mxu0
    %3803 = vdwg.mxu0
    %v3806 = vunpack.c.l.s4 1966171168
    %v3807 = vunpack.c.0.s8 %v3806
    %v3808 = vlaneseq
    %v3809 = vshrl.u32 %v3808, 7
    %v3810 = vsub.s32 %v3807, %v3809
    %v3811 = vrot.slane %v3799, %v3810
    %v3812 = vcombine.high %v3811, %v3811
    %v3814 = vunpack.c.l.s4 1966171168
    %v3815 = vunpack.c.0.s8 %v3814
    %v3816 = vlaneseq
    %v3817 = vshrl.u32 %v3816, 7
    %v3818 = vsub.s32 %v3815, %v3817
    %v3819 = vrot.slane %v3811, %v3818
    %v3821 = vunpack.c.l.s4 1966171168
    %v3822 = vunpack.c.0.s8 %v3821
    %v3823 = vlaneseq
    %v3824 = vshrl.u32 %v3823, 7
    %v3825 = vsub.s32 %v3822, %v3824
    %v3826 = vrot.slane %v3812, %v3825
    %v3827 = vlaneseq
    %v3828 = vshrl.u32 %v3827, 7
    %v3829 = vsub.s32 0, %v3828
    %v3830 = vrot.slane %v3819, %v3829
    %v3831 = vlaneseq
    %v3832 = vshrl.u32 %v3831, 7
    %v3833 = vsub.s32 0, %v3832
    %v3834 = vrot.slane %v3826, %v3833
    %v3837 = vadd.f32 %v1054, %v3830
    %v3838 = vadd.f32 %v1057, %v3830
    %v3839 = vadd.f32 %v1062, %v3834
    %v3840 = vadd.f32 %v1065, %v3834
    %v3841 = vmax.f32 %v3837, 0.0
    %v3842 = vmax.f32 %v3838, 0.0
    %v3843 = vmax.f32 %v3839, 0.0
    %v3844 = vmax.f32 %v3840, 0.0
    %v3845 = vmul.f32 %v3841, %v1184
    %v3846 = vmul.f32 %v3842, %v1184
    %v3847 = vmul.f32 %v3843, %v1184
    %v3848 = vmul.f32 %v3844, %v1184
    %v3849 = vsel %vm830, %v3845, 0.0
    %3850 = vadd.xlane.f32.xlu0 %v3849
    %v3851 = vpop.xlane.xlu0 %3850
    %v3852 = vsel %vm830, %v3846, 0.0
    %3853 = vadd.xlane.f32.xlu0 %v3852
    %v3854 = vpop.xlane.xlu0 %3853
    %v3855 = vsel %vm830, %v3847, 0.0
    %3856 = vadd.xlane.f32.xlu0 %v3855
    %v3857 = vpop.xlane.xlu0 %3856
    %v3858 = vsel %vm830, %v3848, 0.0
    %3859 = vadd.xlane.f32.xlu0 %v3858
    %v3860 = vpop.xlane.xlu0 %3859
    %v3861 = vadd.f32 %v3851, %v1209
    %v3862 = vadd.f32 %v3854, %v1209
    %v3863 = vadd.f32 %v3857, %v1209
    %v3864 = vadd.f32 %v3860, %v1209
    %v3869 = vlaneseq
    %v3870 = vshrl.u32 %v3869, 7
    %v3871 = vsub.s32 %v1220, %v3870
    %v3872 = vrot.slane %v3861, %v3871
    %v3873 = vlaneseq
    %v3874 = vshrl.u32 %v3873, 7
    %v3875 = vsub.s32 %v1225, %v3874
    %v3876 = vrot.slane %v3862, %v3875
    %v3877 = vsel %vm1230, %v3876, %v3872
    %v3878 = vlaneseq
    %v3879 = vshrl.u32 %v3878, 7
    %v3880 = vsub.s32 %v1220, %v3879
    %v3881 = vrot.slane %v3863, %v3880
    %v3882 = vlaneseq
    %v3883 = vshrl.u32 %v3882, 7
    %v3884 = vsub.s32 %v1225, %v3883
    %v3885 = vrot.slane %v3864, %v3884
    %v3886 = vsel %vm1230, %v3885, %v3881
    %v3887 = vsel %vm869, %v3886, %v3877
    %v3889 = vsel %vm1243, %v3887, -inf
    %3890 = vmax.xlane.f32.xlu0 %v3889
    %v3891 = vpop.xlane.xlu0 %3890
    %v3893 = vlaneseq
    %v3894 = vshrl.u32 %v3893, 7
    %v3895 = vsub.s32 0, %v3894
    %v3896 = vrot.slane %v3891, %v3895
    %v3897 = vlaneseq
    %v3898 = vshrl.u32 %v3897, 7
    %v3899 = vsub.s32 1, %v3898
    %v3900 = vrot.slane %v3891, %v3899
    %v3903 = vsub.f32 %v3861, %v3896
    %v3904 = vsub.f32 %v3862, %v3896
    %v3905 = vsub.f32 %v3863, %v3900
    %v3906 = vsub.f32 %v3864, %v3900
    %v3907 = vmul.f32 %v3903, 1.442695
    %v3908 = vpow.pop %v3907
    %v3909 = vmul.f32 %v3904, 1.442695
    %v3910 = vpow.pop %v3909
    %v3911 = vmul.f32 %v3905, 1.442695
    %v3912 = vpow.pop %v3911
    %v3913 = vmul.f32 %v3906, 1.442695
    %v3914 = vpow.pop %v3913
    %3919 = vset.pattern.permute.xlu0 0
    %3920 = vperm.xlu0 %3919, %v3908
    %v3921 = vpop.permute.xlu0 %3920
    %3922 = vset.pattern.permute.xlu0 0
    %3923 = vperm.xlu0 %3922, %v3910
    %v3924 = vpop.permute.xlu0 %3923
    %3925 = vset.pattern.permute.xlu0 0
    %3926 = vperm.xlu0 %3925, %v3912
    %v3927 = vpop.permute.xlu0 %3926
    %3928 = vset.pattern.permute.xlu0 0
    %3929 = vperm.xlu0 %3928, %v3914
    %v3930 = vpop.permute.xlu0 %3929
    %v3931 = vlaneseq
    %v3932 = vshrl.u32 %v3931, 7
    %v3933 = vsub.s32 %v1220, %v3932
    %v3934 = vrot.slane %v3921, %v3933
    %v3935 = vlaneseq
    %v3936 = vshrl.u32 %v3935, 7
    %v3937 = vsub.s32 %v1225, %v3936
    %v3938 = vrot.slane %v3924, %v3937
    %v3939 = vsel %vm1230, %v3938, %v3934
    %v3940 = vlaneseq
    %v3941 = vshrl.u32 %v3940, 7
    %v3942 = vsub.s32 %v1220, %v3941
    %v3943 = vrot.slane %v3927, %v3942
    %v3944 = vlaneseq
    %v3945 = vshrl.u32 %v3944, 7
    %v3946 = vsub.s32 %v1225, %v3945
    %v3947 = vrot.slane %v3930, %v3946
    %v3948 = vsel %vm1230, %v3947, %v3943
    %v3949 = vsel %vm869, %v3948, %v3939
    %v3951 = vsel %vm1243, %v3949, 0.0
    %3952 = vadd.xlane.f32.xlu0 %v3951
    %v3953 = vpop.xlane.xlu0 %3952
    %v3955 = vlaneseq
    %v3956 = vshrl.u32 %v3955, 7
    %v3957 = vsub.s32 0, %v3956
    %v3958 = vrot.slane %v3953, %v3957
    %v3959 = vlaneseq
    %v3960 = vshrl.u32 %v3959, 7
    %v3961 = vsub.s32 1, %v3960
    %v3962 = vrot.slane %v3953, %v3961
    %v3965 = vrcp.pop %v3958
    %v3966 = vmul.f32 %v3908, %v3965
    %v3967 = vmul.f32 %v3910, %v3965
    %v3968 = vrcp.pop %v3962
    %v3969 = vmul.f32 %v3912, %v3968
    %v3970 = vmul.f32 %v3914, %v3968
    %3972 = vset.pattern.permute.xlu0 0
    %3973 = vperm.xlu0 %3972, %v3966
    %v3974 = vpop.permute.xlu0 %3973
    %3977 = vset.pattern.permute.xlu0 0
    %3978 = vperm.xlu0 %3977, %v3967
    %v3979 = vpop.permute.xlu0 %3978
    %3982 = vset.pattern.permute.xlu0 0
    %3983 = vperm.xlu0 %3982, %v3969
    %v3984 = vpop.permute.xlu0 %3983
    %3987 = vset.pattern.permute.xlu0 0
    %3988 = vperm.xlu0 %3987, %v3970
    %v3989 = vpop.permute.xlu0 %3988
    %v3991 = vmul.f32 %v3974, %v814
    %v3992 = vmul.f32 %v3979, %v817
    %v3993 = vmul.f32 %v3984, %v822
    %v3994 = vmul.f32 %v3989, %v825
    %v3995 = vsel %vm830, %v3991, 0.0
    %v3996 = vsel %vm830, %v3992, 0.0
    %v3997 = vadd.f32 %v3995, %v3996
    %v3998 = vrot.slane %v3997, 4
    %v3999 = vadd.f32 %v3997, %v3998
    %v4000 = vrot.slane %v3999, 2
    %v4001 = vadd.f32 %v3999, %v4000
    %v4002 = vrot.slane %v4001, 1
    %v4003 = vadd.f32 %v4001, %v4002
    %v4004 = vsel %vm830, %v3993, 0.0
    %v4005 = vsel %vm830, %v3994, 0.0
    %v4006 = vadd.f32 %v4004, %v4005
    %v4007 = vrot.slane %v4006, 4
    %v4008 = vadd.f32 %v4006, %v4007
    %v4009 = vrot.slane %v4008, 2
    %v4010 = vadd.f32 %v4008, %v4009
    %v4011 = vrot.slane %v4010, 1
    %v4012 = vadd.f32 %v4010, %v4011
    %v4013 = vld [vmem:[%s17] sm:$0xf]
    %v4014 = vld [vmem:[%s17 + $0x4] sm:$0xf]
    %v4015 = vld [vmem:[%s17 + $0x8] sm:$0xf]
    %v4016 = vld [vmem:[%s17 + $0xc] sm:$0xf]
    %v4017 = vld [vmem:[%s18] sm:$0x1]
    %v4019 = vlaneseq
    %v4020 = vshrl.u32 %v4019, 7
    %v4021 = vsub.s32 0, %v4020
    %v4022 = vrot.slane %v4017, %v4021
    %v4028 = vunpack.c.l.b16 %v4013
    %v4029 = vunpack.c.l.b16 %v4014
    %v4030 = vunpack.c.l.b16 %v4015
    %v4031 = vunpack.c.l.b16 %v4016
    %v4032 = vpack.c.b16 %v4029, %v4028
    %v4033 = vpack.c.b16 %v4031, %v4030
    %4036 = vmatprep.subr.bf16.mxu0 0
    %4037 = vmatpush1.bf16.msra.mxu0 %v4032
    %4038 = vmatprep.subr.bf16.mxu0 0
    %4039 = vmatpush1.bf16.msra.mxu0 %v4033
    %4040 = vmatprep.subr.bf16.mxu0 0
    %4041 = vmatpush1.bf16.msra.mxu0 0
    %4042 = vmatprep.subr.bf16.mxu0 0
    %4043 = vmatpush1.bf16.msra.mxu0 0
    %4044 = vmatprep.subr.bf16.mxu0 0
    %4045 = vmatpush1.bf16.msra.mxu0 0
    %4046 = vmatprep.subr.bf16.mxu0 0
    %4047 = vmatpush1.bf16.msra.mxu0 0
    %4048 = vmatprep.subr.bf16.mxu0 0
    %4049 = vmatpush1.bf16.msra.mxu0 0
    %4050 = vmatprep.subr.bf16.mxu0 0
    %4051 = vmatpush1.bf16.msra.mxu0 0
    %4052 = vmatprep.subr.bf16.mxu0 0
    %4053 = vmatpush1.bf16.msra.mxu0 0
    %4054 = vmatprep.subr.bf16.mxu0 0
    %4055 = vmatpush1.bf16.msra.mxu0 0
    %4056 = vmatprep.subr.bf16.mxu0 0
    %4057 = vmatpush1.bf16.msra.mxu0 0
    %4058 = vmatprep.subr.bf16.mxu0 0
    %4059 = vmatpush1.bf16.msra.mxu0 0
    %4060 = vmatprep.subr.bf16.mxu0 0
    %4061 = vmatpush1.bf16.msra.mxu0 0
    %4062 = vmatprep.subr.bf16.mxu0 0
    %4063 = vmatpush1.bf16.msra.mxu0 0
    %4064 = vmatprep.subr.bf16.mxu0 0
    %4065 = vmatpush1.bf16.msra.mxu0 0
    %4066 = vmatprep.subr.bf16.mxu0 0
    %4067 = vmatpush1.bf16.msra.mxu0 0
    %4068 = vmatprep.mubr.bf16.mxu0 0
    %4069 = vmatmul.mubr.bf16.gmra.mrb[0].mxu0 %v3611
    %v4070 = vpop.f32.mrb[0].mxu0
    %v4071 = vadd.f32 %v4022, %v4070
    %v4072 = vpop.f32.mrb[0].mxu0
    %v4073 = vpop.f32.mrb[0].mxu0
    %v4074 = vpop.f32.mrb[0].mxu0
    %4075 = vdwg.mxu0
    %v4076 = vxor.u32 %v4071, 2147483648
    %v4077 = vmul.f32 %v4076, 1.442695
    %v4078 = vpow.pop %v4077
    %v4079 = vadd.f32 %v4078, 1.0
    %v4080 = vrcp.pop %v4079
    %v4081 = vmul.f32 1.0, %v4080
    %v4084 = vsel %vm869, %v4012, %v4003
    %v4086 = vmul.f32 %v4081, %v4084
    %s4087 = sld [smem:[#allocation4 + $0x4]]
    %s4088 = scalar_lea.vmem %s6, %s4087
    %v4089 = vld [vmem:[%s4088] sm:$0x1]
    %4090 = vst.msk [vmem:[#allocation2] sm:$0x1] %vm1445, %v4089
    %s4091 = sld [smem:[#allocation4 + $0x84]]
    %s4092 = scalar_lea.vmem %s6, %s4091
    %v4093 = vld [vmem:[%s4092] sm:$0x1]
    %4094 = vst.msk [vmem:[#allocation2 + $0x1] sm:$0x1] %vm1445, %v4093
    %4096 = vrot.lane.b32.xlu0 %v4086, 32
    %v4097 = vpop.permute.xlu0 %4096
    %4099 = vst.msk [vmem:[#allocation2] sm:$0x3] %vm1455, %v4097
    %4101 = vrot.lane.b32.xlu0 %v3582, 96
    %v4102 = vpop.permute.xlu0 %4101
    %4104 = vst.msk [vmem:[#allocation2] sm:$0x3] %vm1461, %v4102
    %v4105 = vld [vmem:[#allocation2] sm:$0x3]
    %v4106 = vpack.c.bf16 %v4105, %v4105
    %v4107 = vld [vmem:[%s19] sm:$0xf]
    %v4108 = vld [vmem:[%s19 + $0x4] sm:$0xf]
    %v4109 = vld [vmem:[%s19 + $0x8] sm:$0xf]
    %v4110 = vld [vmem:[%s19 + $0xc] sm:$0xf]
    %v4111 = vld [vmem:[%s19 + $0x10] sm:$0xf]
    %v4112 = vld [vmem:[%s19 + $0x14] sm:$0xf]
    %v4113 = vld [vmem:[%s19 + $0x18] sm:$0xf]
    %v4114 = vld [vmem:[%s19 + $0x1c] sm:$0xf]
    %v4115 = vld [vmem:[%s19 + $0x20] sm:$0xf]
    %v4116 = vld [vmem:[%s19 + $0x24] sm:$0xf]
    %v4117 = vld [vmem:[%s19 + $0x28] sm:$0xf]
    %v4118 = vld [vmem:[%s19 + $0x2c] sm:$0xf]
    %v4119 = vld [vmem:[%s19 + $0x30] sm:$0xf]
    %v4120 = vld [vmem:[%s19 + $0x34] sm:$0xf]
    %v4121 = vld [vmem:[%s19 + $0x38] sm:$0xf]
    %v4122 = vld [vmem:[%s19 + $0x3c] sm:$0xf]
    %v4123 = vld [vmem:[%s20] sm:$0x1]
    %v4125 = vlaneseq
    %v4126 = vshrl.u32 %v4125, 7
    %v4127 = vsub.s32 0, %v4126
    %v4128 = vrot.slane %v4123, %v4127
    %v4146 = vunpack.c.l.b16 %v4107
    %v4147 = vunpack.c.l.b16 %v4108
    %v4148 = vunpack.c.l.b16 %v4109
    %v4149 = vunpack.c.l.b16 %v4110
    %v4150 = vunpack.c.l.b16 %v4111
    %v4151 = vunpack.c.l.b16 %v4112
    %v4152 = vunpack.c.l.b16 %v4113
    %v4153 = vunpack.c.l.b16 %v4114
    %v4154 = vunpack.c.l.b16 %v4115
    %v4155 = vunpack.c.l.b16 %v4116
    %v4156 = vunpack.c.l.b16 %v4117
    %v4157 = vunpack.c.l.b16 %v4118
    %v4158 = vunpack.c.l.b16 %v4119
    %v4159 = vunpack.c.l.b16 %v4120
    %v4160 = vunpack.c.l.b16 %v4121
    %v4161 = vunpack.c.l.b16 %v4122
    %v4162 = vpack.c.b16 %v4147, %v4146
    %v4163 = vpack.c.b16 %v4149, %v4148
    %v4164 = vpack.c.b16 %v4151, %v4150
    %v4165 = vpack.c.b16 %v4153, %v4152
    %v4166 = vpack.c.b16 %v4155, %v4154
    %v4167 = vpack.c.b16 %v4157, %v4156
    %v4168 = vpack.c.b16 %v4159, %v4158
    %v4169 = vpack.c.b16 %v4161, %v4160
    %4178 = vmatprep.subr.bf16.mxu0 0
    %4179 = vmatpush1.bf16.msra.mxu0 %v4162
    %4180 = vmatprep.subr.bf16.mxu0 0
    %4181 = vmatpush1.bf16.msra.mxu0 %v4163
    %4182 = vmatprep.subr.bf16.mxu0 0
    %4183 = vmatpush1.bf16.msra.mxu0 %v4164
    %4184 = vmatprep.subr.bf16.mxu0 0
    %4185 = vmatpush1.bf16.msra.mxu0 %v4165
    %4186 = vmatprep.subr.bf16.mxu0 0
    %4187 = vmatpush1.bf16.msra.mxu0 %v4166
    %4188 = vmatprep.subr.bf16.mxu0 0
    %4189 = vmatpush1.bf16.msra.mxu0 %v4167
    %4190 = vmatprep.subr.bf16.mxu0 0
    %4191 = vmatpush1.bf16.msra.mxu0 %v4168
    %4192 = vmatprep.subr.bf16.mxu0 0
    %4193 = vmatpush1.bf16.msra.mxu0 %v4169
    %4194 = vmatprep.subr.bf16.mxu0 0
    %4195 = vmatpush1.bf16.msra.mxu0 0
    %4196 = vmatprep.subr.bf16.mxu0 0
    %4197 = vmatpush1.bf16.msra.mxu0 0
    %4198 = vmatprep.subr.bf16.mxu0 0
    %4199 = vmatpush1.bf16.msra.mxu0 0
    %4200 = vmatprep.subr.bf16.mxu0 0
    %4201 = vmatpush1.bf16.msra.mxu0 0
    %4202 = vmatprep.subr.bf16.mxu0 0
    %4203 = vmatpush1.bf16.msra.mxu0 0
    %4204 = vmatprep.subr.bf16.mxu0 0
    %4205 = vmatpush1.bf16.msra.mxu0 0
    %4206 = vmatprep.subr.bf16.mxu0 0
    %4207 = vmatpush1.bf16.msra.mxu0 0
    %4208 = vmatprep.subr.bf16.mxu0 0
    %4209 = vmatpush1.bf16.msra.mxu0 0
    %4210 = vmatprep.mubr.bf16.mxu0 0
    %4211 = vmatmul.mubr.bf16.gmra.mrb[0].mxu0 %v4106
    %v4212 = vpop.f32.mrb[0].mxu0
    %v4213 = vadd.f32 %v4128, %v4212
    %v4214 = vpop.f32.mrb[0].mxu0
    %v4215 = vpop.f32.mrb[0].mxu0
    %v4216 = vpop.f32.mrb[0].mxu0
    %4217 = vdwg.mxu0
    %v4218 = vxor.u32 %v4213, 2147483648
    %v4219 = vmul.f32 %v4218, 1.442695
    %v4220 = vpow.pop %v4219
    %v4221 = vadd.f32 %v4220, 1.0
    %v4222 = vrcp.pop %v4221
    %v4223 = vmul.f32 1.0, %v4222
    %v4224 = vtanh.pop %v4213
    %v4225 = vmul.f32 %v4223, %v3576
    %4227 = vrot.lane.b32.xlu0 %v4224, 64
    %v4228 = vpop.permute.xlu0 %4227
    %v4230 = vmul.f32 %v4223, %v4228
    %4232 = vrot.lane.b32.xlu0 %v4230, 32
    %v4233 = vpop.permute.xlu0 %4232
    %v4235 = vadd.f32 %v4225, %v4233
    %v4236 = vtanh.pop %v4235
    %4238 = vrot.lane.b32.xlu0 %v4236, 64
    %v4239 = vpop.permute.xlu0 %4238
    %v4241 = vmul.f32 %v4223, %v4239
    %v4242 = vpack.c.bf16 %v4241, %v4241
    %v4243 = vld [vmem:[%s21] sm:$0xf]
    %v4244 = vld [vmem:[%s21 + $0x4] sm:$0xf]
    %v4245 = vld [vmem:[%s21 + $0x8] sm:$0xf]
    %v4246 = vld [vmem:[%s21 + $0xc] sm:$0xf]
    %v4247 = vld [vmem:[%s22] sm:$0x1]
    %v4249 = vlaneseq
    %v4250 = vshrl.u32 %v4249, 7
    %v4251 = vsub.s32 0, %v4250
    %v4252 = vrot.slane %v4247, %v4251
    %4255 = vrot.lane.b32.xlu0 %v4242, 32
    %v4256 = vpop.permute.xlu0 %4255
    %v4261 = vunpack.c.l.b16 %v4243
    %v4262 = vunpack.c.l.b16 %v4244
    %v4263 = vunpack.c.l.b16 %v4245
    %v4264 = vunpack.c.l.b16 %v4246
    %v4265 = vpack.c.b16 %v4262, %v4261
    %v4266 = vpack.c.b16 %v4264, %v4263
    %v4270 = vsel %vm830, %v4256, 0
    %4272 = vmatprep.subr.bf16.mxu0 0
    %4273 = vmatpush1.bf16.msra.mxu0 %v4265
    %4274 = vmatprep.subr.bf16.mxu0 0
    %4275 = vmatpush1.bf16.msra.mxu0 %v4266
    %4276 = vmatprep.subr.bf16.mxu0 0
    %4277 = vmatpush1.bf16.msra.mxu0 0
    %4278 = vmatprep.subr.bf16.mxu0 0
    %4279 = vmatpush1.bf16.msra.mxu0 0
    %4280 = vmatprep.subr.bf16.mxu0 0
    %4281 = vmatpush1.bf16.msra.mxu0 0
    %4282 = vmatprep.subr.bf16.mxu0 0
    %4283 = vmatpush1.bf16.msra.mxu0 0
    %4284 = vmatprep.subr.bf16.mxu0 0
    %4285 = vmatpush1.bf16.msra.mxu0 0
    %4286 = vmatprep.subr.bf16.mxu0 0
    %4287 = vmatpush1.bf16.msra.mxu0 0
    %4288 = vmatprep.subr.bf16.mxu0 0
    %4289 = vmatpush1.bf16.msra.mxu0 0
    %4290 = vmatprep.subr.bf16.mxu0 0
    %4291 = vmatpush1.bf16.msra.mxu0 0
    %4292 = vmatprep.subr.bf16.mxu0 0
    %4293 = vmatpush1.bf16.msra.mxu0 0
    %4294 = vmatprep.subr.bf16.mxu0 0
    %4295 = vmatpush1.bf16.msra.mxu0 0
    %4296 = vmatprep.subr.bf16.mxu0 0
    %4297 = vmatpush1.bf16.msra.mxu0 0
    %4298 = vmatprep.subr.bf16.mxu0 0
    %4299 = vmatpush1.bf16.msra.mxu0 0
    %4300 = vmatprep.subr.bf16.mxu0 0
    %4301 = vmatpush1.bf16.msra.mxu0 0
    %4302 = vmatprep.subr.bf16.mxu0 0
    %4303 = vmatpush1.bf16.msra.mxu0 0
    %4304 = vmatprep.mubr.bf16.mxu0 0
    %4305 = vmatmul.mubr.bf16.gmra.mrb[0].mxu0 %v4270
    %v4306 = vpop.f32.mrb[0].mxu0
    %v4307 = vadd.f32 %v4252, %v4306
    %v4308 = vpop.f32.mrb[0].mxu0
    %v4309 = vpop.f32.mrb[0].mxu0
    %v4310 = vpop.f32.mrb[0].mxu0
    %4311 = vdwg.mxu0
    %vm4312 = vcmp.gt.s32.totalorder %v1069, 4
    %v4313 = vsel %vm4312, 1, 0
    %v4314 = vcvt.s32.f32 %v4313
    %4316 = vset.pattern.permute.xlu0 0
    %4317 = vperm.xlu0 %4316, %v4314
    %v4318 = vpop.permute.xlu0 %4317
    %v4320 = vmul.f32 %v4307, %v4318
    %v4323 = vunpack.c.l.s4 1966171168
    %v4324 = vunpack.c.0.s8 %v4323
    %v4325 = vlaneseq
    %v4326 = vshrl.u32 %v4325, 7
    %v4327 = vsub.s32 %v4324, %v4326
    %v4328 = vrot.slane %v4320, %v4327
    %v4329 = vcombine.high %v4328, %v4328
    %v4331 = vunpack.c.l.s4 1966171168
    %v4332 = vunpack.c.0.s8 %v4331
    %v4333 = vlaneseq
    %v4334 = vshrl.u32 %v4333, 7
    %v4335 = vsub.s32 %v4332, %v4334
    %v4336 = vrot.slane %v4328, %v4335
    %v4338 = vunpack.c.l.s4 1966171168
    %v4339 = vunpack.c.0.s8 %v4338
    %v4340 = vlaneseq
    %v4341 = vshrl.u32 %v4340, 7
    %v4342 = vsub.s32 %v4339, %v4341
    %v4343 = vrot.slane %v4329, %v4342
    %4346 = vst.msk [vmem:[%s23 + $0x4] sm:$0x1] %vm1708, %v4336
    %4347 = vst.msk [vmem:[%s23 + $0xc] sm:$0x1] %vm1708, %v4343
    %v4348 = vlaneseq
    %v4349 = vshrl.u32 %v4348, 7
    %v4350 = vsub.s32 0, %v4349
    %v4351 = vrot.slane %v4318, %v4350
    %v4352 = vlaneseq
    %v4353 = vshrl.u32 %v4352, 7
    %v4354 = vsub.s32 1, %v4353
    %v4355 = vrot.slane %v4318, %v4354
    %v4358 = vmul.f32 %v3966, %v4351
    %v4359 = vmul.f32 %v3967, %v4351
    %v4360 = vmul.f32 %v3969, %v4355
    %v4361 = vmul.f32 %v3970, %v4355
    %4366 = vset.pattern.permute.xlu0 0
    %4367 = vperm.xlu0 %4366, %v4358
    %v4368 = vpop.permute.xlu0 %4367
    %4369 = vset.pattern.permute.xlu0 0
    %4370 = vperm.xlu0 %4369, %v4359
    %v4371 = vpop.permute.xlu0 %4370
    %4372 = vset.pattern.permute.xlu0 0
    %4373 = vperm.xlu0 %4372, %v4360
    %v4374 = vpop.permute.xlu0 %4373
    %4375 = vset.pattern.permute.xlu0 0
    %4376 = vperm.xlu0 %4375, %v4361
    %v4377 = vpop.permute.xlu0 %4376
    %v4378 = vlaneseq
    %v4379 = vshrl.u32 %v4378, 7
    %v4380 = vsub.s32 %v1220, %v4379
    %v4381 = vrot.slane %v4368, %v4380
    %v4382 = vlaneseq
    %v4383 = vshrl.u32 %v4382, 7
    %v4384 = vsub.s32 %v1225, %v4383
    %v4385 = vrot.slane %v4371, %v4384
    %v4386 = vsel %vm1230, %v4385, %v4381
    %v4387 = vlaneseq
    %v4388 = vshrl.u32 %v4387, 7
    %v4389 = vsub.s32 %v1220, %v4388
    %v4390 = vrot.slane %v4374, %v4389
    %v4391 = vlaneseq
    %v4392 = vshrl.u32 %v4391, 7
    %v4393 = vsub.s32 %v1225, %v4392
    %v4394 = vrot.slane %v4377, %v4393
    %v4395 = vsel %vm1230, %v4394, %v4390
    %4398 = vst.msk [vmem:[%s24 + $0x4] sm:$0x1] %vm1761, %v4386
    %4399 = vst.msk [vmem:[%s24 + $0xc] sm:$0x1] %vm1761, %v4395
    %v4400 = vld [vmem:[%s13] sm:$0xf]
    %v4401 = vld [vmem:[%s13 + $0x4] sm:$0xf]
    %v4402 = vld [vmem:[%s13 + $0x8] sm:$0xf]
    %v4403 = vld [vmem:[%s13 + $0xc] sm:$0xf]
    %v4404 = vld [vmem:[%s14] sm:$0x1]
    %v4406 = vlaneseq
    %v4407 = vshrl.u32 %v4406, 7
    %v4408 = vsub.s32 0, %v4407
    %v4409 = vrot.slane %v4404, %v4408
    %v4415 = vunpack.c.l.b16 %v4400
    %v4416 = vunpack.c.l.b16 %v4401
    %v4417 = vunpack.c.l.b16 %v4402
    %v4418 = vunpack.c.l.b16 %v4403
    %v4419 = vpack.c.b16 %v4416, %v4415
    %v4420 = vpack.c.b16 %v4418, %v4417
    %4423 = vmatprep.subr.bf16.mxu0 0
    %4424 = vmatpush1.bf16.msra.mxu0 %v4419
    %4425 = vmatprep.subr.bf16.mxu0 0
    %4426 = vmatpush1.bf16.msra.mxu0 %v4420
    %4427 = vmatprep.subr.bf16.mxu0 0
    %4428 = vmatpush1.bf16.msra.mxu0 0
    %4429 = vmatprep.subr.bf16.mxu0 0
    %4430 = vmatpush1.bf16.msra.mxu0 0
    %4431 = vmatprep.subr.bf16.mxu0 0
    %4432 = vmatpush1.bf16.msra.mxu0 0
    %4433 = vmatprep.subr.bf16.mxu0 0
    %4434 = vmatpush1.bf16.msra.mxu0 0
    %4435 = vmatprep.subr.bf16.mxu0 0
    %4436 = vmatpush1.bf16.msra.mxu0 0
    %4437 = vmatprep.subr.bf16.mxu0 0
    %4438 = vmatpush1.bf16.msra.mxu0 0
    %4439 = vmatprep.subr.bf16.mxu0 0
    %4440 = vmatpush1.bf16.msra.mxu0 0
    %4441 = vmatprep.subr.bf16.mxu0 0
    %4442 = vmatpush1.bf16.msra.mxu0 0
    %4443 = vmatprep.subr.bf16.mxu0 0
    %4444 = vmatpush1.bf16.msra.mxu0 0
    %4445 = vmatprep.subr.bf16.mxu0 0
    %4446 = vmatpush1.bf16.msra.mxu0 0
    %4447 = vmatprep.subr.bf16.mxu0 0
    %4448 = vmatpush1.bf16.msra.mxu0 0
    %4449 = vmatprep.subr.bf16.mxu0 0
    %4450 = vmatpush1.bf16.msra.mxu0 0
    %4451 = vmatprep.subr.bf16.mxu0 0
    %4452 = vmatpush1.bf16.msra.mxu0 0
    %4453 = vmatprep.subr.bf16.mxu0 0
    %4454 = vmatpush1.bf16.msra.mxu0 0
    %4455 = vmatprep.mubr.bf16.mxu0 0
    %4456 = vmatmul.mubr.bf16.gmra.mrb[0].mxu0 %v4270
    %v4457 = vpop.f32.mrb[0].mxu0
    %v4458 = vadd.f32 %v4409, %v4457
    %v4459 = vpop.f32.mrb[0].mxu0
    %v4460 = vpop.f32.mrb[0].mxu0
    %v4461 = vpop.f32.mrb[0].mxu0
    %4462 = vdwg.mxu0
    %v4465 = vunpack.c.l.s4 1966171168
    %v4466 = vunpack.c.0.s8 %v4465
    %v4467 = vlaneseq
    %v4468 = vshrl.u32 %v4467, 7
    %v4469 = vsub.s32 %v4466, %v4468
    %v4470 = vrot.slane %v4458, %v4469
    %v4471 = vcombine.high %v4470, %v4470
    %v4473 = vunpack.c.l.s4 1966171168
    %v4474 = vunpack.c.0.s8 %v4473
    %v4475 = vlaneseq
    %v4476 = vshrl.u32 %v4475, 7
    %v4477 = vsub.s32 %v4474, %v4476
    %v4478 = vrot.slane %v4470, %v4477
    %v4480 = vunpack.c.l.s4 1966171168
    %v4481 = vunpack.c.0.s8 %v4480
    %v4482 = vlaneseq
    %v4483 = vshrl.u32 %v4482, 7
    %v4484 = vsub.s32 %v4481, %v4483
    %v4485 = vrot.slane %v4471, %v4484
    %v4486 = vlaneseq
    %v4487 = vshrl.u32 %v4486, 7
    %v4488 = vsub.s32 0, %v4487
    %v4489 = vrot.slane %v4478, %v4488
    %v4490 = vlaneseq
    %v4491 = vshrl.u32 %v4490, 7
    %v4492 = vsub.s32 0, %v4491
    %v4493 = vrot.slane %v4485, %v4492
    %v4496 = vadd.f32 %v1054, %v4489
    %v4497 = vadd.f32 %v1057, %v4489
    %v4498 = vadd.f32 %v1062, %v4493
    %v4499 = vadd.f32 %v1065, %v4493
    %v4500 = vmax.f32 %v4496, 0.0
    %v4501 = vmax.f32 %v4497, 0.0
    %v4502 = vmax.f32 %v4498, 0.0
    %v4503 = vmax.f32 %v4499, 0.0
    %v4504 = vmul.f32 %v4500, %v1184
    %v4505 = vmul.f32 %v4501, %v1184
    %v4506 = vmul.f32 %v4502, %v1184
    %v4507 = vmul.f32 %v4503, %v1184
    %v4508 = vsel %vm830, %v4504, 0.0
    %4509 = vadd.xlane.f32.xlu0 %v4508
    %v4510 = vpop.xlane.xlu0 %4509
    %v4511 = vsel %vm830, %v4505, 0.0
    %4512 = vadd.xlane.f32.xlu0 %v4511
    %v4513 = vpop.xlane.xlu0 %4512
    %v4514 = vsel %vm830, %v4506, 0.0
    %4515 = vadd.xlane.f32.xlu0 %v4514
    %v4516 = vpop.xlane.xlu0 %4515
    %v4517 = vsel %vm830, %v4507, 0.0
    %4518 = vadd.xlane.f32.xlu0 %v4517
    %v4519 = vpop.xlane.xlu0 %4518
    %v4520 = vadd.f32 %v4510, %v1209
    %v4521 = vadd.f32 %v4513, %v1209
    %v4522 = vadd.f32 %v4516, %v1209
    %v4523 = vadd.f32 %v4519, %v1209
    %v4528 = vlaneseq
    %v4529 = vshrl.u32 %v4528, 7
    %v4530 = vsub.s32 %v1220, %v4529
    %v4531 = vrot.slane %v4520, %v4530
    %v4532 = vlaneseq
    %v4533 = vshrl.u32 %v4532, 7
    %v4534 = vsub.s32 %v1225, %v4533
    %v4535 = vrot.slane %v4521, %v4534
    %v4536 = vsel %vm1230, %v4535, %v4531
    %v4537 = vlaneseq
    %v4538 = vshrl.u32 %v4537, 7
    %v4539 = vsub.s32 %v1220, %v4538
    %v4540 = vrot.slane %v4522, %v4539
    %v4541 = vlaneseq
    %v4542 = vshrl.u32 %v4541, 7
    %v4543 = vsub.s32 %v1225, %v4542
    %v4544 = vrot.slane %v4523, %v4543
    %v4545 = vsel %vm1230, %v4544, %v4540
    %v4546 = vsel %vm869, %v4545, %v4536
    %v4548 = vsel %vm1243, %v4546, -inf
    %4549 = vmax.xlane.f32.xlu0 %v4548
    %v4550 = vpop.xlane.xlu0 %4549
    %v4552 = vlaneseq
    %v4553 = vshrl.u32 %v4552, 7
    %v4554 = vsub.s32 0, %v4553
    %v4555 = vrot.slane %v4550, %v4554
    %v4556 = vlaneseq
    %v4557 = vshrl.u32 %v4556, 7
    %v4558 = vsub.s32 1, %v4557
    %v4559 = vrot.slane %v4550, %v4558
    %v4562 = vsub.f32 %v4520, %v4555
    %v4563 = vsub.f32 %v4521, %v4555
    %v4564 = vsub.f32 %v4522, %v4559
    %v4565 = vsub.f32 %v4523, %v4559
    %v4566 = vmul.f32 %v4562, 1.442695
    %v4567 = vpow.pop %v4566
    %v4568 = vmul.f32 %v4563, 1.442695
    %v4569 = vpow.pop %v4568
    %v4570 = vmul.f32 %v4564, 1.442695
    %v4571 = vpow.pop %v4570
    %v4572 = vmul.f32 %v4565, 1.442695
    %v4573 = vpow.pop %v4572
    %4578 = vset.pattern.permute.xlu0 0
    %4579 = vperm.xlu0 %4578, %v4567
    %v4580 = vpop.permute.xlu0 %4579
    %4581 = vset.pattern.permute.xlu0 0
    %4582 = vperm.xlu0 %4581, %v4569
    %v4583 = vpop.permute.xlu0 %4582
    %4584 = vset.pattern.permute.xlu0 0
    %4585 = vperm.xlu0 %4584, %v4571
    %v4586 = vpop.permute.xlu0 %4585
    %4587 = vset.pattern.permute.xlu0 0
    %4588 = vperm.xlu0 %4587, %v4573
    %v4589 = vpop.permute.xlu0 %4588
    %v4590 = vlaneseq
    %v4591 = vshrl.u32 %v4590, 7
    %v4592 = vsub.s32 %v1220, %v4591
    %v4593 = vrot.slane %v4580, %v4592
    %v4594 = vlaneseq
    %v4595 = vshrl.u32 %v4594, 7
    %v4596 = vsub.s32 %v1225, %v4595
    %v4597 = vrot.slane %v4583, %v4596
    %v4598 = vsel %vm1230, %v4597, %v4593
    %v4599 = vlaneseq
    %v4600 = vshrl.u32 %v4599, 7
    %v4601 = vsub.s32 %v1220, %v4600
    %v4602 = vrot.slane %v4586, %v4601
    %v4603 = vlaneseq
    %v4604 = vshrl.u32 %v4603, 7
    %v4605 = vsub.s32 %v1225, %v4604
    %v4606 = vrot.slane %v4589, %v4605
    %v4607 = vsel %vm1230, %v4606, %v4602
    %v4608 = vsel %vm869, %v4607, %v4598
    %v4610 = vsel %vm1243, %v4608, 0.0
    %4611 = vadd.xlane.f32.xlu0 %v4610
    %v4612 = vpop.xlane.xlu0 %4611
    %v4614 = vlaneseq
    %v4615 = vshrl.u32 %v4614, 7
    %v4616 = vsub.s32 0, %v4615
    %v4617 = vrot.slane %v4612, %v4616
    %v4618 = vlaneseq
    %v4619 = vshrl.u32 %v4618, 7
    %v4620 = vsub.s32 1, %v4619
    %v4621 = vrot.slane %v4612, %v4620
    %v4624 = vrcp.pop %v4617
    %v4625 = vmul.f32 %v4567, %v4624
    %v4626 = vmul.f32 %v4569, %v4624
    %v4627 = vrcp.pop %v4621
    %v4628 = vmul.f32 %v4571, %v4627
    %v4629 = vmul.f32 %v4573, %v4627
    %4631 = vset.pattern.permute.xlu0 0
    %4632 = vperm.xlu0 %4631, %v4625
    %v4633 = vpop.permute.xlu0 %4632
    %4636 = vset.pattern.permute.xlu0 0
    %4637 = vperm.xlu0 %4636, %v4626
    %v4638 = vpop.permute.xlu0 %4637
    %4641 = vset.pattern.permute.xlu0 0
    %4642 = vperm.xlu0 %4641, %v4628
    %v4643 = vpop.permute.xlu0 %4642
    %4646 = vset.pattern.permute.xlu0 0
    %4647 = vperm.xlu0 %4646, %v4629
    %v4648 = vpop.permute.xlu0 %4647
    %v4650 = vmul.f32 %v4633, %v814
    %v4651 = vmul.f32 %v4638, %v817
    %v4652 = vmul.f32 %v4643, %v822
    %v4653 = vmul.f32 %v4648, %v825
    %v4654 = vsel %vm830, %v4650, 0.0
    %v4655 = vsel %vm830, %v4651, 0.0
    %v4656 = vadd.f32 %v4654, %v4655
    %v4657 = vrot.slane %v4656, 4
    %v4658 = vadd.f32 %v4656, %v4657
    %v4659 = vrot.slane %v4658, 2
    %v4660 = vadd.f32 %v4658, %v4659
    %v4661 = vrot.slane %v4660, 1
    %v4662 = vadd.f32 %v4660, %v4661
    %v4663 = vsel %vm830, %v4652, 0.0
    %v4664 = vsel %vm830, %v4653, 0.0
    %v4665 = vadd.f32 %v4663, %v4664
    %v4666 = vrot.slane %v4665, 4
    %v4667 = vadd.f32 %v4665, %v4666
    %v4668 = vrot.slane %v4667, 2
    %v4669 = vadd.f32 %v4667, %v4668
    %v4670 = vrot.slane %v4669, 1
    %v4671 = vadd.f32 %v4669, %v4670
    %v4672 = vld [vmem:[%s17] sm:$0xf]
    %v4673 = vld [vmem:[%s17 + $0x4] sm:$0xf]
    %v4674 = vld [vmem:[%s17 + $0x8] sm:$0xf]
    %v4675 = vld [vmem:[%s17 + $0xc] sm:$0xf]
    %v4676 = vld [vmem:[%s18] sm:$0x1]
    %v4678 = vlaneseq
    %v4679 = vshrl.u32 %v4678, 7
    %v4680 = vsub.s32 0, %v4679
    %v4681 = vrot.slane %v4676, %v4680
    %v4687 = vunpack.c.l.b16 %v4672
    %v4688 = vunpack.c.l.b16 %v4673
    %v4689 = vunpack.c.l.b16 %v4674
    %v4690 = vunpack.c.l.b16 %v4675
    %v4691 = vpack.c.b16 %v4688, %v4687
    %v4692 = vpack.c.b16 %v4690, %v4689
    %4695 = vmatprep.subr.bf16.mxu0 0
    %4696 = vmatpush1.bf16.msra.mxu0 %v4691
    %4697 = vmatprep.subr.bf16.mxu0 0
    %4698 = vmatpush1.bf16.msra.mxu0 %v4692
    %4699 = vmatprep.subr.bf16.mxu0 0
    %4700 = vmatpush1.bf16.msra.mxu0 0
    %4701 = vmatprep.subr.bf16.mxu0 0
    %4702 = vmatpush1.bf16.msra.mxu0 0
    %4703 = vmatprep.subr.bf16.mxu0 0
    %4704 = vmatpush1.bf16.msra.mxu0 0
    %4705 = vmatprep.subr.bf16.mxu0 0
    %4706 = vmatpush1.bf16.msra.mxu0 0
    %4707 = vmatprep.subr.bf16.mxu0 0
    %4708 = vmatpush1.bf16.msra.mxu0 0
    %4709 = vmatprep.subr.bf16.mxu0 0
    %4710 = vmatpush1.bf16.msra.mxu0 0
    %4711 = vmatprep.subr.bf16.mxu0 0
    %4712 = vmatpush1.bf16.msra.mxu0 0
    %4713 = vmatprep.subr.bf16.mxu0 0
    %4714 = vmatpush1.bf16.msra.mxu0 0
    %4715 = vmatprep.subr.bf16.mxu0 0
    %4716 = vmatpush1.bf16.msra.mxu0 0
    %4717 = vmatprep.subr.bf16.mxu0 0
    %4718 = vmatpush1.bf16.msra.mxu0 0
    %4719 = vmatprep.subr.bf16.mxu0 0
    %4720 = vmatpush1.bf16.msra.mxu0 0
    %4721 = vmatprep.subr.bf16.mxu0 0
    %4722 = vmatpush1.bf16.msra.mxu0 0
    %4723 = vmatprep.subr.bf16.mxu0 0
    %4724 = vmatpush1.bf16.msra.mxu0 0
    %4725 = vmatprep.subr.bf16.mxu0 0
    %4726 = vmatpush1.bf16.msra.mxu0 0
    %4727 = vmatprep.mubr.bf16.mxu0 0
    %4728 = vmatmul.mubr.bf16.gmra.mrb[0].mxu0 %v4270
    %v4729 = vpop.f32.mrb[0].mxu0
    %v4730 = vadd.f32 %v4681, %v4729
    %v4731 = vpop.f32.mrb[0].mxu0
    %v4732 = vpop.f32.mrb[0].mxu0
    %v4733 = vpop.f32.mrb[0].mxu0
    %4734 = vdwg.mxu0
    %v4735 = vxor.u32 %v4730, 2147483648
    %v4736 = vmul.f32 %v4735, 1.442695
    %v4737 = vpow.pop %v4736
    %v4738 = vadd.f32 %v4737, 1.0
    %v4739 = vrcp.pop %v4738
    %v4740 = vmul.f32 1.0, %v4739
    %v4743 = vsel %vm869, %v4671, %v4662
    %v4745 = vmul.f32 %v4740, %v4743
    %s4746 = sld [smem:[#allocation4 + $0x5]]
    %s4747 = scalar_lea.vmem %s6, %s4746
    %v4748 = vld [vmem:[%s4747] sm:$0x1]
    %4749 = vst.msk [vmem:[#allocation2] sm:$0x1] %vm1445, %v4748
    %s4750 = sld [smem:[#allocation4 + $0x85]]
    %s4751 = scalar_lea.vmem %s6, %s4750
    %v4752 = vld [vmem:[%s4751] sm:$0x1]
    %4753 = vst.msk [vmem:[#allocation2 + $0x1] sm:$0x1] %vm1445, %v4752
    %4755 = vrot.lane.b32.xlu0 %v4745, 32
    %v4756 = vpop.permute.xlu0 %4755
    %4758 = vst.msk [vmem:[#allocation2] sm:$0x3] %vm1455, %v4756
    %4760 = vrot.lane.b32.xlu0 %v4241, 96
    %v4761 = vpop.permute.xlu0 %4760
    %4763 = vst.msk [vmem:[#allocation2] sm:$0x3] %vm1461, %v4761
    %v4764 = vld [vmem:[#allocation2] sm:$0x3]
    %v4765 = vpack.c.bf16 %v4764, %v4764
    %v4766 = vld [vmem:[%s19] sm:$0xf]
    %v4767 = vld [vmem:[%s19 + $0x4] sm:$0xf]
    %v4768 = vld [vmem:[%s19 + $0x8] sm:$0xf]
    %v4769 = vld [vmem:[%s19 + $0xc] sm:$0xf]
    %v4770 = vld [vmem:[%s19 + $0x10] sm:$0xf]
    %v4771 = vld [vmem:[%s19 + $0x14] sm:$0xf]
    %v4772 = vld [vmem:[%s19 + $0x18] sm:$0xf]
    %v4773 = vld [vmem:[%s19 + $0x1c] sm:$0xf]
    %v4774 = vld [vmem:[%s19 + $0x20] sm:$0xf]
    %v4775 = vld [vmem:[%s19 + $0x24] sm:$0xf]
    %v4776 = vld [vmem:[%s19 + $0x28] sm:$0xf]
    %v4777 = vld [vmem:[%s19 + $0x2c] sm:$0xf]
    %v4778 = vld [vmem:[%s19 + $0x30] sm:$0xf]
    %v4779 = vld [vmem:[%s19 + $0x34] sm:$0xf]
    %v4780 = vld [vmem:[%s19 + $0x38] sm:$0xf]
    %v4781 = vld [vmem:[%s19 + $0x3c] sm:$0xf]
    %v4782 = vld [vmem:[%s20] sm:$0x1]
    %v4784 = vlaneseq
    %v4785 = vshrl.u32 %v4784, 7
    %v4786 = vsub.s32 0, %v4785
    %v4787 = vrot.slane %v4782, %v4786
    %v4805 = vunpack.c.l.b16 %v4766
    %v4806 = vunpack.c.l.b16 %v4767
    %v4807 = vunpack.c.l.b16 %v4768
    %v4808 = vunpack.c.l.b16 %v4769
    %v4809 = vunpack.c.l.b16 %v4770
    %v4810 = vunpack.c.l.b16 %v4771
    %v4811 = vunpack.c.l.b16 %v4772
    %v4812 = vunpack.c.l.b16 %v4773
    %v4813 = vunpack.c.l.b16 %v4774
    %v4814 = vunpack.c.l.b16 %v4775
    %v4815 = vunpack.c.l.b16 %v4776
    %v4816 = vunpack.c.l.b16 %v4777
    %v4817 = vunpack.c.l.b16 %v4778
    %v4818 = vunpack.c.l.b16 %v4779
    %v4819 = vunpack.c.l.b16 %v4780
    %v4820 = vunpack.c.l.b16 %v4781
    %v4821 = vpack.c.b16 %v4806, %v4805
    %v4822 = vpack.c.b16 %v4808, %v4807
    %v4823 = vpack.c.b16 %v4810, %v4809
    %v4824 = vpack.c.b16 %v4812, %v4811
    %v4825 = vpack.c.b16 %v4814, %v4813
    %v4826 = vpack.c.b16 %v4816, %v4815
    %v4827 = vpack.c.b16 %v4818, %v4817
    %v4828 = vpack.c.b16 %v4820, %v4819
    %4837 = vmatprep.subr.bf16.mxu0 0
    %4838 = vmatpush1.bf16.msra.mxu0 %v4821
    %4839 = vmatprep.subr.bf16.mxu0 0
    %4840 = vmatpush1.bf16.msra.mxu0 %v4822
    %4841 = vmatprep.subr.bf16.mxu0 0
    %4842 = vmatpush1.bf16.msra.mxu0 %v4823
    %4843 = vmatprep.subr.bf16.mxu0 0
    %4844 = vmatpush1.bf16.msra.mxu0 %v4824
    %4845 = vmatprep.subr.bf16.mxu0 0
    %4846 = vmatpush1.bf16.msra.mxu0 %v4825
    %4847 = vmatprep.subr.bf16.mxu0 0
    %4848 = vmatpush1.bf16.msra.mxu0 %v4826
    %4849 = vmatprep.subr.bf16.mxu0 0
    %4850 = vmatpush1.bf16.msra.mxu0 %v4827
    %4851 = vmatprep.subr.bf16.mxu0 0
    %4852 = vmatpush1.bf16.msra.mxu0 %v4828
    %4853 = vmatprep.subr.bf16.mxu0 0
    %4854 = vmatpush1.bf16.msra.mxu0 0
    %4855 = vmatprep.subr.bf16.mxu0 0
    %4856 = vmatpush1.bf16.msra.mxu0 0
    %4857 = vmatprep.subr.bf16.mxu0 0
    %4858 = vmatpush1.bf16.msra.mxu0 0
    %4859 = vmatprep.subr.bf16.mxu0 0
    %4860 = vmatpush1.bf16.msra.mxu0 0
    %4861 = vmatprep.subr.bf16.mxu0 0
    %4862 = vmatpush1.bf16.msra.mxu0 0
    %4863 = vmatprep.subr.bf16.mxu0 0
    %4864 = vmatpush1.bf16.msra.mxu0 0
    %4865 = vmatprep.subr.bf16.mxu0 0
    %4866 = vmatpush1.bf16.msra.mxu0 0
    %4867 = vmatprep.subr.bf16.mxu0 0
    %4868 = vmatpush1.bf16.msra.mxu0 0
    %4869 = vmatprep.mubr.bf16.mxu0 0
    %4870 = vmatmul.mubr.bf16.gmra.mrb[0].mxu0 %v4765
    %v4871 = vpop.f32.mrb[0].mxu0
    %v4872 = vadd.f32 %v4787, %v4871
    %v4873 = vpop.f32.mrb[0].mxu0
    %v4874 = vpop.f32.mrb[0].mxu0
    %v4875 = vpop.f32.mrb[0].mxu0
    %4876 = vdwg.mxu0
    %v4877 = vxor.u32 %v4872, 2147483648
    %v4878 = vmul.f32 %v4877, 1.442695
    %v4879 = vpow.pop %v4878
    %v4880 = vadd.f32 %v4879, 1.0
    %v4881 = vrcp.pop %v4880
    %v4882 = vmul.f32 1.0, %v4881
    %v4883 = vtanh.pop %v4872
    %v4884 = vmul.f32 %v4882, %v4235
    %4886 = vrot.lane.b32.xlu0 %v4883, 64
    %v4887 = vpop.permute.xlu0 %4886
    %v4889 = vmul.f32 %v4882, %v4887
    %4891 = vrot.lane.b32.xlu0 %v4889, 32
    %v4892 = vpop.permute.xlu0 %4891
    %v4894 = vadd.f32 %v4884, %v4892
    %v4895 = vtanh.pop %v4894
    %4897 = vrot.lane.b32.xlu0 %v4895, 64
    %v4898 = vpop.permute.xlu0 %4897
    %v4900 = vmul.f32 %v4882, %v4898
    %v4901 = vpack.c.bf16 %v4900, %v4900
    %v4902 = vld [vmem:[%s21] sm:$0xf]
    %v4903 = vld [vmem:[%s21 + $0x4] sm:$0xf]
    %v4904 = vld [vmem:[%s21 + $0x8] sm:$0xf]
    %v4905 = vld [vmem:[%s21 + $0xc] sm:$0xf]
    %v4906 = vld [vmem:[%s22] sm:$0x1]
    %v4908 = vlaneseq
    %v4909 = vshrl.u32 %v4908, 7
    %v4910 = vsub.s32 0, %v4909
    %v4911 = vrot.slane %v4906, %v4910
    %4914 = vrot.lane.b32.xlu0 %v4901, 32
    %v4915 = vpop.permute.xlu0 %4914
    %v4920 = vunpack.c.l.b16 %v4902
    %v4921 = vunpack.c.l.b16 %v4903
    %v4922 = vunpack.c.l.b16 %v4904
    %v4923 = vunpack.c.l.b16 %v4905
    %v4924 = vpack.c.b16 %v4921, %v4920
    %v4925 = vpack.c.b16 %v4923, %v4922
    %v4929 = vsel %vm830, %v4915, 0
    %4931 = vmatprep.subr.bf16.mxu0 0
    %4932 = vmatpush1.bf16.msra.mxu0 %v4924
    %4933 = vmatprep.subr.bf16.mxu0 0
    %4934 = vmatpush1.bf16.msra.mxu0 %v4925
    %4935 = vmatprep.subr.bf16.mxu0 0
    %4936 = vmatpush1.bf16.msra.mxu0 0
    %4937 = vmatprep.subr.bf16.mxu0 0
    %4938 = vmatpush1.bf16.msra.mxu0 0
    %4939 = vmatprep.subr.bf16.mxu0 0
    %4940 = vmatpush1.bf16.msra.mxu0 0
    %4941 = vmatprep.subr.bf16.mxu0 0
    %4942 = vmatpush1.bf16.msra.mxu0 0
    %4943 = vmatprep.subr.bf16.mxu0 0
    %4944 = vmatpush1.bf16.msra.mxu0 0
    %4945 = vmatprep.subr.bf16.mxu0 0
    %4946 = vmatpush1.bf16.msra.mxu0 0
    %4947 = vmatprep.subr.bf16.mxu0 0
    %4948 = vmatpush1.bf16.msra.mxu0 0
    %4949 = vmatprep.subr.bf16.mxu0 0
    %4950 = vmatpush1.bf16.msra.mxu0 0
    %4951 = vmatprep.subr.bf16.mxu0 0
    %4952 = vmatpush1.bf16.msra.mxu0 0
    %4953 = vmatprep.subr.bf16.mxu0 0
    %4954 = vmatpush1.bf16.msra.mxu0 0
    %4955 = vmatprep.subr.bf16.mxu0 0
    %4956 = vmatpush1.bf16.msra.mxu0 0
    %4957 = vmatprep.subr.bf16.mxu0 0
    %4958 = vmatpush1.bf16.msra.mxu0 0
    %4959 = vmatprep.subr.bf16.mxu0 0
    %4960 = vmatpush1.bf16.msra.mxu0 0
    %4961 = vmatprep.subr.bf16.mxu0 0
    %4962 = vmatpush1.bf16.msra.mxu0 0
    %4963 = vmatprep.mubr.bf16.mxu0 0
    %4964 = vmatmul.mubr.bf16.gmra.mrb[0].mxu0 %v4929
    %v4965 = vpop.f32.mrb[0].mxu0
    %v4966 = vadd.f32 %v4911, %v4965
    %v4967 = vpop.f32.mrb[0].mxu0
    %v4968 = vpop.f32.mrb[0].mxu0
    %v4969 = vpop.f32.mrb[0].mxu0
    %4970 = vdwg.mxu0
    %vm4971 = vcmp.gt.s32.totalorder %v1069, 5
    %v4972 = vsel %vm4971, 1, 0
    %v4973 = vcvt.s32.f32 %v4972
    %4975 = vset.pattern.permute.xlu0 0
    %4976 = vperm.xlu0 %4975, %v4973
    %v4977 = vpop.permute.xlu0 %4976
    %v4979 = vmul.f32 %v4966, %v4977
    %v4982 = vunpack.c.l.s4 1966171168
    %v4983 = vunpack.c.0.s8 %v4982
    %v4984 = vlaneseq
    %v4985 = vshrl.u32 %v4984, 7
    %v4986 = vsub.s32 %v4983, %v4985
    %v4987 = vrot.slane %v4979, %v4986
    %v4988 = vcombine.high %v4987, %v4987
    %v4990 = vunpack.c.l.s4 1966171168
    %v4991 = vunpack.c.0.s8 %v4990
    %v4992 = vlaneseq
    %v4993 = vshrl.u32 %v4992, 7
    %v4994 = vsub.s32 %v4991, %v4993
    %v4995 = vrot.slane %v4987, %v4994
    %v4997 = vunpack.c.l.s4 1966171168
    %v4998 = vunpack.c.0.s8 %v4997
    %v4999 = vlaneseq
    %v5000 = vshrl.u32 %v4999, 7
    %v5001 = vsub.s32 %v4998, %v5000
    %v5002 = vrot.slane %v4988, %v5001
    %5005 = vst.msk [vmem:[%s23 + $0x5] sm:$0x1] %vm1708, %v4995
    %5006 = vst.msk [vmem:[%s23 + $0xd] sm:$0x1] %vm1708, %v5002
    %v5007 = vlaneseq
    %v5008 = vshrl.u32 %v5007, 7
    %v5009 = vsub.s32 0, %v5008
    %v5010 = vrot.slane %v4977, %v5009
    %v5011 = vlaneseq
    %v5012 = vshrl.u32 %v5011, 7
    %v5013 = vsub.s32 1, %v5012
    %v5014 = vrot.slane %v4977, %v5013
    %v5017 = vmul.f32 %v4625, %v5010
    %v5018 = vmul.f32 %v4626, %v5010
    %v5019 = vmul.f32 %v4628, %v5014
    %v5020 = vmul.f32 %v4629, %v5014
    %5025 = vset.pattern.permute.xlu0 0
    %5026 = vperm.xlu0 %5025, %v5017
    %v5027 = vpop.permute.xlu0 %5026
    %5028 = vset.pattern.permute.xlu0 0
    %5029 = vperm.xlu0 %5028, %v5018
    %v5030 = vpop.permute.xlu0 %5029
    %5031 = vset.pattern.permute.xlu0 0
    %5032 = vperm.xlu0 %5031, %v5019
    %v5033 = vpop.permute.xlu0 %5032
    %5034 = vset.pattern.permute.xlu0 0
    %5035 = vperm.xlu0 %5034, %v5020
    %v5036 = vpop.permute.xlu0 %5035
    %v5037 = vlaneseq
    %v5038 = vshrl.u32 %v5037, 7
    %v5039 = vsub.s32 %v1220, %v5038
    %v5040 = vrot.slane %v5027, %v5039
    %v5041 = vlaneseq
    %v5042 = vshrl.u32 %v5041, 7
    %v5043 = vsub.s32 %v1225, %v5042
    %v5044 = vrot.slane %v5030, %v5043
    %v5045 = vsel %vm1230, %v5044, %v5040
    %v5046 = vlaneseq
    %v5047 = vshrl.u32 %v5046, 7
    %v5048 = vsub.s32 %v1220, %v5047
    %v5049 = vrot.slane %v5033, %v5048
    %v5050 = vlaneseq
    %v5051 = vshrl.u32 %v5050, 7
    %v5052 = vsub.s32 %v1225, %v5051
    %v5053 = vrot.slane %v5036, %v5052
    %v5054 = vsel %vm1230, %v5053, %v5049
    %5057 = vst.msk [vmem:[%s24 + $0x5] sm:$0x1] %vm1761, %v5045
    %5058 = vst.msk [vmem:[%s24 + $0xd] sm:$0x1] %vm1761, %v5054
    %v5059 = vld [vmem:[%s13] sm:$0xf]
    %v5060 = vld [vmem:[%s13 + $0x4] sm:$0xf]
    %v5061 = vld [vmem:[%s13 + $0x8] sm:$0xf]
    %v5062 = vld [vmem:[%s13 + $0xc] sm:$0xf]
    %v5063 = vld [vmem:[%s14] sm:$0x1]
    %v5065 = vlaneseq
    %v5066 = vshrl.u32 %v5065, 7
    %v5067 = vsub.s32 0, %v5066
    %v5068 = vrot.slane %v5063, %v5067
    %v5074 = vunpack.c.l.b16 %v5059
    %v5075 = vunpack.c.l.b16 %v5060
    %v5076 = vunpack.c.l.b16 %v5061
    %v5077 = vunpack.c.l.b16 %v5062
    %v5078 = vpack.c.b16 %v5075, %v5074
    %v5079 = vpack.c.b16 %v5077, %v5076
    %5082 = vmatprep.subr.bf16.mxu0 0
    %5083 = vmatpush1.bf16.msra.mxu0 %v5078
    %5084 = vmatprep.subr.bf16.mxu0 0
    %5085 = vmatpush1.bf16.msra.mxu0 %v5079
    %5086 = vmatprep.subr.bf16.mxu0 0
    %5087 = vmatpush1.bf16.msra.mxu0 0
    %5088 = vmatprep.subr.bf16.mxu0 0
    %5089 = vmatpush1.bf16.msra.mxu0 0
    %5090 = vmatprep.subr.bf16.mxu0 0
    %5091 = vmatpush1.bf16.msra.mxu0 0
    %5092 = vmatprep.subr.bf16.mxu0 0
    %5093 = vmatpush1.bf16.msra.mxu0 0
    %5094 = vmatprep.subr.bf16.mxu0 0
    %5095 = vmatpush1.bf16.msra.mxu0 0
    %5096 = vmatprep.subr.bf16.mxu0 0
    %5097 = vmatpush1.bf16.msra.mxu0 0
    %5098 = vmatprep.subr.bf16.mxu0 0
    %5099 = vmatpush1.bf16.msra.mxu0 0
    %5100 = vmatprep.subr.bf16.mxu0 0
    %5101 = vmatpush1.bf16.msra.mxu0 0
    %5102 = vmatprep.subr.bf16.mxu0 0
    %5103 = vmatpush1.bf16.msra.mxu0 0
    %5104 = vmatprep.subr.bf16.mxu0 0
    %5105 = vmatpush1.bf16.msra.mxu0 0
    %5106 = vmatprep.subr.bf16.mxu0 0
    %5107 = vmatpush1.bf16.msra.mxu0 0
    %5108 = vmatprep.subr.bf16.mxu0 0
    %5109 = vmatpush1.bf16.msra.mxu0 0
    %5110 = vmatprep.subr.bf16.mxu0 0
    %5111 = vmatpush1.bf16.msra.mxu0 0
    %5112 = vmatprep.subr.bf16.mxu0 0
    %5113 = vmatpush1.bf16.msra.mxu0 0
    %5114 = vmatprep.mubr.bf16.mxu0 0
    %5115 = vmatmul.mubr.bf16.gmra.mrb[0].mxu0 %v4929
    %v5116 = vpop.f32.mrb[0].mxu0
    %v5117 = vadd.f32 %v5068, %v5116
    %v5118 = vpop.f32.mrb[0].mxu0
    %v5119 = vpop.f32.mrb[0].mxu0
    %v5120 = vpop.f32.mrb[0].mxu0
    %5121 = vdwg.mxu0
    %v5124 = vunpack.c.l.s4 1966171168
    %v5125 = vunpack.c.0.s8 %v5124
    %v5126 = vlaneseq
    %v5127 = vshrl.u32 %v5126, 7
    %v5128 = vsub.s32 %v5125, %v5127
    %v5129 = vrot.slane %v5117, %v5128
    %v5130 = vcombine.high %v5129, %v5129
    %v5132 = vunpack.c.l.s4 1966171168
    %v5133 = vunpack.c.0.s8 %v5132
    %v5134 = vlaneseq
    %v5135 = vshrl.u32 %v5134, 7
    %v5136 = vsub.s32 %v5133, %v5135
    %v5137 = vrot.slane %v5129, %v5136
    %v5139 = vunpack.c.l.s4 1966171168
    %v5140 = vunpack.c.0.s8 %v5139
    %v5141 = vlaneseq
    %v5142 = vshrl.u32 %v5141, 7
    %v5143 = vsub.s32 %v5140, %v5142
    %v5144 = vrot.slane %v5130, %v5143
    %v5145 = vlaneseq
    %v5146 = vshrl.u32 %v5145, 7
    %v5147 = vsub.s32 0, %v5146
    %v5148 = vrot.slane %v5137, %v5147
    %v5149 = vlaneseq
    %v5150 = vshrl.u32 %v5149, 7
    %v5151 = vsub.s32 0, %v5150
    %v5152 = vrot.slane %v5144, %v5151
    %v5155 = vadd.f32 %v1054, %v5148
    %v5156 = vadd.f32 %v1057, %v5148
    %v5157 = vadd.f32 %v1062, %v5152
    %v5158 = vadd.f32 %v1065, %v5152
    %v5159 = vmax.f32 %v5155, 0.0
    %v5160 = vmax.f32 %v5156, 0.0
    %v5161 = vmax.f32 %v5157, 0.0
    %v5162 = vmax.f32 %v5158, 0.0
    %v5163 = vmul.f32 %v5159, %v1184
    %v5164 = vmul.f32 %v5160, %v1184
    %v5165 = vmul.f32 %v5161, %v1184
    %v5166 = vmul.f32 %v5162, %v1184
    %v5167 = vsel %vm830, %v5163, 0.0
    %5168 = vadd.xlane.f32.xlu0 %v5167
    %v5169 = vpop.xlane.xlu0 %5168
    %v5170 = vsel %vm830, %v5164, 0.0
    %5171 = vadd.xlane.f32.xlu0 %v5170
    %v5172 = vpop.xlane.xlu0 %5171
    %v5173 = vsel %vm830, %v5165, 0.0
    %5174 = vadd.xlane.f32.xlu0 %v5173
    %v5175 = vpop.xlane.xlu0 %5174
    %v5176 = vsel %vm830, %v5166, 0.0
    %5177 = vadd.xlane.f32.xlu0 %v5176
    %v5178 = vpop.xlane.xlu0 %5177
    %v5179 = vadd.f32 %v5169, %v1209
    %v5180 = vadd.f32 %v5172, %v1209
    %v5181 = vadd.f32 %v5175, %v1209
    %v5182 = vadd.f32 %v5178, %v1209
    %v5187 = vlaneseq
    %v5188 = vshrl.u32 %v5187, 7
    %v5189 = vsub.s32 %v1220, %v5188
    %v5190 = vrot.slane %v5179, %v5189
    %v5191 = vlaneseq
    %v5192 = vshrl.u32 %v5191, 7
    %v5193 = vsub.s32 %v1225, %v5192
    %v5194 = vrot.slane %v5180, %v5193
    %v5195 = vsel %vm1230, %v5194, %v5190
    %v5196 = vlaneseq
    %v5197 = vshrl.u32 %v5196, 7
    %v5198 = vsub.s32 %v1220, %v5197
    %v5199 = vrot.slane %v5181, %v5198
    %v5200 = vlaneseq
    %v5201 = vshrl.u32 %v5200, 7
    %v5202 = vsub.s32 %v1225, %v5201
    %v5203 = vrot.slane %v5182, %v5202
    %v5204 = vsel %vm1230, %v5203, %v5199
    %v5205 = vsel %vm869, %v5204, %v5195
    %v5207 = vsel %vm1243, %v5205, -inf
    %5208 = vmax.xlane.f32.xlu0 %v5207
    %v5209 = vpop.xlane.xlu0 %5208
    %v5211 = vlaneseq
    %v5212 = vshrl.u32 %v5211, 7
    %v5213 = vsub.s32 0, %v5212
    %v5214 = vrot.slane %v5209, %v5213
    %v5215 = vlaneseq
    %v5216 = vshrl.u32 %v5215, 7
    %v5217 = vsub.s32 1, %v5216
    %v5218 = vrot.slane %v5209, %v5217
    %v5221 = vsub.f32 %v5179, %v5214
    %v5222 = vsub.f32 %v5180, %v5214
    %v5223 = vsub.f32 %v5181, %v5218
    %v5224 = vsub.f32 %v5182, %v5218
    %v5225 = vmul.f32 %v5221, 1.442695
    %v5226 = vpow.pop %v5225
    %v5227 = vmul.f32 %v5222, 1.442695
    %v5228 = vpow.pop %v5227
    %v5229 = vmul.f32 %v5223, 1.442695
    %v5230 = vpow.pop %v5229
    %v5231 = vmul.f32 %v5224, 1.442695
    %v5232 = vpow.pop %v5231
    %5237 = vset.pattern.permute.xlu0 0
    %5238 = vperm.xlu0 %5237, %v5226
    %v5239 = vpop.permute.xlu0 %5238
    %5240 = vset.pattern.permute.xlu0 0
    %5241 = vperm.xlu0 %5240, %v5228
    %v5242 = vpop.permute.xlu0 %5241
    %5243 = vset.pattern.permute.xlu0 0
    %5244 = vperm.xlu0 %5243, %v5230
    %v5245 = vpop.permute.xlu0 %5244
    %5246 = vset.pattern.permute.xlu0 0
    %5247 = vperm.xlu0 %5246, %v5232
    %v5248 = vpop.permute.xlu0 %5247
    %v5249 = vlaneseq
    %v5250 = vshrl.u32 %v5249, 7
    %v5251 = vsub.s32 %v1220, %v5250
    %v5252 = vrot.slane %v5239, %v5251
    %v5253 = vlaneseq
    %v5254 = vshrl.u32 %v5253, 7
    %v5255 = vsub.s32 %v1225, %v5254
    %v5256 = vrot.slane %v5242, %v5255
    %v5257 = vsel %vm1230, %v5256, %v5252
    %v5258 = vlaneseq
    %v5259 = vshrl.u32 %v5258, 7
    %v5260 = vsub.s32 %v1220, %v5259
    %v5261 = vrot.slane %v5245, %v5260
    %v5262 = vlaneseq
    %v5263 = vshrl.u32 %v5262, 7
    %v5264 = vsub.s32 %v1225, %v5263
    %v5265 = vrot.slane %v5248, %v5264
    %v5266 = vsel %vm1230, %v5265, %v5261
    %v5267 = vsel %vm869, %v5266, %v5257
    %v5269 = vsel %vm1243, %v5267, 0.0
    %5270 = vadd.xlane.f32.xlu0 %v5269
    %v5271 = vpop.xlane.xlu0 %5270
    %v5273 = vlaneseq
    %v5274 = vshrl.u32 %v5273, 7
    %v5275 = vsub.s32 0, %v5274
    %v5276 = vrot.slane %v5271, %v5275
    %v5277 = vlaneseq
    %v5278 = vshrl.u32 %v5277, 7
    %v5279 = vsub.s32 1, %v5278
    %v5280 = vrot.slane %v5271, %v5279
    %v5283 = vrcp.pop %v5276
    %v5284 = vmul.f32 %v5226, %v5283
    %v5285 = vmul.f32 %v5228, %v5283
    %v5286 = vrcp.pop %v5280
    %v5287 = vmul.f32 %v5230, %v5286
    %v5288 = vmul.f32 %v5232, %v5286
    %5290 = vset.pattern.permute.xlu0 0
    %5291 = vperm.xlu0 %5290, %v5284
    %v5292 = vpop.permute.xlu0 %5291
    %5295 = vset.pattern.permute.xlu0 0
    %5296 = vperm.xlu0 %5295, %v5285
    %v5297 = vpop.permute.xlu0 %5296
    %5300 = vset.pattern.permute.xlu0 0
    %5301 = vperm.xlu0 %5300, %v5287
    %v5302 = vpop.permute.xlu0 %5301
    %5305 = vset.pattern.permute.xlu0 0
    %5306 = vperm.xlu0 %5305, %v5288
    %v5307 = vpop.permute.xlu0 %5306
    %v5309 = vmul.f32 %v5292, %v814
    %v5310 = vmul.f32 %v5297, %v817
    %v5311 = vmul.f32 %v5302, %v822
    %v5312 = vmul.f32 %v5307, %v825
    %v5313 = vsel %vm830, %v5309, 0.0
    %v5314 = vsel %vm830, %v5310, 0.0
    %v5315 = vadd.f32 %v5313, %v5314
    %v5316 = vrot.slane %v5315, 4
    %v5317 = vadd.f32 %v5315, %v5316
    %v5318 = vrot.slane %v5317, 2
    %v5319 = vadd.f32 %v5317, %v5318
    %v5320 = vrot.slane %v5319, 1
    %v5321 = vadd.f32 %v5319, %v5320
    %v5322 = vsel %vm830, %v5311, 0.0
    %v5323 = vsel %vm830, %v5312, 0.0
    %v5324 = vadd.f32 %v5322, %v5323
    %v5325 = vrot.slane %v5324, 4
    %v5326 = vadd.f32 %v5324, %v5325
    %v5327 = vrot.slane %v5326, 2
    %v5328 = vadd.f32 %v5326, %v5327
    %v5329 = vrot.slane %v5328, 1
    %v5330 = vadd.f32 %v5328, %v5329
    %v5331 = vld [vmem:[%s17] sm:$0xf]
    %v5332 = vld [vmem:[%s17 + $0x4] sm:$0xf]
    %v5333 = vld [vmem:[%s17 + $0x8] sm:$0xf]
    %v5334 = vld [vmem:[%s17 + $0xc] sm:$0xf]
    %v5335 = vld [vmem:[%s18] sm:$0x1]
    %v5337 = vlaneseq
    %v5338 = vshrl.u32 %v5337, 7
    %v5339 = vsub.s32 0, %v5338
    %v5340 = vrot.slane %v5335, %v5339
    %v5346 = vunpack.c.l.b16 %v5331
    %v5347 = vunpack.c.l.b16 %v5332
    %v5348 = vunpack.c.l.b16 %v5333
    %v5349 = vunpack.c.l.b16 %v5334
    %v5350 = vpack.c.b16 %v5347, %v5346
    %v5351 = vpack.c.b16 %v5349, %v5348
    %5354 = vmatprep.subr.bf16.mxu0 0
    %5355 = vmatpush1.bf16.msra.mxu0 %v5350
    %5356 = vmatprep.subr.bf16.mxu0 0
    %5357 = vmatpush1.bf16.msra.mxu0 %v5351
    %5358 = vmatprep.subr.bf16.mxu0 0
    %5359 = vmatpush1.bf16.msra.mxu0 0
    %5360 = vmatprep.subr.bf16.mxu0 0
    %5361 = vmatpush1.bf16.msra.mxu0 0
    %5362 = vmatprep.subr.bf16.mxu0 0
    %5363 = vmatpush1.bf16.msra.mxu0 0
    %5364 = vmatprep.subr.bf16.mxu0 0
    %5365 = vmatpush1.bf16.msra.mxu0 0
    %5366 = vmatprep.subr.bf16.mxu0 0
    %5367 = vmatpush1.bf16.msra.mxu0 0
    %5368 = vmatprep.subr.bf16.mxu0 0
    %5369 = vmatpush1.bf16.msra.mxu0 0
    %5370 = vmatprep.subr.bf16.mxu0 0
    %5371 = vmatpush1.bf16.msra.mxu0 0
    %5372 = vmatprep.subr.bf16.mxu0 0
    %5373 = vmatpush1.bf16.msra.mxu0 0
    %5374 = vmatprep.subr.bf16.mxu0 0
    %5375 = vmatpush1.bf16.msra.mxu0 0
    %5376 = vmatprep.subr.bf16.mxu0 0
    %5377 = vmatpush1.bf16.msra.mxu0 0
    %5378 = vmatprep.subr.bf16.mxu0 0
    %5379 = vmatpush1.bf16.msra.mxu0 0
    %5380 = vmatprep.subr.bf16.mxu0 0
    %5381 = vmatpush1.bf16.msra.mxu0 0
    %5382 = vmatprep.subr.bf16.mxu0 0
    %5383 = vmatpush1.bf16.msra.mxu0 0
    %5384 = vmatprep.subr.bf16.mxu0 0
    %5385 = vmatpush1.bf16.msra.mxu0 0
    %5386 = vmatprep.mubr.bf16.mxu0 0
    %5387 = vmatmul.mubr.bf16.gmra.mrb[0].mxu0 %v4929
    %v5388 = vpop.f32.mrb[0].mxu0
    %v5389 = vadd.f32 %v5340, %v5388
    %v5390 = vpop.f32.mrb[0].mxu0
    %v5391 = vpop.f32.mrb[0].mxu0
    %v5392 = vpop.f32.mrb[0].mxu0
    %5393 = vdwg.mxu0
    %v5394 = vxor.u32 %v5389, 2147483648
    %v5395 = vmul.f32 %v5394, 1.442695
    %v5396 = vpow.pop %v5395
    %v5397 = vadd.f32 %v5396, 1.0
    %v5398 = vrcp.pop %v5397
    %v5399 = vmul.f32 1.0, %v5398
    %v5402 = vsel %vm869, %v5330, %v5321
    %v5404 = vmul.f32 %v5399, %v5402
    %s5405 = sld [smem:[#allocation4 + $0x6]]
    %s5406 = scalar_lea.vmem %s6, %s5405
    %v5407 = vld [vmem:[%s5406] sm:$0x1]
    %5408 = vst.msk [vmem:[#allocation2] sm:$0x1] %vm1445, %v5407
    %s5409 = sld [smem:[#allocation4 + $0x86]]
    %s5410 = scalar_lea.vmem %s6, %s5409
    %v5411 = vld [vmem:[%s5410] sm:$0x1]
    %5412 = vst.msk [vmem:[#allocation2 + $0x1] sm:$0x1] %vm1445, %v5411
    %5414 = vrot.lane.b32.xlu0 %v5404, 32
    %v5415 = vpop.permute.xlu0 %5414
    %5417 = vst.msk [vmem:[#allocation2] sm:$0x3] %vm1455, %v5415
    %5419 = vrot.lane.b32.xlu0 %v4900, 96
    %v5420 = vpop.permute.xlu0 %5419
    %5422 = vst.msk [vmem:[#allocation2] sm:$0x3] %vm1461, %v5420
    %v5423 = vld [vmem:[#allocation2] sm:$0x3]
    %v5424 = vpack.c.bf16 %v5423, %v5423
    %v5425 = vld [vmem:[%s19] sm:$0xf]
    %v5426 = vld [vmem:[%s19 + $0x4] sm:$0xf]
    %v5427 = vld [vmem:[%s19 + $0x8] sm:$0xf]
    %v5428 = vld [vmem:[%s19 + $0xc] sm:$0xf]
    %v5429 = vld [vmem:[%s19 + $0x10] sm:$0xf]
    %v5430 = vld [vmem:[%s19 + $0x14] sm:$0xf]
    %v5431 = vld [vmem:[%s19 + $0x18] sm:$0xf]
    %v5432 = vld [vmem:[%s19 + $0x1c] sm:$0xf]
    %v5433 = vld [vmem:[%s19 + $0x20] sm:$0xf]
    %v5434 = vld [vmem:[%s19 + $0x24] sm:$0xf]
    %v5435 = vld [vmem:[%s19 + $0x28] sm:$0xf]
    %v5436 = vld [vmem:[%s19 + $0x2c] sm:$0xf]
    %v5437 = vld [vmem:[%s19 + $0x30] sm:$0xf]
    %v5438 = vld [vmem:[%s19 + $0x34] sm:$0xf]
    %v5439 = vld [vmem:[%s19 + $0x38] sm:$0xf]
    %v5440 = vld [vmem:[%s19 + $0x3c] sm:$0xf]
    %v5441 = vld [vmem:[%s20] sm:$0x1]
    %v5443 = vlaneseq
    %v5444 = vshrl.u32 %v5443, 7
    %v5445 = vsub.s32 0, %v5444
    %v5446 = vrot.slane %v5441, %v5445
    %v5464 = vunpack.c.l.b16 %v5425
    %v5465 = vunpack.c.l.b16 %v5426
    %v5466 = vunpack.c.l.b16 %v5427
    %v5467 = vunpack.c.l.b16 %v5428
    %v5468 = vunpack.c.l.b16 %v5429
    %v5469 = vunpack.c.l.b16 %v5430
    %v5470 = vunpack.c.l.b16 %v5431
    %v5471 = vunpack.c.l.b16 %v5432
    %v5472 = vunpack.c.l.b16 %v5433
    %v5473 = vunpack.c.l.b16 %v5434
    %v5474 = vunpack.c.l.b16 %v5435
    %v5475 = vunpack.c.l.b16 %v5436
    %v5476 = vunpack.c.l.b16 %v5437
    %v5477 = vunpack.c.l.b16 %v5438
    %v5478 = vunpack.c.l.b16 %v5439
    %v5479 = vunpack.c.l.b16 %v5440
    %v5480 = vpack.c.b16 %v5465, %v5464
    %v5481 = vpack.c.b16 %v5467, %v5466
    %v5482 = vpack.c.b16 %v5469, %v5468
    %v5483 = vpack.c.b16 %v5471, %v5470
    %v5484 = vpack.c.b16 %v5473, %v5472
    %v5485 = vpack.c.b16 %v5475, %v5474
    %v5486 = vpack.c.b16 %v5477, %v5476
    %v5487 = vpack.c.b16 %v5479, %v5478
    %5496 = vmatprep.subr.bf16.mxu0 0
    %5497 = vmatpush1.bf16.msra.mxu0 %v5480
    %5498 = vmatprep.subr.bf16.mxu0 0
    %5499 = vmatpush1.bf16.msra.mxu0 %v5481
    %5500 = vmatprep.subr.bf16.mxu0 0
    %5501 = vmatpush1.bf16.msra.mxu0 %v5482
    %5502 = vmatprep.subr.bf16.mxu0 0
    %5503 = vmatpush1.bf16.msra.mxu0 %v5483
    %5504 = vmatprep.subr.bf16.mxu0 0
    %5505 = vmatpush1.bf16.msra.mxu0 %v5484
    %5506 = vmatprep.subr.bf16.mxu0 0
    %5507 = vmatpush1.bf16.msra.mxu0 %v5485
    %5508 = vmatprep.subr.bf16.mxu0 0
    %5509 = vmatpush1.bf16.msra.mxu0 %v5486
    %5510 = vmatprep.subr.bf16.mxu0 0
    %5511 = vmatpush1.bf16.msra.mxu0 %v5487
    %5512 = vmatprep.subr.bf16.mxu0 0
    %5513 = vmatpush1.bf16.msra.mxu0 0
    %5514 = vmatprep.subr.bf16.mxu0 0
    %5515 = vmatpush1.bf16.msra.mxu0 0
    %5516 = vmatprep.subr.bf16.mxu0 0
    %5517 = vmatpush1.bf16.msra.mxu0 0
    %5518 = vmatprep.subr.bf16.mxu0 0
    %5519 = vmatpush1.bf16.msra.mxu0 0
    %5520 = vmatprep.subr.bf16.mxu0 0
    %5521 = vmatpush1.bf16.msra.mxu0 0
    %5522 = vmatprep.subr.bf16.mxu0 0
    %5523 = vmatpush1.bf16.msra.mxu0 0
    %5524 = vmatprep.subr.bf16.mxu0 0
    %5525 = vmatpush1.bf16.msra.mxu0 0
    %5526 = vmatprep.subr.bf16.mxu0 0
    %5527 = vmatpush1.bf16.msra.mxu0 0
    %5528 = vmatprep.mubr.bf16.mxu0 0
    %5529 = vmatmul.mubr.bf16.gmra.mrb[0].mxu0 %v5424
    %v5530 = vpop.f32.mrb[0].mxu0
    %v5531 = vadd.f32 %v5446, %v5530
    %v5532 = vpop.f32.mrb[0].mxu0
    %v5533 = vpop.f32.mrb[0].mxu0
    %v5534 = vpop.f32.mrb[0].mxu0
    %5535 = vdwg.mxu0
    %v5536 = vxor.u32 %v5531, 2147483648
    %v5537 = vmul.f32 %v5536, 1.442695
    %v5538 = vpow.pop %v5537
    %v5539 = vadd.f32 %v5538, 1.0
    %v5540 = vrcp.pop %v5539
    %v5541 = vmul.f32 1.0, %v5540
    %v5542 = vtanh.pop %v5531
    %v5543 = vmul.f32 %v5541, %v4894
    %5545 = vrot.lane.b32.xlu0 %v5542, 64
    %v5546 = vpop.permute.xlu0 %5545
    %v5548 = vmul.f32 %v5541, %v5546
    %5550 = vrot.lane.b32.xlu0 %v5548, 32
    %v5551 = vpop.permute.xlu0 %5550
    %v5553 = vadd.f32 %v5543, %v5551
    %v5554 = vtanh.pop %v5553
    %5556 = vrot.lane.b32.xlu0 %v5554, 64
    %v5557 = vpop.permute.xlu0 %5556
    %v5559 = vmul.f32 %v5541, %v5557
    %v5560 = vpack.c.bf16 %v5559, %v5559
    %v5561 = vld [vmem:[%s21] sm:$0xf]
    %v5562 = vld [vmem:[%s21 + $0x4] sm:$0xf]
    %v5563 = vld [vmem:[%s21 + $0x8] sm:$0xf]
    %v5564 = vld [vmem:[%s21 + $0xc] sm:$0xf]
    %v5565 = vld [vmem:[%s22] sm:$0x1]
    %v5567 = vlaneseq
    %v5568 = vshrl.u32 %v5567, 7
    %v5569 = vsub.s32 0, %v5568
    %v5570 = vrot.slane %v5565, %v5569
    %5573 = vrot.lane.b32.xlu0 %v5560, 32
    %v5574 = vpop.permute.xlu0 %5573
    %v5579 = vunpack.c.l.b16 %v5561
    %v5580 = vunpack.c.l.b16 %v5562
    %v5581 = vunpack.c.l.b16 %v5563
    %v5582 = vunpack.c.l.b16 %v5564
    %v5583 = vpack.c.b16 %v5580, %v5579
    %v5584 = vpack.c.b16 %v5582, %v5581
    %v5588 = vsel %vm830, %v5574, 0
    %5590 = vmatprep.subr.bf16.mxu0 0
    %5591 = vmatpush1.bf16.msra.mxu0 %v5583
    %5592 = vmatprep.subr.bf16.mxu0 0
    %5593 = vmatpush1.bf16.msra.mxu0 %v5584
    %5594 = vmatprep.subr.bf16.mxu0 0
    %5595 = vmatpush1.bf16.msra.mxu0 0
    %5596 = vmatprep.subr.bf16.mxu0 0
    %5597 = vmatpush1.bf16.msra.mxu0 0
    %5598 = vmatprep.subr.bf16.mxu0 0
    %5599 = vmatpush1.bf16.msra.mxu0 0
    %5600 = vmatprep.subr.bf16.mxu0 0
    %5601 = vmatpush1.bf16.msra.mxu0 0
    %5602 = vmatprep.subr.bf16.mxu0 0
    %5603 = vmatpush1.bf16.msra.mxu0 0
    %5604 = vmatprep.subr.bf16.mxu0 0
    %5605 = vmatpush1.bf16.msra.mxu0 0
    %5606 = vmatprep.subr.bf16.mxu0 0
    %5607 = vmatpush1.bf16.msra.mxu0 0
    %5608 = vmatprep.subr.bf16.mxu0 0
    %5609 = vmatpush1.bf16.msra.mxu0 0
    %5610 = vmatprep.subr.bf16.mxu0 0
    %5611 = vmatpush1.bf16.msra.mxu0 0
    %5612 = vmatprep.subr.bf16.mxu0 0
    %5613 = vmatpush1.bf16.msra.mxu0 0
    %5614 = vmatprep.subr.bf16.mxu0 0
    %5615 = vmatpush1.bf16.msra.mxu0 0
    %5616 = vmatprep.subr.bf16.mxu0 0
    %5617 = vmatpush1.bf16.msra.mxu0 0
    %5618 = vmatprep.subr.bf16.mxu0 0
    %5619 = vmatpush1.bf16.msra.mxu0 0
    %5620 = vmatprep.subr.bf16.mxu0 0
    %5621 = vmatpush1.bf16.msra.mxu0 0
    %5622 = vmatprep.mubr.bf16.mxu0 0
    %5623 = vmatmul.mubr.bf16.gmra.mrb[0].mxu0 %v5588
    %v5624 = vpop.f32.mrb[0].mxu0
    %v5625 = vadd.f32 %v5570, %v5624
    %v5626 = vpop.f32.mrb[0].mxu0
    %v5627 = vpop.f32.mrb[0].mxu0
    %v5628 = vpop.f32.mrb[0].mxu0
    %5629 = vdwg.mxu0
    %vm5630 = vcmp.gt.s32.totalorder %v1069, 6
    %v5631 = vsel %vm5630, 1, 0
    %v5632 = vcvt.s32.f32 %v5631
    %5634 = vset.pattern.permute.xlu0 0
    %5635 = vperm.xlu0 %5634, %v5632
    %v5636 = vpop.permute.xlu0 %5635
    %v5638 = vmul.f32 %v5625, %v5636
    %v5641 = vunpack.c.l.s4 1966171168
    %v5642 = vunpack.c.0.s8 %v5641
    %v5643 = vlaneseq
    %v5644 = vshrl.u32 %v5643, 7
    %v5645 = vsub.s32 %v5642, %v5644
    %v5646 = vrot.slane %v5638, %v5645
    %v5647 = vcombine.high %v5646, %v5646
    %v5649 = vunpack.c.l.s4 1966171168
    %v5650 = vunpack.c.0.s8 %v5649
    %v5651 = vlaneseq
    %v5652 = vshrl.u32 %v5651, 7
    %v5653 = vsub.s32 %v5650, %v5652
    %v5654 = vrot.slane %v5646, %v5653
    %v5656 = vunpack.c.l.s4 1966171168
    %v5657 = vunpack.c.0.s8 %v5656
    %v5658 = vlaneseq
    %v5659 = vshrl.u32 %v5658, 7
    %v5660 = vsub.s32 %v5657, %v5659
    %v5661 = vrot.slane %v5647, %v5660
    %5664 = vst.msk [vmem:[%s23 + $0x6] sm:$0x1] %vm1708, %v5654
    %5665 = vst.msk [vmem:[%s23 + $0xe] sm:$0x1] %vm1708, %v5661
    %v5666 = vlaneseq
    %v5667 = vshrl.u32 %v5666, 7
    %v5668 = vsub.s32 0, %v5667
    %v5669 = vrot.slane %v5636, %v5668
    %v5670 = vlaneseq
    %v5671 = vshrl.u32 %v5670, 7
    %v5672 = vsub.s32 1, %v5671
    %v5673 = vrot.slane %v5636, %v5672
    %v5676 = vmul.f32 %v5284, %v5669
    %v5677 = vmul.f32 %v5285, %v5669
    %v5678 = vmul.f32 %v5287, %v5673
    %v5679 = vmul.f32 %v5288, %v5673
    %5684 = vset.pattern.permute.xlu0 0
    %5685 = vperm.xlu0 %5684, %v5676
    %v5686 = vpop.permute.xlu0 %5685
    %5687 = vset.pattern.permute.xlu0 0
    %5688 = vperm.xlu0 %5687, %v5677
    %v5689 = vpop.permute.xlu0 %5688
    %5690 = vset.pattern.permute.xlu0 0
    %5691 = vperm.xlu0 %5690, %v5678
    %v5692 = vpop.permute.xlu0 %5691
    %5693 = vset.pattern.permute.xlu0 0
    %5694 = vperm.xlu0 %5693, %v5679
    %v5695 = vpop.permute.xlu0 %5694
    %v5696 = vlaneseq
    %v5697 = vshrl.u32 %v5696, 7
    %v5698 = vsub.s32 %v1220, %v5697
    %v5699 = vrot.slane %v5686, %v5698
    %v5700 = vlaneseq
    %v5701 = vshrl.u32 %v5700, 7
    %v5702 = vsub.s32 %v1225, %v5701
    %v5703 = vrot.slane %v5689, %v5702
    %v5704 = vsel %vm1230, %v5703, %v5699
    %v5705 = vlaneseq
    %v5706 = vshrl.u32 %v5705, 7
    %v5707 = vsub.s32 %v1220, %v5706
    %v5708 = vrot.slane %v5692, %v5707
    %v5709 = vlaneseq
    %v5710 = vshrl.u32 %v5709, 7
    %v5711 = vsub.s32 %v1225, %v5710
    %v5712 = vrot.slane %v5695, %v5711
    %v5713 = vsel %vm1230, %v5712, %v5708
    %5716 = vst.msk [vmem:[%s24 + $0x6] sm:$0x1] %vm1761, %v5704
    %5717 = vst.msk [vmem:[%s24 + $0xe] sm:$0x1] %vm1761, %v5713
    // Predicated region
    $region98: #{tpu_custom_call.1} parent=1 // pred_check
      _
    $region99: #{tpu_custom_call.1} parent=1 // pred_check_branch
      %5719 = sbr.rel (0) target = $region101
    $region100: #{tpu_custom_call.1} parent=1 // pred_region
      _
    $region101: #{tpu_custom_call.1} parent=1 // pred_fallthru
      _
    // Predicated region
    $region102: #{tpu_custom_call.1} parent=1 // pred_check
      _
    $region103: #{tpu_custom_call.1} parent=1 // pred_check_branch
      %5721 = sbr.rel (0) target = $region105
    $region104: #{tpu_custom_call.1} parent=1 // pred_region
      _
    $region105: #{tpu_custom_call.1} parent=1 // pred_fallthru
      _
    // Predicated region
    $region106: #{tpu_custom_call.1} parent=1 // pred_check
      _
    $region107: #{tpu_custom_call.1} parent=1 // pred_check_branch
      %5723 = sbr.rel (0) target = $region109
    $region108: #{tpu_custom_call.1} parent=1 // pred_region
      _
    $region109: #{tpu_custom_call.1} parent=1 // pred_fallthru
      _
    // Predicated region
    $region110: #{tpu_custom_call.1} parent=1 // pred_check
      _
    $region111: #{tpu_custom_call.1} parent=1 // pred_check_branch
      %5725 = sbr.rel (0) target = $region113
    $region112: #{tpu_custom_call.1} parent=1 // pred_region
      _
    $region113: #{tpu_custom_call.1} parent=1 // pred_fallthru
      _
    %5726 = vsyncpa [#allocation5], 1

</llo_original>
